<compile_context>
chip_gen: v7x
topology: tpu7x:2x2x1
jax: 0.10.0
libtpu: 0.0.40
codegen_flags: <defaults>
</compile_context>

<pallas_src>
import functools

import jax
import jax.numpy as jnp
from jax import lax
from jax.experimental import pallas as pl
from jax.experimental.pallas import tpu as pltpu

LANE = 128        # channel dims padded to lane width
SUBLANE = 16      # node-row padding quantum (bf16-friendly)


def _round_up(x, m):
    return (x + m - 1) // m * m


@functools.lru_cache(maxsize=1)
def _vmem_limit_bytes():
    """Per-generation VMEM budget (review: do not hard-code 48 MiB)."""
    try:
        cap = getattr(pltpu.get_tpu_info(), "vmem_capacity_bytes", None)
        if cap:
            return int(max(32 * 1024 * 1024,
                           min(0.85 * cap, 112 * 1024 * 1024)))
    except Exception:
        pass
    return 48 * 1024 * 1024


def _maybe_pad2(a, rows, cols):
    if a.shape == (rows, cols):
        return a
    return jnp.pad(a, ((0, rows - a.shape[0]), (0, cols - a.shape[1])))


# ----------------------------------------------------------------------------
# Kernel 1: tiled fused matmul  out = [relu](X @ W [+ b])
# ----------------------------------------------------------------------------
def _matmul_kernel_direct(x_ref, w_ref, *rest, has_bias, relu):
    # Single K step: no accumulator scratch, write the tile directly.
    if has_bias:
        b_ref, o_ref = rest
    else:
        (o_ref,) = rest
    out = jnp.dot(x_ref[...], w_ref[...], preferred_element_type=jnp.float32)
    if has_bias:
        out = out + b_ref[...]
    if relu:
        out = jnp.maximum(out, 0.0)
    o_ref[...] = out.astype(o_ref.dtype)


def _matmul_kernel_acc(x_ref, w_ref, *rest, has_bias, relu):
    if has_bias:
        b_ref, o_ref, acc_ref = rest
    else:
        o_ref, acc_ref = rest
        b_ref = None
    k = pl.program_id(2)

    @pl.when(k == 0)
    def _():
        acc_ref[...] = jnp.zeros_like(acc_ref)

    acc_ref[...] += jnp.dot(x_ref[...], w_ref[...],
                            preferred_element_type=jnp.float32)

    @pl.when(k == pl.num_programs(2) - 1)
    def _():
        out = acc_ref[...]
        if has_bias:
            out = out + b_ref[...]
        if relu:
            out = jnp.maximum(out, 0.0)
        o_ref[...] = out.astype(o_ref.dtype)


def _tile(dim, pref, quantum):
    d_pad = _round_up(dim, quantum)
    if d_pad <= pref:
        return d_pad, d_pad
    return _round_up(d_pad, pref), pref


def pallas_matmul(x, w, bias=None, relu=False,
                  tm_pref=256, tn_pref=512, tk_pref=512):
    """Tiled MXU matmul; bf16 operands, f32 accumulation, optional bias/ReLU."""
    M, K = x.shape
    K2, N = w.shape
    assert K == K2, (x.shape, w.shape)
    M_pad, tm = _tile(M, tm_pref, SUBLANE)
    N_pad, tn = _tile(N, tn_pref, LANE)
    K_pad, tk = _tile(K, tk_pref, LANE)

    xp = _maybe_pad2(x.astype(jnp.bfloat16), M_pad, K_pad)
    wp = _maybe_pad2(w.astype(jnp.bfloat16), K_pad, N_pad)
    has_bias = bias is not None
    args = [xp, wp]
    if has_bias:
        bp = _maybe_pad2(bias.reshape(1, -1).astype(jnp.float32), 1, N_pad)
        args.append(bp)

    if K_pad == tk:
        # Fast path: one K step -> no scratch, no init/finalize stores.
        in_specs = [pl.BlockSpec((tm, K_pad), lambda i, j: (i, 0)),
                    pl.BlockSpec((K_pad, tn), lambda i, j: (0, j))]
        if has_bias:
            in_specs.append(pl.BlockSpec((1, tn), lambda i, j: (0, j)))
        out = pl.pallas_call(
            functools.partial(_matmul_kernel_direct, has_bias=has_bias,
                              relu=relu),
            out_shape=jax.ShapeDtypeStruct((M_pad, N_pad), jnp.float32),
            grid_spec=pltpu.PrefetchScalarGridSpec(
                num_scalar_prefetch=0,
                grid=(M_pad // tm, N_pad // tn),
                in_specs=in_specs,
                out_specs=pl.BlockSpec((tm, tn), lambda i, j: (i, j))),
            compiler_params=pltpu.CompilerParams(
                dimension_semantics=("parallel", "parallel"),
                vmem_limit_bytes=_vmem_limit_bytes()),
        )(*args)
    else:
        in_specs = [pl.BlockSpec((tm, tk), lambda i, j, k: (i, k)),
                    pl.BlockSpec((tk, tn), lambda i, j, k: (k, j))]
        if has_bias:
            in_specs.append(pl.BlockSpec((1, tn), lambda i, j, k: (0, j)))
        out = pl.pallas_call(
            functools.partial(_matmul_kernel_acc, has_bias=has_bias,
                              relu=relu),
            out_shape=jax.ShapeDtypeStruct((M_pad, N_pad), jnp.float32),
            grid_spec=pltpu.PrefetchScalarGridSpec(
                num_scalar_prefetch=0,
                grid=(M_pad // tm, N_pad // tn, K_pad // tk),
                in_specs=in_specs,
                out_specs=pl.BlockSpec((tm, tn), lambda i, j, k: (i, j)),
                scratch_shapes=[pltpu.VMEM((tm, tn), jnp.float32)]),
            compiler_params=pltpu.CompilerParams(
                dimension_semantics=("parallel", "parallel", "arbitrary"),
                vmem_limit_bytes=_vmem_limit_bytes()),
        )(*args)

    if (M_pad, N_pad) != (M, N):
        out = out[:M, :N]
    return out


# ----------------------------------------------------------------------------
# Kernel 2: SplineConv edge stage (vectorized gather/combine/scatter per tile)
#           + mean-normalise + root transform + bias + ReLU at finalize
# ----------------------------------------------------------------------------
def _spline_agg_kernel(src_ref, dst_ref, basis_ref, xw_ref, x_ref, rootw_ref,
                       bias_ref, invdeg_ref, out_ref, *, k_total, c_pad, relu):
    t = pl.program_id(0)
    n_pad = out_ref.shape[0]
    te = src_ref.shape[0]

    @pl.when(t == 0)
    def _():
        out_ref[...] = jnp.zeros_like(out_ref)   # accumulate directly in out

    # One-hot gather / scatter matrices built in-register for the whole tile.
    src_oh = (lax.broadcasted_iota(jnp.int32, (te, n_pad), 1)
              == src_ref[...]).astype(jnp.float32)          # (TE, N_pad)
    dst_oh = (lax.broadcasted_iota(jnp.int32, (n_pad, te), 0)
              == dst_ref[...]).astype(jnp.float32)          # (N_pad, TE)

    basis = basis_ref[...]                                  # (TE, K) f32
    msg = jnp.zeros((te, c_pad), jnp.float32)
    for k in range(k_total):                                # static unroll
        xw_k = xw_ref[:, k * c_pad:(k + 1) * c_pad]         # (N_pad, C) slice
        gath = jnp.dot(src_oh, xw_k,                        # MXU gather
                       preferred_element_type=jnp.float32)
        msg = msg + gath * basis[:, k:k + 1]                # VPU combine
    # Vectorized scatter-add of the whole tile (no per-row RMW stores).
    out_ref[...] += jnp.dot(dst_oh, msg, preferred_element_type=jnp.float32)

    @pl.when(t == pl.num_programs(0) - 1)
    def _():
        agg = out_ref[...] * invdeg_ref[...]                # mean aggregation
        root = jnp.dot(x_ref[...], rootw_ref[...],
                       preferred_element_type=jnp.float32)
        res = agg + root + bias_ref[...]
        if relu:
            res = jnp.maximum(res, 0.0)
        out_ref[...] = res


def _spline_conv_layer(h_pad, src_col, dst_row, basis_p, inv_deg, prep,
                       k_total, tile_e, relu=True):
    n_pad, cin_pad = h_pad.shape
    w_flat, root, bias = prep["w_flat"], prep["root"], prep["bias"]
    cout_pad = root.shape[1]
    e_pad = src_col.shape[0]

    # xw[n, k*C:(k+1)*C] = h[n] @ W_k  -- one wide tiled MXU matmul.
    xw = pallas_matmul(h_pad, w_flat)               # (N_pad, k_total*cout_pad)

    # TODO(synk): for very large graphs, tile the node dimension (CSR /
    # dst-sorted edges) instead of keeping xw fully VMEM-resident (v7x 64 MiB).
    return pl.pallas_call(
        functools.partial(_spline_agg_kernel, k_total=k_total,
                          c_pad=cout_pad, relu=relu),
        out_shape=jax.ShapeDtypeStruct((n_pad, cout_pad), jnp.float32),
        grid_spec=pltpu.PrefetchScalarGridSpec(
            num_scalar_prefetch=0,
            grid=(e_pad // tile_e,),
            in_specs=[
                pl.BlockSpec((tile_e, 1), lambda t: (t, 0)),                 # src
                pl.BlockSpec((1, tile_e), lambda t: (0, t)),                 # dst
                pl.BlockSpec((tile_e, k_total), lambda t: (t, 0)),           # basis
                pl.BlockSpec((n_pad, k_total * cout_pad), lambda t: (0, 0)), # xw
                pl.BlockSpec((n_pad, cin_pad), lambda t: (0, 0)),            # h
                pl.BlockSpec((cin_pad, cout_pad), lambda t: (0, 0)),         # root
                pl.BlockSpec((1, cout_pad), lambda t: (0, 0)),               # bias
                pl.BlockSpec((n_pad, 1), lambda t: (0, 0)),                  # 1/deg
            ],
            out_specs=pl.BlockSpec((n_pad, cout_pad), lambda t: (0, 0))),
        compiler_params=pltpu.CompilerParams(
            dimension_semantics=("arbitrary",),
            vmem_limit_bytes=_vmem_limit_bytes()),
    )(src_col, dst_row, basis_p, xw, h_pad.astype(jnp.bfloat16),
      root, bias, inv_deg)


# ----------------------------------------------------------------------------
# Kernel 3: GINConv = (1+eps)*x + vectorized neighbour scatter-sum + MLP
# ----------------------------------------------------------------------------
def _gin_conv_kernel(src_ref, dst_ref, x_ref, w_ref, b_ref, out_ref,
                     *, eps, n_layers, relu_last):
    t = pl.program_id(0)
    n_pad = out_ref.shape[0]
    te = src_ref.shape[0]

    @pl.when(t == 0)
    def _():
        out_ref[...] = (1.0 + eps) * x_ref[...]

    src_oh = (lax.broadcasted_iota(jnp.int32, (te, n_pad), 1)
              == src_ref[...]).astype(jnp.float32)          # (TE, N_pad)
    dst_oh = (lax.broadcasted_iota(jnp.int32, (n_pad, te), 0)
              == dst_ref[...]).astype(jnp.float32)          # (N_pad, TE)
    gathered = jnp.dot(src_oh, x_ref[...],
                       preferred_element_type=jnp.float32)  # (TE, C)
    out_ref[...] += jnp.dot(dst_oh, gathered,
                            preferred_element_type=jnp.float32)

    @pl.when(t == pl.num_programs(0) - 1)
    def _():
        h = out_ref[...]
        # TODO(synk): MLP(out, out, 4) internals not shown in the reference;
        # assumed 4 x [Linear(out, out) + ReLU] (batch_norm=False, dropout=0).
        # TODO(synk): for large N, tile this MLP epilogue over node rows.
        for li in range(n_layers):
            h = jnp.dot(h.astype(jnp.bfloat16), w_ref[li],
                        preferred_element_type=jnp.float32) + b_ref[li]
            if li < n_layers - 1 or relu_last:
                h = jnp.maximum(h, 0.0)
        out_ref[...] = h


def _gin_conv_layer(h_pad, src_col, dst_row, prep, tile_e, relu=True, eps=0.0):
    n_pad, c_pad = h_pad.shape
    w_stack, b_stack = prep["mlp_w"], prep["mlp_b"]
    n_layers = w_stack.shape[0]
    e_pad = src_col.shape[0]

    return pl.pallas_call(
        functools.partial(_gin_conv_kernel, eps=eps, n_layers=n_layers,
                          relu_last=relu),
        out_shape=jax.ShapeDtypeStruct((n_pad, c_pad), jnp.float32),
        grid_spec=pltpu.PrefetchScalarGridSpec(
            num_scalar_prefetch=0,
            grid=(e_pad // tile_e,),
            in_specs=[
                pl.BlockSpec((tile_e, 1), lambda t: (t, 0)),               # src
                pl.BlockSpec((1, tile_e), lambda t: (0, t)),               # dst
                pl.BlockSpec((n_pad, c_pad), lambda t: (0, 0)),            # h
                pl.BlockSpec((n_layers, c_pad, c_pad), lambda t: (0, 0, 0)),
                pl.BlockSpec((n_layers, 1, c_pad), lambda t: (0, 0, 0)),
            ],
            out_specs=pl.BlockSpec((n_pad, c_pad), lambda t: (0, 0))),
        compiler_params=pltpu.CompilerParams(
            dimension_semantics=("arbitrary",),
            vmem_limit_bytes=_vmem_limit_bytes()),
    )(src_col, dst_row, h_pad.astype(jnp.float32), w_stack, b_stack)


# ----------------------------------------------------------------------------
# Spline basis (degree=1, open spline) -- tiny JAX glue
# ----------------------------------------------------------------------------
def spline_basis_deg1(pseudo, kernel_size):
    """Linear (degree-1) open B-spline basis: returns (E, S) basis / indices."""
    E, D = pseudo.shape
    num_steps = kernel_size - 1
    v = pseudo * num_steps
    fl = jnp.floor(v)
    frac = v - fl
    S = 2 ** D
    combos = jnp.array(
        [[(s >> d) & 1 for d in range(D)] for s in range(S)], dtype=jnp.int32)
    b = jnp.where(combos[None, :, :] == 0,
                  (1.0 - frac)[:, None, :], frac[:, None, :])    # (E, S, D)
    basis = jnp.prod(b, axis=-1)                                  # (E, S)
    idx = fl.astype(jnp.int32)[:, None, :] + combos[None, :, :]   # (E, S, D)
    idx = jnp.clip(idx, 0, kernel_size - 1)
    k_pows = (kernel_size ** jnp.arange(D)).astype(jnp.int32)
    wi = jnp.sum(idx * k_pows[None, None, :], axis=-1)            # (E, S)
    return basis, wi


# ----------------------------------------------------------------------------
# One-time parameter prep (all padding / stacking / casts hoisted here)
# ----------------------------------------------------------------------------
def prepare_params(params, in_channels, out_channels, dim, kernel_size):
    k_total = kernel_size ** dim
    cin_pad = _round_up(in_channels, LANE)
    cout_pad = _round_up(out_channels, LANE)
    prep = {"convs": []}
    c_in, c_in_pad = in_channels, cin_pad
    for i, conv in enumerate(params["convs"]):
        if i % 2 == 0:  # SplineConv
            W = conv["weight"]                    # (k_total, c_in, c_out)
            Wp = jnp.pad(W, ((0, 0), (0, c_in_pad - c_in),
                             (0, cout_pad - out_channels)))
            w_flat = jnp.transpose(Wp, (1, 0, 2)).reshape(
                c_in_pad, k_total * cout_pad).astype(jnp.bfloat16)
            root = jnp.pad(conv["root"],
                           ((0, c_in_pad - c_in),
                            (0, cout_pad - out_channels))).astype(jnp.bfloat16)
            bias = jnp.pad(conv["bias"], (0, cout_pad - out_channels)
                           ).reshape(1, cout_pad).astype(jnp.float32)
            prep["convs"].append({"w_flat": w_flat, "root": root, "bias": bias})
        else:           # GINConv MLP
            w_stack = jnp.stack([
                jnp.pad(w, ((0, cout_pad - w.shape[0]),
                            (0, cout_pad - w.shape[1]))).astype(jnp.bfloat16)
                for w in conv["mlp_w"]])
            b_stack = jnp.stack([
                jnp.pad(b, (0, cout_pad - b.shape[0])
                        ).reshape(1, cout_pad).astype(jnp.float32)
                for b in conv["mlp_b"]])
            prep["convs"].append({"mlp_w": w_stack, "mlp_b": b_stack})
        c_in, c_in_pad = out_channels, cout_pad

    num_layers = len(params["convs"])
    wf = params["final_w"]
    real_ch = [in_channels] + [out_channels] * num_layers
    pad_ch = [cin_pad] + [cout_pad] * num_layers
    blocks, off = [], 0
    for c, cp in zip(real_ch, pad_ch):
        blocks.append(jnp.pad(wf[off:off + c],
                              ((0, cp - c), (0, cout_pad - wf.shape[1]))))
        off += c
    prep["final_w"] = jnp.concatenate(blocks, axis=0).astype(jnp.bfloat16)
    prep["final_b"] = jnp.pad(params["final_b"],
                              (0, cout_pad - params["final_b"].shape[0])
                              ).reshape(1, cout_pad).astype(jnp.float32)
    return prep


def _edge_layout(num_edges, max_tile=256):
    if num_edges <= max_tile:
        e_pad = _round_up(max(num_edges, 8), 8)
        return e_pad, e_pad
    e_pad = _round_up(num_edges, max_tile)
    return e_pad, max_tile


# ----------------------------------------------------------------------------
# HybridGNN forward (cat=True, lin=True, dropout=0.0, eval mode)
# ----------------------------------------------------------------------------
def hybrid_gnn_forward(prep, x, edge_index, edge_attr, *,
                       out_channels, kernel_size=5):
    N, c_in = x.shape
    E = edge_index.shape[1]
    dim = edge_attr.shape[1]
    k_total = kernel_size ** dim

    # +1 guarantees a sacrificial padded row for padded edges to land on.
    N_pad = _round_up(N + 1, SUBLANE)
    cin_pad = _round_up(c_in, LANE)
    E_pad, tile_e = _edge_layout(E)

    src = edge_index[0].astype(jnp.int32)
    dst = edge_index[1].astype(jnp.int32)
    pad_e = E_pad - E
    # Padded edges point at the sacrificial row N and have zero basis rows,
    # so no per-edge validity guard is needed inside the kernels.
    src_col = jnp.concatenate(
        [src, jnp.full((pad_e,), N, jnp.int32)]).reshape(E_pad, 1)
    dst_row = jnp.concatenate(
        [dst, jnp.full((pad_e,), N, jnp.int32)]).reshape(1, E_pad)

    x_pad = jnp.pad(x.astype(jnp.float32),
                    ((0, N_pad - N), (0, cin_pad - c_in)))

    # Edge-structure glue, computed once per forward and shared by all layers:
    # degrees for mean aggregation and the dense per-edge kernel-weight matrix
    # B[e, k] = sum_s basis[e, s] * [wi[e, s] == k].
    deg = jnp.zeros((N_pad,), jnp.float32).at[dst].add(1.0)
    inv_deg = (1.0 / jnp.maximum(deg, 1.0)).reshape(N_pad, 1)
    basis, wi = spline_basis_deg1(edge_attr.astype(jnp.float32), kernel_size)
    B = jnp.zeros((E, k_total), jnp.float32).at[
        jnp.arange(E)[:, None], wi].add(basis)
    B = jnp.pad(B, ((0, pad_e), (0, 0)))

    feats = [x_pad]
    h = x_pad
    for li, conv_prep in enumerate(prep["convs"]):
        if li % 2 == 0:
            h = _spline_conv_layer(h, src_col, dst_row, B, inv_deg, conv_prep,
                                   k_total, tile_e, relu=True)
        else:
            h = _gin_conv_layer(h, src_col, dst_row, conv_prep, tile_e,
                                relu=True)
        feats.append(h)

    # jumping-knowledge concat (padded channel blocks), dropout(p=0) = identity.
    x_cat = jnp.concatenate(feats, axis=-1)
    out = pallas_matmul(x_cat, prep["final_w"], bias=prep["final_b"],
                        relu=False)
    return out[:N, :out_channels]


# ----------------------------------------------------------------------------
# Deterministic parameter initialization
# ----------------------------------------------------------------------------
def init_params(key, in_channels, out_channels, dim, num_layers,
                kernel_size=5, mlp_layers=4):
    params = {"convs": []}
    c_in = in_channels
    k_total = kernel_size ** dim
    for i in range(num_layers):
        key, k1, k2, k3 = jax.random.split(key, 4)
        if i % 2 == 0:  # SplineConv
            conv = {
                "weight": 0.1 * jax.random.normal(
                    k1, (k_total, c_in, out_channels), jnp.float32),
                "root": 0.1 * jax.random.normal(
                    k2, (c_in, out_channels), jnp.float32),
                "bias": 0.01 * jax.random.normal(
                    k3, (out_channels,), jnp.float32),
            }
        else:           # GINConv with 4-layer MLP (out -> out)
            ws, bs = [], []
            for _ in range(mlp_layers):
                key, kw, kb = jax.random.split(key, 3)
                ws.append(0.1 * jax.random.normal(
                    kw, (out_channels, out_channels), jnp.float32))
                bs.append(0.01 * jax.random.normal(
                    kb, (out_channels,), jnp.float32))
            conv = {"mlp_w": ws, "mlp_b": bs}
        params["convs"].append(conv)
        c_in = out_channels
    cat_channels = in_channels + num_layers * out_channels      # cat=True
    key, kf, kfb = jax.random.split(key, 3)
    params["final_w"] = 0.1 * jax.random.normal(
        kf, (cat_channels, out_channels), jnp.float32)
    params["final_b"] = 0.01 * jax.random.normal(
        kfb, (out_channels,), jnp.float32)
    return params


# ----------------------------------------------------------------------------
if __name__ == "__main__":
    N_NODES = 32
    N_EDGES = 64
    IN_CHANNELS = 16
    OUT_CHANNELS = 32
    DIM = 2
    NUM_LAYERS = 3          # SplineConv, GINConv, SplineConv
    KERNEL_SIZE = 5

    key = jax.random.PRNGKey(0)
    k_x, k_ei, k_ea, k_p = jax.random.split(key, 4)

    x = jax.random.normal(k_x, (N_NODES, IN_CHANNELS), jnp.float32)
    edge_index = jax.random.randint(k_ei, (2, N_EDGES), 0, N_NODES, jnp.int32)
    edge_attr = jax.random.uniform(k_ea, (N_EDGES, DIM), jnp.float32,
                                   minval=0.0, maxval=0.999)

    params = init_params(k_p, IN_CHANNELS, OUT_CHANNELS, DIM, NUM_LAYERS,
                         kernel_size=KERNEL_SIZE)
    # One-time weight prep (padding / stacking / bf16 casts hoisted out of fwd).
    prep = prepare_params(params, IN_CHANNELS, OUT_CHANNELS, DIM, KERNEL_SIZE)

    fwd = jax.jit(functools.partial(hybrid_gnn_forward,
                                    out_channels=OUT_CHANNELS,
                                    kernel_size=KERNEL_SIZE))
    out = fwd(prep, x, edge_index, edge_attr)
    out = jax.block_until_ready(out)

    expected_shape = (N_NODES, OUT_CHANNELS)
    assert out.shape == expected_shape, (out.shape, expected_shape)
    assert jnp.all(jnp.isfinite(out))
    print("KERNEL_OK")
</pallas_src>

<mosaic_0001>
module attributes {stable_mosaic.version = 11 : i64} {
  func.func private @main(%arg0: i32) attributes {dimension_semantics = [#tpu.dimension_semantics<core_parallel>], iteration_bounds = array<i64: 2>, tpu.core_type = #tpu.core_type<sc_scalar_subcore>, window_params = []} {
    return
  }
}

module attributes {stable_mosaic.version = 11 : i64} {
  func.func private @main(%arg0: i32) attributes {dimension_semantics = [#tpu.dimension_semantics<core_parallel>], iteration_bounds = array<i64: 2>, tpu.core_type = #tpu.core_type<sc_scalar_subcore>, window_params = []} {
    return
  }
}

module attributes {stable_mosaic.version = 11 : i64} {
  func.func @_matmul_kernel_direct(%arg0: i32, %arg1: i32, %arg2: memref<48x128xbf16, #tpu.memory_space<vmem>>, %arg3: memref<128x512xbf16, #tpu.memory_space<vmem>>, %arg4: memref<48x512xf32, #tpu.memory_space<vmem>>) attributes {dimension_semantics = [#tpu.dimension_semantics<parallel>, #tpu.dimension_semantics<parallel>], iteration_bounds = array<i64: 1, 7>, scalar_prefetch = 0 : i64, scratch_operands = 0 : i64, tpu.core_type = #tpu.core_type<tc>, window_params = [{transform_indices = @transform_0, window_bounds = array<i64: 48, 128>}, {transform_indices = @transform_1, window_bounds = array<i64: 128, 512>}, {transform_indices = @transform_2, window_bounds = array<i64: 48, 512>}]} {
    %c0 = arith.constant 0 : index
    %c0_0 = arith.constant 0 : index
    %0 = vector.load %arg2[%c0, %c0_0] : memref<48x128xbf16, #tpu.memory_space<vmem>>, vector<48x128xbf16>
    %c0_1 = arith.constant 0 : index
    %c0_2 = arith.constant 0 : index
    %1 = vector.load %arg3[%c0_1, %c0_2] : memref<128x512xbf16, #tpu.memory_space<vmem>>, vector<128x512xbf16>
    %cst = arith.constant dense<0.000000e+00> : vector<48x512xf32>
    %2 = tpu.matmul %0, %1, %cst {dimension_numbers = #tpu.dot_dimension_numbers<[1], [0], [0], [1], [0, 0, 1, 1], [], []>} : vector<48x128xbf16>, vector<128x512xbf16>, vector<48x512xf32> -> vector<48x512xf32>
    %c0_3 = arith.constant 0 : index
    %c0_4 = arith.constant 0 : index
    %3 = vector.load %arg4[%c0_3, %c0_4] : memref<48x512xf32, #tpu.memory_space<vmem>>, vector<48x512xf32>
    tpu.vector_store %arg4[%c0_3, %c0_4], %2 {strides = array<i32>} : memref<48x512xf32, #tpu.memory_space<vmem>>, vector<48x512xf32>,
    return
  }
  func.func @transform_0(%arg0: i32, %arg1: i32) -> (i32, i32) {
    %c0_i32 = arith.constant 0 : i32
    %c0_i32_0 = arith.constant 0 : i32
    return %arg0, %c0_i32 : i32, i32
  }
  func.func @transform_1(%arg0: i32, %arg1: i32) -> (i32, i32) {
    %c0_i32 = arith.constant 0 : i32
    %c0_i32_0 = arith.constant 0 : i32
    return %c0_i32, %arg1 : i32, i32
  }
  func.func @transform_2(%arg0: i32, %arg1: i32) -> (i32, i32) {
    %c0_i32 = arith.constant 0 : i32
    return %arg0, %arg1 : i32, i32
  }
}

module attributes {stable_mosaic.version = 11 : i64} {
  func.func @_gin_conv_kernel(%arg0: i32, %arg1: memref<64x1xi32, #tpu.memory_space<vmem>>, %arg2: memref<1x64xi32, #tpu.memory_space<vmem>>, %arg3: memref<48x128xf32, #tpu.memory_space<vmem>>, %arg4: memref<4x128x128xbf16, #tpu.memory_space<vmem>>, %arg5: memref<4x1x128xf32, #tpu.memory_space<vmem>>, %arg6: memref<48x128xf32, #tpu.memory_space<vmem>>) attributes {dimension_semantics = [#tpu.dimension_semantics<arbitrary>], iteration_bounds = array<i64: 1>, scalar_prefetch = 0 : i64, scratch_operands = 0 : i64, tpu.core_type = #tpu.core_type<tc>, window_params = [{transform_indices = @transform_0, window_bounds = array<i64: 64, 1>}, {transform_indices = @transform_1, window_bounds = array<i64: 1, 64>}, {pipeline_mode = #tpu.pipeline_mode<synchronous>, transform_indices = @transform_2, window_bounds = array<i64: 48, 128>}, {pipeline_mode = #tpu.pipeline_mode<synchronous>, transform_indices = @transform_3, window_bounds = array<i64: 4, 128, 128>}, {pipeline_mode = #tpu.pipeline_mode<synchronous>, transform_indices = @transform_4, window_bounds = array<i64: 4, 1, 128>}, {pipeline_mode = #tpu.pipeline_mode<synchronous>, transform_indices = @transform_5, window_bounds = array<i64: 48, 128>}]} {
    %c0_i32 = arith.constant 0 : i32
    %0 = arith.cmpi eq, %arg0, %c0_i32 : i32
    %1 = arith.extui %0 : i1 to i32
    %c0_i32_0 = arith.constant 0 : i32
    %2 = arith.cmpi ne, %1, %c0_i32_0 : i32
    scf.if %2 {
      %c0_13 = arith.constant 0 : index
      %c0_14 = arith.constant 0 : index
      %24 = vector.load %arg3[%c0_13, %c0_14] : memref<48x128xf32, #tpu.memory_space<vmem>>, vector<48x128xf32>
      %cst_15 = arith.constant 1.000000e+00 : f32
      %25 = vector.broadcast %cst_15 : f32 to vector<48x128xf32>
      %26 = arith.mulf %25, %24 : vector<48x128xf32>
      %c0_16 = arith.constant 0 : index
      %c0_17 = arith.constant 0 : index
      %27 = vector.load %arg6[%c0_16, %c0_17] : memref<48x128xf32, #tpu.memory_space<vmem>>, vector<48x128xf32>
      tpu.vector_store %arg6[%c0_16, %c0_17], %26 {strides = array<i32>} : memref<48x128xf32, #tpu.memory_space<vmem>>, vector<48x128xf32>,
    } else {
    }
    %3 = tpu.iota {dimensions = array<i32: 1>} : vector<64x48xi32>
    %c0 = arith.constant 0 : index
    %c0_1 = arith.constant 0 : index
    %4 = vector.load %arg1[%c0, %c0_1] : memref<64x1xi32, #tpu.memory_space<vmem>>, vector<64x1xi32>
    %5 = vector.broadcast %4 : vector<64x1xi32> to vector<64x48xi32>
    %6 = arith.cmpi eq, %3, %5 : vector<64x48xi32>
    %7 = arith.extui %6 : vector<64x48xi1> to vector<64x48xi32>
    %8 = arith.sitofp %7 : vector<64x48xi32> to vector<64x48xf32>
    %9 = tpu.iota {dimensions = array<i32: 0>} : vector<48x64xi32>
    %c0_2 = arith.constant 0 : index
    %c0_3 = arith.constant 0 : index
    %10 = vector.load %arg2[%c0_2, %c0_3] : memref<1x64xi32, #tpu.memory_space<vmem>>, vector<1x64xi32>
    %11 = vector.broadcast %10 : vector<1x64xi32> to vector<48x64xi32>
    %12 = arith.cmpi eq, %9, %11 : vector<48x64xi32>
    %13 = arith.extui %12 : vector<48x64xi1> to vector<48x64xi32>
    %14 = arith.sitofp %13 : vector<48x64xi32> to vector<48x64xf32>
    %c0_4 = arith.constant 0 : index
    %c0_5 = arith.constant 0 : index
    %15 = vector.load %arg3[%c0_4, %c0_5] : memref<48x128xf32, #tpu.memory_space<vmem>>, vector<48x128xf32>
    %cst = arith.constant dense<0.000000e+00> : vector<64x128xf32>
    %16 = tpu.matmul %8, %15, %cst {dimension_numbers = #tpu.dot_dimension_numbers<[1], [0], [0], [1], [0, 0, 1, 1], [], []>} : vector<64x48xf32>, vector<48x128xf32>, vector<64x128xf32> -> vector<64x128xf32>
    %c0_6 = arith.constant 0 : index
    %c0_7 = arith.constant 0 : index
    %17 = vector.load %arg6[%c0_6, %c0_7] : memref<48x128xf32, #tpu.memory_space<vmem>>, vector<48x128xf32>
    %cst_8 = arith.constant dense<0.000000e+00> : vector<48x128xf32>
    %18 = tpu.matmul %14, %16, %cst_8 {dimension_numbers = #tpu.dot_dimension_numbers<[1], [0], [0], [1], [0, 0, 1, 1], [], []>} : vector<48x64xf32>, vector<64x128xf32>, vector<48x128xf32> -> vector<48x128xf32>
    %19 = arith.addf %17, %18 : vector<48x128xf32>
    %c0_9 = arith.constant 0 : index
    %c0_10 = arith.constant 0 : index
    %20 = vector.load %arg6[%c0_9, %c0_10] : memref<48x128xf32, #tpu.memory_space<vmem>>, vector<48x128xf32>
    tpu.vector_store %arg6[%c0_9, %c0_10], %19 {strides = array<i32>} : memref<48x128xf32, #tpu.memory_space<vmem>>, vector<48x128xf32>,
    %c0_i32_11 = arith.constant 0 : i32
    %21 = arith.cmpi eq, %arg0, %c0_i32_11 : i32
    %22 = arith.extui %21 : i1 to i32
    %c0_i32_12 = arith.constant 0 : i32
    %23 = arith.cmpi ne, %22, %c0_i32_12 : i32
    scf.if %23 {
      %c0_13 = arith.constant 0 : index
      %c0_14 = arith.constant 0 : index
      %24 = vector.load %arg6[%c0_13, %c0_14] : memref<48x128xf32, #tpu.memory_space<vmem>>, vector<48x128xf32>
      %25 = arith.truncf %24 : vector<48x128xf32> to vector<48x128xbf16>
      %c0_15 = arith.constant 0 : index
      %c0_16 = arith.constant 0 : index
      %c0_17 = arith.constant 0 : index
      %26 = vector.load %arg4[%c0_15, %c0_16, %c0_17] : memref<4x128x128xbf16, #tpu.memory_space<vmem>>, vector<1x128x128xbf16>
      %27 = vector.shape_cast %26 : vector<1x128x128xbf16> to vector<128x128xbf16>
      %cst_18 = arith.constant dense<0.000000e+00> : vector<48x128xf32>
      %28 = tpu.matmul %25, %27, %cst_18 {dimension_numbers = #tpu.dot_dimension_numbers<[1], [0], [0], [1], [0, 0, 1, 1], [], []>} : vector<48x128xbf16>, vector<128x128xbf16>, vector<48x128xf32> -> vector<48x128xf32>
      %c0_19 = arith.constant 0 : index
      %c0_20 = arith.constant 0 : index
      %c0_21 = arith.constant 0 : index
      %29 = vector.load %arg5[%c0_19, %c0_20, %c0_21] : memref<4x1x128xf32, #tpu.memory_space<vmem>>, vector<1x1x128xf32>
      %30 = vector.shape_cast %29 : vector<1x1x128xf32> to vector<1x128xf32>
      %31 = vector.broadcast %30 : vector<1x128xf32> to vector<48x128xf32>
      %32 = arith.addf %28, %31 : vector<48x128xf32>
      %cst_22 = arith.constant 0.000000e+00 : f32
      %33 = vector.broadcast %cst_22 : f32 to vector<48x128xf32>
      %34 = arith.maximumf %32, %33 : vector<48x128xf32>
      %35 = arith.truncf %34 : vector<48x128xf32> to vector<48x128xbf16>
      %c1 = arith.constant 1 : index
      %c0_23 = arith.constant 0 : index
      %c0_24 = arith.constant 0 : index
      %36 = vector.load %arg4[%c1, %c0_23, %c0_24] : memref<4x128x128xbf16, #tpu.memory_space<vmem>>, vector<1x128x128xbf16>
      %37 = vector.shape_cast %36 : vector<1x128x128xbf16> to vector<128x128xbf16>
      %cst_25 = arith.constant dense<0.000000e+00> : vector<48x128xf32>
      %38 = tpu.matmul %35, %37, %cst_25 {dimension_numbers = #tpu.dot_dimension_numbers<[1], [0], [0], [1], [0, 0, 1, 1], [], []>} : vector<48x128xbf16>, vector<128x128xbf16>, vector<48x128xf32> -> vector<48x128xf32>
      %c1_26 = arith.constant 1 : index
      %c0_27 = arith.constant 0 : index
      %c0_28 = arith.constant 0 : index
      %39 = vector.load %arg5[%c1_26, %c0_27, %c0_28] : memref<4x1x128xf32, #tpu.memory_space<vmem>>, vector<1x1x128xf32>
      %40 = vector.shape_cast %39 : vector<1x1x128xf32> to vector<1x128xf32>
      %41 = vector.broadcast %40 : vector<1x128xf32> to vector<48x128xf32>
      %42 = arith.addf %38, %41 : vector<48x128xf32>
      %cst_29 = arith.constant 0.000000e+00 : f32
      %43 = vector.broadcast %cst_29 : f32 to vector<48x128xf32>
      %44 = arith.maximumf %42, %43 : vector<48x128xf32>
      %45 = arith.truncf %44 : vector<48x128xf32> to vector<48x128xbf16>
      %c2 = arith.constant 2 : index
      %c0_30 = arith.constant 0 : index
      %c0_31 = arith.constant 0 : index
      %46 = vector.load %arg4[%c2, %c0_30, %c0_31] : memref<4x128x128xbf16, #tpu.memory_space<vmem>>, vector<1x128x128xbf16>
      %47 = vector.shape_cast %46 : vector<1x128x128xbf16> to vector<128x128xbf16>
      %cst_32 = arith.constant dense<0.000000e+00> : vector<48x128xf32>
      %48 = tpu.matmul %45, %47, %cst_32 {dimension_numbers = #tpu.dot_dimension_numbers<[1], [0], [0], [1], [0, 0, 1, 1], [], []>} : vector<48x128xbf16>, vector<128x128xbf16>, vector<48x128xf32> -> vector<48x128xf32>
      %c2_33 = arith.constant 2 : index
      %c0_34 = arith.constant 0 : index
      %c0_35 = arith.constant 0 : index
      %49 = vector.load %arg5[%c2_33, %c0_34, %c0_35] : memref<4x1x128xf32, #tpu.memory_space<vmem>>, vector<1x1x128xf32>
      %50 = vector.shape_cast %49 : vector<1x1x128xf32> to vector<1x128xf32>
      %51 = vector.broadcast %50 : vector<1x128xf32> to vector<48x128xf32>
      %52 = arith.addf %48, %51 : vector<48x128xf32>
      %cst_36 = arith.constant 0.000000e+00 : f32
      %53 = vector.broadcast %cst_36 : f32 to vector<48x128xf32>
      %54 = arith.maximumf %52, %53 : vector<48x128xf32>
      %55 = arith.truncf %54 : vector<48x128xf32> to vector<48x128xbf16>
      %c3 = arith.constant 3 : index
      %c0_37 = arith.constant 0 : index
      %c0_38 = arith.constant 0 : index
      %56 = vector.load %arg4[%c3, %c0_37, %c0_38] : memref<4x128x128xbf16, #tpu.memory_space<vmem>>, vector<1x128x128xbf16>
      %57 = vector.shape_cast %56 : vector<1x128x128xbf16> to vector<128x128xbf16>
      %cst_39 = arith.constant dense<0.000000e+00> : vector<48x128xf32>
      %58 = tpu.matmul %55, %57, %cst_39 {dimension_numbers = #tpu.dot_dimension_numbers<[1], [0], [0], [1], [0, 0, 1, 1], [], []>} : vector<48x128xbf16>, vector<128x128xbf16>, vector<48x128xf32> -> vector<48x128xf32>
      %c3_40 = arith.constant 3 : index
      %c0_41 = arith.constant 0 : index
      %c0_42 = arith.constant 0 : index
      %59 = vector.load %arg5[%c3_40, %c0_41, %c0_42] : memref<4x1x128xf32, #tpu.memory_space<vmem>>, vector<1x1x128xf32>
      %60 = vector.shape_cast %59 : vector<1x1x128xf32> to vector<1x128xf32>
      %61 = vector.broadcast %60 : vector<1x128xf32> to vector<48x128xf32>
      %62 = arith.addf %58, %61 : vector<48x128xf32>
      %cst_43 = arith.constant 0.000000e+00 : f32
      %63 = vector.broadcast %cst_43 : f32 to vector<48x128xf32>
      %64 = arith.maximumf %62, %63 : vector<48x128xf32>
      %c0_44 = arith.constant 0 : index
      %c0_45 = arith.constant 0 : index
      %65 = vector.load %arg6[%c0_44, %c0_45] : memref<48x128xf32, #tpu.memory_space<vmem>>, vector<48x128xf32>
      tpu.vector_store %arg6[%c0_44, %c0_45], %64 {strides = array<i32>} : memref<48x128xf32, #tpu.memory_space<vmem>>, vector<48x128xf32>,
    } else {
    }
    return
  }
  func.func @transform_0(%arg0: i32) -> (i32, i32) {
    %c0_i32 = arith.constant 0 : i32
    %c0_i32_0 = arith.constant 0 : i32
    return %arg0, %c0_i32 : i32, i32
  }
  func.func @transform_1(%arg0: i32) -> (i32, i32) {
    %c0_i32 = arith.constant 0 : i32
    %c0_i32_0 = arith.constant 0 : i32
    return %c0_i32, %arg0 : i32, i32
  }
  func.func @transform_2(%arg0: i32) -> (i32, i32) {
    %c0_i32 = arith.constant 0 : i32
    %c0_i32_0 = arith.constant 0 : i32
    %c0_i32_1 = arith.constant 0 : i32
    return %c0_i32, %c0_i32_0 : i32, i32
  }
  func.func @transform_3(%arg0: i32) -> (i32, i32, i32) {
    %c0_i32 = arith.constant 0 : i32
    %c0_i32_0 = arith.constant 0 : i32
    %c0_i32_1 = arith.constant 0 : i32
    %c0_i32_2 = arith.constant 0 : i32
    return %c0_i32, %c0_i32_0, %c0_i32_1 : i32, i32, i32
  }
  func.func @transform_4(%arg0: i32) -> (i32, i32, i32) {
    %c0_i32 = arith.constant 0 : i32
    %c0_i32_0 = arith.constant 0 : i32
    %c0_i32_1 = arith.constant 0 : i32
    %c0_i32_2 = arith.constant 0 : i32
    return %c0_i32, %c0_i32_0, %c0_i32_1 : i32, i32, i32
  }
  func.func @transform_5(%arg0: i32) -> (i32, i32) {
    %c0_i32 = arith.constant 0 : i32
    %c0_i32_0 = arith.constant 0 : i32
    %c0_i32_1 = arith.constant 0 : i32
    return %c0_i32, %c0_i32_0 : i32, i32
  }
}

module attributes {stable_mosaic.version = 11 : i64} {
  func.func @_spline_agg_kernel(%arg0: i32, %arg1: memref<64x1xi32, #tpu.memory_space<vmem>>, %arg2: memref<1x64xi32, #tpu.memory_space<vmem>>, %arg3: memref<64x25xf32, #tpu.memory_space<vmem>>, %arg4: memref<48x3200xf32, #tpu.memory_space<vmem>>, %arg5: memref<48x128xbf16, #tpu.memory_space<vmem>>, %arg6: memref<128x128xbf16, #tpu.memory_space<vmem>>, %arg7: memref<1x128xf32, #tpu.memory_space<vmem>>, %arg8: memref<48x1xf32, #tpu.memory_space<vmem>>, %arg9: memref<48x128xf32, #tpu.memory_space<vmem>>) attributes {dimension_semantics = [#tpu.dimension_semantics<arbitrary>], iteration_bounds = array<i64: 1>, scalar_prefetch = 0 : i64, scratch_operands = 0 : i64, tpu.core_type = #tpu.core_type<tc>, window_params = [{transform_indices = @transform_0, window_bounds = array<i64: 64, 1>}, {transform_indices = @transform_1, window_bounds = array<i64: 1, 64>}, {transform_indices = @transform_2, window_bounds = array<i64: 64, 25>}, {pipeline_mode = #tpu.pipeline_mode<synchronous>, transform_indices = @transform_3, window_bounds = array<i64: 48, 3200>}, {pipeline_mode = #tpu.pipeline_mode<synchronous>, transform_indices = @transform_4, window_bounds = array<i64: 48, 128>}, {pipeline_mode = #tpu.pipeline_mode<synchronous>, transform_indices = @transform_5, window_bounds = array<i64: 128, 128>}, {pipeline_mode = #tpu.pipeline_mode<synchronous>, transform_indices = @transform_6, window_bounds = array<i64: 1, 128>}, {pipeline_mode = #tpu.pipeline_mode<synchronous>, transform_indices = @transform_7, window_bounds = array<i64: 48, 1>}, {pipeline_mode = #tpu.pipeline_mode<synchronous>, transform_indices = @transform_8, window_bounds = array<i64: 48, 128>}]} {
    %c0_i32 = arith.constant 0 : i32
    %0 = arith.cmpi eq, %arg0, %c0_i32 : i32
    %1 = arith.extui %0 : i1 to i32
    %c0_i32_0 = arith.constant 0 : i32
    %2 = arith.cmpi ne, %1, %c0_i32_0 : i32
    scf.if %2 {
      %cst_64 = arith.constant 0.000000e+00 : f32
      %174 = vector.broadcast %cst_64 : f32 to vector<48x128xf32>
      %c0_65 = arith.constant 0 : index
      %c0_66 = arith.constant 0 : index
      %175 = vector.load %arg9[%c0_65, %c0_66] : memref<48x128xf32, #tpu.memory_space<vmem>>, vector<48x128xf32>
      tpu.vector_store %arg9[%c0_65, %c0_66], %174 {strides = array<i32>} : memref<48x128xf32, #tpu.memory_space<vmem>>, vector<48x128xf32>,
    } else {
    }
    %3 = tpu.iota {dimensions = array<i32: 1>} : vector<64x48xi32>
    %c0 = arith.constant 0 : index
    %c0_1 = arith.constant 0 : index
    %4 = vector.load %arg1[%c0, %c0_1] : memref<64x1xi32, #tpu.memory_space<vmem>>, vector<64x1xi32>
    %5 = vector.broadcast %4 : vector<64x1xi32> to vector<64x48xi32>
    %6 = arith.cmpi eq, %3, %5 : vector<64x48xi32>
    %7 = arith.extui %6 : vector<64x48xi1> to vector<64x48xi32>
    %8 = arith.sitofp %7 : vector<64x48xi32> to vector<64x48xf32>
    %9 = tpu.iota {dimensions = array<i32: 0>} : vector<48x64xi32>
    %c0_2 = arith.constant 0 : index
    %c0_3 = arith.constant 0 : index
    %10 = vector.load %arg2[%c0_2, %c0_3] : memref<1x64xi32, #tpu.memory_space<vmem>>, vector<1x64xi32>
    %11 = vector.broadcast %10 : vector<1x64xi32> to vector<48x64xi32>
    %12 = arith.cmpi eq, %9, %11 : vector<48x64xi32>
    %13 = arith.extui %12 : vector<48x64xi1> to vector<48x64xi32>
    %14 = arith.sitofp %13 : vector<48x64xi32> to vector<48x64xf32>
    %c0_4 = arith.constant 0 : index
    %c0_5 = arith.constant 0 : index
    %15 = vector.load %arg3[%c0_4, %c0_5] : memref<64x25xf32, #tpu.memory_space<vmem>>, vector<64x25xf32>
    %cst = arith.constant 0.000000e+00 : f32
    %16 = vector.broadcast %cst : f32 to vector<64x128xf32>
    %c0_6 = arith.constant 0 : index
    %c0_7 = arith.constant 0 : index
    %17 = vector.load %arg4[%c0_6, %c0_7] : memref<48x3200xf32, #tpu.memory_space<vmem>>, vector<48x128xf32>
    %cst_8 = arith.constant dense<0.000000e+00> : vector<64x128xf32>
    %18 = tpu.matmul %8, %17, %cst_8 {dimension_numbers = #tpu.dot_dimension_numbers<[1], [0], [0], [1], [0, 0, 1, 1], [], []>} : vector<64x48xf32>, vector<48x128xf32>, vector<64x128xf32> -> vector<64x128xf32>
    %19 = vector.extract_strided_slice %15 {offsets = [0, 0], sizes = [64, 1], strides = [1, 1]} : vector<64x25xf32> to vector<64x1xf32>
    %20 = vector.broadcast %19 : vector<64x1xf32> to vector<64x128xf32>
    %21 = arith.mulf %18, %20 : vector<64x128xf32>
    %22 = arith.addf %16, %21 : vector<64x128xf32>
    %c0_9 = arith.constant 0 : index
    %c128 = arith.constant 128 : index
    %23 = vector.load %arg4[%c0_9, %c128] : memref<48x3200xf32, #tpu.memory_space<vmem>>, vector<48x128xf32>
    %cst_10 = arith.constant dense<0.000000e+00> : vector<64x128xf32>
    %24 = tpu.matmul %8, %23, %cst_10 {dimension_numbers = #tpu.dot_dimension_numbers<[1], [0], [0], [1], [0, 0, 1, 1], [], []>} : vector<64x48xf32>, vector<48x128xf32>, vector<64x128xf32> -> vector<64x128xf32>
    %25 = vector.extract_strided_slice %15 {offsets = [0, 1], sizes = [64, 1], strides = [1, 1]} : vector<64x25xf32> to vector<64x1xf32>
    %26 = vector.broadcast %25 : vector<64x1xf32> to vector<64x128xf32>
    %27 = arith.mulf %24, %26 : vector<64x128xf32>
    %28 = arith.addf %22, %27 : vector<64x128xf32>
    %c0_11 = arith.constant 0 : index
    %c256 = arith.constant 256 : index
    %29 = vector.load %arg4[%c0_11, %c256] : memref<48x3200xf32, #tpu.memory_space<vmem>>, vector<48x128xf32>
    %cst_12 = arith.constant dense<0.000000e+00> : vector<64x128xf32>
    %30 = tpu.matmul %8, %29, %cst_12 {dimension_numbers = #tpu.dot_dimension_numbers<[1], [0], [0], [1], [0, 0, 1, 1], [], []>} : vector<64x48xf32>, vector<48x128xf32>, vector<64x128xf32> -> vector<64x128xf32>
    %31 = vector.extract_strided_slice %15 {offsets = [0, 2], sizes = [64, 1], strides = [1, 1]} : vector<64x25xf32> to vector<64x1xf32>
    %32 = vector.broadcast %31 : vector<64x1xf32> to vector<64x128xf32>
    %33 = arith.mulf %30, %32 : vector<64x128xf32>
    %34 = arith.addf %28, %33 : vector<64x128xf32>
    %c0_13 = arith.constant 0 : index
    %c384 = arith.constant 384 : index
    %35 = vector.load %arg4[%c0_13, %c384] : memref<48x3200xf32, #tpu.memory_space<vmem>>, vector<48x128xf32>
    %cst_14 = arith.constant dense<0.000000e+00> : vector<64x128xf32>
    %36 = tpu.matmul %8, %35, %cst_14 {dimension_numbers = #tpu.dot_dimension_numbers<[1], [0], [0], [1], [0, 0, 1, 1], [], []>} : vector<64x48xf32>, vector<48x128xf32>, vector<64x128xf32> -> vector<64x128xf32>
    %37 = vector.extract_strided_slice %15 {offsets = [0, 3], sizes = [64, 1], strides = [1, 1]} : vector<64x25xf32> to vector<64x1xf32>
    %38 = vector.broadcast %37 : vector<64x1xf32> to vector<64x128xf32>
    %39 = arith.mulf %36, %38 : vector<64x128xf32>
    %40 = arith.addf %34, %39 : vector<64x128xf32>
    %c0_15 = arith.constant 0 : index
    %c512 = arith.constant 512 : index
    %41 = vector.load %arg4[%c0_15, %c512] : memref<48x3200xf32, #tpu.memory_space<vmem>>, vector<48x128xf32>
    %cst_16 = arith.constant dense<0.000000e+00> : vector<64x128xf32>
    %42 = tpu.matmul %8, %41, %cst_16 {dimension_numbers = #tpu.dot_dimension_numbers<[1], [0], [0], [1], [0, 0, 1, 1], [], []>} : vector<64x48xf32>, vector<48x128xf32>, vector<64x128xf32> -> vector<64x128xf32>
    %43 = vector.extract_strided_slice %15 {offsets = [0, 4], sizes = [64, 1], strides = [1, 1]} : vector<64x25xf32> to vector<64x1xf32>
    %44 = vector.broadcast %43 : vector<64x1xf32> to vector<64x128xf32>
    %45 = arith.mulf %42, %44 : vector<64x128xf32>
    %46 = arith.addf %40, %45 : vector<64x128xf32>
    %c0_17 = arith.constant 0 : index
    %c640 = arith.constant 640 : index
    %47 = vector.load %arg4[%c0_17, %c640] : memref<48x3200xf32, #tpu.memory_space<vmem>>, vector<48x128xf32>
    %cst_18 = arith.constant dense<0.000000e+00> : vector<64x128xf32>
    %48 = tpu.matmul %8, %47, %cst_18 {dimension_numbers = #tpu.dot_dimension_numbers<[1], [0], [0], [1], [0, 0, 1, 1], [], []>} : vector<64x48xf32>, vector<48x128xf32>, vector<64x128xf32> -> vector<64x128xf32>
    %49 = vector.extract_strided_slice %15 {offsets = [0, 5], sizes = [64, 1], strides = [1, 1]} : vector<64x25xf32> to vector<64x1xf32>
    %50 = vector.broadcast %49 : vector<64x1xf32> to vector<64x128xf32>
    %51 = arith.mulf %48, %50 : vector<64x128xf32>
    %52 = arith.addf %46, %51 : vector<64x128xf32>
    %c0_19 = arith.constant 0 : index
    %c768 = arith.constant 768 : index
    %53 = vector.load %arg4[%c0_19, %c768] : memref<48x3200xf32, #tpu.memory_space<vmem>>, vector<48x128xf32>
    %cst_20 = arith.constant dense<0.000000e+00> : vector<64x128xf32>
    %54 = tpu.matmul %8, %53, %cst_20 {dimension_numbers = #tpu.dot_dimension_numbers<[1], [0], [0], [1], [0, 0, 1, 1], [], []>} : vector<64x48xf32>, vector<48x128xf32>, vector<64x128xf32> -> vector<64x128xf32>
    %55 = vector.extract_strided_slice %15 {offsets = [0, 6], sizes = [64, 1], strides = [1, 1]} : vector<64x25xf32> to vector<64x1xf32>
    %56 = vector.broadcast %55 : vector<64x1xf32> to vector<64x128xf32>
    %57 = arith.mulf %54, %56 : vector<64x128xf32>
    %58 = arith.addf %52, %57 : vector<64x128xf32>
    %c0_21 = arith.constant 0 : index
    %c896 = arith.constant 896 : index
    %59 = vector.load %arg4[%c0_21, %c896] : memref<48x3200xf32, #tpu.memory_space<vmem>>, vector<48x128xf32>
    %cst_22 = arith.constant dense<0.000000e+00> : vector<64x128xf32>
    %60 = tpu.matmul %8, %59, %cst_22 {dimension_numbers = #tpu.dot_dimension_numbers<[1], [0], [0], [1], [0, 0, 1, 1], [], []>} : vector<64x48xf32>, vector<48x128xf32>, vector<64x128xf32> -> vector<64x128xf32>
    %61 = vector.extract_strided_slice %15 {offsets = [0, 7], sizes = [64, 1], strides = [1, 1]} : vector<64x25xf32> to vector<64x1xf32>
    %62 = vector.broadcast %61 : vector<64x1xf32> to vector<64x128xf32>
    %63 = arith.mulf %60, %62 : vector<64x128xf32>
    %64 = arith.addf %58, %63 : vector<64x128xf32>
    %c0_23 = arith.constant 0 : index
    %c1024 = arith.constant 1024 : index
    %65 = vector.load %arg4[%c0_23, %c1024] : memref<48x3200xf32, #tpu.memory_space<vmem>>, vector<48x128xf32>
    %cst_24 = arith.constant dense<0.000000e+00> : vector<64x128xf32>
    %66 = tpu.matmul %8, %65, %cst_24 {dimension_numbers = #tpu.dot_dimension_numbers<[1], [0], [0], [1], [0, 0, 1, 1], [], []>} : vector<64x48xf32>, vector<48x128xf32>, vector<64x128xf32> -> vector<64x128xf32>
    %67 = vector.extract_strided_slice %15 {offsets = [0, 8], sizes = [64, 1], strides = [1, 1]} : vector<64x25xf32> to vector<64x1xf32>
    %68 = vector.broadcast %67 : vector<64x1xf32> to vector<64x128xf32>
    %69 = arith.mulf %66, %68 : vector<64x128xf32>
    %70 = arith.addf %64, %69 : vector<64x128xf32>
    %c0_25 = arith.constant 0 : index
    %c1152 = arith.constant 1152 : index
    %71 = vector.load %arg4[%c0_25, %c1152] : memref<48x3200xf32, #tpu.memory_space<vmem>>, vector<48x128xf32>
    %cst_26 = arith.constant dense<0.000000e+00> : vector<64x128xf32>
    %72 = tpu.matmul %8, %71, %cst_26 {dimension_numbers = #tpu.dot_dimension_numbers<[1], [0], [0], [1], [0, 0, 1, 1], [], []>} : vector<64x48xf32>, vector<48x128xf32>, vector<64x128xf32> -> vector<64x128xf32>
    %73 = vector.extract_strided_slice %15 {offsets = [0, 9], sizes = [64, 1], strides = [1, 1]} : vector<64x25xf32> to vector<64x1xf32>
    %74 = vector.broadcast %73 : vector<64x1xf32> to vector<64x128xf32>
    %75 = arith.mulf %72, %74 : vector<64x128xf32>
    %76 = arith.addf %70, %75 : vector<64x128xf32>
    %c0_27 = arith.constant 0 : index
    %c1280 = arith.constant 1280 : index
    %77 = vector.load %arg4[%c0_27, %c1280] : memref<48x3200xf32, #tpu.memory_space<vmem>>, vector<48x128xf32>
    %cst_28 = arith.constant dense<0.000000e+00> : vector<64x128xf32>
    %78 = tpu.matmul %8, %77, %cst_28 {dimension_numbers = #tpu.dot_dimension_numbers<[1], [0], [0], [1], [0, 0, 1, 1], [], []>} : vector<64x48xf32>, vector<48x128xf32>, vector<64x128xf32> -> vector<64x128xf32>
    %79 = vector.extract_strided_slice %15 {offsets = [0, 10], sizes = [64, 1], strides = [1, 1]} : vector<64x25xf32> to vector<64x1xf32>
    %80 = vector.broadcast %79 : vector<64x1xf32> to vector<64x128xf32>
    %81 = arith.mulf %78, %80 : vector<64x128xf32>
    %82 = arith.addf %76, %81 : vector<64x128xf32>
    %c0_29 = arith.constant 0 : index
    %c1408 = arith.constant 1408 : index
    %83 = vector.load %arg4[%c0_29, %c1408] : memref<48x3200xf32, #tpu.memory_space<vmem>>, vector<48x128xf32>
    %cst_30 = arith.constant dense<0.000000e+00> : vector<64x128xf32>
    %84 = tpu.matmul %8, %83, %cst_30 {dimension_numbers = #tpu.dot_dimension_numbers<[1], [0], [0], [1], [0, 0, 1, 1], [], []>} : vector<64x48xf32>, vector<48x128xf32>, vector<64x128xf32> -> vector<64x128xf32>
    %85 = vector.extract_strided_slice %15 {offsets = [0, 11], sizes = [64, 1], strides = [1, 1]} : vector<64x25xf32> to vector<64x1xf32>
    %86 = vector.broadcast %85 : vector<64x1xf32> to vector<64x128xf32>
    %87 = arith.mulf %84, %86 : vector<64x128xf32>
    %88 = arith.addf %82, %87 : vector<64x128xf32>
    %c0_31 = arith.constant 0 : index
    %c1536 = arith.constant 1536 : index
    %89 = vector.load %arg4[%c0_31, %c1536] : memref<48x3200xf32, #tpu.memory_space<vmem>>, vector<48x128xf32>
    %cst_32 = arith.constant dense<0.000000e+00> : vector<64x128xf32>
    %90 = tpu.matmul %8, %89, %cst_32 {dimension_numbers = #tpu.dot_dimension_numbers<[1], [0], [0], [1], [0, 0, 1, 1], [], []>} : vector<64x48xf32>, vector<48x128xf32>, vector<64x128xf32> -> vector<64x128xf32>
    %91 = vector.extract_strided_slice %15 {offsets = [0, 12], sizes = [64, 1], strides = [1, 1]} : vector<64x25xf32> to vector<64x1xf32>
    %92 = vector.broadcast %91 : vector<64x1xf32> to vector<64x128xf32>
    %93 = arith.mulf %90, %92 : vector<64x128xf32>
    %94 = arith.addf %88, %93 : vector<64x128xf32>
    %c0_33 = arith.constant 0 : index
    %c1664 = arith.constant 1664 : index
    %95 = vector.load %arg4[%c0_33, %c1664] : memref<48x3200xf32, #tpu.memory_space<vmem>>, vector<48x128xf32>
    %cst_34 = arith.constant dense<0.000000e+00> : vector<64x128xf32>
    %96 = tpu.matmul %8, %95, %cst_34 {dimension_numbers = #tpu.dot_dimension_numbers<[1], [0], [0], [1], [0, 0, 1, 1], [], []>} : vector<64x48xf32>, vector<48x128xf32>, vector<64x128xf32> -> vector<64x128xf32>
    %97 = vector.extract_strided_slice %15 {offsets = [0, 13], sizes = [64, 1], strides = [1, 1]} : vector<64x25xf32> to vector<64x1xf32>
    %98 = vector.broadcast %97 : vector<64x1xf32> to vector<64x128xf32>
    %99 = arith.mulf %96, %98 : vector<64x128xf32>
    %100 = arith.addf %94, %99 : vector<64x128xf32>
    %c0_35 = arith.constant 0 : index
    %c1792 = arith.constant 1792 : index
    %101 = vector.load %arg4[%c0_35, %c1792] : memref<48x3200xf32, #tpu.memory_space<vmem>>, vector<48x128xf32>
    %cst_36 = arith.constant dense<0.000000e+00> : vector<64x128xf32>
    %102 = tpu.matmul %8, %101, %cst_36 {dimension_numbers = #tpu.dot_dimension_numbers<[1], [0], [0], [1], [0, 0, 1, 1], [], []>} : vector<64x48xf32>, vector<48x128xf32>, vector<64x128xf32> -> vector<64x128xf32>
    %103 = vector.extract_strided_slice %15 {offsets = [0, 14], sizes = [64, 1], strides = [1, 1]} : vector<64x25xf32> to vector<64x1xf32>
    %104 = vector.broadcast %103 : vector<64x1xf32> to vector<64x128xf32>
    %105 = arith.mulf %102, %104 : vector<64x128xf32>
    %106 = arith.addf %100, %105 : vector<64x128xf32>
    %c0_37 = arith.constant 0 : index
    %c1920 = arith.constant 1920 : index
    %107 = vector.load %arg4[%c0_37, %c1920] : memref<48x3200xf32, #tpu.memory_space<vmem>>, vector<48x128xf32>
    %cst_38 = arith.constant dense<0.000000e+00> : vector<64x128xf32>
    %108 = tpu.matmul %8, %107, %cst_38 {dimension_numbers = #tpu.dot_dimension_numbers<[1], [0], [0], [1], [0, 0, 1, 1], [], []>} : vector<64x48xf32>, vector<48x128xf32>, vector<64x128xf32> -> vector<64x128xf32>
    %109 = vector.extract_strided_slice %15 {offsets = [0, 15], sizes = [64, 1], strides = [1, 1]} : vector<64x25xf32> to vector<64x1xf32>
    %110 = vector.broadcast %109 : vector<64x1xf32> to vector<64x128xf32>
    %111 = arith.mulf %108, %110 : vector<64x128xf32>
    %112 = arith.addf %106, %111 : vector<64x128xf32>
    %c0_39 = arith.constant 0 : index
    %c2048 = arith.constant 2048 : index
    %113 = vector.load %arg4[%c0_39, %c2048] : memref<48x3200xf32, #tpu.memory_space<vmem>>, vector<48x128xf32>
    %cst_40 = arith.constant dense<0.000000e+00> : vector<64x128xf32>
    %114 = tpu.matmul %8, %113, %cst_40 {dimension_numbers = #tpu.dot_dimension_numbers<[1], [0], [0], [1], [0, 0, 1, 1], [], []>} : vector<64x48xf32>, vector<48x128xf32>, vector<64x128xf32> -> vector<64x128xf32>
    %115 = vector.extract_strided_slice %15 {offsets = [0, 16], sizes = [64, 1], strides = [1, 1]} : vector<64x25xf32> to vector<64x1xf32>
    %116 = vector.broadcast %115 : vector<64x1xf32> to vector<64x128xf32>
    %117 = arith.mulf %114, %116 : vector<64x128xf32>
    %118 = arith.addf %112, %117 : vector<64x128xf32>
    %c0_41 = arith.constant 0 : index
    %c2176 = arith.constant 2176 : index
    %119 = vector.load %arg4[%c0_41, %c2176] : memref<48x3200xf32, #tpu.memory_space<vmem>>, vector<48x128xf32>
    %cst_42 = arith.constant dense<0.000000e+00> : vector<64x128xf32>
    %120 = tpu.matmul %8, %119, %cst_42 {dimension_numbers = #tpu.dot_dimension_numbers<[1], [0], [0], [1], [0, 0, 1, 1], [], []>} : vector<64x48xf32>, vector<48x128xf32>, vector<64x128xf32> -> vector<64x128xf32>
    %121 = vector.extract_strided_slice %15 {offsets = [0, 17], sizes = [64, 1], strides = [1, 1]} : vector<64x25xf32> to vector<64x1xf32>
    %122 = vector.broadcast %121 : vector<64x1xf32> to vector<64x128xf32>
    %123 = arith.mulf %120, %122 : vector<64x128xf32>
    %124 = arith.addf %118, %123 : vector<64x128xf32>
    %c0_43 = arith.constant 0 : index
    %c2304 = arith.constant 2304 : index
    %125 = vector.load %arg4[%c0_43, %c2304] : memref<48x3200xf32, #tpu.memory_space<vmem>>, vector<48x128xf32>
    %cst_44 = arith.constant dense<0.000000e+00> : vector<64x128xf32>
    %126 = tpu.matmul %8, %125, %cst_44 {dimension_numbers = #tpu.dot_dimension_numbers<[1], [0], [0], [1], [0, 0, 1, 1], [], []>} : vector<64x48xf32>, vector<48x128xf32>, vector<64x128xf32> -> vector<64x128xf32>
    %127 = vector.extract_strided_slice %15 {offsets = [0, 18], sizes = [64, 1], strides = [1, 1]} : vector<64x25xf32> to vector<64x1xf32>
    %128 = vector.broadcast %127 : vector<64x1xf32> to vector<64x128xf32>
    %129 = arith.mulf %126, %128 : vector<64x128xf32>
    %130 = arith.addf %124, %129 : vector<64x128xf32>
    %c0_45 = arith.constant 0 : index
    %c2432 = arith.constant 2432 : index
    %131 = vector.load %arg4[%c0_45, %c2432] : memref<48x3200xf32, #tpu.memory_space<vmem>>, vector<48x128xf32>
    %cst_46 = arith.constant dense<0.000000e+00> : vector<64x128xf32>
    %132 = tpu.matmul %8, %131, %cst_46 {dimension_numbers = #tpu.dot_dimension_numbers<[1], [0], [0], [1], [0, 0, 1, 1], [], []>} : vector<64x48xf32>, vector<48x128xf32>, vector<64x128xf32> -> vector<64x128xf32>
    %133 = vector.extract_strided_slice %15 {offsets = [0, 19], sizes = [64, 1], strides = [1, 1]} : vector<64x25xf32> to vector<64x1xf32>
    %134 = vector.broadcast %133 : vector<64x1xf32> to vector<64x128xf32>
    %135 = arith.mulf %132, %134 : vector<64x128xf32>
    %136 = arith.addf %130, %135 : vector<64x128xf32>
    %c0_47 = arith.constant 0 : index
    %c2560 = arith.constant 2560 : index
    %137 = vector.load %arg4[%c0_47, %c2560] : memref<48x3200xf32, #tpu.memory_space<vmem>>, vector<48x128xf32>
    %cst_48 = arith.constant dense<0.000000e+00> : vector<64x128xf32>
    %138 = tpu.matmul %8, %137, %cst_48 {dimension_numbers = #tpu.dot_dimension_numbers<[1], [0], [0], [1], [0, 0, 1, 1], [], []>} : vector<64x48xf32>, vector<48x128xf32>, vector<64x128xf32> -> vector<64x128xf32>
    %139 = vector.extract_strided_slice %15 {offsets = [0, 20], sizes = [64, 1], strides = [1, 1]} : vector<64x25xf32> to vector<64x1xf32>
    %140 = vector.broadcast %139 : vector<64x1xf32> to vector<64x128xf32>
    %141 = arith.mulf %138, %140 : vector<64x128xf32>
    %142 = arith.addf %136, %141 : vector<64x128xf32>
    %c0_49 = arith.constant 0 : index
    %c2688 = arith.constant 2688 : index
    %143 = vector.load %arg4[%c0_49, %c2688] : memref<48x3200xf32, #tpu.memory_space<vmem>>, vector<48x128xf32>
    %cst_50 = arith.constant dense<0.000000e+00> : vector<64x128xf32>
    %144 = tpu.matmul %8, %143, %cst_50 {dimension_numbers = #tpu.dot_dimension_numbers<[1], [0], [0], [1], [0, 0, 1, 1], [], []>} : vector<64x48xf32>, vector<48x128xf32>, vector<64x128xf32> -> vector<64x128xf32>
    %145 = vector.extract_strided_slice %15 {offsets = [0, 21], sizes = [64, 1], strides = [1, 1]} : vector<64x25xf32> to vector<64x1xf32>
    %146 = vector.broadcast %145 : vector<64x1xf32> to vector<64x128xf32>
    %147 = arith.mulf %144, %146 : vector<64x128xf32>
    %148 = arith.addf %142, %147 : vector<64x128xf32>
    %c0_51 = arith.constant 0 : index
    %c2816 = arith.constant 2816 : index
    %149 = vector.load %arg4[%c0_51, %c2816] : memref<48x3200xf32, #tpu.memory_space<vmem>>, vector<48x128xf32>
    %cst_52 = arith.constant dense<0.000000e+00> : vector<64x128xf32>
    %150 = tpu.matmul %8, %149, %cst_52 {dimension_numbers = #tpu.dot_dimension_numbers<[1], [0], [0], [1], [0, 0, 1, 1], [], []>} : vector<64x48xf32>, vector<48x128xf32>, vector<64x128xf32> -> vector<64x128xf32>
    %151 = vector.extract_strided_slice %15 {offsets = [0, 22], sizes = [64, 1], strides = [1, 1]} : vector<64x25xf32> to vector<64x1xf32>
    %152 = vector.broadcast %151 : vector<64x1xf32> to vector<64x128xf32>
    %153 = arith.mulf %150, %152 : vector<64x128xf32>
    %154 = arith.addf %148, %153 : vector<64x128xf32>
    %c0_53 = arith.constant 0 : index
    %c2944 = arith.constant 2944 : index
    %155 = vector.load %arg4[%c0_53, %c2944] : memref<48x3200xf32, #tpu.memory_space<vmem>>, vector<48x128xf32>
    %cst_54 = arith.constant dense<0.000000e+00> : vector<64x128xf32>
    %156 = tpu.matmul %8, %155, %cst_54 {dimension_numbers = #tpu.dot_dimension_numbers<[1], [0], [0], [1], [0, 0, 1, 1], [], []>} : vector<64x48xf32>, vector<48x128xf32>, vector<64x128xf32> -> vector<64x128xf32>
    %157 = vector.extract_strided_slice %15 {offsets = [0, 23], sizes = [64, 1], strides = [1, 1]} : vector<64x25xf32> to vector<64x1xf32>
    %158 = vector.broadcast %157 : vector<64x1xf32> to vector<64x128xf32>
    %159 = arith.mulf %156, %158 : vector<64x128xf32>
    %160 = arith.addf %154, %159 : vector<64x128xf32>
    %c0_55 = arith.constant 0 : index
    %c3072 = arith.constant 3072 : index
    %161 = vector.load %arg4[%c0_55, %c3072] : memref<48x3200xf32, #tpu.memory_space<vmem>>, vector<48x128xf32>
    %cst_56 = arith.constant dense<0.000000e+00> : vector<64x128xf32>
    %162 = tpu.matmul %8, %161, %cst_56 {dimension_numbers = #tpu.dot_dimension_numbers<[1], [0], [0], [1], [0, 0, 1, 1], [], []>} : vector<64x48xf32>, vector<48x128xf32>, vector<64x128xf32> -> vector<64x128xf32>
    %163 = vector.extract_strided_slice %15 {offsets = [0, 24], sizes = [64, 1], strides = [1, 1]} : vector<64x25xf32> to vector<64x1xf32>
    %164 = vector.broadcast %163 : vector<64x1xf32> to vector<64x128xf32>
    %165 = arith.mulf %162, %164 : vector<64x128xf32>
    %166 = arith.addf %160, %165 : vector<64x128xf32>
    %c0_57 = arith.constant 0 : index
    %c0_58 = arith.constant 0 : index
    %167 = vector.load %arg9[%c0_57, %c0_58] : memref<48x128xf32, #tpu.memory_space<vmem>>, vector<48x128xf32>
    %cst_59 = arith.constant dense<0.000000e+00> : vector<48x128xf32>
    %168 = tpu.matmul %14, %166, %cst_59 {dimension_numbers = #tpu.dot_dimension_numbers<[1], [0], [0], [1], [0, 0, 1, 1], [], []>} : vector<48x64xf32>, vector<64x128xf32>, vector<48x128xf32> -> vector<48x128xf32>
    %169 = arith.addf %167, %168 : vector<48x128xf32>
    %c0_60 = arith.constant 0 : index
    %c0_61 = arith.constant 0 : index
    %170 = vector.load %arg9[%c0_60, %c0_61] : memref<48x128xf32, #tpu.memory_space<vmem>>, vector<48x128xf32>
    tpu.vector_store %arg9[%c0_60, %c0_61], %169 {strides = array<i32>} : memref<48x128xf32, #tpu.memory_space<vmem>>, vector<48x128xf32>,
    %c0_i32_62 = arith.constant 0 : i32
    %171 = arith.cmpi eq, %arg0, %c0_i32_62 : i32
    %172 = arith.extui %171 : i1 to i32
    %c0_i32_63 = arith.constant 0 : i32
    %173 = arith.cmpi ne, %172, %c0_i32_63 : i32
    scf.if %173 {
      %c0_64 = arith.constant 0 : index
      %c0_65 = arith.constant 0 : index
      %174 = vector.load %arg9[%c0_64, %c0_65] : memref<48x128xf32, #tpu.memory_space<vmem>>, vector<48x128xf32>
      %c0_66 = arith.constant 0 : index
      %c0_67 = arith.constant 0 : index
      %175 = vector.load %arg8[%c0_66, %c0_67] : memref<48x1xf32, #tpu.memory_space<vmem>>, vector<48x1xf32>
      %176 = vector.broadcast %175 : vector<48x1xf32> to vector<48x128xf32>
      %177 = arith.mulf %174, %176 : vector<48x128xf32>
      %c0_68 = arith.constant 0 : index
      %c0_69 = arith.constant 0 : index
      %178 = vector.load %arg5[%c0_68, %c0_69] : memref<48x128xbf16, #tpu.memory_space<vmem>>, vector<48x128xbf16>
      %c0_70 = arith.constant 0 : index
      %c0_71 = arith.constant 0 : index
      %179 = vector.load %arg6[%c0_70, %c0_71] : memref<128x128xbf16, #tpu.memory_space<vmem>>, vector<128x128xbf16>
      %cst_72 = arith.constant dense<0.000000e+00> : vector<48x128xf32>
      %180 = tpu.matmul %178, %179, %cst_72 {dimension_numbers = #tpu.dot_dimension_numbers<[1], [0], [0], [1], [0, 0, 1, 1], [], []>} : vector<48x128xbf16>, vector<128x128xbf16>, vector<48x128xf32> -> vector<48x128xf32>
      %181 = arith.addf %177, %180 : vector<48x128xf32>
      %c0_73 = arith.constant 0 : index
      %c0_74 = arith.constant 0 : index
      %182 = vector.load %arg7[%c0_73, %c0_74] : memref<1x128xf32, #tpu.memory_space<vmem>>, vector<1x128xf32>
      %183 = vector.broadcast %182 : vector<1x128xf32> to vector<48x128xf32>
      %184 = arith.addf %181, %183 : vector<48x128xf32>
      %cst_75 = arith.constant 0.000000e+00 : f32
      %185 = vector.broadcast %cst_75 : f32 to vector<48x128xf32>
      %186 = arith.maximumf %184, %185 : vector<48x128xf32>
      %c0_76 = arith.constant 0 : index
      %c0_77 = arith.constant 0 : index
      %187 = vector.load %arg9[%c0_76, %c0_77] : memref<48x128xf32, #tpu.memory_space<vmem>>, vector<48x128xf32>
      tpu.vector_store %arg9[%c0_76, %c0_77], %186 {strides = array<i32>} : memref<48x128xf32, #tpu.memory_space<vmem>>, vector<48x128xf32>,
    } else {
    }
    return
  }
  func.func @transform_0(%arg0: i32) -> (i32, i32) {
    %c0_i32 = arith.constant 0 : i32
    %c0_i32_0 = arith.constant 0 : i32
    return %arg0, %c0_i32 : i32, i32
  }
  func.func @transform_1(%arg0: i32) -> (i32, i32) {
    %c0_i32 = arith.constant 0 : i32
    %c0_i32_0 = arith.constant 0 : i32
    return %c0_i32, %arg0 : i32, i32
  }
  func.func @transform_2(%arg0: i32) -> (i32, i32) {
    %c0_i32 = arith.constant 0 : i32
    %c0_i32_0 = arith.constant 0 : i32
    return %arg0, %c0_i32 : i32, i32
  }
  func.func @transform_3(%arg0: i32) -> (i32, i32) {
    %c0_i32 = arith.constant 0 : i32
    %c0_i32_0 = arith.constant 0 : i32
    %c0_i32_1 = arith.constant 0 : i32
    return %c0_i32, %c0_i32_0 : i32, i32
  }
  func.func @transform_4(%arg0: i32) -> (i32, i32) {
    %c0_i32 = arith.constant 0 : i32
    %c0_i32_0 = arith.constant 0 : i32
    %c0_i32_1 = arith.constant 0 : i32
    return %c0_i32, %c0_i32_0 : i32, i32
  }
  func.func @transform_5(%arg0: i32) -> (i32, i32) {
    %c0_i32 = arith.constant 0 : i32
    %c0_i32_0 = arith.constant 0 : i32
    %c0_i32_1 = arith.constant 0 : i32
    return %c0_i32, %c0_i32_0 : i32, i32
  }
  func.func @transform_6(%arg0: i32) -> (i32, i32) {
    %c0_i32 = arith.constant 0 : i32
    %c0_i32_0 = arith.constant 0 : i32
    %c0_i32_1 = arith.constant 0 : i32
    return %c0_i32, %c0_i32_0 : i32, i32
  }
  func.func @transform_7(%arg0: i32) -> (i32, i32) {
    %c0_i32 = arith.constant 0 : i32
    %c0_i32_0 = arith.constant 0 : i32
    %c0_i32_1 = arith.constant 0 : i32
    return %c0_i32, %c0_i32_0 : i32, i32
  }
  func.func @transform_8(%arg0: i32) -> (i32, i32) {
    %c0_i32 = arith.constant 0 : i32
    %c0_i32_0 = arith.constant 0 : i32
    %c0_i32_1 = arith.constant 0 : i32
    return %c0_i32, %c0_i32_0 : i32, i32
  }
}

module attributes {stable_mosaic.version = 11 : i64} {
  func.func @_matmul_kernel_direct(%arg0: i32, %arg1: i32, %arg2: memref<48x512xbf16, #tpu.memory_space<vmem>>, %arg3: memref<512x128xbf16, #tpu.memory_space<vmem>>, %arg4: memref<1x128xf32, #tpu.memory_space<vmem>>, %arg5: memref<48x128xf32, #tpu.memory_space<vmem>>) attributes {dimension_semantics = [#tpu.dimension_semantics<parallel>, #tpu.dimension_semantics<parallel>], iteration_bounds = array<i64: 1, 1>, scalar_prefetch = 0 : i64, scratch_operands = 0 : i64, tpu.core_type = #tpu.core_type<tc>, window_params = [{transform_indices = @transform_0, window_bounds = array<i64: 48, 512>}, {transform_indices = @transform_1, window_bounds = array<i64: 512, 128>}, {transform_indices = @transform_2, window_bounds = array<i64: 1, 128>}, {transform_indices = @transform_3, window_bounds = array<i64: 48, 128>}]} {
    %c0 = arith.constant 0 : index
    %c0_0 = arith.constant 0 : index
    %0 = vector.load %arg2[%c0, %c0_0] : memref<48x512xbf16, #tpu.memory_space<vmem>>, vector<48x512xbf16>
    %c0_1 = arith.constant 0 : index
    %c0_2 = arith.constant 0 : index
    %1 = vector.load %arg3[%c0_1, %c0_2] : memref<512x128xbf16, #tpu.memory_space<vmem>>, vector<512x128xbf16>
    %cst = arith.constant dense<0.000000e+00> : vector<48x128xf32>
    %2 = tpu.matmul %0, %1, %cst {dimension_numbers = #tpu.dot_dimension_numbers<[1], [0], [0], [1], [0, 0, 1, 1], [], []>} : vector<48x512xbf16>, vector<512x128xbf16>, vector<48x128xf32> -> vector<48x128xf32>
    %c0_3 = arith.constant 0 : index
    %c0_4 = arith.constant 0 : index
    %3 = vector.load %arg4[%c0_3, %c0_4] : memref<1x128xf32, #tpu.memory_space<vmem>>, vector<1x128xf32>
    %4 = vector.broadcast %3 : vector<1x128xf32> to vector<48x128xf32>
    %5 = arith.addf %2, %4 : vector<48x128xf32>
    %c0_5 = arith.constant 0 : index
    %c0_6 = arith.constant 0 : index
    %6 = vector.load %arg5[%c0_5, %c0_6] : memref<48x128xf32, #tpu.memory_space<vmem>>, vector<48x128xf32>
    tpu.vector_store %arg5[%c0_5, %c0_6], %5 {strides = array<i32>} : memref<48x128xf32, #tpu.memory_space<vmem>>, vector<48x128xf32>,
    return
  }
  func.func @transform_0(%arg0: i32, %arg1: i32) -> (i32, i32) {
    %c0_i32 = arith.constant 0 : i32
    %c0_i32_0 = arith.constant 0 : i32
    return %arg0, %c0_i32 : i32, i32
  }
  func.func @transform_1(%arg0: i32, %arg1: i32) -> (i32, i32) {
    %c0_i32 = arith.constant 0 : i32
    %c0_i32_0 = arith.constant 0 : i32
    return %c0_i32, %arg1 : i32, i32
  }
  func.func @transform_2(%arg0: i32, %arg1: i32) -> (i32, i32) {
    %c0_i32 = arith.constant 0 : i32
    %c0_i32_0 = arith.constant 0 : i32
    return %c0_i32, %arg1 : i32, i32
  }
  func.func @transform_3(%arg0: i32, %arg1: i32) -> (i32, i32) {
    %c0_i32 = arith.constant 0 : i32
    return %arg0, %arg1 : i32, i32
  }
}

</mosaic_0001>

<llo_original>
// kernel: hybrid_gnn_forward.6
$region0: #{hybrid_gnn_forward.6}
  #allocation0 [shape = 'u32[]', space=smem, size = 0x4, offset = 0x4, fixed_abs, tag = 'smem constant byte address 0x4 - core index']
  #allocation1 [shape = 'u32[144,128]{1,0:T(1,128)}', space=vmem, size = 0x12000, scoped, tag = 'internal scratch']
  %s0 = inlined_call_operand.vmem [shape: bf16[48,128], index: 0, kind: input, shape index: {}]
  %s1 = inlined_call_operand.vmem [shape: bf16[128,3584], index: 1, kind: input, shape index: {}]
  %s2 = inlined_call_operand.vmem [shape: f32[48,3584], index: 2, kind: output, shape index: {}]
  %s3 = sld [smem:[#allocation0]]
  $region83: #{hybrid_gnn_forward.6} parent=0
    _
  %s5 = ssub.s32 1, %s3
  %s6 = scalar_select 0, %s5, %s3
  $region1: #{hybrid_gnn_forward.6} parent=0
    #allocation2 [shape = 'u8[262144]{0}', space=vmem, size = 0x40000, scoped, tag = 'input window, operand 1']
    #allocation3 [shape = 'u8[196608]{0}', space=vmem, size = 0x30000, scoped, tag = 'output window, operand 0']
    loop: start=0, step=1, limit=9
    $region2: #{hybrid_gnn_forward.6} parent=1 // loop_pre_header
      _
    $region3: #{hybrid_gnn_forward.6} parent=1 // loop_header
      %s8 = sphi 0, %s12
      %p9 = scmp.ge.s32.totalorder %s8, 9
      %s15 = sphi 0, %s27
      %s16 = sphi 0, %s23
      %s17 = sphi 0, %s15
      %s18 = sphi 0, %s16
      %s19 = sphi 0, %s17
      %s20 = sphi 0, %s18
      %s30 = sphi 0, %s32
      %s33 = sphi 0, %s30
      %s34 = sphi 0, %s33
      %s50 = sphi 0, %s34
      %s56 = sphi 0, %s58
      %s59 = sphi 0, %s56
      %s60 = sphi 0, %s59
      %s76 = sphi 0, %s60
      %s84 = sphi 0, %s86
      %s87 = sphi 0, %s84
      %s88 = sphi 0, %s87
      %s104 = sphi 0, %s88
    $region4: #{hybrid_gnn_forward.6} parent=1 // loop_header_branch
      %11 = sbr.rel (%p9) target = $region8
    $region5: #{hybrid_gnn_forward.6} parent=1 // loop_body
      %s13 = ssub.s32 %s8, 1
      %s14 = ssub.s32 %s8, 2
      %s21 = sadd.s32 1, %s16
      %p22 = scmp.ge.s32.totalorder %s21, 7
      %s23 = scalar_select %p22, 0, %s21
      %s24 = sadd.s32 1, %s15
      %s25 = scalar_select %p22, %s24, %s15
      %p26 = scmp.ge.s32.totalorder %s25, 1
      %s27 = scalar_select %p26, 0, %s25
      %s28 = ssub.s32 %s15, %s27
      %p29 = scmp.eq.s32.totalorder %s28, 0
      %s31 = sadd.s32 %s30, 1
      %s32 = scalar_select %p29, %s30, %s31
      %p35 = pneg %p29
      %p36 = scmp.eq.s32.totalorder %s8, 6
      %p37 = por %p35, %p36
      %p38 = scmp.ne.s32.totalorder %s30, %s33
      %p39 = scmp.eq.s32.totalorder %s8, 0
      %p40 = por %p38, %p39
      %p41 = scmp.ne.s32.totalorder %s30, %s33
      %p42 = scmp.eq.s32.totalorder %s13, 6
      %p43 = por %p41, %p42
      %p44 = scmp.ne.s32.totalorder %s33, %s34
      %p45 = scmp.eq.s32.totalorder %s13, 0
      %p46 = por %p44, %p45
      %p47 = scmp.ne.s32.totalorder %s33, %s34
      %p48 = scmp.eq.s32.totalorder %s14, 6
      %p49 = por %p47, %p48
      %p51 = scmp.ne.s32.totalorder %s34, %s50
      %p52 = scmp.eq.s32.totalorder %s14, 0
      %p53 = por %p51, %p52
      %s54 = ssub.s32 %s16, %s23
      %p55 = scmp.eq.s32.totalorder %s54, 0
      %s57 = sadd.s32 %s56, 1
      %s58 = scalar_select %p55, %s56, %s57
      %p61 = pneg %p55
      %p62 = scmp.eq.s32.totalorder %s8, 6
      %p63 = por %p61, %p62
      %p64 = scmp.ne.s32.totalorder %s56, %s59
      %p65 = scmp.eq.s32.totalorder %s8, 0
      %p66 = por %p64, %p65
      %p67 = scmp.ne.s32.totalorder %s56, %s59
      %p68 = scmp.eq.s32.totalorder %s13, 6
      %p69 = por %p67, %p68
      %p70 = scmp.ne.s32.totalorder %s59, %s60
      %p71 = scmp.eq.s32.totalorder %s13, 0
      %p72 = por %p70, %p71
      %p73 = scmp.ne.s32.totalorder %s59, %s60
      %p74 = scmp.eq.s32.totalorder %s14, 6
      %p75 = por %p73, %p74
      %p77 = scmp.ne.s32.totalorder %s60, %s76
      %p78 = scmp.eq.s32.totalorder %s14, 0
      %p79 = por %p77, %p78
      %s80 = ssub.s32 %s15, %s27
      %s81 = ssub.s32 %s16, %s23
      %s82 = sor.u32 %s80, %s81
      %p83 = scmp.eq.s32.totalorder %s82, 0
      %s85 = sadd.s32 %s84, 1
      %s86 = scalar_select %p83, %s84, %s85
      %p89 = pneg %p83
      %p90 = scmp.eq.s32.totalorder %s8, 6
      %p91 = por %p89, %p90
      %p92 = scmp.ne.s32.totalorder %s84, %s87
      %p93 = scmp.eq.s32.totalorder %s8, 0
      %p94 = por %p92, %p93
      %p95 = scmp.ne.s32.totalorder %s84, %s87
      %p96 = scmp.eq.s32.totalorder %s13, 6
      %p97 = por %p95, %p96
      %p98 = scmp.ne.s32.totalorder %s87, %s88
      %p99 = scmp.eq.s32.totalorder %s13, 0
      %p100 = por %p98, %p99
      %p101 = scmp.ne.s32.totalorder %s87, %s88
      %p102 = scmp.eq.s32.totalorder %s14, 6
      %p103 = por %p101, %p102
      %p105 = scmp.ne.s32.totalorder %s88, %s104
      %p106 = scmp.eq.s32.totalorder %s14, 0
      %p107 = por %p105, %p106
      %p108 = scmp.le.s32.totalorder 1, %s8
      %p109 = scmp.lt.s32.totalorder %s8, 8
      %p110 = pnand %p108, %p109
      %p111 = pneg %p110
      // Predicated region
      $region9: #{hybrid_gnn_forward.6} parent=5 // pred_check
        _
      $region10: #{hybrid_gnn_forward.6} parent=5 // pred_check_branch
        %113 = sbr.rel (%p110) target = $region12
      $region11: #{hybrid_gnn_forward.6} parent=5 // pred_region
        %s114 = ssub.s32 %s8, 1
        // Predicated region
        $region13: #{hybrid_gnn_forward.6} parent=11 // pred_check
          %p115 = pneg %p46
        $region14: #{hybrid_gnn_forward.6} parent=11 // pred_check_branch
          %117 = sbr.rel (%p115) target = $region16
        $region15: #{hybrid_gnn_forward.6} parent=11 // pred_region
          %s118 = smul.u32 6, %s17
          %p119 = scmp.lt.s32.totalorder %s118, 5
          %s120 = scalar_select %p119, %s118, 5
          %s121 = smul.addr %s120, 4
          %s122 = scalar_lea.vmem %s0, %s121
          %s123 = smul.u32 6, %s17
        $region16: #{hybrid_gnn_forward.6} parent=11 // pred_fallthru
          _
      $region12: #{hybrid_gnn_forward.6} parent=5 // pred_fallthru
        _
      %p124 = scmp.lt.s32.totalorder %s8, 7
      // Predicated region
      $region17: #{hybrid_gnn_forward.6} parent=5 // pred_check
        %p125 = pneg %p124
      $region18: #{hybrid_gnn_forward.6} parent=5 // pred_check_branch
        %127 = sbr.rel (%p125) target = $region20
      $region19: #{hybrid_gnn_forward.6} parent=5 // pred_region
        // Predicated region
        $region21: #{hybrid_gnn_forward.6} parent=19 // pred_check
          %p128 = pneg %p66
        $region22: #{hybrid_gnn_forward.6} parent=19 // pred_check_branch
          %130 = sbr.rel (%p128) target = $region24
        $region23: #{hybrid_gnn_forward.6} parent=19 // pred_region
          %s131 = sand.u32 %s56, 1
          %s132 = sand.u32 %s56, 1
          %s133 = smul.addr %s132, 256
          %s134 = scalar_lea.vmem [#allocation2], %s133
          %s135 = smul.u32 4, %s16
          %s136 = smul.addr %s135, 4
          %s137 = scalar_lea.vmem %s1, %s136
          // Predicated region
          $region25: #{hybrid_gnn_forward.6} parent=23 // pred_check
            _
          $region26: #{hybrid_gnn_forward.6} parent=23 // pred_check_branch
            %139 = sbr.rel (0) target = $region28
          $region27: #{hybrid_gnn_forward.6} parent=23 // pred_region
            // Predicated region
            $region29: #{hybrid_gnn_forward.6} parent=27 // pred_check
              _
            $region30: #{hybrid_gnn_forward.6} parent=27 // pred_check_branch
              %141 = sbr.rel (0) target = $region32
            $region31: #{hybrid_gnn_forward.6} parent=27 // pred_region
              loop: start=0, step=1, limit=1
              $region33: #{hybrid_gnn_forward.6} parent=31 // loop_pre_header
                _
              $region34: #{hybrid_gnn_forward.6} parent=31 // loop_header
                %s143 = sphi 0, %s147
                %p144 = scmp.ge.s32.totalorder %s143, 1
                %s148 = sphi %s137, %s137
                %s149 = sphi %s134, %s134
              $region35: #{hybrid_gnn_forward.6} parent=31 // loop_header_branch
                %146 = sbr.rel (%p144) target = $region39
              $region36: #{hybrid_gnn_forward.6} parent=31 // loop_body
                %v150 = vld [vmem:[%s148] sm:$0xff]
                %151 = vst [vmem:[%s149] sm:$0xff] %v150
                %v152 = vld [vmem:[%s148 + $0x8] sm:$0xff]
                %153 = vst [vmem:[%s149 + $0x8] sm:$0xff] %v152
                %v154 = vld [vmem:[%s148 + $0x70] sm:$0xff]
                %155 = vst [vmem:[%s149 + $0x10] sm:$0xff] %v154
                %v156 = vld [vmem:[%s148 + $0x78] sm:$0xff]
                %157 = vst [vmem:[%s149 + $0x18] sm:$0xff] %v156
                %v158 = vld [vmem:[%s148 + $0xe0] sm:$0xff]
                %159 = vst [vmem:[%s149 + $0x20] sm:$0xff] %v158
                %v160 = vld [vmem:[%s148 + $0xe8] sm:$0xff]
                %161 = vst [vmem:[%s149 + $0x28] sm:$0xff] %v160
                %v162 = vld [vmem:[%s148 + $0x150] sm:$0xff]
                %163 = vst [vmem:[%s149 + $0x30] sm:$0xff] %v162
                %v164 = vld [vmem:[%s148 + $0x158] sm:$0xff]
                %165 = vst [vmem:[%s149 + $0x38] sm:$0xff] %v164
                %v166 = vld [vmem:[%s148 + $0x1c0] sm:$0xff]
                %167 = vst [vmem:[%s149 + $0x40] sm:$0xff] %v166
                %v168 = vld [vmem:[%s148 + $0x1c8] sm:$0xff]
                %169 = vst [vmem:[%s149 + $0x48] sm:$0xff] %v168
                %v170 = vld [vmem:[%s148 + $0x230] sm:$0xff]
                %171 = vst [vmem:[%s149 + $0x50] sm:$0xff] %v170
                %v172 = vld [vmem:[%s148 + $0x238] sm:$0xff]
                %173 = vst [vmem:[%s149 + $0x58] sm:$0xff] %v172
                %v174 = vld [vmem:[%s148 + $0x2a0] sm:$0xff]
                %175 = vst [vmem:[%s149 + $0x60] sm:$0xff] %v174
                %v176 = vld [vmem:[%s148 + $0x2a8] sm:$0xff]
                %177 = vst [vmem:[%s149 + $0x68] sm:$0xff] %v176
                %v178 = vld [vmem:[%s148 + $0x310] sm:$0xff]
                %179 = vst [vmem:[%s149 + $0x70] sm:$0xff] %v178
                %v180 = vld [vmem:[%s148 + $0x318] sm:$0xff]
                %181 = vst [vmem:[%s149 + $0x78] sm:$0xff] %v180
                %v182 = vld [vmem:[%s148 + $0x380] sm:$0xff]
                %183 = vst [vmem:[%s149 + $0x80] sm:$0xff] %v182
                %v184 = vld [vmem:[%s148 + $0x388] sm:$0xff]
                %185 = vst [vmem:[%s149 + $0x88] sm:$0xff] %v184
                %v186 = vld [vmem:[%s148 + $0x3f0] sm:$0xff]
                %187 = vst [vmem:[%s149 + $0x90] sm:$0xff] %v186
                %v188 = vld [vmem:[%s148 + $0x3f8] sm:$0xff]
                %189 = vst [vmem:[%s149 + $0x98] sm:$0xff] %v188
                %v190 = vld [vmem:[%s148 + $0x460] sm:$0xff]
                %191 = vst [vmem:[%s149 + $0xa0] sm:$0xff] %v190
                %v192 = vld [vmem:[%s148 + $0x468] sm:$0xff]
                %193 = vst [vmem:[%s149 + $0xa8] sm:$0xff] %v192
                %v194 = vld [vmem:[%s148 + $0x4d0] sm:$0xff]
                %195 = vst [vmem:[%s149 + $0xb0] sm:$0xff] %v194
                %v196 = vld [vmem:[%s148 + $0x4d8] sm:$0xff]
                %197 = vst [vmem:[%s149 + $0xb8] sm:$0xff] %v196
                %v198 = vld [vmem:[%s148 + $0x540] sm:$0xff]
                %199 = vst [vmem:[%s149 + $0xc0] sm:$0xff] %v198
                %v200 = vld [vmem:[%s148 + $0x548] sm:$0xff]
                %201 = vst [vmem:[%s149 + $0xc8] sm:$0xff] %v200
                %v202 = vld [vmem:[%s148 + $0x5b0] sm:$0xff]
                %203 = vst [vmem:[%s149 + $0xd0] sm:$0xff] %v202
                %v204 = vld [vmem:[%s148 + $0x5b8] sm:$0xff]
                %205 = vst [vmem:[%s149 + $0xd8] sm:$0xff] %v204
                %v206 = vld [vmem:[%s148 + $0x620] sm:$0xff]
                %207 = vst [vmem:[%s149 + $0xe0] sm:$0xff] %v206
                %v208 = vld [vmem:[%s148 + $0x628] sm:$0xff]
                %209 = vst [vmem:[%s149 + $0xe8] sm:$0xff] %v208
                %v210 = vld [vmem:[%s148 + $0x690] sm:$0xff]
                %211 = vst [vmem:[%s149 + $0xf0] sm:$0xff] %v210
                %v212 = vld [vmem:[%s148 + $0x698] sm:$0xff]
                %213 = vst [vmem:[%s149 + $0xf8] sm:$0xff] %v212
              $region37: #{hybrid_gnn_forward.6} parent=31 // loop_footer
                %s147 = sadd.s32 1, %s143
              $region38: #{hybrid_gnn_forward.6} parent=31 // loop_footer_branch
                %142 = sbr.rel target = $region34
              $region39: #{hybrid_gnn_forward.6} parent=31 // loop_exit
                _
            $region32: #{hybrid_gnn_forward.6} parent=27 // pred_fallthru
              _
            // Predicated region
            $region40: #{hybrid_gnn_forward.6} parent=27 // pred_check
              _
            $region41: #{hybrid_gnn_forward.6} parent=27 // pred_check_branch
              %215 = sbr.rel target = $region43
            $region42: #{hybrid_gnn_forward.6} parent=27 // pred_region
              _
            $region43: #{hybrid_gnn_forward.6} parent=27 // pred_fallthru
              _
          $region28: #{hybrid_gnn_forward.6} parent=23 // pred_fallthru
            _
          %216 = vnop
        $region24: #{hybrid_gnn_forward.6} parent=19 // pred_fallthru
          _
      $region20: #{hybrid_gnn_forward.6} parent=5 // pred_fallthru
        _
      %p217 = scmp.le.s32.totalorder 1, %s8
      %p218 = scmp.lt.s32.totalorder %s8, 8
      %p219 = pnand %p217, %p218
      %p220 = pneg %p219
      // Predicated region
      $region44: #{hybrid_gnn_forward.6} parent=5 // pred_check
        _
      $region45: #{hybrid_gnn_forward.6} parent=5 // pred_check_branch
        %222 = sbr.rel (%p219) target = $region47
      $region46: #{hybrid_gnn_forward.6} parent=5 // pred_region
        %s223 = ssub.s32 %s8, 1
        %s224 = sand.u32 %s59, 1
        %s225 = sand.u32 %s59, 1
        %s226 = smul.addr %s225, 256
        %s227 = scalar_lea.vmem [#allocation2], %s226
        // Predicated region
        $region48: #{hybrid_gnn_forward.6} parent=46 // pred_check
          %p228 = pneg %p72
        $region49: #{hybrid_gnn_forward.6} parent=46 // pred_check_branch
          %230 = sbr.rel (%p228) target = $region51
        $region50: #{hybrid_gnn_forward.6} parent=46 // pred_region
          _
        $region51: #{hybrid_gnn_forward.6} parent=46 // pred_fallthru
          _
        %s231 = smul.u32 6, %s17
        %p232 = scmp.lt.s32.totalorder %s231, 5
        %s233 = scalar_select %p232, %s231, 5
        %s234 = smul.addr %s233, 4
        %s235 = scalar_lea.vmem %s0, %s234
        %p236 = pneg %p46
        %p237 = pneg %p43
        %s238 = sand.u32 %s59, 1
        %s239 = sand.u32 %s59, 1
        %s240 = smul.addr %s239, 256
        %s241 = scalar_lea.vmem [#allocation2], %s240
        %p242 = pneg %p72
        %p243 = pneg %p69
        %p244 = pneg %p100
        %p245 = pneg %p97
        %s246 = sand.u32 %s87, 1
        %s247 = sand.u32 %s87, 1
        %s248 = smul.addr %s247, 192
        %s249 = scalar_lea.vmem [#allocation3], %s248
        %s250 = smul.u32 6, %s17
        %p251 = scmp.lt.s32.totalorder %s250, 5
        %s252 = scalar_select %p251, %s250, 5
        %s253 = smul.addr %s252, 4
        %s254 = scalar_lea.vmem %s0, %s253
        %s255 = smul.u32 6, %s17
        %s256 = smul.u32 4, %s18
        %s257 = smul.u32 6, %s17
        %s258 = smul.u32 4, %s18
        %v260 = vld [vmem:[%s254] sm:$0xf]
        %v261 = vld [vmem:[%s254 + $0x4] sm:$0xf]
        %v262 = vld [vmem:[%s254 + $0x8] sm:$0xf]
        %v263 = vld [vmem:[%s254 + $0xc] sm:$0xf]
        %v264 = vld [vmem:[%s254 + $0x10] sm:$0xf]
        %v265 = vld [vmem:[%s254 + $0x14] sm:$0xf]
        %v266 = vld [vmem:[%s227] sm:$0xff]
        %v267 = vld [vmem:[%s227 + $0x8] sm:$0xff]
        %v268 = vld [vmem:[%s227 + $0x10] sm:$0xff]
        %v269 = vld [vmem:[%s227 + $0x18] sm:$0xff]
        %v270 = vld [vmem:[%s227 + $0x20] sm:$0xff]
        %v271 = vld [vmem:[%s227 + $0x28] sm:$0xff]
        %v272 = vld [vmem:[%s227 + $0x30] sm:$0xff]
        %v273 = vld [vmem:[%s227 + $0x38] sm:$0xff]
        %v274 = vld [vmem:[%s227 + $0x40] sm:$0xff]
        %v275 = vld [vmem:[%s227 + $0x48] sm:$0xff]
        %v276 = vld [vmem:[%s227 + $0x50] sm:$0xff]
        %v277 = vld [vmem:[%s227 + $0x58] sm:$0xff]
        %v278 = vld [vmem:[%s227 + $0x60] sm:$0xff]
        %v279 = vld [vmem:[%s227 + $0x68] sm:$0xff]
        %v280 = vld [vmem:[%s227 + $0x70] sm:$0xff]
        %v281 = vld [vmem:[%s227 + $0x78] sm:$0xff]
        %v282 = vld [vmem:[%s227 + $0x80] sm:$0xff]
        %v283 = vld [vmem:[%s227 + $0x88] sm:$0xff]
        %v284 = vld [vmem:[%s227 + $0x90] sm:$0xff]
        %v285 = vld [vmem:[%s227 + $0x98] sm:$0xff]
        %v286 = vld [vmem:[%s227 + $0xa0] sm:$0xff]
        %v287 = vld [vmem:[%s227 + $0xa8] sm:$0xff]
        %v288 = vld [vmem:[%s227 + $0xb0] sm:$0xff]
        %v289 = vld [vmem:[%s227 + $0xb8] sm:$0xff]
        %v290 = vld [vmem:[%s227 + $0xc0] sm:$0xff]
        %v291 = vld [vmem:[%s227 + $0xc8] sm:$0xff]
        %v292 = vld [vmem:[%s227 + $0xd0] sm:$0xff]
        %v293 = vld [vmem:[%s227 + $0xd8] sm:$0xff]
        %v294 = vld [vmem:[%s227 + $0xe0] sm:$0xff]
        %v295 = vld [vmem:[%s227 + $0xe8] sm:$0xff]
        %v296 = vld [vmem:[%s227 + $0xf0] sm:$0xff]
        %v297 = vld [vmem:[%s227 + $0xf8] sm:$0xff]
        %v304 = vunpack.c.l.b16 %v260
        %v305 = vunpack.c.l.b16 %v261
        %v306 = vunpack.c.l.b16 %v262
        %v307 = vunpack.c.l.b16 %v263
        %v308 = vunpack.c.l.b16 %v264
        %v309 = vunpack.c.l.b16 %v265
        %v310 = vpack.c.b16 %v305, %v304
        %v311 = vpack.c.b16 %v307, %v306
        %v312 = vpack.c.b16 %v309, %v308
        %v348 = vunpack.c.l.b16 %v266
        %v349 = vunpack.c.h.b16 %v266
        %v350 = vunpack.c.l.b16 %v267
        %v351 = vunpack.c.h.b16 %v267
        %v352 = vunpack.c.l.b16 %v268
        %v353 = vunpack.c.h.b16 %v268
        %v354 = vunpack.c.l.b16 %v269
        %v355 = vunpack.c.h.b16 %v269
        %v356 = vunpack.c.l.b16 %v270
        %v357 = vunpack.c.h.b16 %v270
        %v358 = vunpack.c.l.b16 %v271
        %v359 = vunpack.c.h.b16 %v271
        %v360 = vunpack.c.l.b16 %v272
        %v361 = vunpack.c.h.b16 %v272
        %v362 = vunpack.c.l.b16 %v273
        %v363 = vunpack.c.h.b16 %v273
        %v364 = vunpack.c.l.b16 %v274
        %v365 = vunpack.c.h.b16 %v274
        %v366 = vunpack.c.l.b16 %v275
        %v367 = vunpack.c.h.b16 %v275
        %v368 = vunpack.c.l.b16 %v276
        %v369 = vunpack.c.h.b16 %v276
        %v370 = vunpack.c.l.b16 %v277
        %v371 = vunpack.c.h.b16 %v277
        %v372 = vunpack.c.l.b16 %v278
        %v373 = vunpack.c.h.b16 %v278
        %v374 = vunpack.c.l.b16 %v279
        %v375 = vunpack.c.h.b16 %v279
        %v376 = vunpack.c.l.b16 %v280
        %v377 = vunpack.c.h.b16 %v280
        %v378 = vunpack.c.l.b16 %v281
        %v379 = vunpack.c.h.b16 %v281
        %v380 = vunpack.c.l.b16 %v282
        %v381 = vunpack.c.h.b16 %v282
        %v382 = vunpack.c.l.b16 %v283
        %v383 = vunpack.c.h.b16 %v283
        %v384 = vunpack.c.l.b16 %v284
        %v385 = vunpack.c.h.b16 %v284
        %v386 = vunpack.c.l.b16 %v285
        %v387 = vunpack.c.h.b16 %v285
        %v388 = vunpack.c.l.b16 %v286
        %v389 = vunpack.c.h.b16 %v286
        %v390 = vunpack.c.l.b16 %v287
        %v391 = vunpack.c.h.b16 %v287
        %v392 = vunpack.c.l.b16 %v288
        %v393 = vunpack.c.h.b16 %v288
        %v394 = vunpack.c.l.b16 %v289
        %v395 = vunpack.c.h.b16 %v289
        %v396 = vunpack.c.l.b16 %v290
        %v397 = vunpack.c.h.b16 %v290
        %v398 = vunpack.c.l.b16 %v291
        %v399 = vunpack.c.h.b16 %v291
        %v400 = vunpack.c.l.b16 %v292
        %v401 = vunpack.c.h.b16 %v292
        %v402 = vunpack.c.l.b16 %v293
        %v403 = vunpack.c.h.b16 %v293
        %v404 = vunpack.c.l.b16 %v294
        %v405 = vunpack.c.h.b16 %v294
        %v406 = vunpack.c.l.b16 %v295
        %v407 = vunpack.c.h.b16 %v295
        %v408 = vunpack.c.l.b16 %v296
        %v409 = vunpack.c.h.b16 %v296
        %v410 = vunpack.c.l.b16 %v297
        %v411 = vunpack.c.h.b16 %v297
        %v412 = vpack.c.b16 %v352, %v348
        %v413 = vpack.c.b16 %v353, %v349
        %v414 = vpack.c.b16 %v354, %v350
        %v415 = vpack.c.b16 %v355, %v351
        %v416 = vpack.c.b16 %v360, %v356
        %v417 = vpack.c.b16 %v361, %v357
        %v418 = vpack.c.b16 %v362, %v358
        %v419 = vpack.c.b16 %v363, %v359
        %v420 = vpack.c.b16 %v368, %v364
        %v421 = vpack.c.b16 %v369, %v365
        %v422 = vpack.c.b16 %v370, %v366
        %v423 = vpack.c.b16 %v371, %v367
        %v424 = vpack.c.b16 %v376, %v372
        %v425 = vpack.c.b16 %v377, %v373
        %v426 = vpack.c.b16 %v378, %v374
        %v427 = vpack.c.b16 %v379, %v375
        %v428 = vpack.c.b16 %v384, %v380
        %v429 = vpack.c.b16 %v385, %v381
        %v430 = vpack.c.b16 %v386, %v382
        %v431 = vpack.c.b16 %v387, %v383
        %v432 = vpack.c.b16 %v392, %v388
        %v433 = vpack.c.b16 %v393, %v389
        %v434 = vpack.c.b16 %v394, %v390
        %v435 = vpack.c.b16 %v395, %v391
        %v436 = vpack.c.b16 %v400, %v396
        %v437 = vpack.c.b16 %v401, %v397
        %v438 = vpack.c.b16 %v402, %v398
        %v439 = vpack.c.b16 %v403, %v399
        %v440 = vpack.c.b16 %v408, %v404
        %v441 = vpack.c.b16 %v409, %v405
        %v442 = vpack.c.b16 %v410, %v406
        %v443 = vpack.c.b16 %v411, %v407
        %476 = vmatprep.subr.bf16.mxu0 %v413
        %477 = vmatpush1.bf16.msra.mxu0 %v412
        %478 = vmatprep.subr.bf16.mxu0 %v417
        %479 = vmatpush1.bf16.msra.mxu0 %v416
        %480 = vmatprep.subr.bf16.mxu0 %v421
        %481 = vmatpush1.bf16.msra.mxu0 %v420
        %482 = vmatprep.subr.bf16.mxu0 %v425
        %483 = vmatpush1.bf16.msra.mxu0 %v424
        %484 = vmatprep.subr.bf16.mxu0 %v429
        %485 = vmatpush1.bf16.msra.mxu0 %v428
        %486 = vmatprep.subr.bf16.mxu0 %v433
        %487 = vmatpush1.bf16.msra.mxu0 %v432
        %488 = vmatprep.subr.bf16.mxu0 %v437
        %489 = vmatpush1.bf16.msra.mxu0 %v436
        %490 = vmatprep.subr.bf16.mxu0 %v441
        %491 = vmatpush1.bf16.msra.mxu0 %v440
        %492 = vmatprep.subr.bf16.mxu0 0
        %493 = vmatpush1.bf16.msra.mxu0 0
        %494 = vmatprep.subr.bf16.mxu0 0
        %495 = vmatpush1.bf16.msra.mxu0 0
        %496 = vmatprep.subr.bf16.mxu0 0
        %497 = vmatpush1.bf16.msra.mxu0 0
        %498 = vmatprep.subr.bf16.mxu0 0
        %499 = vmatpush1.bf16.msra.mxu0 0
        %500 = vmatprep.subr.bf16.mxu0 0
        %501 = vmatpush1.bf16.msra.mxu0 0
        %502 = vmatprep.subr.bf16.mxu0 0
        %503 = vmatpush1.bf16.msra.mxu0 0
        %504 = vmatprep.subr.bf16.mxu0 0
        %505 = vmatpush1.bf16.msra.mxu0 0
        %506 = vmatprep.subr.bf16.mxu0 0
        %507 = vmatpush1.bf16.msra.mxu0 0
        %508 = vmatprep.mubr.bf16.mxu0 0
        %509 = vmatmul.mubr.bf16.gmra.mrb[0].mxu0 %v310
        %v510 = vpop.f32.mrb[0].mxu0
        %v511 = vadd.f32 0.0, %v510
        %v512 = vpop.f32.mrb[0].mxu0
        %v513 = vadd.f32 0.0, %v512
        %v514 = vpop.f32.mrb[0].mxu0
        %v515 = vadd.f32 0.0, %v514
        %v516 = vpop.f32.mrb[0].mxu0
        %v517 = vadd.f32 0.0, %v516
        %518 = vmatprep.mubr.bf16.mxu0 0
        %519 = vmatmul.mubr.bf16.gmra.mrb[0].mxu0 %v311
        %v520 = vpop.f32.mrb[0].mxu0
        %v521 = vadd.f32 0.0, %v520
        %v522 = vpop.f32.mrb[0].mxu0
        %v523 = vadd.f32 0.0, %v522
        %v524 = vpop.f32.mrb[0].mxu0
        %v525 = vadd.f32 0.0, %v524
        %v526 = vpop.f32.mrb[0].mxu0
        %v527 = vadd.f32 0.0, %v526
        %528 = vmatprep.mubr.bf16.mxu0 0
        %529 = vmatmul.mubr.bf16.gmra.mrb[0].mxu0 %v312
        %v530 = vpop.f32.mrb[0].mxu0
        %v531 = vadd.f32 0.0, %v530
        %v532 = vpop.f32.mrb[0].mxu0
        %v533 = vadd.f32 0.0, %v532
        %v534 = vpop.f32.mrb[0].mxu0
        %v535 = vadd.f32 0.0, %v534
        %v536 = vpop.f32.mrb[0].mxu0
        %v537 = vadd.f32 0.0, %v536
        %538 = vdwg.mxu0
        %539 = vmatprep.subr.bf16.mxu0 %v415
        %540 = vmatpush1.bf16.msra.mxu0 %v414
        %541 = vmatprep.subr.bf16.mxu0 %v419
        %542 = vmatpush1.bf16.msra.mxu0 %v418
        %543 = vmatprep.subr.bf16.mxu0 %v423
        %544 = vmatpush1.bf16.msra.mxu0 %v422
        %545 = vmatprep.subr.bf16.mxu0 %v427
        %546 = vmatpush1.bf16.msra.mxu0 %v426
        %547 = vmatprep.subr.bf16.mxu0 %v431
        %548 = vmatpush1.bf16.msra.mxu0 %v430
        %549 = vmatprep.subr.bf16.mxu0 %v435
        %550 = vmatpush1.bf16.msra.mxu0 %v434
        %551 = vmatprep.subr.bf16.mxu0 %v439
        %552 = vmatpush1.bf16.msra.mxu0 %v438
        %553 = vmatprep.subr.bf16.mxu0 %v443
        %554 = vmatpush1.bf16.msra.mxu0 %v442
        %555 = vmatprep.subr.bf16.mxu0 0
        %556 = vmatpush1.bf16.msra.mxu0 0
        %557 = vmatprep.subr.bf16.mxu0 0
        %558 = vmatpush1.bf16.msra.mxu0 0
        %559 = vmatprep.subr.bf16.mxu0 0
        %560 = vmatpush1.bf16.msra.mxu0 0
        %561 = vmatprep.subr.bf16.mxu0 0
        %562 = vmatpush1.bf16.msra.mxu0 0
        %563 = vmatprep.subr.bf16.mxu0 0
        %564 = vmatpush1.bf16.msra.mxu0 0
        %565 = vmatprep.subr.bf16.mxu0 0
        %566 = vmatpush1.bf16.msra.mxu0 0
        %567 = vmatprep.subr.bf16.mxu0 0
        %568 = vmatpush1.bf16.msra.mxu0 0
        %569 = vmatprep.subr.bf16.mxu0 0
        %570 = vmatpush1.bf16.msra.mxu0 0
        %571 = vmatprep.mubr.bf16.mxu0 0
        %572 = vmatmul.mubr.bf16.gmra.mrb[0].mxu0 %v310
        %v573 = vpop.f32.mrb[0].mxu0
        %v574 = vadd.f32 0.0, %v573
        %v575 = vpop.f32.mrb[0].mxu0
        %v576 = vadd.f32 0.0, %v575
        %v577 = vpop.f32.mrb[0].mxu0
        %v578 = vadd.f32 0.0, %v577
        %v579 = vpop.f32.mrb[0].mxu0
        %v580 = vadd.f32 0.0, %v579
        %581 = vmatprep.mubr.bf16.mxu0 0
        %582 = vmatmul.mubr.bf16.gmra.mrb[0].mxu0 %v311
        %v583 = vpop.f32.mrb[0].mxu0
        %v584 = vadd.f32 0.0, %v583
        %v585 = vpop.f32.mrb[0].mxu0
        %v586 = vadd.f32 0.0, %v585
        %v587 = vpop.f32.mrb[0].mxu0
        %v588 = vadd.f32 0.0, %v587
        %v589 = vpop.f32.mrb[0].mxu0
        %v590 = vadd.f32 0.0, %v589
        %591 = vmatprep.mubr.bf16.mxu0 0
        %592 = vmatmul.mubr.bf16.gmra.mrb[0].mxu0 %v312
        %v593 = vpop.f32.mrb[0].mxu0
        %v594 = vadd.f32 0.0, %v593
        %v595 = vpop.f32.mrb[0].mxu0
        %v596 = vadd.f32 0.0, %v595
        %v597 = vpop.f32.mrb[0].mxu0
        %v598 = vadd.f32 0.0, %v597
        %v599 = vpop.f32.mrb[0].mxu0
        %v600 = vadd.f32 0.0, %v599
        %601 = vdwg.mxu0
        %602 = vst [vmem:[%s249] sm:$0xff] %v511
        %603 = vst [vmem:[%s249 + $0x8] sm:$0xff] %v513
        %604 = vst [vmem:[%s249 + $0x10] sm:$0xff] %v574
        %605 = vst [vmem:[%s249 + $0x18] sm:$0xff] %v576
        %606 = vst [vmem:[%s249 + $0x20] sm:$0xff] %v515
        %607 = vst [vmem:[%s249 + $0x28] sm:$0xff] %v517
        %608 = vst [vmem:[%s249 + $0x30] sm:$0xff] %v578
        %609 = vst [vmem:[%s249 + $0x38] sm:$0xff] %v580
        %610 = vst [vmem:[%s249 + $0x40] sm:$0xff] %v521
        %611 = vst [vmem:[%s249 + $0x48] sm:$0xff] %v523
        %612 = vst [vmem:[%s249 + $0x50] sm:$0xff] %v584
        %613 = vst [vmem:[%s249 + $0x58] sm:$0xff] %v586
        %614 = vst [vmem:[%s249 + $0x60] sm:$0xff] %v525
        %615 = vst [vmem:[%s249 + $0x68] sm:$0xff] %v527
        %616 = vst [vmem:[%s249 + $0x70] sm:$0xff] %v588
        %617 = vst [vmem:[%s249 + $0x78] sm:$0xff] %v590
        %618 = vst [vmem:[%s249 + $0x80] sm:$0xff] %v531
        %619 = vst [vmem:[%s249 + $0x88] sm:$0xff] %v533
        %620 = vst [vmem:[%s249 + $0x90] sm:$0xff] %v594
        %621 = vst [vmem:[%s249 + $0x98] sm:$0xff] %v596
        %622 = vst [vmem:[%s249 + $0xa0] sm:$0xff] %v535
        %623 = vst [vmem:[%s249 + $0xa8] sm:$0xff] %v537
        %624 = vst [vmem:[%s249 + $0xb0] sm:$0xff] %v598
        %625 = vst [vmem:[%s249 + $0xb8] sm:$0xff] %v600
        %s626 = sand.u32 %s87, 1
        %s627 = sand.u32 %s87, 1
        %s628 = smul.addr %s627, 192
        %s629 = scalar_lea.vmem [#allocation3], %s628
        // Predicated region
        $region52: #{hybrid_gnn_forward.6} parent=46 // pred_check
          %p630 = pneg %p97
        $region53: #{hybrid_gnn_forward.6} parent=46 // pred_check_branch
          %632 = sbr.rel (%p630) target = $region55
        $region54: #{hybrid_gnn_forward.6} parent=46 // pred_region
          %s633 = smul.u32 6, %s17
          %s634 = smul.u32 4, %s18
          %s635 = smul.addr %s633, 28
          %s636 = sadd.s32 %s634, %s635
          %s637 = smul.addr %s636, 8
          %s638 = scalar_lea.vmem %s2, %s637
          // Predicated region
          $region56: #{hybrid_gnn_forward.6} parent=54 // pred_check
            _
          $region57: #{hybrid_gnn_forward.6} parent=54 // pred_check_branch
            %640 = sbr.rel (0) target = $region59
          $region58: #{hybrid_gnn_forward.6} parent=54 // pred_region
            // Predicated region
            $region60: #{hybrid_gnn_forward.6} parent=58 // pred_check
              _
            $region61: #{hybrid_gnn_forward.6} parent=58 // pred_check_branch
              %642 = sbr.rel (0) target = $region63
            $region62: #{hybrid_gnn_forward.6} parent=58 // pred_region
              loop: start=0, step=1, limit=1
              $region64: #{hybrid_gnn_forward.6} parent=62 // loop_pre_header
                _
              $region65: #{hybrid_gnn_forward.6} parent=62 // loop_header
                %s644 = sphi 0, %s648
                %p645 = scmp.ge.s32.totalorder %s644, 1
                %s649 = sphi %s629, %s629
                %s650 = sphi %s638, %s638
              $region66: #{hybrid_gnn_forward.6} parent=62 // loop_header_branch
                %647 = sbr.rel (%p645) target = $region70
              $region67: #{hybrid_gnn_forward.6} parent=62 // loop_body
                %v651 = vld [vmem:[%s649] sm:$0xff]
                %652 = vst [vmem:[%s650] sm:$0xff] %v651
                %v653 = vld [vmem:[%s649 + $0x8] sm:$0xff]
                %654 = vst [vmem:[%s650 + $0x8] sm:$0xff] %v653
                %v655 = vld [vmem:[%s649 + $0x10] sm:$0xff]
                %656 = vst [vmem:[%s650 + $0x10] sm:$0xff] %v655
                %v657 = vld [vmem:[%s649 + $0x18] sm:$0xff]
                %658 = vst [vmem:[%s650 + $0x18] sm:$0xff] %v657
                %v659 = vld [vmem:[%s649 + $0x20] sm:$0xff]
                %660 = vst [vmem:[%s650 + $0xe0] sm:$0xff] %v659
                %v661 = vld [vmem:[%s649 + $0x28] sm:$0xff]
                %662 = vst [vmem:[%s650 + $0xe8] sm:$0xff] %v661
                %v663 = vld [vmem:[%s649 + $0x30] sm:$0xff]
                %664 = vst [vmem:[%s650 + $0xf0] sm:$0xff] %v663
                %v665 = vld [vmem:[%s649 + $0x38] sm:$0xff]
                %666 = vst [vmem:[%s650 + $0xf8] sm:$0xff] %v665
                %v667 = vld [vmem:[%s649 + $0x40] sm:$0xff]
                %668 = vst [vmem:[%s650 + $0x1c0] sm:$0xff] %v667
                %v669 = vld [vmem:[%s649 + $0x48] sm:$0xff]
                %670 = vst [vmem:[%s650 + $0x1c8] sm:$0xff] %v669
                %v671 = vld [vmem:[%s649 + $0x50] sm:$0xff]
                %672 = vst [vmem:[%s650 + $0x1d0] sm:$0xff] %v671
                %v673 = vld [vmem:[%s649 + $0x58] sm:$0xff]
                %674 = vst [vmem:[%s650 + $0x1d8] sm:$0xff] %v673
                %v675 = vld [vmem:[%s649 + $0x60] sm:$0xff]
                %676 = vst [vmem:[%s650 + $0x2a0] sm:$0xff] %v675
                %v677 = vld [vmem:[%s649 + $0x68] sm:$0xff]
                %678 = vst [vmem:[%s650 + $0x2a8] sm:$0xff] %v677
                %v679 = vld [vmem:[%s649 + $0x70] sm:$0xff]
                %680 = vst [vmem:[%s650 + $0x2b0] sm:$0xff] %v679
                %v681 = vld [vmem:[%s649 + $0x78] sm:$0xff]
                %682 = vst [vmem:[%s650 + $0x2b8] sm:$0xff] %v681
                %v683 = vld [vmem:[%s649 + $0x80] sm:$0xff]
                %684 = vst [vmem:[%s650 + $0x380] sm:$0xff] %v683
                %v685 = vld [vmem:[%s649 + $0x88] sm:$0xff]
                %686 = vst [vmem:[%s650 + $0x388] sm:$0xff] %v685
                %v687 = vld [vmem:[%s649 + $0x90] sm:$0xff]
                %688 = vst [vmem:[%s650 + $0x390] sm:$0xff] %v687
                %v689 = vld [vmem:[%s649 + $0x98] sm:$0xff]
                %690 = vst [vmem:[%s650 + $0x398] sm:$0xff] %v689
                %v691 = vld [vmem:[%s649 + $0xa0] sm:$0xff]
                %692 = vst [vmem:[%s650 + $0x460] sm:$0xff] %v691
                %v693 = vld [vmem:[%s649 + $0xa8] sm:$0xff]
                %694 = vst [vmem:[%s650 + $0x468] sm:$0xff] %v693
                %v695 = vld [vmem:[%s649 + $0xb0] sm:$0xff]
                %696 = vst [vmem:[%s650 + $0x470] sm:$0xff] %v695
                %v697 = vld [vmem:[%s649 + $0xb8] sm:$0xff]
                %698 = vst [vmem:[%s650 + $0x478] sm:$0xff] %v697
              $region68: #{hybrid_gnn_forward.6} parent=62 // loop_footer
                %s648 = sadd.s32 1, %s644
              $region69: #{hybrid_gnn_forward.6} parent=62 // loop_footer_branch
                %643 = sbr.rel target = $region65
              $region70: #{hybrid_gnn_forward.6} parent=62 // loop_exit
                _
            $region63: #{hybrid_gnn_forward.6} parent=58 // pred_fallthru
              _
            // Predicated region
            $region71: #{hybrid_gnn_forward.6} parent=58 // pred_check
              _
            $region72: #{hybrid_gnn_forward.6} parent=58 // pred_check_branch
              %700 = sbr.rel target = $region74
            $region73: #{hybrid_gnn_forward.6} parent=58 // pred_region
              _
            $region74: #{hybrid_gnn_forward.6} parent=58 // pred_fallthru
              _
          $region59: #{hybrid_gnn_forward.6} parent=54 // pred_fallthru
            _
          %701 = vnop
        $region55: #{hybrid_gnn_forward.6} parent=46 // pred_fallthru
          _
      $region47: #{hybrid_gnn_forward.6} parent=5 // pred_fallthru
        _
      %p702 = scmp.le.s32.totalorder 2, %s8
      // Predicated region
      $region75: #{hybrid_gnn_forward.6} parent=5 // pred_check
        %p703 = pneg %p702
      $region76: #{hybrid_gnn_forward.6} parent=5 // pred_check_branch
        %705 = sbr.rel (%p703) target = $region78
      $region77: #{hybrid_gnn_forward.6} parent=5 // pred_region
        %s706 = ssub.s32 %s8, 2
        // Predicated region
        $region79: #{hybrid_gnn_forward.6} parent=77 // pred_check
          %p707 = pneg %p103
        $region80: #{hybrid_gnn_forward.6} parent=77 // pred_check_branch
          %709 = sbr.rel (%p707) target = $region82
        $region81: #{hybrid_gnn_forward.6} parent=77 // pred_region
          %s710 = sand.u32 %s88, 1
          %s711 = sand.u32 %s88, 1
          %s712 = smul.addr %s711, 192
          %s713 = scalar_lea.vmem [#allocation3], %s712
        $region82: #{hybrid_gnn_forward.6} parent=77 // pred_fallthru
          _
      $region78: #{hybrid_gnn_forward.6} parent=5 // pred_fallthru
        _
    $region6: #{hybrid_gnn_forward.6} parent=1 // loop_footer
      %s12 = sadd.s32 1, %s8
    $region7: #{hybrid_gnn_forward.6} parent=1 // loop_footer_branch
      %7 = sbr.rel target = $region3
    $region8: #{hybrid_gnn_forward.6} parent=1 // loop_exit
      _

// kernel: hybrid_gnn_forward.8
$region0: #{hybrid_gnn_forward.8}
  #allocation0 [shape = 'u32[]', space=smem, size = 0x4, offset = 0x4, fixed_abs, tag = 'smem constant byte address 0x4 - core index']
  #allocation1 [shape = 'u32[144,128]{1,0:T(1,128)}', space=vmem, size = 0x12000, scoped, tag = 'internal scratch']
  %s0 = inlined_call_operand.vmem [shape: s32[64,1], index: 0, kind: input, shape index: {}]
  %s1 = inlined_call_operand.vmem [shape: s32[1,64], index: 1, kind: input, shape index: {}]
  %s2 = inlined_call_operand.vmem [shape: f32[48,128], index: 2, kind: input, shape index: {}]
  %s3 = inlined_call_operand.vmem [shape: bf16[4,128,128], index: 3, kind: input, shape index: {}]
  %s4 = inlined_call_operand.vmem [shape: f32[4,1,128], index: 4, kind: input, shape index: {}]
  %s5 = inlined_call_operand.vmem [shape: f32[48,128], index: 5, kind: output, shape index: {}]
  %s6 = sld [smem:[#allocation0]]
  $region38: #{hybrid_gnn_forward.8} parent=0
    _
  %s8 = ssub.s32 1, %s6
  %s9 = scalar_select 0, %s8, %s6
  // Predicated region
  $region2: #{hybrid_gnn_forward.8} parent=0 // pred_check
    _
  $region3: #{hybrid_gnn_forward.8} parent=0 // pred_check_branch
    %11 = sbr.rel (0) target = $region5
  $region4: #{hybrid_gnn_forward.8} parent=0 // pred_region
    _
  $region5: #{hybrid_gnn_forward.8} parent=0 // pred_fallthru
    _
  // Predicated region
  $region6: #{hybrid_gnn_forward.8} parent=0 // pred_check
    _
  $region7: #{hybrid_gnn_forward.8} parent=0 // pred_check_branch
    %13 = sbr.rel (0) target = $region9
  $region8: #{hybrid_gnn_forward.8} parent=0 // pred_region
    _
  $region9: #{hybrid_gnn_forward.8} parent=0 // pred_fallthru
    _
  // Predicated region
  $region10: #{hybrid_gnn_forward.8} parent=0 // pred_check
    _
  $region11: #{hybrid_gnn_forward.8} parent=0 // pred_check_branch
    %15 = sbr.rel (0) target = $region13
  $region12: #{hybrid_gnn_forward.8} parent=0 // pred_region
    _
  $region13: #{hybrid_gnn_forward.8} parent=0 // pred_fallthru
    _
  // Predicated region
  $region14: #{hybrid_gnn_forward.8} parent=0 // pred_check
    _
  $region15: #{hybrid_gnn_forward.8} parent=0 // pred_check_branch
    %17 = sbr.rel (0) target = $region17
  $region16: #{hybrid_gnn_forward.8} parent=0 // pred_region
    _
  $region17: #{hybrid_gnn_forward.8} parent=0 // pred_fallthru
    _
  // Predicated region
  $region18: #{hybrid_gnn_forward.8} parent=0 // pred_check
    _
  $region19: #{hybrid_gnn_forward.8} parent=0 // pred_check_branch
    %19 = sbr.rel (0) target = $region21
  $region20: #{hybrid_gnn_forward.8} parent=0 // pred_region
    _
  $region21: #{hybrid_gnn_forward.8} parent=0 // pred_fallthru
    _
  %p21 = scmp.eq.s32.totalorder 0, 0
  // Predicated region
  $region22: #{hybrid_gnn_forward.8} parent=0 // pred_check
    %p22 = pneg %p21
  $region23: #{hybrid_gnn_forward.8} parent=0 // pred_check_branch
    %24 = sbr.rel (%p22) target = $region25
  $region24: #{hybrid_gnn_forward.8} parent=0 // pred_region
    %v25 = vld [vmem:[%s2] sm:$0xff]
    %v26 = vld [vmem:[%s2 + $0x8] sm:$0xff]
    %v27 = vld [vmem:[%s2 + $0x10] sm:$0xff]
    %v28 = vld [vmem:[%s2 + $0x18] sm:$0xff]
    %v29 = vld [vmem:[%s2 + $0x20] sm:$0xff]
    %v30 = vld [vmem:[%s2 + $0x28] sm:$0xff]
    %31 = vst [vmem:[%s5] sm:$0xff] %v25
    %32 = vst [vmem:[%s5 + $0x8] sm:$0xff] %v26
    %33 = vst [vmem:[%s5 + $0x10] sm:$0xff] %v27
    %34 = vst [vmem:[%s5 + $0x18] sm:$0xff] %v28
    %35 = vst [vmem:[%s5 + $0x20] sm:$0xff] %v29
    %36 = vst [vmem:[%s5 + $0x28] sm:$0xff] %v30
  $region25: #{hybrid_gnn_forward.8} parent=0 // pred_fallthru
    _
  %v37 = vlaneseq
  %v38 = vand.u32 %v37, 127
  %v39 = vld [vmem:[%s0] sm:$0xff]
  %v40 = vld [vmem:[%s0 + $0x8] sm:$0xff]
  %v41 = vld [vmem:[%s0 + $0x10] sm:$0xff]
  %v42 = vld [vmem:[%s0 + $0x18] sm:$0xff]
  %v43 = vld [vmem:[%s0 + $0x20] sm:$0xff]
  %v44 = vld [vmem:[%s0 + $0x28] sm:$0xff]
  %v45 = vld [vmem:[%s0 + $0x30] sm:$0xff]
  %v46 = vld [vmem:[%s0 + $0x38] sm:$0xff]
  %47 = vset.pattern.permute.xlu0 0
  %48 = vperm.xlu0 %47, %v39
  %v49 = vpop.permute.xlu0 %48
  %50 = vset.pattern.permute.xlu0 0
  %51 = vperm.xlu0 %50, %v40
  %v52 = vpop.permute.xlu0 %51
  %53 = vset.pattern.permute.xlu0 0
  %54 = vperm.xlu0 %53, %v41
  %v55 = vpop.permute.xlu0 %54
  %56 = vset.pattern.permute.xlu0 0
  %57 = vperm.xlu0 %56, %v42
  %v58 = vpop.permute.xlu0 %57
  %59 = vset.pattern.permute.xlu0 0
  %60 = vperm.xlu0 %59, %v43
  %v61 = vpop.permute.xlu0 %60
  %62 = vset.pattern.permute.xlu0 0
  %63 = vperm.xlu0 %62, %v44
  %v64 = vpop.permute.xlu0 %63
  %65 = vset.pattern.permute.xlu0 0
  %66 = vperm.xlu0 %65, %v45
  %v67 = vpop.permute.xlu0 %66
  %68 = vset.pattern.permute.xlu0 0
  %69 = vperm.xlu0 %68, %v46
  %v70 = vpop.permute.xlu0 %69
  %vm71 = vcmp.eq.s32.totalorder %v38, %v49
  %vm72 = vcmp.eq.s32.totalorder %v38, %v52
  %vm73 = vcmp.eq.s32.totalorder %v38, %v55
  %vm74 = vcmp.eq.s32.totalorder %v38, %v58
  %vm75 = vcmp.eq.s32.totalorder %v38, %v61
  %vm76 = vcmp.eq.s32.totalorder %v38, %v64
  %vm77 = vcmp.eq.s32.totalorder %v38, %v67
  %vm78 = vcmp.eq.s32.totalorder %v38, %v70
  %v79 = vsel %vm71, 1, 0
  %v80 = vsel %vm72, 1, 0
  %v81 = vsel %vm73, 1, 0
  %v82 = vsel %vm74, 1, 0
  %v83 = vsel %vm75, 1, 0
  %v84 = vsel %vm76, 1, 0
  %v85 = vsel %vm77, 1, 0
  %v86 = vsel %vm78, 1, 0
  %v87 = vcvt.s32.f32 %v79
  %v88 = vcvt.s32.f32 %v80
  %v89 = vcvt.s32.f32 %v81
  %v90 = vcvt.s32.f32 %v82
  %v91 = vcvt.s32.f32 %v83
  %v92 = vcvt.s32.f32 %v84
  %v93 = vcvt.s32.f32 %v85
  %v94 = vcvt.s32.f32 %v86
  %v95 = vlaneseq
  %v96 = vshrl.u32 %v95, 7
  %v97 = vadd.s32 %v96, 8
  %v98 = vadd.s32 %v96, 16
  %v99 = vadd.s32 %v96, 24
  %v100 = vadd.s32 %v96, 32
  %v101 = vadd.s32 %v96, 40
  %v102 = vld [vmem:[%s1] sm:$0x1]
  %v103 = vlaneseq
  %v104 = vshrl.u32 %v103, 7
  %v105 = vsub.s32 0, %v104
  %v106 = vrot.slane %v102, %v105
  %vm107 = vcmp.eq.s32.totalorder %v96, %v106
  %vm108 = vcmp.eq.s32.totalorder %v97, %v106
  %vm109 = vcmp.eq.s32.totalorder %v98, %v106
  %vm110 = vcmp.eq.s32.totalorder %v99, %v106
  %vm111 = vcmp.eq.s32.totalorder %v100, %v106
  %vm112 = vcmp.eq.s32.totalorder %v101, %v106
  %v113 = vsel %vm107, 1, 0
  %v114 = vsel %vm108, 1, 0
  %v115 = vsel %vm109, 1, 0
  %v116 = vsel %vm110, 1, 0
  %v117 = vsel %vm111, 1, 0
  %v118 = vsel %vm112, 1, 0
  %v119 = vcvt.s32.f32 %v113
  %v120 = vcvt.s32.f32 %v114
  %v121 = vcvt.s32.f32 %v115
  %v122 = vcvt.s32.f32 %v116
  %v123 = vcvt.s32.f32 %v117
  %v124 = vcvt.s32.f32 %v118
  %v125 = vld [vmem:[%s2] sm:$0xff]
  %v126 = vld [vmem:[%s2 + $0x8] sm:$0xff]
  %v127 = vld [vmem:[%s2 + $0x10] sm:$0xff]
  %v128 = vld [vmem:[%s2 + $0x18] sm:$0xff]
  %v129 = vld [vmem:[%s2 + $0x20] sm:$0xff]
  %v130 = vld [vmem:[%s2 + $0x28] sm:$0xff]
  %vm131 = vcmask 392192
  %v133 = vsel %vm131, %v87, 0
  %v136 = vsel %vm131, %v88, 0
  %v139 = vsel %vm131, %v89, 0
  %v142 = vsel %vm131, %v90, 0
  %v145 = vsel %vm131, %v91, 0
  %v148 = vsel %vm131, %v92, 0
  %v151 = vsel %vm131, %v93, 0
  %v154 = vsel %vm131, %v94, 0
  %156 = vmatprep.subr.mxu0 0.0
  %157 = vmatpush1.msra.mxu0 %v125
  %158 = vmatprep.subr.mxu0 0.0
  %159 = vmatpush1.msra.mxu0 %v126
  %160 = vmatprep.subr.mxu0 0.0
  %161 = vmatpush1.msra.mxu0 %v127
  %162 = vmatprep.subr.mxu0 0.0
  %163 = vmatpush1.msra.mxu0 %v128
  %164 = vmatprep.subr.mxu0 0.0
  %165 = vmatpush1.msra.mxu0 %v129
  %166 = vmatprep.subr.mxu0 0.0
  %167 = vmatpush1.msra.mxu0 %v130
  %168 = vmatprep.subr.mxu0 0.0
  %169 = vmatpush1.msra.mxu0 0.0
  %170 = vmatprep.subr.mxu0 0.0
  %171 = vmatpush1.msra.mxu0 0.0
  %172 = vmatprep.subr.mxu0 0.0
  %173 = vmatpush1.msra.mxu0 0.0
  %174 = vmatprep.subr.mxu0 0.0
  %175 = vmatpush1.msra.mxu0 0.0
  %176 = vmatprep.subr.mxu0 0.0
  %177 = vmatpush1.msra.mxu0 0.0
  %178 = vmatprep.subr.mxu0 0.0
  %179 = vmatpush1.msra.mxu0 0.0
  %180 = vmatprep.subr.mxu0 0.0
  %181 = vmatpush1.msra.mxu0 0.0
  %182 = vmatprep.subr.mxu0 0.0
  %183 = vmatpush1.msra.mxu0 0.0
  %184 = vmatprep.subr.mxu0 0.0
  %185 = vmatpush1.msra.mxu0 0.0
  %186 = vmatprep.subr.mxu0 0.0
  %187 = vmatpush1.msra.mxu0 0.0
  %188 = vmatprep.subr.mxu0 0.0
  %189 = vmatpush1.msra.mxu0 0.0
  %190 = vmatprep.subr.mxu0 0.0
  %191 = vmatpush1.msra.mxu0 0.0
  %192 = vmatprep.subr.mxu0 0.0
  %193 = vmatpush1.msra.mxu0 0.0
  %194 = vmatprep.subr.mxu0 0.0
  %195 = vmatpush1.msra.mxu0 0.0
  %196 = vmatprep.subr.mxu0 0.0
  %197 = vmatpush1.msra.mxu0 0.0
  %198 = vmatprep.subr.mxu0 0.0
  %199 = vmatpush1.msra.mxu0 0.0
  %200 = vmatprep.subr.mxu0 0.0
  %201 = vmatpush1.msra.mxu0 0.0
  %202 = vmatprep.subr.mxu0 0.0
  %203 = vmatpush1.msra.mxu0 0.0
  %204 = vmatprep.subr.mxu0 0.0
  %205 = vmatpush1.msra.mxu0 0.0
  %206 = vmatprep.subr.mxu0 0.0
  %207 = vmatpush1.msra.mxu0 0.0
  %208 = vmatprep.subr.mxu0 0.0
  %209 = vmatpush1.msra.mxu0 0.0
  %210 = vmatprep.subr.mxu0 0.0
  %211 = vmatpush1.msra.mxu0 0.0
  %212 = vmatprep.subr.mxu0 0.0
  %213 = vmatpush1.msra.mxu0 0.0
  %214 = vmatprep.subr.mxu0 0.0
  %215 = vmatpush1.msra.mxu0 0.0
  %216 = vmatprep.subr.mxu0 0.0
  %217 = vmatpush1.msra.mxu0 0.0
  %218 = vmatprep.subr.mxu0 0.0
  %219 = vmatpush1.msra.mxu0 0.0
  %220 = vmatprep.mubr.f32.mxu0 0.0
  %221 = vmatmul.mubr.f32.gmra.mrb[0].mxu0 %v133
  %v222 = vpop.f32.mrb[0].mxu0
  %v223 = vadd.f32 0.0, %v222
  %v224 = vpop.f32.mrb[0].mxu0
  %225 = vmatprep.mubr.f32.mxu0 0.0
  %226 = vmatmul.mubr.f32.gmra.mrb[0].mxu0 %v136
  %v227 = vpop.f32.mrb[0].mxu0
  %v228 = vadd.f32 0.0, %v227
  %v229 = vpop.f32.mrb[0].mxu0
  %230 = vmatprep.mubr.f32.mxu0 0.0
  %231 = vmatmul.mubr.f32.gmra.mrb[0].mxu0 %v139
  %v232 = vpop.f32.mrb[0].mxu0
  %v233 = vadd.f32 0.0, %v232
  %v234 = vpop.f32.mrb[0].mxu0
  %235 = vmatprep.mubr.f32.mxu0 0.0
  %236 = vmatmul.mubr.f32.gmra.mrb[0].mxu0 %v142
  %v237 = vpop.f32.mrb[0].mxu0
  %v238 = vadd.f32 0.0, %v237
  %v239 = vpop.f32.mrb[0].mxu0
  %240 = vmatprep.mubr.f32.mxu0 0.0
  %241 = vmatmul.mubr.f32.gmra.mrb[0].mxu0 %v145
  %v242 = vpop.f32.mrb[0].mxu0
  %v243 = vadd.f32 0.0, %v242
  %v244 = vpop.f32.mrb[0].mxu0
  %245 = vmatprep.mubr.f32.mxu0 0.0
  %246 = vmatmul.mubr.f32.gmra.mrb[0].mxu0 %v148
  %v247 = vpop.f32.mrb[0].mxu0
  %v248 = vadd.f32 0.0, %v247
  %v249 = vpop.f32.mrb[0].mxu0
  %250 = vmatprep.mubr.f32.mxu0 0.0
  %251 = vmatmul.mubr.f32.gmra.mrb[0].mxu0 %v151
  %v252 = vpop.f32.mrb[0].mxu0
  %v253 = vadd.f32 0.0, %v252
  %v254 = vpop.f32.mrb[0].mxu0
  %255 = vmatprep.mubr.f32.mxu0 0.0
  %256 = vmatmul.mubr.f32.gmra.mrb[0].mxu0 %v154
  %v257 = vpop.f32.mrb[0].mxu0
  %v258 = vadd.f32 0.0, %v257
  %v259 = vpop.f32.mrb[0].mxu0
  %260 = vdwg.mxu0
  %v261 = vld [vmem:[%s5] sm:$0xff]
  %v262 = vld [vmem:[%s5 + $0x8] sm:$0xff]
  %v263 = vld [vmem:[%s5 + $0x10] sm:$0xff]
  %v264 = vld [vmem:[%s5 + $0x18] sm:$0xff]
  %v265 = vld [vmem:[%s5 + $0x20] sm:$0xff]
  %v266 = vld [vmem:[%s5 + $0x28] sm:$0xff]
  %vm267 = vcmask 523264
  %v269 = vsel %vm267, %v119, 0
  %v272 = vsel %vm267, %v120, 0
  %v275 = vsel %vm267, %v121, 0
  %v278 = vsel %vm267, %v122, 0
  %v281 = vsel %vm267, %v123, 0
  %v284 = vsel %vm267, %v124, 0
  %286 = vmatprep.subr.mxu0 0.0
  %287 = vmatpush1.msra.mxu0 %v223
  %288 = vmatprep.subr.mxu0 0.0
  %289 = vmatpush1.msra.mxu0 %v228
  %290 = vmatprep.subr.mxu0 0.0
  %291 = vmatpush1.msra.mxu0 %v233
  %292 = vmatprep.subr.mxu0 0.0
  %293 = vmatpush1.msra.mxu0 %v238
  %294 = vmatprep.subr.mxu0 0.0
  %295 = vmatpush1.msra.mxu0 %v243
  %296 = vmatprep.subr.mxu0 0.0
  %297 = vmatpush1.msra.mxu0 %v248
  %298 = vmatprep.subr.mxu0 0.0
  %299 = vmatpush1.msra.mxu0 %v253
  %300 = vmatprep.subr.mxu0 0.0
  %301 = vmatpush1.msra.mxu0 %v258
  %302 = vmatprep.subr.mxu0 0.0
  %303 = vmatpush1.msra.mxu0 0.0
  %304 = vmatprep.subr.mxu0 0.0
  %305 = vmatpush1.msra.mxu0 0.0
  %306 = vmatprep.subr.mxu0 0.0
  %307 = vmatpush1.msra.mxu0 0.0
  %308 = vmatprep.subr.mxu0 0.0
  %309 = vmatpush1.msra.mxu0 0.0
  %310 = vmatprep.subr.mxu0 0.0
  %311 = vmatpush1.msra.mxu0 0.0
  %312 = vmatprep.subr.mxu0 0.0
  %313 = vmatpush1.msra.mxu0 0.0
  %314 = vmatprep.subr.mxu0 0.0
  %315 = vmatpush1.msra.mxu0 0.0
  %316 = vmatprep.subr.mxu0 0.0
  %317 = vmatpush1.msra.mxu0 0.0
  %318 = vmatprep.subr.mxu0 0.0
  %319 = vmatpush1.msra.mxu0 0.0
  %320 = vmatprep.subr.mxu0 0.0
  %321 = vmatpush1.msra.mxu0 0.0
  %322 = vmatprep.subr.mxu0 0.0
  %323 = vmatpush1.msra.mxu0 0.0
  %324 = vmatprep.subr.mxu0 0.0
  %325 = vmatpush1.msra.mxu0 0.0
  %326 = vmatprep.subr.mxu0 0.0
  %327 = vmatpush1.msra.mxu0 0.0
  %328 = vmatprep.subr.mxu0 0.0
  %329 = vmatpush1.msra.mxu0 0.0
  %330 = vmatprep.subr.mxu0 0.0
  %331 = vmatpush1.msra.mxu0 0.0
  %332 = vmatprep.subr.mxu0 0.0
  %333 = vmatpush1.msra.mxu0 0.0
  %334 = vmatprep.subr.mxu0 0.0
  %335 = vmatpush1.msra.mxu0 0.0
  %336 = vmatprep.subr.mxu0 0.0
  %337 = vmatpush1.msra.mxu0 0.0
  %338 = vmatprep.subr.mxu0 0.0
  %339 = vmatpush1.msra.mxu0 0.0
  %340 = vmatprep.subr.mxu0 0.0
  %341 = vmatpush1.msra.mxu0 0.0
  %342 = vmatprep.subr.mxu0 0.0
  %343 = vmatpush1.msra.mxu0 0.0
  %344 = vmatprep.subr.mxu0 0.0
  %345 = vmatpush1.msra.mxu0 0.0
  %346 = vmatprep.subr.mxu0 0.0
  %347 = vmatpush1.msra.mxu0 0.0
  %348 = vmatprep.subr.mxu0 0.0
  %349 = vmatpush1.msra.mxu0 0.0
  %350 = vmatprep.mubr.f32.mxu0 0.0
  %351 = vmatmul.mubr.f32.gmra.mrb[0].mxu0 %v269
  %v352 = vpop.f32.mrb[0].mxu0
  %v353 = vadd.f32 0.0, %v352
  %v354 = vpop.f32.mrb[0].mxu0
  %355 = vmatprep.mubr.f32.mxu0 0.0
  %356 = vmatmul.mubr.f32.gmra.mrb[0].mxu0 %v272
  %v357 = vpop.f32.mrb[0].mxu0
  %v358 = vadd.f32 0.0, %v357
  %v359 = vpop.f32.mrb[0].mxu0
  %360 = vmatprep.mubr.f32.mxu0 0.0
  %361 = vmatmul.mubr.f32.gmra.mrb[0].mxu0 %v275
  %v362 = vpop.f32.mrb[0].mxu0
  %v363 = vadd.f32 0.0, %v362
  %v364 = vpop.f32.mrb[0].mxu0
  %365 = vmatprep.mubr.f32.mxu0 0.0
  %366 = vmatmul.mubr.f32.gmra.mrb[0].mxu0 %v278
  %v367 = vpop.f32.mrb[0].mxu0
  %v368 = vadd.f32 0.0, %v367
  %v369 = vpop.f32.mrb[0].mxu0
  %370 = vmatprep.mubr.f32.mxu0 0.0
  %371 = vmatmul.mubr.f32.gmra.mrb[0].mxu0 %v281
  %v372 = vpop.f32.mrb[0].mxu0
  %v373 = vadd.f32 0.0, %v372
  %v374 = vpop.f32.mrb[0].mxu0
  %375 = vmatprep.mubr.f32.mxu0 0.0
  %376 = vmatmul.mubr.f32.gmra.mrb[0].mxu0 %v284
  %v377 = vpop.f32.mrb[0].mxu0
  %v378 = vadd.f32 0.0, %v377
  %v379 = vpop.f32.mrb[0].mxu0
  %380 = vdwg.mxu0
  %v381 = vadd.f32 %v261, %v353
  %v382 = vadd.f32 %v262, %v358
  %v383 = vadd.f32 %v263, %v363
  %v384 = vadd.f32 %v264, %v368
  %v385 = vadd.f32 %v265, %v373
  %v386 = vadd.f32 %v266, %v378
  %387 = vst [vmem:[%s5] sm:$0xff] %v381
  %388 = vst [vmem:[%s5 + $0x8] sm:$0xff] %v382
  %389 = vst [vmem:[%s5 + $0x10] sm:$0xff] %v383
  %390 = vst [vmem:[%s5 + $0x18] sm:$0xff] %v384
  %391 = vst [vmem:[%s5 + $0x20] sm:$0xff] %v385
  %392 = vst [vmem:[%s5 + $0x28] sm:$0xff] %v386
  // Predicated region
  $region26: #{hybrid_gnn_forward.8} parent=0 // pred_check
    %p393 = pneg %p21
  $region27: #{hybrid_gnn_forward.8} parent=0 // pred_check_branch
    %395 = sbr.rel (%p393) target = $region29
  $region28: #{hybrid_gnn_forward.8} parent=0 // pred_region
    %v396 = vld [vmem:[%s5] sm:$0xff]
    %v397 = vld [vmem:[%s5 + $0x8] sm:$0xff]
    %v398 = vld [vmem:[%s5 + $0x10] sm:$0xff]
    %v399 = vld [vmem:[%s5 + $0x18] sm:$0xff]
    %v400 = vld [vmem:[%s5 + $0x20] sm:$0xff]
    %v401 = vld [vmem:[%s5 + $0x28] sm:$0xff]
    %v402 = vpack.c.bf16 %v397, %v396
    %v403 = vpack.c.bf16 %v399, %v398
    %v404 = vpack.c.bf16 %v401, %v400
    %v405 = vld [vmem:[%s3] sm:$0xf]
    %v406 = vld [vmem:[%s3 + $0x4] sm:$0xf]
    %v407 = vld [vmem:[%s3 + $0x8] sm:$0xf]
    %v408 = vld [vmem:[%s3 + $0xc] sm:$0xf]
    %v409 = vld [vmem:[%s3 + $0x10] sm:$0xf]
    %v410 = vld [vmem:[%s3 + $0x14] sm:$0xf]
    %v411 = vld [vmem:[%s3 + $0x18] sm:$0xf]
    %v412 = vld [vmem:[%s3 + $0x1c] sm:$0xf]
    %v413 = vld [vmem:[%s3 + $0x20] sm:$0xf]
    %v414 = vld [vmem:[%s3 + $0x24] sm:$0xf]
    %v415 = vld [vmem:[%s3 + $0x28] sm:$0xf]
    %v416 = vld [vmem:[%s3 + $0x2c] sm:$0xf]
    %v417 = vld [vmem:[%s3 + $0x30] sm:$0xf]
    %v418 = vld [vmem:[%s3 + $0x34] sm:$0xf]
    %v419 = vld [vmem:[%s3 + $0x38] sm:$0xf]
    %v420 = vld [vmem:[%s3 + $0x3c] sm:$0xf]
    %v421 = vld [vmem:[%s4] sm:$0x1]
    %v423 = vlaneseq
    %v424 = vshrl.u32 %v423, 7
    %v425 = vsub.s32 0, %v424
    %v426 = vrot.slane %v421, %v425
    %v444 = vunpack.c.l.b16 %v405
    %v445 = vunpack.c.l.b16 %v406
    %v446 = vunpack.c.l.b16 %v407
    %v447 = vunpack.c.l.b16 %v408
    %v448 = vunpack.c.l.b16 %v409
    %v449 = vunpack.c.l.b16 %v410
    %v450 = vunpack.c.l.b16 %v411
    %v451 = vunpack.c.l.b16 %v412
    %v452 = vunpack.c.l.b16 %v413
    %v453 = vunpack.c.l.b16 %v414
    %v454 = vunpack.c.l.b16 %v415
    %v455 = vunpack.c.l.b16 %v416
    %v456 = vunpack.c.l.b16 %v417
    %v457 = vunpack.c.l.b16 %v418
    %v458 = vunpack.c.l.b16 %v419
    %v459 = vunpack.c.l.b16 %v420
    %v460 = vpack.c.b16 %v445, %v444
    %v461 = vpack.c.b16 %v447, %v446
    %v462 = vpack.c.b16 %v449, %v448
    %v463 = vpack.c.b16 %v451, %v450
    %v464 = vpack.c.b16 %v453, %v452
    %v465 = vpack.c.b16 %v455, %v454
    %v466 = vpack.c.b16 %v457, %v456
    %v467 = vpack.c.b16 %v459, %v458
    %476 = vmatprep.subr.bf16.mxu0 0
    %477 = vmatpush1.bf16.msra.mxu0 %v460
    %478 = vmatprep.subr.bf16.mxu0 0
    %479 = vmatpush1.bf16.msra.mxu0 %v461
    %480 = vmatprep.subr.bf16.mxu0 0
    %481 = vmatpush1.bf16.msra.mxu0 %v462
    %482 = vmatprep.subr.bf16.mxu0 0
    %483 = vmatpush1.bf16.msra.mxu0 %v463
    %484 = vmatprep.subr.bf16.mxu0 0
    %485 = vmatpush1.bf16.msra.mxu0 %v464
    %486 = vmatprep.subr.bf16.mxu0 0
    %487 = vmatpush1.bf16.msra.mxu0 %v465
    %488 = vmatprep.subr.bf16.mxu0 0
    %489 = vmatpush1.bf16.msra.mxu0 %v466
    %490 = vmatprep.subr.bf16.mxu0 0
    %491 = vmatpush1.bf16.msra.mxu0 %v467
    %492 = vmatprep.subr.bf16.mxu0 0
    %493 = vmatpush1.bf16.msra.mxu0 0
    %494 = vmatprep.subr.bf16.mxu0 0
    %495 = vmatpush1.bf16.msra.mxu0 0
    %496 = vmatprep.subr.bf16.mxu0 0
    %497 = vmatpush1.bf16.msra.mxu0 0
    %498 = vmatprep.subr.bf16.mxu0 0
    %499 = vmatpush1.bf16.msra.mxu0 0
    %500 = vmatprep.subr.bf16.mxu0 0
    %501 = vmatpush1.bf16.msra.mxu0 0
    %502 = vmatprep.subr.bf16.mxu0 0
    %503 = vmatpush1.bf16.msra.mxu0 0
    %504 = vmatprep.subr.bf16.mxu0 0
    %505 = vmatpush1.bf16.msra.mxu0 0
    %506 = vmatprep.subr.bf16.mxu0 0
    %507 = vmatpush1.bf16.msra.mxu0 0
    %508 = vmatprep.mubr.bf16.mxu0 0
    %509 = vmatmul.mubr.bf16.gmra.mrb[0].mxu0 %v402
    %v510 = vpop.f32.mrb[0].mxu0
    %v511 = vadd.f32 %v426, %v510
    %v512 = vpop.f32.mrb[0].mxu0
    %v513 = vpop.f32.mrb[0].mxu0
    %v514 = vadd.f32 %v426, %v513
    %v515 = vpop.f32.mrb[0].mxu0
    %516 = vmatprep.mubr.bf16.mxu0 0
    %517 = vmatmul.mubr.bf16.gmra.mrb[0].mxu0 %v403
    %v518 = vpop.f32.mrb[0].mxu0
    %v519 = vadd.f32 %v426, %v518
    %v520 = vpop.f32.mrb[0].mxu0
    %v521 = vpop.f32.mrb[0].mxu0
    %v522 = vadd.f32 %v426, %v521
    %v523 = vpop.f32.mrb[0].mxu0
    %524 = vmatprep.mubr.bf16.mxu0 0
    %525 = vmatmul.mubr.bf16.gmra.mrb[0].mxu0 %v404
    %v526 = vpop.f32.mrb[0].mxu0
    %v527 = vadd.f32 %v426, %v526
    %v528 = vpop.f32.mrb[0].mxu0
    %v529 = vpop.f32.mrb[0].mxu0
    %v530 = vadd.f32 %v426, %v529
    %v531 = vpop.f32.mrb[0].mxu0
    %532 = vdwg.mxu0
    %v533 = vmax.f32 %v511, 0.0
    %v534 = vmax.f32 %v514, 0.0
    %v535 = vmax.f32 %v519, 0.0
    %v536 = vmax.f32 %v522, 0.0
    %v537 = vmax.f32 %v527, 0.0
    %v538 = vmax.f32 %v530, 0.0
    %v539 = vpack.c.bf16 %v534, %v533
    %v540 = vpack.c.bf16 %v536, %v535
    %v541 = vpack.c.bf16 %v538, %v537
    %s542 = scalar_lea.vmem %s3, 64
    %v543 = vld [vmem:[%s542] sm:$0xf]
    %v544 = vld [vmem:[%s542 + $0x4] sm:$0xf]
    %v545 = vld [vmem:[%s542 + $0x8] sm:$0xf]
    %v546 = vld [vmem:[%s542 + $0xc] sm:$0xf]
    %v547 = vld [vmem:[%s542 + $0x10] sm:$0xf]
    %v548 = vld [vmem:[%s542 + $0x14] sm:$0xf]
    %v549 = vld [vmem:[%s542 + $0x18] sm:$0xf]
    %v550 = vld [vmem:[%s542 + $0x1c] sm:$0xf]
    %v551 = vld [vmem:[%s542 + $0x20] sm:$0xf]
    %v552 = vld [vmem:[%s542 + $0x24] sm:$0xf]
    %v553 = vld [vmem:[%s542 + $0x28] sm:$0xf]
    %v554 = vld [vmem:[%s542 + $0x2c] sm:$0xf]
    %v555 = vld [vmem:[%s542 + $0x30] sm:$0xf]
    %v556 = vld [vmem:[%s542 + $0x34] sm:$0xf]
    %v557 = vld [vmem:[%s542 + $0x38] sm:$0xf]
    %v558 = vld [vmem:[%s542 + $0x3c] sm:$0xf]
    %s559 = scalar_lea.vmem %s4, 1
    %v560 = vld [vmem:[%s559] sm:$0x1]
    %v562 = vlaneseq
    %v563 = vshrl.u32 %v562, 7
    %v564 = vsub.s32 0, %v563
    %v565 = vrot.slane %v560, %v564
    %v583 = vunpack.c.l.b16 %v543
    %v584 = vunpack.c.l.b16 %v544
    %v585 = vunpack.c.l.b16 %v545
    %v586 = vunpack.c.l.b16 %v546
    %v587 = vunpack.c.l.b16 %v547
    %v588 = vunpack.c.l.b16 %v548
    %v589 = vunpack.c.l.b16 %v549
    %v590 = vunpack.c.l.b16 %v550
    %v591 = vunpack.c.l.b16 %v551
    %v592 = vunpack.c.l.b16 %v552
    %v593 = vunpack.c.l.b16 %v553
    %v594 = vunpack.c.l.b16 %v554
    %v595 = vunpack.c.l.b16 %v555
    %v596 = vunpack.c.l.b16 %v556
    %v597 = vunpack.c.l.b16 %v557
    %v598 = vunpack.c.l.b16 %v558
    %v599 = vpack.c.b16 %v584, %v583
    %v600 = vpack.c.b16 %v586, %v585
    %v601 = vpack.c.b16 %v588, %v587
    %v602 = vpack.c.b16 %v590, %v589
    %v603 = vpack.c.b16 %v592, %v591
    %v604 = vpack.c.b16 %v594, %v593
    %v605 = vpack.c.b16 %v596, %v595
    %v606 = vpack.c.b16 %v598, %v597
    %615 = vmatprep.subr.bf16.mxu0 0
    %616 = vmatpush1.bf16.msra.mxu0 %v599
    %617 = vmatprep.subr.bf16.mxu0 0
    %618 = vmatpush1.bf16.msra.mxu0 %v600
    %619 = vmatprep.subr.bf16.mxu0 0
    %620 = vmatpush1.bf16.msra.mxu0 %v601
    %621 = vmatprep.subr.bf16.mxu0 0
    %622 = vmatpush1.bf16.msra.mxu0 %v602
    %623 = vmatprep.subr.bf16.mxu0 0
    %624 = vmatpush1.bf16.msra.mxu0 %v603
    %625 = vmatprep.subr.bf16.mxu0 0
    %626 = vmatpush1.bf16.msra.mxu0 %v604
    %627 = vmatprep.subr.bf16.mxu0 0
    %628 = vmatpush1.bf16.msra.mxu0 %v605
    %629 = vmatprep.subr.bf16.mxu0 0
    %630 = vmatpush1.bf16.msra.mxu0 %v606
    %631 = vmatprep.subr.bf16.mxu0 0
    %632 = vmatpush1.bf16.msra.mxu0 0
    %633 = vmatprep.subr.bf16.mxu0 0
    %634 = vmatpush1.bf16.msra.mxu0 0
    %635 = vmatprep.subr.bf16.mxu0 0
    %636 = vmatpush1.bf16.msra.mxu0 0
    %637 = vmatprep.subr.bf16.mxu0 0
    %638 = vmatpush1.bf16.msra.mxu0 0
    %639 = vmatprep.subr.bf16.mxu0 0
    %640 = vmatpush1.bf16.msra.mxu0 0
    %641 = vmatprep.subr.bf16.mxu0 0
    %642 = vmatpush1.bf16.msra.mxu0 0
    %643 = vmatprep.subr.bf16.mxu0 0
    %644 = vmatpush1.bf16.msra.mxu0 0
    %645 = vmatprep.subr.bf16.mxu0 0
    %646 = vmatpush1.bf16.msra.mxu0 0
    %647 = vmatprep.mubr.bf16.mxu0 0
    %648 = vmatmul.mubr.bf16.gmra.mrb[0].mxu0 %v539
    %v649 = vpop.f32.mrb[0].mxu0
    %v650 = vadd.f32 %v565, %v649
    %v651 = vpop.f32.mrb[0].mxu0
    %v652 = vpop.f32.mrb[0].mxu0
    %v653 = vadd.f32 %v565, %v652
    %v654 = vpop.f32.mrb[0].mxu0
    %655 = vmatprep.mubr.bf16.mxu0 0
    %656 = vmatmul.mubr.bf16.gmra.mrb[0].mxu0 %v540
    %v657 = vpop.f32.mrb[0].mxu0
    %v658 = vadd.f32 %v565, %v657
    %v659 = vpop.f32.mrb[0].mxu0
    %v660 = vpop.f32.mrb[0].mxu0
    %v661 = vadd.f32 %v565, %v660
    %v662 = vpop.f32.mrb[0].mxu0
    %663 = vmatprep.mubr.bf16.mxu0 0
    %664 = vmatmul.mubr.bf16.gmra.mrb[0].mxu0 %v541
    %v665 = vpop.f32.mrb[0].mxu0
    %v666 = vadd.f32 %v565, %v665
    %v667 = vpop.f32.mrb[0].mxu0
    %v668 = vpop.f32.mrb[0].mxu0
    %v669 = vadd.f32 %v565, %v668
    %v670 = vpop.f32.mrb[0].mxu0
    %671 = vdwg.mxu0
    %v672 = vmax.f32 %v650, 0.0
    %v673 = vmax.f32 %v653, 0.0
    %v674 = vmax.f32 %v658, 0.0
    %v675 = vmax.f32 %v661, 0.0
    %v676 = vmax.f32 %v666, 0.0
    %v677 = vmax.f32 %v669, 0.0
    %v678 = vpack.c.bf16 %v673, %v672
    %v679 = vpack.c.bf16 %v675, %v674
    %v680 = vpack.c.bf16 %v677, %v676
    %s681 = scalar_lea.vmem %s3, 128
    %v682 = vld [vmem:[%s681] sm:$0xf]
    %v683 = vld [vmem:[%s681 + $0x4] sm:$0xf]
    %v684 = vld [vmem:[%s681 + $0x8] sm:$0xf]
    %v685 = vld [vmem:[%s681 + $0xc] sm:$0xf]
    %v686 = vld [vmem:[%s681 + $0x10] sm:$0xf]
    %v687 = vld [vmem:[%s681 + $0x14] sm:$0xf]
    %v688 = vld [vmem:[%s681 + $0x18] sm:$0xf]
    %v689 = vld [vmem:[%s681 + $0x1c] sm:$0xf]
    %v690 = vld [vmem:[%s681 + $0x20] sm:$0xf]
    %v691 = vld [vmem:[%s681 + $0x24] sm:$0xf]
    %v692 = vld [vmem:[%s681 + $0x28] sm:$0xf]
    %v693 = vld [vmem:[%s681 + $0x2c] sm:$0xf]
    %v694 = vld [vmem:[%s681 + $0x30] sm:$0xf]
    %v695 = vld [vmem:[%s681 + $0x34] sm:$0xf]
    %v696 = vld [vmem:[%s681 + $0x38] sm:$0xf]
    %v697 = vld [vmem:[%s681 + $0x3c] sm:$0xf]
    %s698 = scalar_lea.vmem %s4, 2
    %v699 = vld [vmem:[%s698] sm:$0x1]
    %v701 = vlaneseq
    %v702 = vshrl.u32 %v701, 7
    %v703 = vsub.s32 0, %v702
    %v704 = vrot.slane %v699, %v703
    %v722 = vunpack.c.l.b16 %v682
    %v723 = vunpack.c.l.b16 %v683
    %v724 = vunpack.c.l.b16 %v684
    %v725 = vunpack.c.l.b16 %v685
    %v726 = vunpack.c.l.b16 %v686
    %v727 = vunpack.c.l.b16 %v687
    %v728 = vunpack.c.l.b16 %v688
    %v729 = vunpack.c.l.b16 %v689
    %v730 = vunpack.c.l.b16 %v690
    %v731 = vunpack.c.l.b16 %v691
    %v732 = vunpack.c.l.b16 %v692
    %v733 = vunpack.c.l.b16 %v693
    %v734 = vunpack.c.l.b16 %v694
    %v735 = vunpack.c.l.b16 %v695
    %v736 = vunpack.c.l.b16 %v696
    %v737 = vunpack.c.l.b16 %v697
    %v738 = vpack.c.b16 %v723, %v722
    %v739 = vpack.c.b16 %v725, %v724
    %v740 = vpack.c.b16 %v727, %v726
    %v741 = vpack.c.b16 %v729, %v728
    %v742 = vpack.c.b16 %v731, %v730
    %v743 = vpack.c.b16 %v733, %v732
    %v744 = vpack.c.b16 %v735, %v734
    %v745 = vpack.c.b16 %v737, %v736
    %754 = vmatprep.subr.bf16.mxu0 0
    %755 = vmatpush1.bf16.msra.mxu0 %v738
    %756 = vmatprep.subr.bf16.mxu0 0
    %757 = vmatpush1.bf16.msra.mxu0 %v739
    %758 = vmatprep.subr.bf16.mxu0 0
    %759 = vmatpush1.bf16.msra.mxu0 %v740
    %760 = vmatprep.subr.bf16.mxu0 0
    %761 = vmatpush1.bf16.msra.mxu0 %v741
    %762 = vmatprep.subr.bf16.mxu0 0
    %763 = vmatpush1.bf16.msra.mxu0 %v742
    %764 = vmatprep.subr.bf16.mxu0 0
    %765 = vmatpush1.bf16.msra.mxu0 %v743
    %766 = vmatprep.subr.bf16.mxu0 0
    %767 = vmatpush1.bf16.msra.mxu0 %v744
    %768 = vmatprep.subr.bf16.mxu0 0
    %769 = vmatpush1.bf16.msra.mxu0 %v745
    %770 = vmatprep.subr.bf16.mxu0 0
    %771 = vmatpush1.bf16.msra.mxu0 0
    %772 = vmatprep.subr.bf16.mxu0 0
    %773 = vmatpush1.bf16.msra.mxu0 0
    %774 = vmatprep.subr.bf16.mxu0 0
    %775 = vmatpush1.bf16.msra.mxu0 0
    %776 = vmatprep.subr.bf16.mxu0 0
    %777 = vmatpush1.bf16.msra.mxu0 0
    %778 = vmatprep.subr.bf16.mxu0 0
    %779 = vmatpush1.bf16.msra.mxu0 0
    %780 = vmatprep.subr.bf16.mxu0 0
    %781 = vmatpush1.bf16.msra.mxu0 0
    %782 = vmatprep.subr.bf16.mxu0 0
    %783 = vmatpush1.bf16.msra.mxu0 0
    %784 = vmatprep.subr.bf16.mxu0 0
    %785 = vmatpush1.bf16.msra.mxu0 0
    %786 = vmatprep.mubr.bf16.mxu0 0
    %787 = vmatmul.mubr.bf16.gmra.mrb[0].mxu0 %v678
    %v788 = vpop.f32.mrb[0].mxu0
    %v789 = vadd.f32 %v704, %v788
    %v790 = vpop.f32.mrb[0].mxu0
    %v791 = vpop.f32.mrb[0].mxu0
    %v792 = vadd.f32 %v704, %v791
    %v793 = vpop.f32.mrb[0].mxu0
    %794 = vmatprep.mubr.bf16.mxu0 0
    %795 = vmatmul.mubr.bf16.gmra.mrb[0].mxu0 %v679
    %v796 = vpop.f32.mrb[0].mxu0
    %v797 = vadd.f32 %v704, %v796
    %v798 = vpop.f32.mrb[0].mxu0
    %v799 = vpop.f32.mrb[0].mxu0
    %v800 = vadd.f32 %v704, %v799
    %v801 = vpop.f32.mrb[0].mxu0
    %802 = vmatprep.mubr.bf16.mxu0 0
    %803 = vmatmul.mubr.bf16.gmra.mrb[0].mxu0 %v680
    %v804 = vpop.f32.mrb[0].mxu0
    %v805 = vadd.f32 %v704, %v804
    %v806 = vpop.f32.mrb[0].mxu0
    %v807 = vpop.f32.mrb[0].mxu0
    %v808 = vadd.f32 %v704, %v807
    %v809 = vpop.f32.mrb[0].mxu0
    %810 = vdwg.mxu0
    %v811 = vmax.f32 %v789, 0.0
    %v812 = vmax.f32 %v792, 0.0
    %v813 = vmax.f32 %v797, 0.0
    %v814 = vmax.f32 %v800, 0.0
    %v815 = vmax.f32 %v805, 0.0
    %v816 = vmax.f32 %v808, 0.0
    %v817 = vpack.c.bf16 %v812, %v811
    %v818 = vpack.c.bf16 %v814, %v813
    %v819 = vpack.c.bf16 %v816, %v815
    %s820 = scalar_lea.vmem %s3, 192
    %v821 = vld [vmem:[%s820] sm:$0xf]
    %v822 = vld [vmem:[%s820 + $0x4] sm:$0xf]
    %v823 = vld [vmem:[%s820 + $0x8] sm:$0xf]
    %v824 = vld [vmem:[%s820 + $0xc] sm:$0xf]
    %v825 = vld [vmem:[%s820 + $0x10] sm:$0xf]
    %v826 = vld [vmem:[%s820 + $0x14] sm:$0xf]
    %v827 = vld [vmem:[%s820 + $0x18] sm:$0xf]
    %v828 = vld [vmem:[%s820 + $0x1c] sm:$0xf]
    %v829 = vld [vmem:[%s820 + $0x20] sm:$0xf]
    %v830 = vld [vmem:[%s820 + $0x24] sm:$0xf]
    %v831 = vld [vmem:[%s820 + $0x28] sm:$0xf]
    %v832 = vld [vmem:[%s820 + $0x2c] sm:$0xf]
    %v833 = vld [vmem:[%s820 + $0x30] sm:$0xf]
    %v834 = vld [vmem:[%s820 + $0x34] sm:$0xf]
    %v835 = vld [vmem:[%s820 + $0x38] sm:$0xf]
    %v836 = vld [vmem:[%s820 + $0x3c] sm:$0xf]
    %s837 = scalar_lea.vmem %s4, 3
    %v838 = vld [vmem:[%s837] sm:$0x1]
    %v840 = vlaneseq
    %v841 = vshrl.u32 %v840, 7
    %v842 = vsub.s32 0, %v841
    %v843 = vrot.slane %v838, %v842
    %v861 = vunpack.c.l.b16 %v821
    %v862 = vunpack.c.l.b16 %v822
    %v863 = vunpack.c.l.b16 %v823
    %v864 = vunpack.c.l.b16 %v824
    %v865 = vunpack.c.l.b16 %v825
    %v866 = vunpack.c.l.b16 %v826
    %v867 = vunpack.c.l.b16 %v827
    %v868 = vunpack.c.l.b16 %v828
    %v869 = vunpack.c.l.b16 %v829
    %v870 = vunpack.c.l.b16 %v830
    %v871 = vunpack.c.l.b16 %v831
    %v872 = vunpack.c.l.b16 %v832
    %v873 = vunpack.c.l.b16 %v833
    %v874 = vunpack.c.l.b16 %v834
    %v875 = vunpack.c.l.b16 %v835
    %v876 = vunpack.c.l.b16 %v836
    %v877 = vpack.c.b16 %v862, %v861
    %v878 = vpack.c.b16 %v864, %v863
    %v879 = vpack.c.b16 %v866, %v865
    %v880 = vpack.c.b16 %v868, %v867
    %v881 = vpack.c.b16 %v870, %v869
    %v882 = vpack.c.b16 %v872, %v871
    %v883 = vpack.c.b16 %v874, %v873
    %v884 = vpack.c.b16 %v876, %v875
    %893 = vmatprep.subr.bf16.mxu0 0
    %894 = vmatpush1.bf16.msra.mxu0 %v877
    %895 = vmatprep.subr.bf16.mxu0 0
    %896 = vmatpush1.bf16.msra.mxu0 %v878
    %897 = vmatprep.subr.bf16.mxu0 0
    %898 = vmatpush1.bf16.msra.mxu0 %v879
    %899 = vmatprep.subr.bf16.mxu0 0
    %900 = vmatpush1.bf16.msra.mxu0 %v880
    %901 = vmatprep.subr.bf16.mxu0 0
    %902 = vmatpush1.bf16.msra.mxu0 %v881
    %903 = vmatprep.subr.bf16.mxu0 0
    %904 = vmatpush1.bf16.msra.mxu0 %v882
    %905 = vmatprep.subr.bf16.mxu0 0
    %906 = vmatpush1.bf16.msra.mxu0 %v883
    %907 = vmatprep.subr.bf16.mxu0 0
    %908 = vmatpush1.bf16.msra.mxu0 %v884
    %909 = vmatprep.subr.bf16.mxu0 0
    %910 = vmatpush1.bf16.msra.mxu0 0
    %911 = vmatprep.subr.bf16.mxu0 0
    %912 = vmatpush1.bf16.msra.mxu0 0
    %913 = vmatprep.subr.bf16.mxu0 0
    %914 = vmatpush1.bf16.msra.mxu0 0
    %915 = vmatprep.subr.bf16.mxu0 0
    %916 = vmatpush1.bf16.msra.mxu0 0
    %917 = vmatprep.subr.bf16.mxu0 0
    %918 = vmatpush1.bf16.msra.mxu0 0
    %919 = vmatprep.subr.bf16.mxu0 0
    %920 = vmatpush1.bf16.msra.mxu0 0
    %921 = vmatprep.subr.bf16.mxu0 0
    %922 = vmatpush1.bf16.msra.mxu0 0
    %923 = vmatprep.subr.bf16.mxu0 0
    %924 = vmatpush1.bf16.msra.mxu0 0
    %925 = vmatprep.mubr.bf16.mxu0 0
    %926 = vmatmul.mubr.bf16.gmra.mrb[0].mxu0 %v817
    %v927 = vpop.f32.mrb[0].mxu0
    %v928 = vadd.f32 %v843, %v927
    %v929 = vpop.f32.mrb[0].mxu0
    %v930 = vpop.f32.mrb[0].mxu0
    %v931 = vadd.f32 %v843, %v930
    %v932 = vpop.f32.mrb[0].mxu0
    %933 = vmatprep.mubr.bf16.mxu0 0
    %934 = vmatmul.mubr.bf16.gmra.mrb[0].mxu0 %v818
    %v935 = vpop.f32.mrb[0].mxu0
    %v936 = vadd.f32 %v843, %v935
    %v937 = vpop.f32.mrb[0].mxu0
    %v938 = vpop.f32.mrb[0].mxu0
    %v939 = vadd.f32 %v843, %v938
    %v940 = vpop.f32.mrb[0].mxu0
    %941 = vmatprep.mubr.bf16.mxu0 0
    %942 = vmatmul.mubr.bf16.gmra.mrb[0].mxu0 %v819
    %v943 = vpop.f32.mrb[0].mxu0
    %v944 = vadd.f32 %v843, %v943
    %v945 = vpop.f32.mrb[0].mxu0
    %v946 = vpop.f32.mrb[0].mxu0
    %v947 = vadd.f32 %v843, %v946
    %v948 = vpop.f32.mrb[0].mxu0
    %949 = vdwg.mxu0
    %v950 = vmax.f32 %v928, 0.0
    %v951 = vmax.f32 %v931, 0.0
    %v952 = vmax.f32 %v936, 0.0
    %v953 = vmax.f32 %v939, 0.0
    %v954 = vmax.f32 %v944, 0.0
    %v955 = vmax.f32 %v947, 0.0
    %956 = vst [vmem:[%s5] sm:$0xff] %v950
    %957 = vst [vmem:[%s5 + $0x8] sm:$0xff] %v951
    %958 = vst [vmem:[%s5 + $0x10] sm:$0xff] %v952
    %959 = vst [vmem:[%s5 + $0x18] sm:$0xff] %v953
    %960 = vst [vmem:[%s5 + $0x20] sm:$0xff] %v954
    %961 = vst [vmem:[%s5 + $0x28] sm:$0xff] %v955
  $region29: #{hybrid_gnn_forward.8} parent=0 // pred_fallthru
    _
  // Predicated region
  $region30: #{hybrid_gnn_forward.8} parent=0 // pred_check
    _
  $region31: #{hybrid_gnn_forward.8} parent=0 // pred_check_branch
    %963 = sbr.rel (0) target = $region33
  $region32: #{hybrid_gnn_forward.8} parent=0 // pred_region
    _
  $region33: #{hybrid_gnn_forward.8} parent=0 // pred_fallthru
    _
  // Predicated region
  $region34: #{hybrid_gnn_forward.8} parent=0 // pred_check
    _
  $region35: #{hybrid_gnn_forward.8} parent=0 // pred_check_branch
    %965 = sbr.rel (0) target = $region37
  $region36: #{hybrid_gnn_forward.8} parent=0 // pred_region
    _
  $region37: #{hybrid_gnn_forward.8} parent=0 // pred_fallthru
    _

// kernel: hybrid_gnn_forward.11
$region0: #{hybrid_gnn_forward.11}
  #allocation0 [shape = 'u32[]', space=smem, size = 0x4, offset = 0x4, fixed_abs, tag = 'smem constant byte address 0x4 - core index']
  #allocation1 [shape = 'u32[144,128]{1,0:T(1,128)}', space=vmem, size = 0x12000, scoped, tag = 'internal scratch']
  %s0 = inlined_call_operand.vmem [shape: bf16[48,512], index: 0, kind: input, shape index: {}]
  %s1 = inlined_call_operand.vmem [shape: bf16[512,128], index: 1, kind: input, shape index: {}]
  %s2 = inlined_call_operand.vmem [shape: f32[1,128], index: 2, kind: input, shape index: {}]
  %s3 = inlined_call_operand.vmem [shape: f32[48,128], index: 3, kind: output, shape index: {}]
  %s4 = sld [smem:[#allocation0]]
  $region22: #{hybrid_gnn_forward.11} parent=0
    _
  %s6 = ssub.s32 1, %s4
  %s7 = scalar_select 0, %s6, %s4
  // Predicated region
  $region2: #{hybrid_gnn_forward.11} parent=0 // pred_check
    _
  $region3: #{hybrid_gnn_forward.11} parent=0 // pred_check_branch
    %9 = sbr.rel (0) target = $region5
  $region4: #{hybrid_gnn_forward.11} parent=0 // pred_region
    _
  $region5: #{hybrid_gnn_forward.11} parent=0 // pred_fallthru
    _
  // Predicated region
  $region6: #{hybrid_gnn_forward.11} parent=0 // pred_check
    _
  $region7: #{hybrid_gnn_forward.11} parent=0 // pred_check_branch
    %11 = sbr.rel (0) target = $region9
  $region8: #{hybrid_gnn_forward.11} parent=0 // pred_region
    _
  $region9: #{hybrid_gnn_forward.11} parent=0 // pred_fallthru
    _
  // Predicated region
  $region10: #{hybrid_gnn_forward.11} parent=0 // pred_check
    _
  $region11: #{hybrid_gnn_forward.11} parent=0 // pred_check_branch
    %13 = sbr.rel (0) target = $region13
  $region12: #{hybrid_gnn_forward.11} parent=0 // pred_region
    _
  $region13: #{hybrid_gnn_forward.11} parent=0 // pred_fallthru
    _
  %v15 = vld [vmem:[%s0] sm:$0xff]
  %v16 = vld [vmem:[%s0 + $0x8] sm:$0xff]
  %v17 = vld [vmem:[%s0 + $0x10] sm:$0xff]
  %v18 = vld [vmem:[%s0 + $0x18] sm:$0xff]
  %v19 = vld [vmem:[%s0 + $0x20] sm:$0xff]
  %v20 = vld [vmem:[%s0 + $0x28] sm:$0xff]
  %v21 = vld [vmem:[%s0 + $0x30] sm:$0xff]
  %v22 = vld [vmem:[%s0 + $0x38] sm:$0xff]
  %v23 = vld [vmem:[%s0 + $0x40] sm:$0xff]
  %v24 = vld [vmem:[%s0 + $0x48] sm:$0xff]
  %v25 = vld [vmem:[%s0 + $0x50] sm:$0xff]
  %v26 = vld [vmem:[%s0 + $0x58] sm:$0xff]
  %v27 = vld [vmem:[%s1] sm:$0xf]
  %v28 = vld [vmem:[%s1 + $0x4] sm:$0xf]
  %v29 = vld [vmem:[%s1 + $0x8] sm:$0xf]
  %v30 = vld [vmem:[%s1 + $0xc] sm:$0xf]
  %v31 = vld [vmem:[%s1 + $0x10] sm:$0xf]
  %v32 = vld [vmem:[%s1 + $0x14] sm:$0xf]
  %v33 = vld [vmem:[%s1 + $0x18] sm:$0xf]
  %v34 = vld [vmem:[%s1 + $0x1c] sm:$0xf]
  %v35 = vld [vmem:[%s1 + $0x20] sm:$0xf]
  %v36 = vld [vmem:[%s1 + $0x24] sm:$0xf]
  %v37 = vld [vmem:[%s1 + $0x28] sm:$0xf]
  %v38 = vld [vmem:[%s1 + $0x2c] sm:$0xf]
  %v39 = vld [vmem:[%s1 + $0x30] sm:$0xf]
  %v40 = vld [vmem:[%s1 + $0x34] sm:$0xf]
  %v41 = vld [vmem:[%s1 + $0x38] sm:$0xf]
  %v42 = vld [vmem:[%s1 + $0x3c] sm:$0xf]
  %v43 = vld [vmem:[%s1 + $0x40] sm:$0xf]
  %v44 = vld [vmem:[%s1 + $0x44] sm:$0xf]
  %v45 = vld [vmem:[%s1 + $0x48] sm:$0xf]
  %v46 = vld [vmem:[%s1 + $0x4c] sm:$0xf]
  %v47 = vld [vmem:[%s1 + $0x50] sm:$0xf]
  %v48 = vld [vmem:[%s1 + $0x54] sm:$0xf]
  %v49 = vld [vmem:[%s1 + $0x58] sm:$0xf]
  %v50 = vld [vmem:[%s1 + $0x5c] sm:$0xf]
  %v51 = vld [vmem:[%s1 + $0x60] sm:$0xf]
  %v52 = vld [vmem:[%s1 + $0x64] sm:$0xf]
  %v53 = vld [vmem:[%s1 + $0x68] sm:$0xf]
  %v54 = vld [vmem:[%s1 + $0x6c] sm:$0xf]
  %v55 = vld [vmem:[%s1 + $0x70] sm:$0xf]
  %v56 = vld [vmem:[%s1 + $0x74] sm:$0xf]
  %v57 = vld [vmem:[%s1 + $0x78] sm:$0xf]
  %v58 = vld [vmem:[%s1 + $0x7c] sm:$0xf]
  %v59 = vld [vmem:[%s1 + $0x80] sm:$0xf]
  %v60 = vld [vmem:[%s1 + $0x84] sm:$0xf]
  %v61 = vld [vmem:[%s1 + $0x88] sm:$0xf]
  %v62 = vld [vmem:[%s1 + $0x8c] sm:$0xf]
  %v63 = vld [vmem:[%s1 + $0x90] sm:$0xf]
  %v64 = vld [vmem:[%s1 + $0x94] sm:$0xf]
  %v65 = vld [vmem:[%s1 + $0x98] sm:$0xf]
  %v66 = vld [vmem:[%s1 + $0x9c] sm:$0xf]
  %v67 = vld [vmem:[%s1 + $0xa0] sm:$0xf]
  %v68 = vld [vmem:[%s1 + $0xa4] sm:$0xf]
  %v69 = vld [vmem:[%s1 + $0xa8] sm:$0xf]
  %v70 = vld [vmem:[%s1 + $0xac] sm:$0xf]
  %v71 = vld [vmem:[%s1 + $0xb0] sm:$0xf]
  %v72 = vld [vmem:[%s1 + $0xb4] sm:$0xf]
  %v73 = vld [vmem:[%s1 + $0xb8] sm:$0xf]
  %v74 = vld [vmem:[%s1 + $0xbc] sm:$0xf]
  %v75 = vld [vmem:[%s1 + $0xc0] sm:$0xf]
  %v76 = vld [vmem:[%s1 + $0xc4] sm:$0xf]
  %v77 = vld [vmem:[%s1 + $0xc8] sm:$0xf]
  %v78 = vld [vmem:[%s1 + $0xcc] sm:$0xf]
  %v79 = vld [vmem:[%s1 + $0xd0] sm:$0xf]
  %v80 = vld [vmem:[%s1 + $0xd4] sm:$0xf]
  %v81 = vld [vmem:[%s1 + $0xd8] sm:$0xf]
  %v82 = vld [vmem:[%s1 + $0xdc] sm:$0xf]
  %v83 = vld [vmem:[%s1 + $0xe0] sm:$0xf]
  %v84 = vld [vmem:[%s1 + $0xe4] sm:$0xf]
  %v85 = vld [vmem:[%s1 + $0xe8] sm:$0xf]
  %v86 = vld [vmem:[%s1 + $0xec] sm:$0xf]
  %v87 = vld [vmem:[%s1 + $0xf0] sm:$0xf]
  %v88 = vld [vmem:[%s1 + $0xf4] sm:$0xf]
  %v89 = vld [vmem:[%s1 + $0xf8] sm:$0xf]
  %v90 = vld [vmem:[%s1 + $0xfc] sm:$0xf]
  %v91 = vld [vmem:[%s2] sm:$0x1]
  %v93 = vlaneseq
  %v94 = vshrl.u32 %v93, 7
  %v95 = vsub.s32 0, %v94
  %v96 = vrot.slane %v91, %v95
  %v110 = vunpack.c.l.b16 %v15
  %v111 = vunpack.c.h.b16 %v15
  %v112 = vunpack.c.l.b16 %v16
  %v113 = vunpack.c.h.b16 %v16
  %v114 = vunpack.c.l.b16 %v17
  %v115 = vunpack.c.h.b16 %v17
  %v116 = vunpack.c.l.b16 %v18
  %v117 = vunpack.c.h.b16 %v18
  %v118 = vunpack.c.l.b16 %v19
  %v119 = vunpack.c.h.b16 %v19
  %v120 = vunpack.c.l.b16 %v20
  %v121 = vunpack.c.h.b16 %v20
  %v122 = vunpack.c.l.b16 %v21
  %v123 = vunpack.c.h.b16 %v21
  %v124 = vunpack.c.l.b16 %v22
  %v125 = vunpack.c.h.b16 %v22
  %v126 = vunpack.c.l.b16 %v23
  %v127 = vunpack.c.h.b16 %v23
  %v128 = vunpack.c.l.b16 %v24
  %v129 = vunpack.c.h.b16 %v24
  %v130 = vunpack.c.l.b16 %v25
  %v131 = vunpack.c.h.b16 %v25
  %v132 = vunpack.c.l.b16 %v26
  %v133 = vunpack.c.h.b16 %v26
  %v134 = vpack.c.b16 %v114, %v110
  %v135 = vpack.c.b16 %v115, %v111
  %v136 = vpack.c.b16 %v116, %v112
  %v137 = vpack.c.b16 %v117, %v113
  %v138 = vpack.c.b16 %v122, %v118
  %v139 = vpack.c.b16 %v123, %v119
  %v140 = vpack.c.b16 %v124, %v120
  %v141 = vpack.c.b16 %v125, %v121
  %v142 = vpack.c.b16 %v130, %v126
  %v143 = vpack.c.b16 %v131, %v127
  %v144 = vpack.c.b16 %v132, %v128
  %v145 = vpack.c.b16 %v133, %v129
  %v222 = vunpack.c.l.b16 %v27
  %v223 = vunpack.c.l.b16 %v28
  %v224 = vunpack.c.l.b16 %v29
  %v225 = vunpack.c.l.b16 %v30
  %v226 = vunpack.c.l.b16 %v31
  %v227 = vunpack.c.l.b16 %v32
  %v228 = vunpack.c.l.b16 %v33
  %v229 = vunpack.c.l.b16 %v34
  %v230 = vunpack.c.l.b16 %v35
  %v231 = vunpack.c.l.b16 %v36
  %v232 = vunpack.c.l.b16 %v37
  %v233 = vunpack.c.l.b16 %v38
  %v234 = vunpack.c.l.b16 %v39
  %v235 = vunpack.c.l.b16 %v40
  %v236 = vunpack.c.l.b16 %v41
  %v237 = vunpack.c.l.b16 %v42
  %v238 = vunpack.c.l.b16 %v43
  %v239 = vunpack.c.l.b16 %v44
  %v240 = vunpack.c.l.b16 %v45
  %v241 = vunpack.c.l.b16 %v46
  %v242 = vunpack.c.l.b16 %v47
  %v243 = vunpack.c.l.b16 %v48
  %v244 = vunpack.c.l.b16 %v49
  %v245 = vunpack.c.l.b16 %v50
  %v246 = vunpack.c.l.b16 %v51
  %v247 = vunpack.c.l.b16 %v52
  %v248 = vunpack.c.l.b16 %v53
  %v249 = vunpack.c.l.b16 %v54
  %v250 = vunpack.c.l.b16 %v55
  %v251 = vunpack.c.l.b16 %v56
  %v252 = vunpack.c.l.b16 %v57
  %v253 = vunpack.c.l.b16 %v58
  %v254 = vunpack.c.l.b16 %v59
  %v255 = vunpack.c.l.b16 %v60
  %v256 = vunpack.c.l.b16 %v61
  %v257 = vunpack.c.l.b16 %v62
  %v258 = vunpack.c.l.b16 %v63
  %v259 = vunpack.c.l.b16 %v64
  %v260 = vunpack.c.l.b16 %v65
  %v261 = vunpack.c.l.b16 %v66
  %v262 = vunpack.c.l.b16 %v67
  %v263 = vunpack.c.l.b16 %v68
  %v264 = vunpack.c.l.b16 %v69
  %v265 = vunpack.c.l.b16 %v70
  %v266 = vunpack.c.l.b16 %v71
  %v267 = vunpack.c.l.b16 %v72
  %v268 = vunpack.c.l.b16 %v73
  %v269 = vunpack.c.l.b16 %v74
  %v270 = vunpack.c.l.b16 %v75
  %v271 = vunpack.c.l.b16 %v76
  %v272 = vunpack.c.l.b16 %v77
  %v273 = vunpack.c.l.b16 %v78
  %v274 = vunpack.c.l.b16 %v79
  %v275 = vunpack.c.l.b16 %v80
  %v276 = vunpack.c.l.b16 %v81
  %v277 = vunpack.c.l.b16 %v82
  %v278 = vunpack.c.l.b16 %v83
  %v279 = vunpack.c.l.b16 %v84
  %v280 = vunpack.c.l.b16 %v85
  %v281 = vunpack.c.l.b16 %v86
  %v282 = vunpack.c.l.b16 %v87
  %v283 = vunpack.c.l.b16 %v88
  %v284 = vunpack.c.l.b16 %v89
  %v285 = vunpack.c.l.b16 %v90
  %v286 = vpack.c.b16 %v223, %v222
  %v287 = vpack.c.b16 %v225, %v224
  %v288 = vpack.c.b16 %v227, %v226
  %v289 = vpack.c.b16 %v229, %v228
  %v290 = vpack.c.b16 %v231, %v230
  %v291 = vpack.c.b16 %v233, %v232
  %v292 = vpack.c.b16 %v235, %v234
  %v293 = vpack.c.b16 %v237, %v236
  %v294 = vpack.c.b16 %v239, %v238
  %v295 = vpack.c.b16 %v241, %v240
  %v296 = vpack.c.b16 %v243, %v242
  %v297 = vpack.c.b16 %v245, %v244
  %v298 = vpack.c.b16 %v247, %v246
  %v299 = vpack.c.b16 %v249, %v248
  %v300 = vpack.c.b16 %v251, %v250
  %v301 = vpack.c.b16 %v253, %v252
  %v302 = vpack.c.b16 %v255, %v254
  %v303 = vpack.c.b16 %v257, %v256
  %v304 = vpack.c.b16 %v259, %v258
  %v305 = vpack.c.b16 %v261, %v260
  %v306 = vpack.c.b16 %v263, %v262
  %v307 = vpack.c.b16 %v265, %v264
  %v308 = vpack.c.b16 %v267, %v266
  %v309 = vpack.c.b16 %v269, %v268
  %v310 = vpack.c.b16 %v271, %v270
  %v311 = vpack.c.b16 %v273, %v272
  %v312 = vpack.c.b16 %v275, %v274
  %v313 = vpack.c.b16 %v277, %v276
  %v314 = vpack.c.b16 %v279, %v278
  %v315 = vpack.c.b16 %v281, %v280
  %v316 = vpack.c.b16 %v283, %v282
  %v317 = vpack.c.b16 %v285, %v284
  %350 = vmatprep.subr.bf16.mxu0 0
  %351 = vmatpush1.bf16.msra.mxu0 %v286
  %352 = vmatprep.subr.bf16.mxu0 0
  %353 = vmatpush1.bf16.msra.mxu0 %v287
  %354 = vmatprep.subr.bf16.mxu0 0
  %355 = vmatpush1.bf16.msra.mxu0 %v288
  %356 = vmatprep.subr.bf16.mxu0 0
  %357 = vmatpush1.bf16.msra.mxu0 %v289
  %358 = vmatprep.subr.bf16.mxu0 0
  %359 = vmatpush1.bf16.msra.mxu0 %v290
  %360 = vmatprep.subr.bf16.mxu0 0
  %361 = vmatpush1.bf16.msra.mxu0 %v291
  %362 = vmatprep.subr.bf16.mxu0 0
  %363 = vmatpush1.bf16.msra.mxu0 %v292
  %364 = vmatprep.subr.bf16.mxu0 0
  %365 = vmatpush1.bf16.msra.mxu0 %v293
  %366 = vmatprep.subr.bf16.mxu0 0
  %367 = vmatpush1.bf16.msra.mxu0 %v294
  %368 = vmatprep.subr.bf16.mxu0 0
  %369 = vmatpush1.bf16.msra.mxu0 %v295
  %370 = vmatprep.subr.bf16.mxu0 0
  %371 = vmatpush1.bf16.msra.mxu0 %v296
  %372 = vmatprep.subr.bf16.mxu0 0
  %373 = vmatpush1.bf16.msra.mxu0 %v297
  %374 = vmatprep.subr.bf16.mxu0 0
  %375 = vmatpush1.bf16.msra.mxu0 %v298
  %376 = vmatprep.subr.bf16.mxu0 0
  %377 = vmatpush1.bf16.msra.mxu0 %v299
  %378 = vmatprep.subr.bf16.mxu0 0
  %379 = vmatpush1.bf16.msra.mxu0 %v300
  %380 = vmatprep.subr.bf16.mxu0 0
  %381 = vmatpush1.bf16.msra.mxu0 %v301
  %382 = vmatprep.mubr.bf16.mxu0 %v135
  %383 = vmatmul.mubr.bf16.gmra.mrb[0].mxu0 %v134
  %v384 = vpop.f32.mrb[0].mxu0
  %v385 = vadd.f32 %v96, %v384
  %v386 = vpop.f32.mrb[0].mxu0
  %v387 = vpop.f32.mrb[0].mxu0
  %v388 = vadd.f32 %v96, %v387
  %v389 = vpop.f32.mrb[0].mxu0
  %390 = vmatprep.mubr.bf16.mxu0 %v139
  %391 = vmatmul.mubr.bf16.gmra.mrb[0].mxu0 %v138
  %v392 = vpop.f32.mrb[0].mxu0
  %v393 = vadd.f32 %v96, %v392
  %v394 = vpop.f32.mrb[0].mxu0
  %v395 = vpop.f32.mrb[0].mxu0
  %v396 = vadd.f32 %v96, %v395
  %v397 = vpop.f32.mrb[0].mxu0
  %398 = vmatprep.mubr.bf16.mxu0 %v143
  %399 = vmatmul.mubr.bf16.gmra.mrb[0].mxu0 %v142
  %v400 = vpop.f32.mrb[0].mxu0
  %v401 = vadd.f32 %v96, %v400
  %v402 = vpop.f32.mrb[0].mxu0
  %v403 = vpop.f32.mrb[0].mxu0
  %v404 = vadd.f32 %v96, %v403
  %v405 = vpop.f32.mrb[0].mxu0
  %406 = vdwg.mxu0
  %407 = vmatprep.subr.bf16.mxu0 0
  %408 = vmatpush1.bf16.msra.mxu0 %v302
  %409 = vmatprep.subr.bf16.mxu0 0
  %410 = vmatpush1.bf16.msra.mxu0 %v303
  %411 = vmatprep.subr.bf16.mxu0 0
  %412 = vmatpush1.bf16.msra.mxu0 %v304
  %413 = vmatprep.subr.bf16.mxu0 0
  %414 = vmatpush1.bf16.msra.mxu0 %v305
  %415 = vmatprep.subr.bf16.mxu0 0
  %416 = vmatpush1.bf16.msra.mxu0 %v306
  %417 = vmatprep.subr.bf16.mxu0 0
  %418 = vmatpush1.bf16.msra.mxu0 %v307
  %419 = vmatprep.subr.bf16.mxu0 0
  %420 = vmatpush1.bf16.msra.mxu0 %v308
  %421 = vmatprep.subr.bf16.mxu0 0
  %422 = vmatpush1.bf16.msra.mxu0 %v309
  %423 = vmatprep.subr.bf16.mxu0 0
  %424 = vmatpush1.bf16.msra.mxu0 %v310
  %425 = vmatprep.subr.bf16.mxu0 0
  %426 = vmatpush1.bf16.msra.mxu0 %v311
  %427 = vmatprep.subr.bf16.mxu0 0
  %428 = vmatpush1.bf16.msra.mxu0 %v312
  %429 = vmatprep.subr.bf16.mxu0 0
  %430 = vmatpush1.bf16.msra.mxu0 %v313
  %431 = vmatprep.subr.bf16.mxu0 0
  %432 = vmatpush1.bf16.msra.mxu0 %v314
  %433 = vmatprep.subr.bf16.mxu0 0
  %434 = vmatpush1.bf16.msra.mxu0 %v315
  %435 = vmatprep.subr.bf16.mxu0 0
  %436 = vmatpush1.bf16.msra.mxu0 %v316
  %437 = vmatprep.subr.bf16.mxu0 0
  %438 = vmatpush1.bf16.msra.mxu0 %v317
  %439 = vmatprep.mubr.bf16.mxu0 %v137
  %440 = vmatmul.mubr.bf16.gmra.mrb[0].mxu0 %v136
  %v441 = vpop.f32.mrb[0].mxu0
  %v442 = vadd.f32 %v385, %v441
  %v443 = vpop.f32.mrb[0].mxu0
  %v444 = vpop.f32.mrb[0].mxu0
  %v445 = vadd.f32 %v388, %v444
  %v446 = vpop.f32.mrb[0].mxu0
  %447 = vmatprep.mubr.bf16.mxu0 %v141
  %448 = vmatmul.mubr.bf16.gmra.mrb[0].mxu0 %v140
  %v449 = vpop.f32.mrb[0].mxu0
  %v450 = vadd.f32 %v393, %v449
  %v451 = vpop.f32.mrb[0].mxu0
  %v452 = vpop.f32.mrb[0].mxu0
  %v453 = vadd.f32 %v396, %v452
  %v454 = vpop.f32.mrb[0].mxu0
  %455 = vmatprep.mubr.bf16.mxu0 %v145
  %456 = vmatmul.mubr.bf16.gmra.mrb[0].mxu0 %v144
  %v457 = vpop.f32.mrb[0].mxu0
  %v458 = vadd.f32 %v401, %v457
  %v459 = vpop.f32.mrb[0].mxu0
  %v460 = vpop.f32.mrb[0].mxu0
  %v461 = vadd.f32 %v404, %v460
  %v462 = vpop.f32.mrb[0].mxu0
  %463 = vdwg.mxu0
  %464 = vst [vmem:[%s3] sm:$0xff] %v442
  %465 = vst [vmem:[%s3 + $0x8] sm:$0xff] %v445
  %466 = vst [vmem:[%s3 + $0x10] sm:$0xff] %v450
  %467 = vst [vmem:[%s3 + $0x18] sm:$0xff] %v453
  %468 = vst [vmem:[%s3 + $0x20] sm:$0xff] %v458
  %469 = vst [vmem:[%s3 + $0x28] sm:$0xff] %v461
  // Predicated region
  $region14: #{hybrid_gnn_forward.11} parent=0 // pred_check
    _
  $region15: #{hybrid_gnn_forward.11} parent=0 // pred_check_branch
    %471 = sbr.rel (0) target = $region17
  $region16: #{hybrid_gnn_forward.11} parent=0 // pred_region
    _
  $region17: #{hybrid_gnn_forward.11} parent=0 // pred_fallthru
    _
  // Predicated region
  $region18: #{hybrid_gnn_forward.11} parent=0 // pred_check
    _
  $region19: #{hybrid_gnn_forward.11} parent=0 // pred_check_branch
    %473 = sbr.rel (0) target = $region21
  $region20: #{hybrid_gnn_forward.11} parent=0 // pred_region
    _
  $region21: #{hybrid_gnn_forward.11} parent=0 // pred_fallthru
    _

// kernel: hybrid_gnn_forward.7
$region0: #{hybrid_gnn_forward.7}
  #allocation0 [shape = 'u32[]', space=smem, size = 0x4, offset = 0x4, fixed_abs, tag = 'smem constant byte address 0x4 - core index']
  #allocation1 [shape = 'u32[144,128]{1,0:T(1,128)}', space=vmem, size = 0x12000, scoped, tag = 'internal scratch']
  %s0 = inlined_call_operand.vmem [shape: s32[64,1], index: 0, kind: input, shape index: {}]
  %s1 = inlined_call_operand.vmem [shape: s32[1,64], index: 1, kind: input, shape index: {}]
  %s2 = inlined_call_operand.vmem [shape: f32[64,25], index: 2, kind: input, shape index: {}]
  %s3 = inlined_call_operand.vmem [shape: f32[48,3200], index: 3, kind: input, shape index: {}]
  %s4 = inlined_call_operand.vmem [shape: bf16[48,128], index: 4, kind: input, shape index: {}]
  %s5 = inlined_call_operand.vmem [shape: bf16[128,128], index: 5, kind: input, shape index: {}]
  %s6 = inlined_call_operand.vmem [shape: f32[1,128], index: 6, kind: input, shape index: {}]
  %s7 = inlined_call_operand.vmem [shape: f32[48,1], index: 7, kind: input, shape index: {}]
  %s8 = inlined_call_operand.vmem [shape: f32[48,128], index: 8, kind: output, shape index: {}]
  %s9 = sld [smem:[#allocation0]]
  $region50: #{hybrid_gnn_forward.7} parent=0
    _
  %s11 = ssub.s32 1, %s9
  %s12 = scalar_select 0, %s11, %s9
  // Predicated region
  $region2: #{hybrid_gnn_forward.7} parent=0 // pred_check
    _
  $region3: #{hybrid_gnn_forward.7} parent=0 // pred_check_branch
    %14 = sbr.rel (0) target = $region5
  $region4: #{hybrid_gnn_forward.7} parent=0 // pred_region
    _
  $region5: #{hybrid_gnn_forward.7} parent=0 // pred_fallthru
    _
  // Predicated region
  $region6: #{hybrid_gnn_forward.7} parent=0 // pred_check
    _
  $region7: #{hybrid_gnn_forward.7} parent=0 // pred_check_branch
    %16 = sbr.rel (0) target = $region9
  $region8: #{hybrid_gnn_forward.7} parent=0 // pred_region
    _
  $region9: #{hybrid_gnn_forward.7} parent=0 // pred_fallthru
    _
  // Predicated region
  $region10: #{hybrid_gnn_forward.7} parent=0 // pred_check
    _
  $region11: #{hybrid_gnn_forward.7} parent=0 // pred_check_branch
    %18 = sbr.rel (0) target = $region13
  $region12: #{hybrid_gnn_forward.7} parent=0 // pred_region
    _
  $region13: #{hybrid_gnn_forward.7} parent=0 // pred_fallthru
    _
  // Predicated region
  $region14: #{hybrid_gnn_forward.7} parent=0 // pred_check
    _
  $region15: #{hybrid_gnn_forward.7} parent=0 // pred_check_branch
    %20 = sbr.rel (0) target = $region17
  $region16: #{hybrid_gnn_forward.7} parent=0 // pred_region
    _
  $region17: #{hybrid_gnn_forward.7} parent=0 // pred_fallthru
    _
  // Predicated region
  $region18: #{hybrid_gnn_forward.7} parent=0 // pred_check
    _
  $region19: #{hybrid_gnn_forward.7} parent=0 // pred_check_branch
    %22 = sbr.rel (0) target = $region21
  $region20: #{hybrid_gnn_forward.7} parent=0 // pred_region
    _
  $region21: #{hybrid_gnn_forward.7} parent=0 // pred_fallthru
    _
  // Predicated region
  $region22: #{hybrid_gnn_forward.7} parent=0 // pred_check
    _
  $region23: #{hybrid_gnn_forward.7} parent=0 // pred_check_branch
    %24 = sbr.rel (0) target = $region25
  $region24: #{hybrid_gnn_forward.7} parent=0 // pred_region
    _
  $region25: #{hybrid_gnn_forward.7} parent=0 // pred_fallthru
    _
  // Predicated region
  $region26: #{hybrid_gnn_forward.7} parent=0 // pred_check
    _
  $region27: #{hybrid_gnn_forward.7} parent=0 // pred_check_branch
    %26 = sbr.rel (0) target = $region29
  $region28: #{hybrid_gnn_forward.7} parent=0 // pred_region
    _
  $region29: #{hybrid_gnn_forward.7} parent=0 // pred_fallthru
    _
  // Predicated region
  $region30: #{hybrid_gnn_forward.7} parent=0 // pred_check
    _
  $region31: #{hybrid_gnn_forward.7} parent=0 // pred_check_branch
    %28 = sbr.rel (0) target = $region33
  $region32: #{hybrid_gnn_forward.7} parent=0 // pred_region
    _
  $region33: #{hybrid_gnn_forward.7} parent=0 // pred_fallthru
    _
  %p30 = scmp.eq.s32.totalorder 0, 0
  // Predicated region
  $region34: #{hybrid_gnn_forward.7} parent=0 // pred_check
    %p31 = pneg %p30
  $region35: #{hybrid_gnn_forward.7} parent=0 // pred_check_branch
    %33 = sbr.rel (%p31) target = $region37
  $region36: #{hybrid_gnn_forward.7} parent=0 // pred_region
    %34 = vst [vmem:[%s8] sm:$0xff] 0.0
    %35 = vst [vmem:[%s8 + $0x8] sm:$0xff] 0.0
    %36 = vst [vmem:[%s8 + $0x10] sm:$0xff] 0.0
    %37 = vst [vmem:[%s8 + $0x18] sm:$0xff] 0.0
    %38 = vst [vmem:[%s8 + $0x20] sm:$0xff] 0.0
    %39 = vst [vmem:[%s8 + $0x28] sm:$0xff] 0.0
  $region37: #{hybrid_gnn_forward.7} parent=0 // pred_fallthru
    _
  %v40 = vlaneseq
  %v41 = vand.u32 %v40, 127
  %v42 = vld [vmem:[%s0] sm:$0xff]
  %v43 = vld [vmem:[%s0 + $0x8] sm:$0xff]
  %v44 = vld [vmem:[%s0 + $0x10] sm:$0xff]
  %v45 = vld [vmem:[%s0 + $0x18] sm:$0xff]
  %v46 = vld [vmem:[%s0 + $0x20] sm:$0xff]
  %v47 = vld [vmem:[%s0 + $0x28] sm:$0xff]
  %v48 = vld [vmem:[%s0 + $0x30] sm:$0xff]
  %v49 = vld [vmem:[%s0 + $0x38] sm:$0xff]
  %50 = vset.pattern.permute.xlu0 0
  %51 = vperm.xlu0 %50, %v42
  %v52 = vpop.permute.xlu0 %51
  %53 = vset.pattern.permute.xlu0 0
  %54 = vperm.xlu0 %53, %v43
  %v55 = vpop.permute.xlu0 %54
  %56 = vset.pattern.permute.xlu0 0
  %57 = vperm.xlu0 %56, %v44
  %v58 = vpop.permute.xlu0 %57
  %59 = vset.pattern.permute.xlu0 0
  %60 = vperm.xlu0 %59, %v45
  %v61 = vpop.permute.xlu0 %60
  %62 = vset.pattern.permute.xlu0 0
  %63 = vperm.xlu0 %62, %v46
  %v64 = vpop.permute.xlu0 %63
  %65 = vset.pattern.permute.xlu0 0
  %66 = vperm.xlu0 %65, %v47
  %v67 = vpop.permute.xlu0 %66
  %68 = vset.pattern.permute.xlu0 0
  %69 = vperm.xlu0 %68, %v48
  %v70 = vpop.permute.xlu0 %69
  %71 = vset.pattern.permute.xlu0 0
  %72 = vperm.xlu0 %71, %v49
  %v73 = vpop.permute.xlu0 %72
  %vm74 = vcmp.eq.s32.totalorder %v41, %v52
  %vm75 = vcmp.eq.s32.totalorder %v41, %v55
  %vm76 = vcmp.eq.s32.totalorder %v41, %v58
  %vm77 = vcmp.eq.s32.totalorder %v41, %v61
  %vm78 = vcmp.eq.s32.totalorder %v41, %v64
  %vm79 = vcmp.eq.s32.totalorder %v41, %v67
  %vm80 = vcmp.eq.s32.totalorder %v41, %v70
  %vm81 = vcmp.eq.s32.totalorder %v41, %v73
  %v82 = vsel %vm74, 1, 0
  %v83 = vsel %vm75, 1, 0
  %v84 = vsel %vm76, 1, 0
  %v85 = vsel %vm77, 1, 0
  %v86 = vsel %vm78, 1, 0
  %v87 = vsel %vm79, 1, 0
  %v88 = vsel %vm80, 1, 0
  %v89 = vsel %vm81, 1, 0
  %v90 = vcvt.s32.f32 %v82
  %v91 = vcvt.s32.f32 %v83
  %v92 = vcvt.s32.f32 %v84
  %v93 = vcvt.s32.f32 %v85
  %v94 = vcvt.s32.f32 %v86
  %v95 = vcvt.s32.f32 %v87
  %v96 = vcvt.s32.f32 %v88
  %v97 = vcvt.s32.f32 %v89
  %v98 = vlaneseq
  %v99 = vshrl.u32 %v98, 7
  %v100 = vadd.s32 %v99, 8
  %v101 = vadd.s32 %v99, 16
  %v102 = vadd.s32 %v99, 24
  %v103 = vadd.s32 %v99, 32
  %v104 = vadd.s32 %v99, 40
  %v105 = vld [vmem:[%s1] sm:$0x1]
  %v106 = vlaneseq
  %v107 = vshrl.u32 %v106, 7
  %v108 = vsub.s32 0, %v107
  %v109 = vrot.slane %v105, %v108
  %vm110 = vcmp.eq.s32.totalorder %v99, %v109
  %vm111 = vcmp.eq.s32.totalorder %v100, %v109
  %vm112 = vcmp.eq.s32.totalorder %v101, %v109
  %vm113 = vcmp.eq.s32.totalorder %v102, %v109
  %vm114 = vcmp.eq.s32.totalorder %v103, %v109
  %vm115 = vcmp.eq.s32.totalorder %v104, %v109
  %v116 = vsel %vm110, 1, 0
  %v117 = vsel %vm111, 1, 0
  %v118 = vsel %vm112, 1, 0
  %v119 = vsel %vm113, 1, 0
  %v120 = vsel %vm114, 1, 0
  %v121 = vsel %vm115, 1, 0
  %v122 = vcvt.s32.f32 %v116
  %v123 = vcvt.s32.f32 %v117
  %v124 = vcvt.s32.f32 %v118
  %v125 = vcvt.s32.f32 %v119
  %v126 = vcvt.s32.f32 %v120
  %v127 = vcvt.s32.f32 %v121
  %v128 = vld [vmem:[%s2] sm:$0xff]
  %v129 = vld [vmem:[%s2 + $0x8] sm:$0xff]
  %v130 = vld [vmem:[%s2 + $0x10] sm:$0xff]
  %v131 = vld [vmem:[%s2 + $0x18] sm:$0xff]
  %v132 = vld [vmem:[%s2 + $0x20] sm:$0xff]
  %v133 = vld [vmem:[%s2 + $0x28] sm:$0xff]
  %v134 = vld [vmem:[%s2 + $0x30] sm:$0xff]
  %v135 = vld [vmem:[%s2 + $0x38] sm:$0xff]
  %v136 = vld [vmem:[%s3] sm:$0xff]
  %v137 = vld [vmem:[%s3 + $0xc8] sm:$0xff]
  %v138 = vld [vmem:[%s3 + $0x190] sm:$0xff]
  %v139 = vld [vmem:[%s3 + $0x258] sm:$0xff]
  %v140 = vld [vmem:[%s3 + $0x320] sm:$0xff]
  %v141 = vld [vmem:[%s3 + $0x3e8] sm:$0xff]
  %vm142 = vcmask 392192
  %v144 = vsel %vm142, %v90, 0
  %v147 = vsel %vm142, %v91, 0
  %v150 = vsel %vm142, %v92, 0
  %v153 = vsel %vm142, %v93, 0
  %v156 = vsel %vm142, %v94, 0
  %v159 = vsel %vm142, %v95, 0
  %v162 = vsel %vm142, %v96, 0
  %v165 = vsel %vm142, %v97, 0
  %167 = vmatprep.subr.mxu0 0.0
  %168 = vmatpush1.msra.mxu0 %v136
  %169 = vmatprep.subr.mxu0 0.0
  %170 = vmatpush1.msra.mxu0 %v137
  %171 = vmatprep.subr.mxu0 0.0
  %172 = vmatpush1.msra.mxu0 %v138
  %173 = vmatprep.subr.mxu0 0.0
  %174 = vmatpush1.msra.mxu0 %v139
  %175 = vmatprep.subr.mxu0 0.0
  %176 = vmatpush1.msra.mxu0 %v140
  %177 = vmatprep.subr.mxu0 0.0
  %178 = vmatpush1.msra.mxu0 %v141
  %179 = vmatprep.subr.mxu0 0.0
  %180 = vmatpush1.msra.mxu0 0.0
  %181 = vmatprep.subr.mxu0 0.0
  %182 = vmatpush1.msra.mxu0 0.0
  %183 = vmatprep.subr.mxu0 0.0
  %184 = vmatpush1.msra.mxu0 0.0
  %185 = vmatprep.subr.mxu0 0.0
  %186 = vmatpush1.msra.mxu0 0.0
  %187 = vmatprep.subr.mxu0 0.0
  %188 = vmatpush1.msra.mxu0 0.0
  %189 = vmatprep.subr.mxu0 0.0
  %190 = vmatpush1.msra.mxu0 0.0
  %191 = vmatprep.subr.mxu0 0.0
  %192 = vmatpush1.msra.mxu0 0.0
  %193 = vmatprep.subr.mxu0 0.0
  %194 = vmatpush1.msra.mxu0 0.0
  %195 = vmatprep.subr.mxu0 0.0
  %196 = vmatpush1.msra.mxu0 0.0
  %197 = vmatprep.subr.mxu0 0.0
  %198 = vmatpush1.msra.mxu0 0.0
  %199 = vmatprep.subr.mxu0 0.0
  %200 = vmatpush1.msra.mxu0 0.0
  %201 = vmatprep.subr.mxu0 0.0
  %202 = vmatpush1.msra.mxu0 0.0
  %203 = vmatprep.subr.mxu0 0.0
  %204 = vmatpush1.msra.mxu0 0.0
  %205 = vmatprep.subr.mxu0 0.0
  %206 = vmatpush1.msra.mxu0 0.0
  %207 = vmatprep.subr.mxu0 0.0
  %208 = vmatpush1.msra.mxu0 0.0
  %209 = vmatprep.subr.mxu0 0.0
  %210 = vmatpush1.msra.mxu0 0.0
  %211 = vmatprep.subr.mxu0 0.0
  %212 = vmatpush1.msra.mxu0 0.0
  %213 = vmatprep.subr.mxu0 0.0
  %214 = vmatpush1.msra.mxu0 0.0
  %215 = vmatprep.subr.mxu0 0.0
  %216 = vmatpush1.msra.mxu0 0.0
  %217 = vmatprep.subr.mxu0 0.0
  %218 = vmatpush1.msra.mxu0 0.0
  %219 = vmatprep.subr.mxu0 0.0
  %220 = vmatpush1.msra.mxu0 0.0
  %221 = vmatprep.subr.mxu0 0.0
  %222 = vmatpush1.msra.mxu0 0.0
  %223 = vmatprep.subr.mxu0 0.0
  %224 = vmatpush1.msra.mxu0 0.0
  %225 = vmatprep.subr.mxu0 0.0
  %226 = vmatpush1.msra.mxu0 0.0
  %227 = vmatprep.subr.mxu0 0.0
  %228 = vmatpush1.msra.mxu0 0.0
  %229 = vmatprep.subr.mxu0 0.0
  %230 = vmatpush1.msra.mxu0 0.0
  %231 = vmatprep.mubr.f32.mxu0 0.0
  %232 = vmatmul.mubr.f32.gmra.mrb[0].mxu0 %v144
  %v233 = vpop.f32.mrb[0].mxu0
  %v234 = vadd.f32 0.0, %v233
  %v235 = vpop.f32.mrb[0].mxu0
  %236 = vmatprep.mubr.f32.mxu0 0.0
  %237 = vmatmul.mubr.f32.gmra.mrb[0].mxu0 %v147
  %v238 = vpop.f32.mrb[0].mxu0
  %v239 = vadd.f32 0.0, %v238
  %v240 = vpop.f32.mrb[0].mxu0
  %241 = vmatprep.mubr.f32.mxu0 0.0
  %242 = vmatmul.mubr.f32.gmra.mrb[0].mxu0 %v150
  %v243 = vpop.f32.mrb[0].mxu0
  %v244 = vadd.f32 0.0, %v243
  %v245 = vpop.f32.mrb[0].mxu0
  %246 = vmatprep.mubr.f32.mxu0 0.0
  %247 = vmatmul.mubr.f32.gmra.mrb[0].mxu0 %v153
  %v248 = vpop.f32.mrb[0].mxu0
  %v249 = vadd.f32 0.0, %v248
  %v250 = vpop.f32.mrb[0].mxu0
  %251 = vmatprep.mubr.f32.mxu0 0.0
  %252 = vmatmul.mubr.f32.gmra.mrb[0].mxu0 %v156
  %v253 = vpop.f32.mrb[0].mxu0
  %v254 = vadd.f32 0.0, %v253
  %v255 = vpop.f32.mrb[0].mxu0
  %256 = vmatprep.mubr.f32.mxu0 0.0
  %257 = vmatmul.mubr.f32.gmra.mrb[0].mxu0 %v159
  %v258 = vpop.f32.mrb[0].mxu0
  %v259 = vadd.f32 0.0, %v258
  %v260 = vpop.f32.mrb[0].mxu0
  %261 = vmatprep.mubr.f32.mxu0 0.0
  %262 = vmatmul.mubr.f32.gmra.mrb[0].mxu0 %v162
  %v263 = vpop.f32.mrb[0].mxu0
  %v264 = vadd.f32 0.0, %v263
  %v265 = vpop.f32.mrb[0].mxu0
  %266 = vmatprep.mubr.f32.mxu0 0.0
  %267 = vmatmul.mubr.f32.gmra.mrb[0].mxu0 %v165
  %v268 = vpop.f32.mrb[0].mxu0
  %v269 = vadd.f32 0.0, %v268
  %v270 = vpop.f32.mrb[0].mxu0
  %271 = vdwg.mxu0
  %273 = vset.pattern.permute.xlu0 0
  %274 = vperm.xlu0 %273, %v128
  %v275 = vpop.permute.xlu0 %274
  %278 = vset.pattern.permute.xlu0 0
  %279 = vperm.xlu0 %278, %v129
  %v280 = vpop.permute.xlu0 %279
  %283 = vset.pattern.permute.xlu0 0
  %284 = vperm.xlu0 %283, %v130
  %v285 = vpop.permute.xlu0 %284
  %288 = vset.pattern.permute.xlu0 0
  %289 = vperm.xlu0 %288, %v131
  %v290 = vpop.permute.xlu0 %289
  %293 = vset.pattern.permute.xlu0 0
  %294 = vperm.xlu0 %293, %v132
  %v295 = vpop.permute.xlu0 %294
  %298 = vset.pattern.permute.xlu0 0
  %299 = vperm.xlu0 %298, %v133
  %v300 = vpop.permute.xlu0 %299
  %303 = vset.pattern.permute.xlu0 0
  %304 = vperm.xlu0 %303, %v134
  %v305 = vpop.permute.xlu0 %304
  %308 = vset.pattern.permute.xlu0 0
  %309 = vperm.xlu0 %308, %v135
  %v310 = vpop.permute.xlu0 %309
  %v312 = vmul.f32 %v234, %v275
  %v313 = vmul.f32 %v239, %v280
  %v314 = vmul.f32 %v244, %v285
  %v315 = vmul.f32 %v249, %v290
  %v316 = vmul.f32 %v254, %v295
  %v317 = vmul.f32 %v259, %v300
  %v318 = vmul.f32 %v264, %v305
  %v319 = vmul.f32 %v269, %v310
  %v320 = vadd.f32 %v312, 0.0
  %v321 = vadd.f32 %v313, 0.0
  %v322 = vadd.f32 %v314, 0.0
  %v323 = vadd.f32 %v315, 0.0
  %v324 = vadd.f32 %v316, 0.0
  %v325 = vadd.f32 %v317, 0.0
  %v326 = vadd.f32 %v318, 0.0
  %v327 = vadd.f32 %v319, 0.0
  %v328 = vld [vmem:[%s3 + $0x8] sm:$0xff]
  %v329 = vld [vmem:[%s3 + $0xd0] sm:$0xff]
  %v330 = vld [vmem:[%s3 + $0x198] sm:$0xff]
  %v331 = vld [vmem:[%s3 + $0x260] sm:$0xff]
  %v332 = vld [vmem:[%s3 + $0x328] sm:$0xff]
  %v333 = vld [vmem:[%s3 + $0x3f0] sm:$0xff]
  %334 = vmatprep.subr.mxu0 0.0
  %335 = vmatpush1.msra.mxu0 %v328
  %336 = vmatprep.subr.mxu0 0.0
  %337 = vmatpush1.msra.mxu0 %v329
  %338 = vmatprep.subr.mxu0 0.0
  %339 = vmatpush1.msra.mxu0 %v330
  %340 = vmatprep.subr.mxu0 0.0
  %341 = vmatpush1.msra.mxu0 %v331
  %342 = vmatprep.subr.mxu0 0.0
  %343 = vmatpush1.msra.mxu0 %v332
  %344 = vmatprep.subr.mxu0 0.0
  %345 = vmatpush1.msra.mxu0 %v333
  %346 = vmatprep.subr.mxu0 0.0
  %347 = vmatpush1.msra.mxu0 0.0
  %348 = vmatprep.subr.mxu0 0.0
  %349 = vmatpush1.msra.mxu0 0.0
  %350 = vmatprep.subr.mxu0 0.0
  %351 = vmatpush1.msra.mxu0 0.0
  %352 = vmatprep.subr.mxu0 0.0
  %353 = vmatpush1.msra.mxu0 0.0
  %354 = vmatprep.subr.mxu0 0.0
  %355 = vmatpush1.msra.mxu0 0.0
  %356 = vmatprep.subr.mxu0 0.0
  %357 = vmatpush1.msra.mxu0 0.0
  %358 = vmatprep.subr.mxu0 0.0
  %359 = vmatpush1.msra.mxu0 0.0
  %360 = vmatprep.subr.mxu0 0.0
  %361 = vmatpush1.msra.mxu0 0.0
  %362 = vmatprep.subr.mxu0 0.0
  %363 = vmatpush1.msra.mxu0 0.0
  %364 = vmatprep.subr.mxu0 0.0
  %365 = vmatpush1.msra.mxu0 0.0
  %366 = vmatprep.subr.mxu0 0.0
  %367 = vmatpush1.msra.mxu0 0.0
  %368 = vmatprep.subr.mxu0 0.0
  %369 = vmatpush1.msra.mxu0 0.0
  %370 = vmatprep.subr.mxu0 0.0
  %371 = vmatpush1.msra.mxu0 0.0
  %372 = vmatprep.subr.mxu0 0.0
  %373 = vmatpush1.msra.mxu0 0.0
  %374 = vmatprep.subr.mxu0 0.0
  %375 = vmatpush1.msra.mxu0 0.0
  %376 = vmatprep.subr.mxu0 0.0
  %377 = vmatpush1.msra.mxu0 0.0
  %378 = vmatprep.subr.mxu0 0.0
  %379 = vmatpush1.msra.mxu0 0.0
  %380 = vmatprep.subr.mxu0 0.0
  %381 = vmatpush1.msra.mxu0 0.0
  %382 = vmatprep.subr.mxu0 0.0
  %383 = vmatpush1.msra.mxu0 0.0
  %384 = vmatprep.subr.mxu0 0.0
  %385 = vmatpush1.msra.mxu0 0.0
  %386 = vmatprep.subr.mxu0 0.0
  %387 = vmatpush1.msra.mxu0 0.0
  %388 = vmatprep.subr.mxu0 0.0
  %389 = vmatpush1.msra.mxu0 0.0
  %390 = vmatprep.subr.mxu0 0.0
  %391 = vmatpush1.msra.mxu0 0.0
  %392 = vmatprep.subr.mxu0 0.0
  %393 = vmatpush1.msra.mxu0 0.0
  %394 = vmatprep.subr.mxu0 0.0
  %395 = vmatpush1.msra.mxu0 0.0
  %396 = vmatprep.subr.mxu0 0.0
  %397 = vmatpush1.msra.mxu0 0.0
  %398 = vmatprep.mubr.f32.mxu0 0.0
  %399 = vmatmul.mubr.f32.gmra.mrb[0].mxu0 %v144
  %v400 = vpop.f32.mrb[0].mxu0
  %v401 = vadd.f32 0.0, %v400
  %v402 = vpop.f32.mrb[0].mxu0
  %403 = vmatprep.mubr.f32.mxu0 0.0
  %404 = vmatmul.mubr.f32.gmra.mrb[0].mxu0 %v147
  %v405 = vpop.f32.mrb[0].mxu0
  %v406 = vadd.f32 0.0, %v405
  %v407 = vpop.f32.mrb[0].mxu0
  %408 = vmatprep.mubr.f32.mxu0 0.0
  %409 = vmatmul.mubr.f32.gmra.mrb[0].mxu0 %v150
  %v410 = vpop.f32.mrb[0].mxu0
  %v411 = vadd.f32 0.0, %v410
  %v412 = vpop.f32.mrb[0].mxu0
  %413 = vmatprep.mubr.f32.mxu0 0.0
  %414 = vmatmul.mubr.f32.gmra.mrb[0].mxu0 %v153
  %v415 = vpop.f32.mrb[0].mxu0
  %v416 = vadd.f32 0.0, %v415
  %v417 = vpop.f32.mrb[0].mxu0
  %418 = vmatprep.mubr.f32.mxu0 0.0
  %419 = vmatmul.mubr.f32.gmra.mrb[0].mxu0 %v156
  %v420 = vpop.f32.mrb[0].mxu0
  %v421 = vadd.f32 0.0, %v420
  %v422 = vpop.f32.mrb[0].mxu0
  %423 = vmatprep.mubr.f32.mxu0 0.0
  %424 = vmatmul.mubr.f32.gmra.mrb[0].mxu0 %v159
  %v425 = vpop.f32.mrb[0].mxu0
  %v426 = vadd.f32 0.0, %v425
  %v427 = vpop.f32.mrb[0].mxu0
  %428 = vmatprep.mubr.f32.mxu0 0.0
  %429 = vmatmul.mubr.f32.gmra.mrb[0].mxu0 %v162
  %v430 = vpop.f32.mrb[0].mxu0
  %v431 = vadd.f32 0.0, %v430
  %v432 = vpop.f32.mrb[0].mxu0
  %433 = vmatprep.mubr.f32.mxu0 0.0
  %434 = vmatmul.mubr.f32.gmra.mrb[0].mxu0 %v165
  %v435 = vpop.f32.mrb[0].mxu0
  %v436 = vadd.f32 0.0, %v435
  %v437 = vpop.f32.mrb[0].mxu0
  %438 = vdwg.mxu0
  %439 = vset.pattern.permute.xlu0 1
  %440 = vperm.xlu0 %439, %v128
  %v441 = vpop.permute.xlu0 %440
  %443 = vset.pattern.permute.xlu0 1
  %444 = vperm.xlu0 %443, %v129
  %v445 = vpop.permute.xlu0 %444
  %447 = vset.pattern.permute.xlu0 1
  %448 = vperm.xlu0 %447, %v130
  %v449 = vpop.permute.xlu0 %448
  %451 = vset.pattern.permute.xlu0 1
  %452 = vperm.xlu0 %451, %v131
  %v453 = vpop.permute.xlu0 %452
  %455 = vset.pattern.permute.xlu0 1
  %456 = vperm.xlu0 %455, %v132
  %v457 = vpop.permute.xlu0 %456
  %459 = vset.pattern.permute.xlu0 1
  %460 = vperm.xlu0 %459, %v133
  %v461 = vpop.permute.xlu0 %460
  %463 = vset.pattern.permute.xlu0 1
  %464 = vperm.xlu0 %463, %v134
  %v465 = vpop.permute.xlu0 %464
  %467 = vset.pattern.permute.xlu0 1
  %468 = vperm.xlu0 %467, %v135
  %v469 = vpop.permute.xlu0 %468
  %v471 = vmul.f32 %v401, %v441
  %v472 = vmul.f32 %v406, %v445
  %v473 = vmul.f32 %v411, %v449
  %v474 = vmul.f32 %v416, %v453
  %v475 = vmul.f32 %v421, %v457
  %v476 = vmul.f32 %v426, %v461
  %v477 = vmul.f32 %v431, %v465
  %v478 = vmul.f32 %v436, %v469
  %v479 = vadd.f32 %v320, %v471
  %v480 = vadd.f32 %v321, %v472
  %v481 = vadd.f32 %v322, %v473
  %v482 = vadd.f32 %v323, %v474
  %v483 = vadd.f32 %v324, %v475
  %v484 = vadd.f32 %v325, %v476
  %v485 = vadd.f32 %v326, %v477
  %v486 = vadd.f32 %v327, %v478
  %v487 = vld [vmem:[%s3 + $0x10] sm:$0xff]
  %v488 = vld [vmem:[%s3 + $0xd8] sm:$0xff]
  %v489 = vld [vmem:[%s3 + $0x1a0] sm:$0xff]
  %v490 = vld [vmem:[%s3 + $0x268] sm:$0xff]
  %v491 = vld [vmem:[%s3 + $0x330] sm:$0xff]
  %v492 = vld [vmem:[%s3 + $0x3f8] sm:$0xff]
  %493 = vmatprep.subr.mxu0 0.0
  %494 = vmatpush1.msra.mxu0 %v487
  %495 = vmatprep.subr.mxu0 0.0
  %496 = vmatpush1.msra.mxu0 %v488
  %497 = vmatprep.subr.mxu0 0.0
  %498 = vmatpush1.msra.mxu0 %v489
  %499 = vmatprep.subr.mxu0 0.0
  %500 = vmatpush1.msra.mxu0 %v490
  %501 = vmatprep.subr.mxu0 0.0
  %502 = vmatpush1.msra.mxu0 %v491
  %503 = vmatprep.subr.mxu0 0.0
  %504 = vmatpush1.msra.mxu0 %v492
  %505 = vmatprep.subr.mxu0 0.0
  %506 = vmatpush1.msra.mxu0 0.0
  %507 = vmatprep.subr.mxu0 0.0
  %508 = vmatpush1.msra.mxu0 0.0
  %509 = vmatprep.subr.mxu0 0.0
  %510 = vmatpush1.msra.mxu0 0.0
  %511 = vmatprep.subr.mxu0 0.0
  %512 = vmatpush1.msra.mxu0 0.0
  %513 = vmatprep.subr.mxu0 0.0
  %514 = vmatpush1.msra.mxu0 0.0
  %515 = vmatprep.subr.mxu0 0.0
  %516 = vmatpush1.msra.mxu0 0.0
  %517 = vmatprep.subr.mxu0 0.0
  %518 = vmatpush1.msra.mxu0 0.0
  %519 = vmatprep.subr.mxu0 0.0
  %520 = vmatpush1.msra.mxu0 0.0
  %521 = vmatprep.subr.mxu0 0.0
  %522 = vmatpush1.msra.mxu0 0.0
  %523 = vmatprep.subr.mxu0 0.0
  %524 = vmatpush1.msra.mxu0 0.0
  %525 = vmatprep.subr.mxu0 0.0
  %526 = vmatpush1.msra.mxu0 0.0
  %527 = vmatprep.subr.mxu0 0.0
  %528 = vmatpush1.msra.mxu0 0.0
  %529 = vmatprep.subr.mxu0 0.0
  %530 = vmatpush1.msra.mxu0 0.0
  %531 = vmatprep.subr.mxu0 0.0
  %532 = vmatpush1.msra.mxu0 0.0
  %533 = vmatprep.subr.mxu0 0.0
  %534 = vmatpush1.msra.mxu0 0.0
  %535 = vmatprep.subr.mxu0 0.0
  %536 = vmatpush1.msra.mxu0 0.0
  %537 = vmatprep.subr.mxu0 0.0
  %538 = vmatpush1.msra.mxu0 0.0
  %539 = vmatprep.subr.mxu0 0.0
  %540 = vmatpush1.msra.mxu0 0.0
  %541 = vmatprep.subr.mxu0 0.0
  %542 = vmatpush1.msra.mxu0 0.0
  %543 = vmatprep.subr.mxu0 0.0
  %544 = vmatpush1.msra.mxu0 0.0
  %545 = vmatprep.subr.mxu0 0.0
  %546 = vmatpush1.msra.mxu0 0.0
  %547 = vmatprep.subr.mxu0 0.0
  %548 = vmatpush1.msra.mxu0 0.0
  %549 = vmatprep.subr.mxu0 0.0
  %550 = vmatpush1.msra.mxu0 0.0
  %551 = vmatprep.subr.mxu0 0.0
  %552 = vmatpush1.msra.mxu0 0.0
  %553 = vmatprep.subr.mxu0 0.0
  %554 = vmatpush1.msra.mxu0 0.0
  %555 = vmatprep.subr.mxu0 0.0
  %556 = vmatpush1.msra.mxu0 0.0
  %557 = vmatprep.mubr.f32.mxu0 0.0
  %558 = vmatmul.mubr.f32.gmra.mrb[0].mxu0 %v144
  %v559 = vpop.f32.mrb[0].mxu0
  %v560 = vadd.f32 0.0, %v559
  %v561 = vpop.f32.mrb[0].mxu0
  %562 = vmatprep.mubr.f32.mxu0 0.0
  %563 = vmatmul.mubr.f32.gmra.mrb[0].mxu0 %v147
  %v564 = vpop.f32.mrb[0].mxu0
  %v565 = vadd.f32 0.0, %v564
  %v566 = vpop.f32.mrb[0].mxu0
  %567 = vmatprep.mubr.f32.mxu0 0.0
  %568 = vmatmul.mubr.f32.gmra.mrb[0].mxu0 %v150
  %v569 = vpop.f32.mrb[0].mxu0
  %v570 = vadd.f32 0.0, %v569
  %v571 = vpop.f32.mrb[0].mxu0
  %572 = vmatprep.mubr.f32.mxu0 0.0
  %573 = vmatmul.mubr.f32.gmra.mrb[0].mxu0 %v153
  %v574 = vpop.f32.mrb[0].mxu0
  %v575 = vadd.f32 0.0, %v574
  %v576 = vpop.f32.mrb[0].mxu0
  %577 = vmatprep.mubr.f32.mxu0 0.0
  %578 = vmatmul.mubr.f32.gmra.mrb[0].mxu0 %v156
  %v579 = vpop.f32.mrb[0].mxu0
  %v580 = vadd.f32 0.0, %v579
  %v581 = vpop.f32.mrb[0].mxu0
  %582 = vmatprep.mubr.f32.mxu0 0.0
  %583 = vmatmul.mubr.f32.gmra.mrb[0].mxu0 %v159
  %v584 = vpop.f32.mrb[0].mxu0
  %v585 = vadd.f32 0.0, %v584
  %v586 = vpop.f32.mrb[0].mxu0
  %587 = vmatprep.mubr.f32.mxu0 0.0
  %588 = vmatmul.mubr.f32.gmra.mrb[0].mxu0 %v162
  %v589 = vpop.f32.mrb[0].mxu0
  %v590 = vadd.f32 0.0, %v589
  %v591 = vpop.f32.mrb[0].mxu0
  %592 = vmatprep.mubr.f32.mxu0 0.0
  %593 = vmatmul.mubr.f32.gmra.mrb[0].mxu0 %v165
  %v594 = vpop.f32.mrb[0].mxu0
  %v595 = vadd.f32 0.0, %v594
  %v596 = vpop.f32.mrb[0].mxu0
  %597 = vdwg.mxu0
  %598 = vset.pattern.permute.xlu0 2
  %599 = vperm.xlu0 %598, %v128
  %v600 = vpop.permute.xlu0 %599
  %602 = vset.pattern.permute.xlu0 2
  %603 = vperm.xlu0 %602, %v129
  %v604 = vpop.permute.xlu0 %603
  %606 = vset.pattern.permute.xlu0 2
  %607 = vperm.xlu0 %606, %v130
  %v608 = vpop.permute.xlu0 %607
  %610 = vset.pattern.permute.xlu0 2
  %611 = vperm.xlu0 %610, %v131
  %v612 = vpop.permute.xlu0 %611
  %614 = vset.pattern.permute.xlu0 2
  %615 = vperm.xlu0 %614, %v132
  %v616 = vpop.permute.xlu0 %615
  %618 = vset.pattern.permute.xlu0 2
  %619 = vperm.xlu0 %618, %v133
  %v620 = vpop.permute.xlu0 %619
  %622 = vset.pattern.permute.xlu0 2
  %623 = vperm.xlu0 %622, %v134
  %v624 = vpop.permute.xlu0 %623
  %626 = vset.pattern.permute.xlu0 2
  %627 = vperm.xlu0 %626, %v135
  %v628 = vpop.permute.xlu0 %627
  %v630 = vmul.f32 %v560, %v600
  %v631 = vmul.f32 %v565, %v604
  %v632 = vmul.f32 %v570, %v608
  %v633 = vmul.f32 %v575, %v612
  %v634 = vmul.f32 %v580, %v616
  %v635 = vmul.f32 %v585, %v620
  %v636 = vmul.f32 %v590, %v624
  %v637 = vmul.f32 %v595, %v628
  %v638 = vadd.f32 %v479, %v630
  %v639 = vadd.f32 %v480, %v631
  %v640 = vadd.f32 %v481, %v632
  %v641 = vadd.f32 %v482, %v633
  %v642 = vadd.f32 %v483, %v634
  %v643 = vadd.f32 %v484, %v635
  %v644 = vadd.f32 %v485, %v636
  %v645 = vadd.f32 %v486, %v637
  %v646 = vld [vmem:[%s3 + $0x18] sm:$0xff]
  %v647 = vld [vmem:[%s3 + $0xe0] sm:$0xff]
  %v648 = vld [vmem:[%s3 + $0x1a8] sm:$0xff]
  %v649 = vld [vmem:[%s3 + $0x270] sm:$0xff]
  %v650 = vld [vmem:[%s3 + $0x338] sm:$0xff]
  %v651 = vld [vmem:[%s3 + $0x400] sm:$0xff]
  %652 = vmatprep.subr.mxu0 0.0
  %653 = vmatpush1.msra.mxu0 %v646
  %654 = vmatprep.subr.mxu0 0.0
  %655 = vmatpush1.msra.mxu0 %v647
  %656 = vmatprep.subr.mxu0 0.0
  %657 = vmatpush1.msra.mxu0 %v648
  %658 = vmatprep.subr.mxu0 0.0
  %659 = vmatpush1.msra.mxu0 %v649
  %660 = vmatprep.subr.mxu0 0.0
  %661 = vmatpush1.msra.mxu0 %v650
  %662 = vmatprep.subr.mxu0 0.0
  %663 = vmatpush1.msra.mxu0 %v651
  %664 = vmatprep.subr.mxu0 0.0
  %665 = vmatpush1.msra.mxu0 0.0
  %666 = vmatprep.subr.mxu0 0.0
  %667 = vmatpush1.msra.mxu0 0.0
  %668 = vmatprep.subr.mxu0 0.0
  %669 = vmatpush1.msra.mxu0 0.0
  %670 = vmatprep.subr.mxu0 0.0
  %671 = vmatpush1.msra.mxu0 0.0
  %672 = vmatprep.subr.mxu0 0.0
  %673 = vmatpush1.msra.mxu0 0.0
  %674 = vmatprep.subr.mxu0 0.0
  %675 = vmatpush1.msra.mxu0 0.0
  %676 = vmatprep.subr.mxu0 0.0
  %677 = vmatpush1.msra.mxu0 0.0
  %678 = vmatprep.subr.mxu0 0.0
  %679 = vmatpush1.msra.mxu0 0.0
  %680 = vmatprep.subr.mxu0 0.0
  %681 = vmatpush1.msra.mxu0 0.0
  %682 = vmatprep.subr.mxu0 0.0
  %683 = vmatpush1.msra.mxu0 0.0
  %684 = vmatprep.subr.mxu0 0.0
  %685 = vmatpush1.msra.mxu0 0.0
  %686 = vmatprep.subr.mxu0 0.0
  %687 = vmatpush1.msra.mxu0 0.0
  %688 = vmatprep.subr.mxu0 0.0
  %689 = vmatpush1.msra.mxu0 0.0
  %690 = vmatprep.subr.mxu0 0.0
  %691 = vmatpush1.msra.mxu0 0.0
  %692 = vmatprep.subr.mxu0 0.0
  %693 = vmatpush1.msra.mxu0 0.0
  %694 = vmatprep.subr.mxu0 0.0
  %695 = vmatpush1.msra.mxu0 0.0
  %696 = vmatprep.subr.mxu0 0.0
  %697 = vmatpush1.msra.mxu0 0.0
  %698 = vmatprep.subr.mxu0 0.0
  %699 = vmatpush1.msra.mxu0 0.0
  %700 = vmatprep.subr.mxu0 0.0
  %701 = vmatpush1.msra.mxu0 0.0
  %702 = vmatprep.subr.mxu0 0.0
  %703 = vmatpush1.msra.mxu0 0.0
  %704 = vmatprep.subr.mxu0 0.0
  %705 = vmatpush1.msra.mxu0 0.0
  %706 = vmatprep.subr.mxu0 0.0
  %707 = vmatpush1.msra.mxu0 0.0
  %708 = vmatprep.subr.mxu0 0.0
  %709 = vmatpush1.msra.mxu0 0.0
  %710 = vmatprep.subr.mxu0 0.0
  %711 = vmatpush1.msra.mxu0 0.0
  %712 = vmatprep.subr.mxu0 0.0
  %713 = vmatpush1.msra.mxu0 0.0
  %714 = vmatprep.subr.mxu0 0.0
  %715 = vmatpush1.msra.mxu0 0.0
  %716 = vmatprep.mubr.f32.mxu0 0.0
  %717 = vmatmul.mubr.f32.gmra.mrb[0].mxu0 %v144
  %v718 = vpop.f32.mrb[0].mxu0
  %v719 = vadd.f32 0.0, %v718
  %v720 = vpop.f32.mrb[0].mxu0
  %721 = vmatprep.mubr.f32.mxu0 0.0
  %722 = vmatmul.mubr.f32.gmra.mrb[0].mxu0 %v147
  %v723 = vpop.f32.mrb[0].mxu0
  %v724 = vadd.f32 0.0, %v723
  %v725 = vpop.f32.mrb[0].mxu0
  %726 = vmatprep.mubr.f32.mxu0 0.0
  %727 = vmatmul.mubr.f32.gmra.mrb[0].mxu0 %v150
  %v728 = vpop.f32.mrb[0].mxu0
  %v729 = vadd.f32 0.0, %v728
  %v730 = vpop.f32.mrb[0].mxu0
  %731 = vmatprep.mubr.f32.mxu0 0.0
  %732 = vmatmul.mubr.f32.gmra.mrb[0].mxu0 %v153
  %v733 = vpop.f32.mrb[0].mxu0
  %v734 = vadd.f32 0.0, %v733
  %v735 = vpop.f32.mrb[0].mxu0
  %736 = vmatprep.mubr.f32.mxu0 0.0
  %737 = vmatmul.mubr.f32.gmra.mrb[0].mxu0 %v156
  %v738 = vpop.f32.mrb[0].mxu0
  %v739 = vadd.f32 0.0, %v738
  %v740 = vpop.f32.mrb[0].mxu0
  %741 = vmatprep.mubr.f32.mxu0 0.0
  %742 = vmatmul.mubr.f32.gmra.mrb[0].mxu0 %v159
  %v743 = vpop.f32.mrb[0].mxu0
  %v744 = vadd.f32 0.0, %v743
  %v745 = vpop.f32.mrb[0].mxu0
  %746 = vmatprep.mubr.f32.mxu0 0.0
  %747 = vmatmul.mubr.f32.gmra.mrb[0].mxu0 %v162
  %v748 = vpop.f32.mrb[0].mxu0
  %v749 = vadd.f32 0.0, %v748
  %v750 = vpop.f32.mrb[0].mxu0
  %751 = vmatprep.mubr.f32.mxu0 0.0
  %752 = vmatmul.mubr.f32.gmra.mrb[0].mxu0 %v165
  %v753 = vpop.f32.mrb[0].mxu0
  %v754 = vadd.f32 0.0, %v753
  %v755 = vpop.f32.mrb[0].mxu0
  %756 = vdwg.mxu0
  %757 = vset.pattern.permute.xlu0 3
  %758 = vperm.xlu0 %757, %v128
  %v759 = vpop.permute.xlu0 %758
  %761 = vset.pattern.permute.xlu0 3
  %762 = vperm.xlu0 %761, %v129
  %v763 = vpop.permute.xlu0 %762
  %765 = vset.pattern.permute.xlu0 3
  %766 = vperm.xlu0 %765, %v130
  %v767 = vpop.permute.xlu0 %766
  %769 = vset.pattern.permute.xlu0 3
  %770 = vperm.xlu0 %769, %v131
  %v771 = vpop.permute.xlu0 %770
  %773 = vset.pattern.permute.xlu0 3
  %774 = vperm.xlu0 %773, %v132
  %v775 = vpop.permute.xlu0 %774
  %777 = vset.pattern.permute.xlu0 3
  %778 = vperm.xlu0 %777, %v133
  %v779 = vpop.permute.xlu0 %778
  %781 = vset.pattern.permute.xlu0 3
  %782 = vperm.xlu0 %781, %v134
  %v783 = vpop.permute.xlu0 %782
  %785 = vset.pattern.permute.xlu0 3
  %786 = vperm.xlu0 %785, %v135
  %v787 = vpop.permute.xlu0 %786
  %v789 = vmul.f32 %v719, %v759
  %v790 = vmul.f32 %v724, %v763
  %v791 = vmul.f32 %v729, %v767
  %v792 = vmul.f32 %v734, %v771
  %v793 = vmul.f32 %v739, %v775
  %v794 = vmul.f32 %v744, %v779
  %v795 = vmul.f32 %v749, %v783
  %v796 = vmul.f32 %v754, %v787
  %v797 = vadd.f32 %v638, %v789
  %v798 = vadd.f32 %v639, %v790
  %v799 = vadd.f32 %v640, %v791
  %v800 = vadd.f32 %v641, %v792
  %v801 = vadd.f32 %v642, %v793
  %v802 = vadd.f32 %v643, %v794
  %v803 = vadd.f32 %v644, %v795
  %v804 = vadd.f32 %v645, %v796
  %v805 = vld [vmem:[%s3 + $0x20] sm:$0xff]
  %v806 = vld [vmem:[%s3 + $0xe8] sm:$0xff]
  %v807 = vld [vmem:[%s3 + $0x1b0] sm:$0xff]
  %v808 = vld [vmem:[%s3 + $0x278] sm:$0xff]
  %v809 = vld [vmem:[%s3 + $0x340] sm:$0xff]
  %v810 = vld [vmem:[%s3 + $0x408] sm:$0xff]
  %811 = vmatprep.subr.mxu0 0.0
  %812 = vmatpush1.msra.mxu0 %v805
  %813 = vmatprep.subr.mxu0 0.0
  %814 = vmatpush1.msra.mxu0 %v806
  %815 = vmatprep.subr.mxu0 0.0
  %816 = vmatpush1.msra.mxu0 %v807
  %817 = vmatprep.subr.mxu0 0.0
  %818 = vmatpush1.msra.mxu0 %v808
  %819 = vmatprep.subr.mxu0 0.0
  %820 = vmatpush1.msra.mxu0 %v809
  %821 = vmatprep.subr.mxu0 0.0
  %822 = vmatpush1.msra.mxu0 %v810
  %823 = vmatprep.subr.mxu0 0.0
  %824 = vmatpush1.msra.mxu0 0.0
  %825 = vmatprep.subr.mxu0 0.0
  %826 = vmatpush1.msra.mxu0 0.0
  %827 = vmatprep.subr.mxu0 0.0
  %828 = vmatpush1.msra.mxu0 0.0
  %829 = vmatprep.subr.mxu0 0.0
  %830 = vmatpush1.msra.mxu0 0.0
  %831 = vmatprep.subr.mxu0 0.0
  %832 = vmatpush1.msra.mxu0 0.0
  %833 = vmatprep.subr.mxu0 0.0
  %834 = vmatpush1.msra.mxu0 0.0
  %835 = vmatprep.subr.mxu0 0.0
  %836 = vmatpush1.msra.mxu0 0.0
  %837 = vmatprep.subr.mxu0 0.0
  %838 = vmatpush1.msra.mxu0 0.0
  %839 = vmatprep.subr.mxu0 0.0
  %840 = vmatpush1.msra.mxu0 0.0
  %841 = vmatprep.subr.mxu0 0.0
  %842 = vmatpush1.msra.mxu0 0.0
  %843 = vmatprep.subr.mxu0 0.0
  %844 = vmatpush1.msra.mxu0 0.0
  %845 = vmatprep.subr.mxu0 0.0
  %846 = vmatpush1.msra.mxu0 0.0
  %847 = vmatprep.subr.mxu0 0.0
  %848 = vmatpush1.msra.mxu0 0.0
  %849 = vmatprep.subr.mxu0 0.0
  %850 = vmatpush1.msra.mxu0 0.0
  %851 = vmatprep.subr.mxu0 0.0
  %852 = vmatpush1.msra.mxu0 0.0
  %853 = vmatprep.subr.mxu0 0.0
  %854 = vmatpush1.msra.mxu0 0.0
  %855 = vmatprep.subr.mxu0 0.0
  %856 = vmatpush1.msra.mxu0 0.0
  %857 = vmatprep.subr.mxu0 0.0
  %858 = vmatpush1.msra.mxu0 0.0
  %859 = vmatprep.subr.mxu0 0.0
  %860 = vmatpush1.msra.mxu0 0.0
  %861 = vmatprep.subr.mxu0 0.0
  %862 = vmatpush1.msra.mxu0 0.0
  %863 = vmatprep.subr.mxu0 0.0
  %864 = vmatpush1.msra.mxu0 0.0
  %865 = vmatprep.subr.mxu0 0.0
  %866 = vmatpush1.msra.mxu0 0.0
  %867 = vmatprep.subr.mxu0 0.0
  %868 = vmatpush1.msra.mxu0 0.0
  %869 = vmatprep.subr.mxu0 0.0
  %870 = vmatpush1.msra.mxu0 0.0
  %871 = vmatprep.subr.mxu0 0.0
  %872 = vmatpush1.msra.mxu0 0.0
  %873 = vmatprep.subr.mxu0 0.0
  %874 = vmatpush1.msra.mxu0 0.0
  %875 = vmatprep.mubr.f32.mxu0 0.0
  %876 = vmatmul.mubr.f32.gmra.mrb[0].mxu0 %v144
  %v877 = vpop.f32.mrb[0].mxu0
  %v878 = vadd.f32 0.0, %v877
  %v879 = vpop.f32.mrb[0].mxu0
  %880 = vmatprep.mubr.f32.mxu0 0.0
  %881 = vmatmul.mubr.f32.gmra.mrb[0].mxu0 %v147
  %v882 = vpop.f32.mrb[0].mxu0
  %v883 = vadd.f32 0.0, %v882
  %v884 = vpop.f32.mrb[0].mxu0
  %885 = vmatprep.mubr.f32.mxu0 0.0
  %886 = vmatmul.mubr.f32.gmra.mrb[0].mxu0 %v150
  %v887 = vpop.f32.mrb[0].mxu0
  %v888 = vadd.f32 0.0, %v887
  %v889 = vpop.f32.mrb[0].mxu0
  %890 = vmatprep.mubr.f32.mxu0 0.0
  %891 = vmatmul.mubr.f32.gmra.mrb[0].mxu0 %v153
  %v892 = vpop.f32.mrb[0].mxu0
  %v893 = vadd.f32 0.0, %v892
  %v894 = vpop.f32.mrb[0].mxu0
  %895 = vmatprep.mubr.f32.mxu0 0.0
  %896 = vmatmul.mubr.f32.gmra.mrb[0].mxu0 %v156
  %v897 = vpop.f32.mrb[0].mxu0
  %v898 = vadd.f32 0.0, %v897
  %v899 = vpop.f32.mrb[0].mxu0
  %900 = vmatprep.mubr.f32.mxu0 0.0
  %901 = vmatmul.mubr.f32.gmra.mrb[0].mxu0 %v159
  %v902 = vpop.f32.mrb[0].mxu0
  %v903 = vadd.f32 0.0, %v902
  %v904 = vpop.f32.mrb[0].mxu0
  %905 = vmatprep.mubr.f32.mxu0 0.0
  %906 = vmatmul.mubr.f32.gmra.mrb[0].mxu0 %v162
  %v907 = vpop.f32.mrb[0].mxu0
  %v908 = vadd.f32 0.0, %v907
  %v909 = vpop.f32.mrb[0].mxu0
  %910 = vmatprep.mubr.f32.mxu0 0.0
  %911 = vmatmul.mubr.f32.gmra.mrb[0].mxu0 %v165
  %v912 = vpop.f32.mrb[0].mxu0
  %v913 = vadd.f32 0.0, %v912
  %v914 = vpop.f32.mrb[0].mxu0
  %915 = vdwg.mxu0
  %916 = vset.pattern.permute.xlu0 4
  %917 = vperm.xlu0 %916, %v128
  %v918 = vpop.permute.xlu0 %917
  %920 = vset.pattern.permute.xlu0 4
  %921 = vperm.xlu0 %920, %v129
  %v922 = vpop.permute.xlu0 %921
  %924 = vset.pattern.permute.xlu0 4
  %925 = vperm.xlu0 %924, %v130
  %v926 = vpop.permute.xlu0 %925
  %928 = vset.pattern.permute.xlu0 4
  %929 = vperm.xlu0 %928, %v131
  %v930 = vpop.permute.xlu0 %929
  %932 = vset.pattern.permute.xlu0 4
  %933 = vperm.xlu0 %932, %v132
  %v934 = vpop.permute.xlu0 %933
  %936 = vset.pattern.permute.xlu0 4
  %937 = vperm.xlu0 %936, %v133
  %v938 = vpop.permute.xlu0 %937
  %940 = vset.pattern.permute.xlu0 4
  %941 = vperm.xlu0 %940, %v134
  %v942 = vpop.permute.xlu0 %941
  %944 = vset.pattern.permute.xlu0 4
  %945 = vperm.xlu0 %944, %v135
  %v946 = vpop.permute.xlu0 %945
  %v948 = vmul.f32 %v878, %v918
  %v949 = vmul.f32 %v883, %v922
  %v950 = vmul.f32 %v888, %v926
  %v951 = vmul.f32 %v893, %v930
  %v952 = vmul.f32 %v898, %v934
  %v953 = vmul.f32 %v903, %v938
  %v954 = vmul.f32 %v908, %v942
  %v955 = vmul.f32 %v913, %v946
  %v956 = vadd.f32 %v797, %v948
  %v957 = vadd.f32 %v798, %v949
  %v958 = vadd.f32 %v799, %v950
  %v959 = vadd.f32 %v800, %v951
  %v960 = vadd.f32 %v801, %v952
  %v961 = vadd.f32 %v802, %v953
  %v962 = vadd.f32 %v803, %v954
  %v963 = vadd.f32 %v804, %v955
  %v964 = vld [vmem:[%s3 + $0x28] sm:$0xff]
  %v965 = vld [vmem:[%s3 + $0xf0] sm:$0xff]
  %v966 = vld [vmem:[%s3 + $0x1b8] sm:$0xff]
  %v967 = vld [vmem:[%s3 + $0x280] sm:$0xff]
  %v968 = vld [vmem:[%s3 + $0x348] sm:$0xff]
  %v969 = vld [vmem:[%s3 + $0x410] sm:$0xff]
  %970 = vmatprep.subr.mxu0 0.0
  %971 = vmatpush1.msra.mxu0 %v964
  %972 = vmatprep.subr.mxu0 0.0
  %973 = vmatpush1.msra.mxu0 %v965
  %974 = vmatprep.subr.mxu0 0.0
  %975 = vmatpush1.msra.mxu0 %v966
  %976 = vmatprep.subr.mxu0 0.0
  %977 = vmatpush1.msra.mxu0 %v967
  %978 = vmatprep.subr.mxu0 0.0
  %979 = vmatpush1.msra.mxu0 %v968
  %980 = vmatprep.subr.mxu0 0.0
  %981 = vmatpush1.msra.mxu0 %v969
  %982 = vmatprep.subr.mxu0 0.0
  %983 = vmatpush1.msra.mxu0 0.0
  %984 = vmatprep.subr.mxu0 0.0
  %985 = vmatpush1.msra.mxu0 0.0
  %986 = vmatprep.subr.mxu0 0.0
  %987 = vmatpush1.msra.mxu0 0.0
  %988 = vmatprep.subr.mxu0 0.0
  %989 = vmatpush1.msra.mxu0 0.0
  %990 = vmatprep.subr.mxu0 0.0
  %991 = vmatpush1.msra.mxu0 0.0
  %992 = vmatprep.subr.mxu0 0.0
  %993 = vmatpush1.msra.mxu0 0.0
  %994 = vmatprep.subr.mxu0 0.0
  %995 = vmatpush1.msra.mxu0 0.0
  %996 = vmatprep.subr.mxu0 0.0
  %997 = vmatpush1.msra.mxu0 0.0
  %998 = vmatprep.subr.mxu0 0.0
  %999 = vmatpush1.msra.mxu0 0.0
  %1000 = vmatprep.subr.mxu0 0.0
  %1001 = vmatpush1.msra.mxu0 0.0
  %1002 = vmatprep.subr.mxu0 0.0
  %1003 = vmatpush1.msra.mxu0 0.0
  %1004 = vmatprep.subr.mxu0 0.0
  %1005 = vmatpush1.msra.mxu0 0.0
  %1006 = vmatprep.subr.mxu0 0.0
  %1007 = vmatpush1.msra.mxu0 0.0
  %1008 = vmatprep.subr.mxu0 0.0
  %1009 = vmatpush1.msra.mxu0 0.0
  %1010 = vmatprep.subr.mxu0 0.0
  %1011 = vmatpush1.msra.mxu0 0.0
  %1012 = vmatprep.subr.mxu0 0.0
  %1013 = vmatpush1.msra.mxu0 0.0
  %1014 = vmatprep.subr.mxu0 0.0
  %1015 = vmatpush1.msra.mxu0 0.0
  %1016 = vmatprep.subr.mxu0 0.0
  %1017 = vmatpush1.msra.mxu0 0.0
  %1018 = vmatprep.subr.mxu0 0.0
  %1019 = vmatpush1.msra.mxu0 0.0
  %1020 = vmatprep.subr.mxu0 0.0
  %1021 = vmatpush1.msra.mxu0 0.0
  %1022 = vmatprep.subr.mxu0 0.0
  %1023 = vmatpush1.msra.mxu0 0.0
  %1024 = vmatprep.subr.mxu0 0.0
  %1025 = vmatpush1.msra.mxu0 0.0
  %1026 = vmatprep.subr.mxu0 0.0
  %1027 = vmatpush1.msra.mxu0 0.0
  %1028 = vmatprep.subr.mxu0 0.0
  %1029 = vmatpush1.msra.mxu0 0.0
  %1030 = vmatprep.subr.mxu0 0.0
  %1031 = vmatpush1.msra.mxu0 0.0
  %1032 = vmatprep.subr.mxu0 0.0
  %1033 = vmatpush1.msra.mxu0 0.0
  %1034 = vmatprep.mubr.f32.mxu0 0.0
  %1035 = vmatmul.mubr.f32.gmra.mrb[0].mxu0 %v144
  %v1036 = vpop.f32.mrb[0].mxu0
  %v1037 = vadd.f32 0.0, %v1036
  %v1038 = vpop.f32.mrb[0].mxu0
  %1039 = vmatprep.mubr.f32.mxu0 0.0
  %1040 = vmatmul.mubr.f32.gmra.mrb[0].mxu0 %v147
  %v1041 = vpop.f32.mrb[0].mxu0
  %v1042 = vadd.f32 0.0, %v1041
  %v1043 = vpop.f32.mrb[0].mxu0
  %1044 = vmatprep.mubr.f32.mxu0 0.0
  %1045 = vmatmul.mubr.f32.gmra.mrb[0].mxu0 %v150
  %v1046 = vpop.f32.mrb[0].mxu0
  %v1047 = vadd.f32 0.0, %v1046
  %v1048 = vpop.f32.mrb[0].mxu0
  %1049 = vmatprep.mubr.f32.mxu0 0.0
  %1050 = vmatmul.mubr.f32.gmra.mrb[0].mxu0 %v153
  %v1051 = vpop.f32.mrb[0].mxu0
  %v1052 = vadd.f32 0.0, %v1051
  %v1053 = vpop.f32.mrb[0].mxu0
  %1054 = vmatprep.mubr.f32.mxu0 0.0
  %1055 = vmatmul.mubr.f32.gmra.mrb[0].mxu0 %v156
  %v1056 = vpop.f32.mrb[0].mxu0
  %v1057 = vadd.f32 0.0, %v1056
  %v1058 = vpop.f32.mrb[0].mxu0
  %1059 = vmatprep.mubr.f32.mxu0 0.0
  %1060 = vmatmul.mubr.f32.gmra.mrb[0].mxu0 %v159
  %v1061 = vpop.f32.mrb[0].mxu0
  %v1062 = vadd.f32 0.0, %v1061
  %v1063 = vpop.f32.mrb[0].mxu0
  %1064 = vmatprep.mubr.f32.mxu0 0.0
  %1065 = vmatmul.mubr.f32.gmra.mrb[0].mxu0 %v162
  %v1066 = vpop.f32.mrb[0].mxu0
  %v1067 = vadd.f32 0.0, %v1066
  %v1068 = vpop.f32.mrb[0].mxu0
  %1069 = vmatprep.mubr.f32.mxu0 0.0
  %1070 = vmatmul.mubr.f32.gmra.mrb[0].mxu0 %v165
  %v1071 = vpop.f32.mrb[0].mxu0
  %v1072 = vadd.f32 0.0, %v1071
  %v1073 = vpop.f32.mrb[0].mxu0
  %1074 = vdwg.mxu0
  %1075 = vset.pattern.permute.xlu0 5
  %1076 = vperm.xlu0 %1075, %v128
  %v1077 = vpop.permute.xlu0 %1076
  %1079 = vset.pattern.permute.xlu0 5
  %1080 = vperm.xlu0 %1079, %v129
  %v1081 = vpop.permute.xlu0 %1080
  %1083 = vset.pattern.permute.xlu0 5
  %1084 = vperm.xlu0 %1083, %v130
  %v1085 = vpop.permute.xlu0 %1084
  %1087 = vset.pattern.permute.xlu0 5
  %1088 = vperm.xlu0 %1087, %v131
  %v1089 = vpop.permute.xlu0 %1088
  %1091 = vset.pattern.permute.xlu0 5
  %1092 = vperm.xlu0 %1091, %v132
  %v1093 = vpop.permute.xlu0 %1092
  %1095 = vset.pattern.permute.xlu0 5
  %1096 = vperm.xlu0 %1095, %v133
  %v1097 = vpop.permute.xlu0 %1096
  %1099 = vset.pattern.permute.xlu0 5
  %1100 = vperm.xlu0 %1099, %v134
  %v1101 = vpop.permute.xlu0 %1100
  %1103 = vset.pattern.permute.xlu0 5
  %1104 = vperm.xlu0 %1103, %v135
  %v1105 = vpop.permute.xlu0 %1104
  %v1107 = vmul.f32 %v1037, %v1077
  %v1108 = vmul.f32 %v1042, %v1081
  %v1109 = vmul.f32 %v1047, %v1085
  %v1110 = vmul.f32 %v1052, %v1089
  %v1111 = vmul.f32 %v1057, %v1093
  %v1112 = vmul.f32 %v1062, %v1097
  %v1113 = vmul.f32 %v1067, %v1101
  %v1114 = vmul.f32 %v1072, %v1105
  %v1115 = vadd.f32 %v956, %v1107
  %v1116 = vadd.f32 %v957, %v1108
  %v1117 = vadd.f32 %v958, %v1109
  %v1118 = vadd.f32 %v959, %v1110
  %v1119 = vadd.f32 %v960, %v1111
  %v1120 = vadd.f32 %v961, %v1112
  %v1121 = vadd.f32 %v962, %v1113
  %v1122 = vadd.f32 %v963, %v1114
  %v1123 = vld [vmem:[%s3 + $0x30] sm:$0xff]
  %v1124 = vld [vmem:[%s3 + $0xf8] sm:$0xff]
  %v1125 = vld [vmem:[%s3 + $0x1c0] sm:$0xff]
  %v1126 = vld [vmem:[%s3 + $0x288] sm:$0xff]
  %v1127 = vld [vmem:[%s3 + $0x350] sm:$0xff]
  %v1128 = vld [vmem:[%s3 + $0x418] sm:$0xff]
  %1129 = vmatprep.subr.mxu0 0.0
  %1130 = vmatpush1.msra.mxu0 %v1123
  %1131 = vmatprep.subr.mxu0 0.0
  %1132 = vmatpush1.msra.mxu0 %v1124
  %1133 = vmatprep.subr.mxu0 0.0
  %1134 = vmatpush1.msra.mxu0 %v1125
  %1135 = vmatprep.subr.mxu0 0.0
  %1136 = vmatpush1.msra.mxu0 %v1126
  %1137 = vmatprep.subr.mxu0 0.0
  %1138 = vmatpush1.msra.mxu0 %v1127
  %1139 = vmatprep.subr.mxu0 0.0
  %1140 = vmatpush1.msra.mxu0 %v1128
  %1141 = vmatprep.subr.mxu0 0.0
  %1142 = vmatpush1.msra.mxu0 0.0
  %1143 = vmatprep.subr.mxu0 0.0
  %1144 = vmatpush1.msra.mxu0 0.0
  %1145 = vmatprep.subr.mxu0 0.0
  %1146 = vmatpush1.msra.mxu0 0.0
  %1147 = vmatprep.subr.mxu0 0.0
  %1148 = vmatpush1.msra.mxu0 0.0
  %1149 = vmatprep.subr.mxu0 0.0
  %1150 = vmatpush1.msra.mxu0 0.0
  %1151 = vmatprep.subr.mxu0 0.0
  %1152 = vmatpush1.msra.mxu0 0.0
  %1153 = vmatprep.subr.mxu0 0.0
  %1154 = vmatpush1.msra.mxu0 0.0
  %1155 = vmatprep.subr.mxu0 0.0
  %1156 = vmatpush1.msra.mxu0 0.0
  %1157 = vmatprep.subr.mxu0 0.0
  %1158 = vmatpush1.msra.mxu0 0.0
  %1159 = vmatprep.subr.mxu0 0.0
  %1160 = vmatpush1.msra.mxu0 0.0
  %1161 = vmatprep.subr.mxu0 0.0
  %1162 = vmatpush1.msra.mxu0 0.0
  %1163 = vmatprep.subr.mxu0 0.0
  %1164 = vmatpush1.msra.mxu0 0.0
  %1165 = vmatprep.subr.mxu0 0.0
  %1166 = vmatpush1.msra.mxu0 0.0
  %1167 = vmatprep.subr.mxu0 0.0
  %1168 = vmatpush1.msra.mxu0 0.0
  %1169 = vmatprep.subr.mxu0 0.0
  %1170 = vmatpush1.msra.mxu0 0.0
  %1171 = vmatprep.subr.mxu0 0.0
  %1172 = vmatpush1.msra.mxu0 0.0
  %1173 = vmatprep.subr.mxu0 0.0
  %1174 = vmatpush1.msra.mxu0 0.0
  %1175 = vmatprep.subr.mxu0 0.0
  %1176 = vmatpush1.msra.mxu0 0.0
  %1177 = vmatprep.subr.mxu0 0.0
  %1178 = vmatpush1.msra.mxu0 0.0
  %1179 = vmatprep.subr.mxu0 0.0
  %1180 = vmatpush1.msra.mxu0 0.0
  %1181 = vmatprep.subr.mxu0 0.0
  %1182 = vmatpush1.msra.mxu0 0.0
  %1183 = vmatprep.subr.mxu0 0.0
  %1184 = vmatpush1.msra.mxu0 0.0
  %1185 = vmatprep.subr.mxu0 0.0
  %1186 = vmatpush1.msra.mxu0 0.0
  %1187 = vmatprep.subr.mxu0 0.0
  %1188 = vmatpush1.msra.mxu0 0.0
  %1189 = vmatprep.subr.mxu0 0.0
  %1190 = vmatpush1.msra.mxu0 0.0
  %1191 = vmatprep.subr.mxu0 0.0
  %1192 = vmatpush1.msra.mxu0 0.0
  %1193 = vmatprep.mubr.f32.mxu0 0.0
  %1194 = vmatmul.mubr.f32.gmra.mrb[0].mxu0 %v144
  %v1195 = vpop.f32.mrb[0].mxu0
  %v1196 = vadd.f32 0.0, %v1195
  %v1197 = vpop.f32.mrb[0].mxu0
  %1198 = vmatprep.mubr.f32.mxu0 0.0
  %1199 = vmatmul.mubr.f32.gmra.mrb[0].mxu0 %v147
  %v1200 = vpop.f32.mrb[0].mxu0
  %v1201 = vadd.f32 0.0, %v1200
  %v1202 = vpop.f32.mrb[0].mxu0
  %1203 = vmatprep.mubr.f32.mxu0 0.0
  %1204 = vmatmul.mubr.f32.gmra.mrb[0].mxu0 %v150
  %v1205 = vpop.f32.mrb[0].mxu0
  %v1206 = vadd.f32 0.0, %v1205
  %v1207 = vpop.f32.mrb[0].mxu0
  %1208 = vmatprep.mubr.f32.mxu0 0.0
  %1209 = vmatmul.mubr.f32.gmra.mrb[0].mxu0 %v153
  %v1210 = vpop.f32.mrb[0].mxu0
  %v1211 = vadd.f32 0.0, %v1210
  %v1212 = vpop.f32.mrb[0].mxu0
  %1213 = vmatprep.mubr.f32.mxu0 0.0
  %1214 = vmatmul.mubr.f32.gmra.mrb[0].mxu0 %v156
  %v1215 = vpop.f32.mrb[0].mxu0
  %v1216 = vadd.f32 0.0, %v1215
  %v1217 = vpop.f32.mrb[0].mxu0
  %1218 = vmatprep.mubr.f32.mxu0 0.0
  %1219 = vmatmul.mubr.f32.gmra.mrb[0].mxu0 %v159
  %v1220 = vpop.f32.mrb[0].mxu0
  %v1221 = vadd.f32 0.0, %v1220
  %v1222 = vpop.f32.mrb[0].mxu0
  %1223 = vmatprep.mubr.f32.mxu0 0.0
  %1224 = vmatmul.mubr.f32.gmra.mrb[0].mxu0 %v162
  %v1225 = vpop.f32.mrb[0].mxu0
  %v1226 = vadd.f32 0.0, %v1225
  %v1227 = vpop.f32.mrb[0].mxu0
  %1228 = vmatprep.mubr.f32.mxu0 0.0
  %1229 = vmatmul.mubr.f32.gmra.mrb[0].mxu0 %v165
  %v1230 = vpop.f32.mrb[0].mxu0
  %v1231 = vadd.f32 0.0, %v1230
  %v1232 = vpop.f32.mrb[0].mxu0
  %1233 = vdwg.mxu0
  %1234 = vset.pattern.permute.xlu0 6
  %1235 = vperm.xlu0 %1234, %v128
  %v1236 = vpop.permute.xlu0 %1235
  %1238 = vset.pattern.permute.xlu0 6
  %1239 = vperm.xlu0 %1238, %v129
  %v1240 = vpop.permute.xlu0 %1239
  %1242 = vset.pattern.permute.xlu0 6
  %1243 = vperm.xlu0 %1242, %v130
  %v1244 = vpop.permute.xlu0 %1243
  %1246 = vset.pattern.permute.xlu0 6
  %1247 = vperm.xlu0 %1246, %v131
  %v1248 = vpop.permute.xlu0 %1247
  %1250 = vset.pattern.permute.xlu0 6
  %1251 = vperm.xlu0 %1250, %v132
  %v1252 = vpop.permute.xlu0 %1251
  %1254 = vset.pattern.permute.xlu0 6
  %1255 = vperm.xlu0 %1254, %v133
  %v1256 = vpop.permute.xlu0 %1255
  %1258 = vset.pattern.permute.xlu0 6
  %1259 = vperm.xlu0 %1258, %v134
  %v1260 = vpop.permute.xlu0 %1259
  %1262 = vset.pattern.permute.xlu0 6
  %1263 = vperm.xlu0 %1262, %v135
  %v1264 = vpop.permute.xlu0 %1263
  %v1266 = vmul.f32 %v1196, %v1236
  %v1267 = vmul.f32 %v1201, %v1240
  %v1268 = vmul.f32 %v1206, %v1244
  %v1269 = vmul.f32 %v1211, %v1248
  %v1270 = vmul.f32 %v1216, %v1252
  %v1271 = vmul.f32 %v1221, %v1256
  %v1272 = vmul.f32 %v1226, %v1260
  %v1273 = vmul.f32 %v1231, %v1264
  %v1274 = vadd.f32 %v1115, %v1266
  %v1275 = vadd.f32 %v1116, %v1267
  %v1276 = vadd.f32 %v1117, %v1268
  %v1277 = vadd.f32 %v1118, %v1269
  %v1278 = vadd.f32 %v1119, %v1270
  %v1279 = vadd.f32 %v1120, %v1271
  %v1280 = vadd.f32 %v1121, %v1272
  %v1281 = vadd.f32 %v1122, %v1273
  %v1282 = vld [vmem:[%s3 + $0x38] sm:$0xff]
  %v1283 = vld [vmem:[%s3 + $0x100] sm:$0xff]
  %v1284 = vld [vmem:[%s3 + $0x1c8] sm:$0xff]
  %v1285 = vld [vmem:[%s3 + $0x290] sm:$0xff]
  %v1286 = vld [vmem:[%s3 + $0x358] sm:$0xff]
  %v1287 = vld [vmem:[%s3 + $0x420] sm:$0xff]
  %1288 = vmatprep.subr.mxu0 0.0
  %1289 = vmatpush1.msra.mxu0 %v1282
  %1290 = vmatprep.subr.mxu0 0.0
  %1291 = vmatpush1.msra.mxu0 %v1283
  %1292 = vmatprep.subr.mxu0 0.0
  %1293 = vmatpush1.msra.mxu0 %v1284
  %1294 = vmatprep.subr.mxu0 0.0
  %1295 = vmatpush1.msra.mxu0 %v1285
  %1296 = vmatprep.subr.mxu0 0.0
  %1297 = vmatpush1.msra.mxu0 %v1286
  %1298 = vmatprep.subr.mxu0 0.0
  %1299 = vmatpush1.msra.mxu0 %v1287
  %1300 = vmatprep.subr.mxu0 0.0
  %1301 = vmatpush1.msra.mxu0 0.0
  %1302 = vmatprep.subr.mxu0 0.0
  %1303 = vmatpush1.msra.mxu0 0.0
  %1304 = vmatprep.subr.mxu0 0.0
  %1305 = vmatpush1.msra.mxu0 0.0
  %1306 = vmatprep.subr.mxu0 0.0
  %1307 = vmatpush1.msra.mxu0 0.0
  %1308 = vmatprep.subr.mxu0 0.0
  %1309 = vmatpush1.msra.mxu0 0.0
  %1310 = vmatprep.subr.mxu0 0.0
  %1311 = vmatpush1.msra.mxu0 0.0
  %1312 = vmatprep.subr.mxu0 0.0
  %1313 = vmatpush1.msra.mxu0 0.0
  %1314 = vmatprep.subr.mxu0 0.0
  %1315 = vmatpush1.msra.mxu0 0.0
  %1316 = vmatprep.subr.mxu0 0.0
  %1317 = vmatpush1.msra.mxu0 0.0
  %1318 = vmatprep.subr.mxu0 0.0
  %1319 = vmatpush1.msra.mxu0 0.0
  %1320 = vmatprep.subr.mxu0 0.0
  %1321 = vmatpush1.msra.mxu0 0.0
  %1322 = vmatprep.subr.mxu0 0.0
  %1323 = vmatpush1.msra.mxu0 0.0
  %1324 = vmatprep.subr.mxu0 0.0
  %1325 = vmatpush1.msra.mxu0 0.0
  %1326 = vmatprep.subr.mxu0 0.0
  %1327 = vmatpush1.msra.mxu0 0.0
  %1328 = vmatprep.subr.mxu0 0.0
  %1329 = vmatpush1.msra.mxu0 0.0
  %1330 = vmatprep.subr.mxu0 0.0
  %1331 = vmatpush1.msra.mxu0 0.0
  %1332 = vmatprep.subr.mxu0 0.0
  %1333 = vmatpush1.msra.mxu0 0.0
  %1334 = vmatprep.subr.mxu0 0.0
  %1335 = vmatpush1.msra.mxu0 0.0
  %1336 = vmatprep.subr.mxu0 0.0
  %1337 = vmatpush1.msra.mxu0 0.0
  %1338 = vmatprep.subr.mxu0 0.0
  %1339 = vmatpush1.msra.mxu0 0.0
  %1340 = vmatprep.subr.mxu0 0.0
  %1341 = vmatpush1.msra.mxu0 0.0
  %1342 = vmatprep.subr.mxu0 0.0
  %1343 = vmatpush1.msra.mxu0 0.0
  %1344 = vmatprep.subr.mxu0 0.0
  %1345 = vmatpush1.msra.mxu0 0.0
  %1346 = vmatprep.subr.mxu0 0.0
  %1347 = vmatpush1.msra.mxu0 0.0
  %1348 = vmatprep.subr.mxu0 0.0
  %1349 = vmatpush1.msra.mxu0 0.0
  %1350 = vmatprep.subr.mxu0 0.0
  %1351 = vmatpush1.msra.mxu0 0.0
  %1352 = vmatprep.mubr.f32.mxu0 0.0
  %1353 = vmatmul.mubr.f32.gmra.mrb[0].mxu0 %v144
  %v1354 = vpop.f32.mrb[0].mxu0
  %v1355 = vadd.f32 0.0, %v1354
  %v1356 = vpop.f32.mrb[0].mxu0
  %1357 = vmatprep.mubr.f32.mxu0 0.0
  %1358 = vmatmul.mubr.f32.gmra.mrb[0].mxu0 %v147
  %v1359 = vpop.f32.mrb[0].mxu0
  %v1360 = vadd.f32 0.0, %v1359
  %v1361 = vpop.f32.mrb[0].mxu0
  %1362 = vmatprep.mubr.f32.mxu0 0.0
  %1363 = vmatmul.mubr.f32.gmra.mrb[0].mxu0 %v150
  %v1364 = vpop.f32.mrb[0].mxu0
  %v1365 = vadd.f32 0.0, %v1364
  %v1366 = vpop.f32.mrb[0].mxu0
  %1367 = vmatprep.mubr.f32.mxu0 0.0
  %1368 = vmatmul.mubr.f32.gmra.mrb[0].mxu0 %v153
  %v1369 = vpop.f32.mrb[0].mxu0
  %v1370 = vadd.f32 0.0, %v1369
  %v1371 = vpop.f32.mrb[0].mxu0
  %1372 = vmatprep.mubr.f32.mxu0 0.0
  %1373 = vmatmul.mubr.f32.gmra.mrb[0].mxu0 %v156
  %v1374 = vpop.f32.mrb[0].mxu0
  %v1375 = vadd.f32 0.0, %v1374
  %v1376 = vpop.f32.mrb[0].mxu0
  %1377 = vmatprep.mubr.f32.mxu0 0.0
  %1378 = vmatmul.mubr.f32.gmra.mrb[0].mxu0 %v159
  %v1379 = vpop.f32.mrb[0].mxu0
  %v1380 = vadd.f32 0.0, %v1379
  %v1381 = vpop.f32.mrb[0].mxu0
  %1382 = vmatprep.mubr.f32.mxu0 0.0
  %1383 = vmatmul.mubr.f32.gmra.mrb[0].mxu0 %v162
  %v1384 = vpop.f32.mrb[0].mxu0
  %v1385 = vadd.f32 0.0, %v1384
  %v1386 = vpop.f32.mrb[0].mxu0
  %1387 = vmatprep.mubr.f32.mxu0 0.0
  %1388 = vmatmul.mubr.f32.gmra.mrb[0].mxu0 %v165
  %v1389 = vpop.f32.mrb[0].mxu0
  %v1390 = vadd.f32 0.0, %v1389
  %v1391 = vpop.f32.mrb[0].mxu0
  %1392 = vdwg.mxu0
  %1393 = vset.pattern.permute.xlu0 7
  %1394 = vperm.xlu0 %1393, %v128
  %v1395 = vpop.permute.xlu0 %1394
  %1397 = vset.pattern.permute.xlu0 7
  %1398 = vperm.xlu0 %1397, %v129
  %v1399 = vpop.permute.xlu0 %1398
  %1401 = vset.pattern.permute.xlu0 7
  %1402 = vperm.xlu0 %1401, %v130
  %v1403 = vpop.permute.xlu0 %1402
  %1405 = vset.pattern.permute.xlu0 7
  %1406 = vperm.xlu0 %1405, %v131
  %v1407 = vpop.permute.xlu0 %1406
  %1409 = vset.pattern.permute.xlu0 7
  %1410 = vperm.xlu0 %1409, %v132
  %v1411 = vpop.permute.xlu0 %1410
  %1413 = vset.pattern.permute.xlu0 7
  %1414 = vperm.xlu0 %1413, %v133
  %v1415 = vpop.permute.xlu0 %1414
  %1417 = vset.pattern.permute.xlu0 7
  %1418 = vperm.xlu0 %1417, %v134
  %v1419 = vpop.permute.xlu0 %1418
  %1421 = vset.pattern.permute.xlu0 7
  %1422 = vperm.xlu0 %1421, %v135
  %v1423 = vpop.permute.xlu0 %1422
  %v1425 = vmul.f32 %v1355, %v1395
  %v1426 = vmul.f32 %v1360, %v1399
  %v1427 = vmul.f32 %v1365, %v1403
  %v1428 = vmul.f32 %v1370, %v1407
  %v1429 = vmul.f32 %v1375, %v1411
  %v1430 = vmul.f32 %v1380, %v1415
  %v1431 = vmul.f32 %v1385, %v1419
  %v1432 = vmul.f32 %v1390, %v1423
  %v1433 = vadd.f32 %v1274, %v1425
  %v1434 = vadd.f32 %v1275, %v1426
  %v1435 = vadd.f32 %v1276, %v1427
  %v1436 = vadd.f32 %v1277, %v1428
  %v1437 = vadd.f32 %v1278, %v1429
  %v1438 = vadd.f32 %v1279, %v1430
  %v1439 = vadd.f32 %v1280, %v1431
  %v1440 = vadd.f32 %v1281, %v1432
  %v1441 = vld [vmem:[%s3 + $0x40] sm:$0xff]
  %v1442 = vld [vmem:[%s3 + $0x108] sm:$0xff]
  %v1443 = vld [vmem:[%s3 + $0x1d0] sm:$0xff]
  %v1444 = vld [vmem:[%s3 + $0x298] sm:$0xff]
  %v1445 = vld [vmem:[%s3 + $0x360] sm:$0xff]
  %v1446 = vld [vmem:[%s3 + $0x428] sm:$0xff]
  %1447 = vmatprep.subr.mxu0 0.0
  %1448 = vmatpush1.msra.mxu0 %v1441
  %1449 = vmatprep.subr.mxu0 0.0
  %1450 = vmatpush1.msra.mxu0 %v1442
  %1451 = vmatprep.subr.mxu0 0.0
  %1452 = vmatpush1.msra.mxu0 %v1443
  %1453 = vmatprep.subr.mxu0 0.0
  %1454 = vmatpush1.msra.mxu0 %v1444
  %1455 = vmatprep.subr.mxu0 0.0
  %1456 = vmatpush1.msra.mxu0 %v1445
  %1457 = vmatprep.subr.mxu0 0.0
  %1458 = vmatpush1.msra.mxu0 %v1446
  %1459 = vmatprep.subr.mxu0 0.0
  %1460 = vmatpush1.msra.mxu0 0.0
  %1461 = vmatprep.subr.mxu0 0.0
  %1462 = vmatpush1.msra.mxu0 0.0
  %1463 = vmatprep.subr.mxu0 0.0
  %1464 = vmatpush1.msra.mxu0 0.0
  %1465 = vmatprep.subr.mxu0 0.0
  %1466 = vmatpush1.msra.mxu0 0.0
  %1467 = vmatprep.subr.mxu0 0.0
  %1468 = vmatpush1.msra.mxu0 0.0
  %1469 = vmatprep.subr.mxu0 0.0
  %1470 = vmatpush1.msra.mxu0 0.0
  %1471 = vmatprep.subr.mxu0 0.0
  %1472 = vmatpush1.msra.mxu0 0.0
  %1473 = vmatprep.subr.mxu0 0.0
  %1474 = vmatpush1.msra.mxu0 0.0
  %1475 = vmatprep.subr.mxu0 0.0
  %1476 = vmatpush1.msra.mxu0 0.0
  %1477 = vmatprep.subr.mxu0 0.0
  %1478 = vmatpush1.msra.mxu0 0.0
  %1479 = vmatprep.subr.mxu0 0.0
  %1480 = vmatpush1.msra.mxu0 0.0
  %1481 = vmatprep.subr.mxu0 0.0
  %1482 = vmatpush1.msra.mxu0 0.0
  %1483 = vmatprep.subr.mxu0 0.0
  %1484 = vmatpush1.msra.mxu0 0.0
  %1485 = vmatprep.subr.mxu0 0.0
  %1486 = vmatpush1.msra.mxu0 0.0
  %1487 = vmatprep.subr.mxu0 0.0
  %1488 = vmatpush1.msra.mxu0 0.0
  %1489 = vmatprep.subr.mxu0 0.0
  %1490 = vmatpush1.msra.mxu0 0.0
  %1491 = vmatprep.subr.mxu0 0.0
  %1492 = vmatpush1.msra.mxu0 0.0
  %1493 = vmatprep.subr.mxu0 0.0
  %1494 = vmatpush1.msra.mxu0 0.0
  %1495 = vmatprep.subr.mxu0 0.0
  %1496 = vmatpush1.msra.mxu0 0.0
  %1497 = vmatprep.subr.mxu0 0.0
  %1498 = vmatpush1.msra.mxu0 0.0
  %1499 = vmatprep.subr.mxu0 0.0
  %1500 = vmatpush1.msra.mxu0 0.0
  %1501 = vmatprep.subr.mxu0 0.0
  %1502 = vmatpush1.msra.mxu0 0.0
  %1503 = vmatprep.subr.mxu0 0.0
  %1504 = vmatpush1.msra.mxu0 0.0
  %1505 = vmatprep.subr.mxu0 0.0
  %1506 = vmatpush1.msra.mxu0 0.0
  %1507 = vmatprep.subr.mxu0 0.0
  %1508 = vmatpush1.msra.mxu0 0.0
  %1509 = vmatprep.subr.mxu0 0.0
  %1510 = vmatpush1.msra.mxu0 0.0
  %1511 = vmatprep.mubr.f32.mxu0 0.0
  %1512 = vmatmul.mubr.f32.gmra.mrb[0].mxu0 %v144
  %v1513 = vpop.f32.mrb[0].mxu0
  %v1514 = vadd.f32 0.0, %v1513
  %v1515 = vpop.f32.mrb[0].mxu0
  %1516 = vmatprep.mubr.f32.mxu0 0.0
  %1517 = vmatmul.mubr.f32.gmra.mrb[0].mxu0 %v147
  %v1518 = vpop.f32.mrb[0].mxu0
  %v1519 = vadd.f32 0.0, %v1518
  %v1520 = vpop.f32.mrb[0].mxu0
  %1521 = vmatprep.mubr.f32.mxu0 0.0
  %1522 = vmatmul.mubr.f32.gmra.mrb[0].mxu0 %v150
  %v1523 = vpop.f32.mrb[0].mxu0
  %v1524 = vadd.f32 0.0, %v1523
  %v1525 = vpop.f32.mrb[0].mxu0
  %1526 = vmatprep.mubr.f32.mxu0 0.0
  %1527 = vmatmul.mubr.f32.gmra.mrb[0].mxu0 %v153
  %v1528 = vpop.f32.mrb[0].mxu0
  %v1529 = vadd.f32 0.0, %v1528
  %v1530 = vpop.f32.mrb[0].mxu0
  %1531 = vmatprep.mubr.f32.mxu0 0.0
  %1532 = vmatmul.mubr.f32.gmra.mrb[0].mxu0 %v156
  %v1533 = vpop.f32.mrb[0].mxu0
  %v1534 = vadd.f32 0.0, %v1533
  %v1535 = vpop.f32.mrb[0].mxu0
  %1536 = vmatprep.mubr.f32.mxu0 0.0
  %1537 = vmatmul.mubr.f32.gmra.mrb[0].mxu0 %v159
  %v1538 = vpop.f32.mrb[0].mxu0
  %v1539 = vadd.f32 0.0, %v1538
  %v1540 = vpop.f32.mrb[0].mxu0
  %1541 = vmatprep.mubr.f32.mxu0 0.0
  %1542 = vmatmul.mubr.f32.gmra.mrb[0].mxu0 %v162
  %v1543 = vpop.f32.mrb[0].mxu0
  %v1544 = vadd.f32 0.0, %v1543
  %v1545 = vpop.f32.mrb[0].mxu0
  %1546 = vmatprep.mubr.f32.mxu0 0.0
  %1547 = vmatmul.mubr.f32.gmra.mrb[0].mxu0 %v165
  %v1548 = vpop.f32.mrb[0].mxu0
  %v1549 = vadd.f32 0.0, %v1548
  %v1550 = vpop.f32.mrb[0].mxu0
  %1551 = vdwg.mxu0
  %1552 = vset.pattern.permute.xlu0 8
  %1553 = vperm.xlu0 %1552, %v128
  %v1554 = vpop.permute.xlu0 %1553
  %1556 = vset.pattern.permute.xlu0 8
  %1557 = vperm.xlu0 %1556, %v129
  %v1558 = vpop.permute.xlu0 %1557
  %1560 = vset.pattern.permute.xlu0 8
  %1561 = vperm.xlu0 %1560, %v130
  %v1562 = vpop.permute.xlu0 %1561
  %1564 = vset.pattern.permute.xlu0 8
  %1565 = vperm.xlu0 %1564, %v131
  %v1566 = vpop.permute.xlu0 %1565
  %1568 = vset.pattern.permute.xlu0 8
  %1569 = vperm.xlu0 %1568, %v132
  %v1570 = vpop.permute.xlu0 %1569
  %1572 = vset.pattern.permute.xlu0 8
  %1573 = vperm.xlu0 %1572, %v133
  %v1574 = vpop.permute.xlu0 %1573
  %1576 = vset.pattern.permute.xlu0 8
  %1577 = vperm.xlu0 %1576, %v134
  %v1578 = vpop.permute.xlu0 %1577
  %1580 = vset.pattern.permute.xlu0 8
  %1581 = vperm.xlu0 %1580, %v135
  %v1582 = vpop.permute.xlu0 %1581
  %v1584 = vmul.f32 %v1514, %v1554
  %v1585 = vmul.f32 %v1519, %v1558
  %v1586 = vmul.f32 %v1524, %v1562
  %v1587 = vmul.f32 %v1529, %v1566
  %v1588 = vmul.f32 %v1534, %v1570
  %v1589 = vmul.f32 %v1539, %v1574
  %v1590 = vmul.f32 %v1544, %v1578
  %v1591 = vmul.f32 %v1549, %v1582
  %v1592 = vadd.f32 %v1433, %v1584
  %v1593 = vadd.f32 %v1434, %v1585
  %v1594 = vadd.f32 %v1435, %v1586
  %v1595 = vadd.f32 %v1436, %v1587
  %v1596 = vadd.f32 %v1437, %v1588
  %v1597 = vadd.f32 %v1438, %v1589
  %v1598 = vadd.f32 %v1439, %v1590
  %v1599 = vadd.f32 %v1440, %v1591
  %v1600 = vld [vmem:[%s3 + $0x48] sm:$0xff]
  %v1601 = vld [vmem:[%s3 + $0x110] sm:$0xff]
  %v1602 = vld [vmem:[%s3 + $0x1d8] sm:$0xff]
  %v1603 = vld [vmem:[%s3 + $0x2a0] sm:$0xff]
  %v1604 = vld [vmem:[%s3 + $0x368] sm:$0xff]
  %v1605 = vld [vmem:[%s3 + $0x430] sm:$0xff]
  %1606 = vmatprep.subr.mxu0 0.0
  %1607 = vmatpush1.msra.mxu0 %v1600
  %1608 = vmatprep.subr.mxu0 0.0
  %1609 = vmatpush1.msra.mxu0 %v1601
  %1610 = vmatprep.subr.mxu0 0.0
  %1611 = vmatpush1.msra.mxu0 %v1602
  %1612 = vmatprep.subr.mxu0 0.0
  %1613 = vmatpush1.msra.mxu0 %v1603
  %1614 = vmatprep.subr.mxu0 0.0
  %1615 = vmatpush1.msra.mxu0 %v1604
  %1616 = vmatprep.subr.mxu0 0.0
  %1617 = vmatpush1.msra.mxu0 %v1605
  %1618 = vmatprep.subr.mxu0 0.0
  %1619 = vmatpush1.msra.mxu0 0.0
  %1620 = vmatprep.subr.mxu0 0.0
  %1621 = vmatpush1.msra.mxu0 0.0
  %1622 = vmatprep.subr.mxu0 0.0
  %1623 = vmatpush1.msra.mxu0 0.0
  %1624 = vmatprep.subr.mxu0 0.0
  %1625 = vmatpush1.msra.mxu0 0.0
  %1626 = vmatprep.subr.mxu0 0.0
  %1627 = vmatpush1.msra.mxu0 0.0
  %1628 = vmatprep.subr.mxu0 0.0
  %1629 = vmatpush1.msra.mxu0 0.0
  %1630 = vmatprep.subr.mxu0 0.0
  %1631 = vmatpush1.msra.mxu0 0.0
  %1632 = vmatprep.subr.mxu0 0.0
  %1633 = vmatpush1.msra.mxu0 0.0
  %1634 = vmatprep.subr.mxu0 0.0
  %1635 = vmatpush1.msra.mxu0 0.0
  %1636 = vmatprep.subr.mxu0 0.0
  %1637 = vmatpush1.msra.mxu0 0.0
  %1638 = vmatprep.subr.mxu0 0.0
  %1639 = vmatpush1.msra.mxu0 0.0
  %1640 = vmatprep.subr.mxu0 0.0
  %1641 = vmatpush1.msra.mxu0 0.0
  %1642 = vmatprep.subr.mxu0 0.0
  %1643 = vmatpush1.msra.mxu0 0.0
  %1644 = vmatprep.subr.mxu0 0.0
  %1645 = vmatpush1.msra.mxu0 0.0
  %1646 = vmatprep.subr.mxu0 0.0
  %1647 = vmatpush1.msra.mxu0 0.0
  %1648 = vmatprep.subr.mxu0 0.0
  %1649 = vmatpush1.msra.mxu0 0.0
  %1650 = vmatprep.subr.mxu0 0.0
  %1651 = vmatpush1.msra.mxu0 0.0
  %1652 = vmatprep.subr.mxu0 0.0
  %1653 = vmatpush1.msra.mxu0 0.0
  %1654 = vmatprep.subr.mxu0 0.0
  %1655 = vmatpush1.msra.mxu0 0.0
  %1656 = vmatprep.subr.mxu0 0.0
  %1657 = vmatpush1.msra.mxu0 0.0
  %1658 = vmatprep.subr.mxu0 0.0
  %1659 = vmatpush1.msra.mxu0 0.0
  %1660 = vmatprep.subr.mxu0 0.0
  %1661 = vmatpush1.msra.mxu0 0.0
  %1662 = vmatprep.subr.mxu0 0.0
  %1663 = vmatpush1.msra.mxu0 0.0
  %1664 = vmatprep.subr.mxu0 0.0
  %1665 = vmatpush1.msra.mxu0 0.0
  %1666 = vmatprep.subr.mxu0 0.0
  %1667 = vmatpush1.msra.mxu0 0.0
  %1668 = vmatprep.subr.mxu0 0.0
  %1669 = vmatpush1.msra.mxu0 0.0
  %1670 = vmatprep.mubr.f32.mxu0 0.0
  %1671 = vmatmul.mubr.f32.gmra.mrb[0].mxu0 %v144
  %v1672 = vpop.f32.mrb[0].mxu0
  %v1673 = vadd.f32 0.0, %v1672
  %v1674 = vpop.f32.mrb[0].mxu0
  %1675 = vmatprep.mubr.f32.mxu0 0.0
  %1676 = vmatmul.mubr.f32.gmra.mrb[0].mxu0 %v147
  %v1677 = vpop.f32.mrb[0].mxu0
  %v1678 = vadd.f32 0.0, %v1677
  %v1679 = vpop.f32.mrb[0].mxu0
  %1680 = vmatprep.mubr.f32.mxu0 0.0
  %1681 = vmatmul.mubr.f32.gmra.mrb[0].mxu0 %v150
  %v1682 = vpop.f32.mrb[0].mxu0
  %v1683 = vadd.f32 0.0, %v1682
  %v1684 = vpop.f32.mrb[0].mxu0
  %1685 = vmatprep.mubr.f32.mxu0 0.0
  %1686 = vmatmul.mubr.f32.gmra.mrb[0].mxu0 %v153
  %v1687 = vpop.f32.mrb[0].mxu0
  %v1688 = vadd.f32 0.0, %v1687
  %v1689 = vpop.f32.mrb[0].mxu0
  %1690 = vmatprep.mubr.f32.mxu0 0.0
  %1691 = vmatmul.mubr.f32.gmra.mrb[0].mxu0 %v156
  %v1692 = vpop.f32.mrb[0].mxu0
  %v1693 = vadd.f32 0.0, %v1692
  %v1694 = vpop.f32.mrb[0].mxu0
  %1695 = vmatprep.mubr.f32.mxu0 0.0
  %1696 = vmatmul.mubr.f32.gmra.mrb[0].mxu0 %v159
  %v1697 = vpop.f32.mrb[0].mxu0
  %v1698 = vadd.f32 0.0, %v1697
  %v1699 = vpop.f32.mrb[0].mxu0
  %1700 = vmatprep.mubr.f32.mxu0 0.0
  %1701 = vmatmul.mubr.f32.gmra.mrb[0].mxu0 %v162
  %v1702 = vpop.f32.mrb[0].mxu0
  %v1703 = vadd.f32 0.0, %v1702
  %v1704 = vpop.f32.mrb[0].mxu0
  %1705 = vmatprep.mubr.f32.mxu0 0.0
  %1706 = vmatmul.mubr.f32.gmra.mrb[0].mxu0 %v165
  %v1707 = vpop.f32.mrb[0].mxu0
  %v1708 = vadd.f32 0.0, %v1707
  %v1709 = vpop.f32.mrb[0].mxu0
  %1710 = vdwg.mxu0
  %1711 = vset.pattern.permute.xlu0 9
  %1712 = vperm.xlu0 %1711, %v128
  %v1713 = vpop.permute.xlu0 %1712
  %1715 = vset.pattern.permute.xlu0 9
  %1716 = vperm.xlu0 %1715, %v129
  %v1717 = vpop.permute.xlu0 %1716
  %1719 = vset.pattern.permute.xlu0 9
  %1720 = vperm.xlu0 %1719, %v130
  %v1721 = vpop.permute.xlu0 %1720
  %1723 = vset.pattern.permute.xlu0 9
  %1724 = vperm.xlu0 %1723, %v131
  %v1725 = vpop.permute.xlu0 %1724
  %1727 = vset.pattern.permute.xlu0 9
  %1728 = vperm.xlu0 %1727, %v132
  %v1729 = vpop.permute.xlu0 %1728
  %1731 = vset.pattern.permute.xlu0 9
  %1732 = vperm.xlu0 %1731, %v133
  %v1733 = vpop.permute.xlu0 %1732
  %1735 = vset.pattern.permute.xlu0 9
  %1736 = vperm.xlu0 %1735, %v134
  %v1737 = vpop.permute.xlu0 %1736
  %1739 = vset.pattern.permute.xlu0 9
  %1740 = vperm.xlu0 %1739, %v135
  %v1741 = vpop.permute.xlu0 %1740
  %v1743 = vmul.f32 %v1673, %v1713
  %v1744 = vmul.f32 %v1678, %v1717
  %v1745 = vmul.f32 %v1683, %v1721
  %v1746 = vmul.f32 %v1688, %v1725
  %v1747 = vmul.f32 %v1693, %v1729
  %v1748 = vmul.f32 %v1698, %v1733
  %v1749 = vmul.f32 %v1703, %v1737
  %v1750 = vmul.f32 %v1708, %v1741
  %v1751 = vadd.f32 %v1592, %v1743
  %v1752 = vadd.f32 %v1593, %v1744
  %v1753 = vadd.f32 %v1594, %v1745
  %v1754 = vadd.f32 %v1595, %v1746
  %v1755 = vadd.f32 %v1596, %v1747
  %v1756 = vadd.f32 %v1597, %v1748
  %v1757 = vadd.f32 %v1598, %v1749
  %v1758 = vadd.f32 %v1599, %v1750
  %v1759 = vld [vmem:[%s3 + $0x50] sm:$0xff]
  %v1760 = vld [vmem:[%s3 + $0x118] sm:$0xff]
  %v1761 = vld [vmem:[%s3 + $0x1e0] sm:$0xff]
  %v1762 = vld [vmem:[%s3 + $0x2a8] sm:$0xff]
  %v1763 = vld [vmem:[%s3 + $0x370] sm:$0xff]
  %v1764 = vld [vmem:[%s3 + $0x438] sm:$0xff]
  %1765 = vmatprep.subr.mxu0 0.0
  %1766 = vmatpush1.msra.mxu0 %v1759
  %1767 = vmatprep.subr.mxu0 0.0
  %1768 = vmatpush1.msra.mxu0 %v1760
  %1769 = vmatprep.subr.mxu0 0.0
  %1770 = vmatpush1.msra.mxu0 %v1761
  %1771 = vmatprep.subr.mxu0 0.0
  %1772 = vmatpush1.msra.mxu0 %v1762
  %1773 = vmatprep.subr.mxu0 0.0
  %1774 = vmatpush1.msra.mxu0 %v1763
  %1775 = vmatprep.subr.mxu0 0.0
  %1776 = vmatpush1.msra.mxu0 %v1764
  %1777 = vmatprep.subr.mxu0 0.0
  %1778 = vmatpush1.msra.mxu0 0.0
  %1779 = vmatprep.subr.mxu0 0.0
  %1780 = vmatpush1.msra.mxu0 0.0
  %1781 = vmatprep.subr.mxu0 0.0
  %1782 = vmatpush1.msra.mxu0 0.0
  %1783 = vmatprep.subr.mxu0 0.0
  %1784 = vmatpush1.msra.mxu0 0.0
  %1785 = vmatprep.subr.mxu0 0.0
  %1786 = vmatpush1.msra.mxu0 0.0
  %1787 = vmatprep.subr.mxu0 0.0
  %1788 = vmatpush1.msra.mxu0 0.0
  %1789 = vmatprep.subr.mxu0 0.0
  %1790 = vmatpush1.msra.mxu0 0.0
  %1791 = vmatprep.subr.mxu0 0.0
  %1792 = vmatpush1.msra.mxu0 0.0
  %1793 = vmatprep.subr.mxu0 0.0
  %1794 = vmatpush1.msra.mxu0 0.0
  %1795 = vmatprep.subr.mxu0 0.0
  %1796 = vmatpush1.msra.mxu0 0.0
  %1797 = vmatprep.subr.mxu0 0.0
  %1798 = vmatpush1.msra.mxu0 0.0
  %1799 = vmatprep.subr.mxu0 0.0
  %1800 = vmatpush1.msra.mxu0 0.0
  %1801 = vmatprep.subr.mxu0 0.0
  %1802 = vmatpush1.msra.mxu0 0.0
  %1803 = vmatprep.subr.mxu0 0.0
  %1804 = vmatpush1.msra.mxu0 0.0
  %1805 = vmatprep.subr.mxu0 0.0
  %1806 = vmatpush1.msra.mxu0 0.0
  %1807 = vmatprep.subr.mxu0 0.0
  %1808 = vmatpush1.msra.mxu0 0.0
  %1809 = vmatprep.subr.mxu0 0.0
  %1810 = vmatpush1.msra.mxu0 0.0
  %1811 = vmatprep.subr.mxu0 0.0
  %1812 = vmatpush1.msra.mxu0 0.0
  %1813 = vmatprep.subr.mxu0 0.0
  %1814 = vmatpush1.msra.mxu0 0.0
  %1815 = vmatprep.subr.mxu0 0.0
  %1816 = vmatpush1.msra.mxu0 0.0
  %1817 = vmatprep.subr.mxu0 0.0
  %1818 = vmatpush1.msra.mxu0 0.0
  %1819 = vmatprep.subr.mxu0 0.0
  %1820 = vmatpush1.msra.mxu0 0.0
  %1821 = vmatprep.subr.mxu0 0.0
  %1822 = vmatpush1.msra.mxu0 0.0
  %1823 = vmatprep.subr.mxu0 0.0
  %1824 = vmatpush1.msra.mxu0 0.0
  %1825 = vmatprep.subr.mxu0 0.0
  %1826 = vmatpush1.msra.mxu0 0.0
  %1827 = vmatprep.subr.mxu0 0.0
  %1828 = vmatpush1.msra.mxu0 0.0
  %1829 = vmatprep.mubr.f32.mxu0 0.0
  %1830 = vmatmul.mubr.f32.gmra.mrb[0].mxu0 %v144
  %v1831 = vpop.f32.mrb[0].mxu0
  %v1832 = vadd.f32 0.0, %v1831
  %v1833 = vpop.f32.mrb[0].mxu0
  %1834 = vmatprep.mubr.f32.mxu0 0.0
  %1835 = vmatmul.mubr.f32.gmra.mrb[0].mxu0 %v147
  %v1836 = vpop.f32.mrb[0].mxu0
  %v1837 = vadd.f32 0.0, %v1836
  %v1838 = vpop.f32.mrb[0].mxu0
  %1839 = vmatprep.mubr.f32.mxu0 0.0
  %1840 = vmatmul.mubr.f32.gmra.mrb[0].mxu0 %v150
  %v1841 = vpop.f32.mrb[0].mxu0
  %v1842 = vadd.f32 0.0, %v1841
  %v1843 = vpop.f32.mrb[0].mxu0
  %1844 = vmatprep.mubr.f32.mxu0 0.0
  %1845 = vmatmul.mubr.f32.gmra.mrb[0].mxu0 %v153
  %v1846 = vpop.f32.mrb[0].mxu0
  %v1847 = vadd.f32 0.0, %v1846
  %v1848 = vpop.f32.mrb[0].mxu0
  %1849 = vmatprep.mubr.f32.mxu0 0.0
  %1850 = vmatmul.mubr.f32.gmra.mrb[0].mxu0 %v156
  %v1851 = vpop.f32.mrb[0].mxu0
  %v1852 = vadd.f32 0.0, %v1851
  %v1853 = vpop.f32.mrb[0].mxu0
  %1854 = vmatprep.mubr.f32.mxu0 0.0
  %1855 = vmatmul.mubr.f32.gmra.mrb[0].mxu0 %v159
  %v1856 = vpop.f32.mrb[0].mxu0
  %v1857 = vadd.f32 0.0, %v1856
  %v1858 = vpop.f32.mrb[0].mxu0
  %1859 = vmatprep.mubr.f32.mxu0 0.0
  %1860 = vmatmul.mubr.f32.gmra.mrb[0].mxu0 %v162
  %v1861 = vpop.f32.mrb[0].mxu0
  %v1862 = vadd.f32 0.0, %v1861
  %v1863 = vpop.f32.mrb[0].mxu0
  %1864 = vmatprep.mubr.f32.mxu0 0.0
  %1865 = vmatmul.mubr.f32.gmra.mrb[0].mxu0 %v165
  %v1866 = vpop.f32.mrb[0].mxu0
  %v1867 = vadd.f32 0.0, %v1866
  %v1868 = vpop.f32.mrb[0].mxu0
  %1869 = vdwg.mxu0
  %1870 = vset.pattern.permute.xlu0 10
  %1871 = vperm.xlu0 %1870, %v128
  %v1872 = vpop.permute.xlu0 %1871
  %1874 = vset.pattern.permute.xlu0 10
  %1875 = vperm.xlu0 %1874, %v129
  %v1876 = vpop.permute.xlu0 %1875
  %1878 = vset.pattern.permute.xlu0 10
  %1879 = vperm.xlu0 %1878, %v130
  %v1880 = vpop.permute.xlu0 %1879
  %1882 = vset.pattern.permute.xlu0 10
  %1883 = vperm.xlu0 %1882, %v131
  %v1884 = vpop.permute.xlu0 %1883
  %1886 = vset.pattern.permute.xlu0 10
  %1887 = vperm.xlu0 %1886, %v132
  %v1888 = vpop.permute.xlu0 %1887
  %1890 = vset.pattern.permute.xlu0 10
  %1891 = vperm.xlu0 %1890, %v133
  %v1892 = vpop.permute.xlu0 %1891
  %1894 = vset.pattern.permute.xlu0 10
  %1895 = vperm.xlu0 %1894, %v134
  %v1896 = vpop.permute.xlu0 %1895
  %1898 = vset.pattern.permute.xlu0 10
  %1899 = vperm.xlu0 %1898, %v135
  %v1900 = vpop.permute.xlu0 %1899
  %v1902 = vmul.f32 %v1832, %v1872
  %v1903 = vmul.f32 %v1837, %v1876
  %v1904 = vmul.f32 %v1842, %v1880
  %v1905 = vmul.f32 %v1847, %v1884
  %v1906 = vmul.f32 %v1852, %v1888
  %v1907 = vmul.f32 %v1857, %v1892
  %v1908 = vmul.f32 %v1862, %v1896
  %v1909 = vmul.f32 %v1867, %v1900
  %v1910 = vadd.f32 %v1751, %v1902
  %v1911 = vadd.f32 %v1752, %v1903
  %v1912 = vadd.f32 %v1753, %v1904
  %v1913 = vadd.f32 %v1754, %v1905
  %v1914 = vadd.f32 %v1755, %v1906
  %v1915 = vadd.f32 %v1756, %v1907
  %v1916 = vadd.f32 %v1757, %v1908
  %v1917 = vadd.f32 %v1758, %v1909
  %v1918 = vld [vmem:[%s3 + $0x58] sm:$0xff]
  %v1919 = vld [vmem:[%s3 + $0x120] sm:$0xff]
  %v1920 = vld [vmem:[%s3 + $0x1e8] sm:$0xff]
  %v1921 = vld [vmem:[%s3 + $0x2b0] sm:$0xff]
  %v1922 = vld [vmem:[%s3 + $0x378] sm:$0xff]
  %v1923 = vld [vmem:[%s3 + $0x440] sm:$0xff]
  %1924 = vmatprep.subr.mxu0 0.0
  %1925 = vmatpush1.msra.mxu0 %v1918
  %1926 = vmatprep.subr.mxu0 0.0
  %1927 = vmatpush1.msra.mxu0 %v1919
  %1928 = vmatprep.subr.mxu0 0.0
  %1929 = vmatpush1.msra.mxu0 %v1920
  %1930 = vmatprep.subr.mxu0 0.0
  %1931 = vmatpush1.msra.mxu0 %v1921
  %1932 = vmatprep.subr.mxu0 0.0
  %1933 = vmatpush1.msra.mxu0 %v1922
  %1934 = vmatprep.subr.mxu0 0.0
  %1935 = vmatpush1.msra.mxu0 %v1923
  %1936 = vmatprep.subr.mxu0 0.0
  %1937 = vmatpush1.msra.mxu0 0.0
  %1938 = vmatprep.subr.mxu0 0.0
  %1939 = vmatpush1.msra.mxu0 0.0
  %1940 = vmatprep.subr.mxu0 0.0
  %1941 = vmatpush1.msra.mxu0 0.0
  %1942 = vmatprep.subr.mxu0 0.0
  %1943 = vmatpush1.msra.mxu0 0.0
  %1944 = vmatprep.subr.mxu0 0.0
  %1945 = vmatpush1.msra.mxu0 0.0
  %1946 = vmatprep.subr.mxu0 0.0
  %1947 = vmatpush1.msra.mxu0 0.0
  %1948 = vmatprep.subr.mxu0 0.0
  %1949 = vmatpush1.msra.mxu0 0.0
  %1950 = vmatprep.subr.mxu0 0.0
  %1951 = vmatpush1.msra.mxu0 0.0
  %1952 = vmatprep.subr.mxu0 0.0
  %1953 = vmatpush1.msra.mxu0 0.0
  %1954 = vmatprep.subr.mxu0 0.0
  %1955 = vmatpush1.msra.mxu0 0.0
  %1956 = vmatprep.subr.mxu0 0.0
  %1957 = vmatpush1.msra.mxu0 0.0
  %1958 = vmatprep.subr.mxu0 0.0
  %1959 = vmatpush1.msra.mxu0 0.0
  %1960 = vmatprep.subr.mxu0 0.0
  %1961 = vmatpush1.msra.mxu0 0.0
  %1962 = vmatprep.subr.mxu0 0.0
  %1963 = vmatpush1.msra.mxu0 0.0
  %1964 = vmatprep.subr.mxu0 0.0
  %1965 = vmatpush1.msra.mxu0 0.0
  %1966 = vmatprep.subr.mxu0 0.0
  %1967 = vmatpush1.msra.mxu0 0.0
  %1968 = vmatprep.subr.mxu0 0.0
  %1969 = vmatpush1.msra.mxu0 0.0
  %1970 = vmatprep.subr.mxu0 0.0
  %1971 = vmatpush1.msra.mxu0 0.0
  %1972 = vmatprep.subr.mxu0 0.0
  %1973 = vmatpush1.msra.mxu0 0.0
  %1974 = vmatprep.subr.mxu0 0.0
  %1975 = vmatpush1.msra.mxu0 0.0
  %1976 = vmatprep.subr.mxu0 0.0
  %1977 = vmatpush1.msra.mxu0 0.0
  %1978 = vmatprep.subr.mxu0 0.0
  %1979 = vmatpush1.msra.mxu0 0.0
  %1980 = vmatprep.subr.mxu0 0.0
  %1981 = vmatpush1.msra.mxu0 0.0
  %1982 = vmatprep.subr.mxu0 0.0
  %1983 = vmatpush1.msra.mxu0 0.0
  %1984 = vmatprep.subr.mxu0 0.0
  %1985 = vmatpush1.msra.mxu0 0.0
  %1986 = vmatprep.subr.mxu0 0.0
  %1987 = vmatpush1.msra.mxu0 0.0
  %1988 = vmatprep.mubr.f32.mxu0 0.0
  %1989 = vmatmul.mubr.f32.gmra.mrb[0].mxu0 %v144
  %v1990 = vpop.f32.mrb[0].mxu0
  %v1991 = vadd.f32 0.0, %v1990
  %v1992 = vpop.f32.mrb[0].mxu0
  %1993 = vmatprep.mubr.f32.mxu0 0.0
  %1994 = vmatmul.mubr.f32.gmra.mrb[0].mxu0 %v147
  %v1995 = vpop.f32.mrb[0].mxu0
  %v1996 = vadd.f32 0.0, %v1995
  %v1997 = vpop.f32.mrb[0].mxu0
  %1998 = vmatprep.mubr.f32.mxu0 0.0
  %1999 = vmatmul.mubr.f32.gmra.mrb[0].mxu0 %v150
  %v2000 = vpop.f32.mrb[0].mxu0
  %v2001 = vadd.f32 0.0, %v2000
  %v2002 = vpop.f32.mrb[0].mxu0
  %2003 = vmatprep.mubr.f32.mxu0 0.0
  %2004 = vmatmul.mubr.f32.gmra.mrb[0].mxu0 %v153
  %v2005 = vpop.f32.mrb[0].mxu0
  %v2006 = vadd.f32 0.0, %v2005
  %v2007 = vpop.f32.mrb[0].mxu0
  %2008 = vmatprep.mubr.f32.mxu0 0.0
  %2009 = vmatmul.mubr.f32.gmra.mrb[0].mxu0 %v156
  %v2010 = vpop.f32.mrb[0].mxu0
  %v2011 = vadd.f32 0.0, %v2010
  %v2012 = vpop.f32.mrb[0].mxu0
  %2013 = vmatprep.mubr.f32.mxu0 0.0
  %2014 = vmatmul.mubr.f32.gmra.mrb[0].mxu0 %v159
  %v2015 = vpop.f32.mrb[0].mxu0
  %v2016 = vadd.f32 0.0, %v2015
  %v2017 = vpop.f32.mrb[0].mxu0
  %2018 = vmatprep.mubr.f32.mxu0 0.0
  %2019 = vmatmul.mubr.f32.gmra.mrb[0].mxu0 %v162
  %v2020 = vpop.f32.mrb[0].mxu0
  %v2021 = vadd.f32 0.0, %v2020
  %v2022 = vpop.f32.mrb[0].mxu0
  %2023 = vmatprep.mubr.f32.mxu0 0.0
  %2024 = vmatmul.mubr.f32.gmra.mrb[0].mxu0 %v165
  %v2025 = vpop.f32.mrb[0].mxu0
  %v2026 = vadd.f32 0.0, %v2025
  %v2027 = vpop.f32.mrb[0].mxu0
  %2028 = vdwg.mxu0
  %2029 = vset.pattern.permute.xlu0 11
  %2030 = vperm.xlu0 %2029, %v128
  %v2031 = vpop.permute.xlu0 %2030
  %2033 = vset.pattern.permute.xlu0 11
  %2034 = vperm.xlu0 %2033, %v129
  %v2035 = vpop.permute.xlu0 %2034
  %2037 = vset.pattern.permute.xlu0 11
  %2038 = vperm.xlu0 %2037, %v130
  %v2039 = vpop.permute.xlu0 %2038
  %2041 = vset.pattern.permute.xlu0 11
  %2042 = vperm.xlu0 %2041, %v131
  %v2043 = vpop.permute.xlu0 %2042
  %2045 = vset.pattern.permute.xlu0 11
  %2046 = vperm.xlu0 %2045, %v132
  %v2047 = vpop.permute.xlu0 %2046
  %2049 = vset.pattern.permute.xlu0 11
  %2050 = vperm.xlu0 %2049, %v133
  %v2051 = vpop.permute.xlu0 %2050
  %2053 = vset.pattern.permute.xlu0 11
  %2054 = vperm.xlu0 %2053, %v134
  %v2055 = vpop.permute.xlu0 %2054
  %2057 = vset.pattern.permute.xlu0 11
  %2058 = vperm.xlu0 %2057, %v135
  %v2059 = vpop.permute.xlu0 %2058
  %v2061 = vmul.f32 %v1991, %v2031
  %v2062 = vmul.f32 %v1996, %v2035
  %v2063 = vmul.f32 %v2001, %v2039
  %v2064 = vmul.f32 %v2006, %v2043
  %v2065 = vmul.f32 %v2011, %v2047
  %v2066 = vmul.f32 %v2016, %v2051
  %v2067 = vmul.f32 %v2021, %v2055
  %v2068 = vmul.f32 %v2026, %v2059
  %v2069 = vadd.f32 %v1910, %v2061
  %v2070 = vadd.f32 %v1911, %v2062
  %v2071 = vadd.f32 %v1912, %v2063
  %v2072 = vadd.f32 %v1913, %v2064
  %v2073 = vadd.f32 %v1914, %v2065
  %v2074 = vadd.f32 %v1915, %v2066
  %v2075 = vadd.f32 %v1916, %v2067
  %v2076 = vadd.f32 %v1917, %v2068
  %v2077 = vld [vmem:[%s3 + $0x60] sm:$0xff]
  %v2078 = vld [vmem:[%s3 + $0x128] sm:$0xff]
  %v2079 = vld [vmem:[%s3 + $0x1f0] sm:$0xff]
  %v2080 = vld [vmem:[%s3 + $0x2b8] sm:$0xff]
  %v2081 = vld [vmem:[%s3 + $0x380] sm:$0xff]
  %v2082 = vld [vmem:[%s3 + $0x448] sm:$0xff]
  %2083 = vmatprep.subr.mxu0 0.0
  %2084 = vmatpush1.msra.mxu0 %v2077
  %2085 = vmatprep.subr.mxu0 0.0
  %2086 = vmatpush1.msra.mxu0 %v2078
  %2087 = vmatprep.subr.mxu0 0.0
  %2088 = vmatpush1.msra.mxu0 %v2079
  %2089 = vmatprep.subr.mxu0 0.0
  %2090 = vmatpush1.msra.mxu0 %v2080
  %2091 = vmatprep.subr.mxu0 0.0
  %2092 = vmatpush1.msra.mxu0 %v2081
  %2093 = vmatprep.subr.mxu0 0.0
  %2094 = vmatpush1.msra.mxu0 %v2082
  %2095 = vmatprep.subr.mxu0 0.0
  %2096 = vmatpush1.msra.mxu0 0.0
  %2097 = vmatprep.subr.mxu0 0.0
  %2098 = vmatpush1.msra.mxu0 0.0
  %2099 = vmatprep.subr.mxu0 0.0
  %2100 = vmatpush1.msra.mxu0 0.0
  %2101 = vmatprep.subr.mxu0 0.0
  %2102 = vmatpush1.msra.mxu0 0.0
  %2103 = vmatprep.subr.mxu0 0.0
  %2104 = vmatpush1.msra.mxu0 0.0
  %2105 = vmatprep.subr.mxu0 0.0
  %2106 = vmatpush1.msra.mxu0 0.0
  %2107 = vmatprep.subr.mxu0 0.0
  %2108 = vmatpush1.msra.mxu0 0.0
  %2109 = vmatprep.subr.mxu0 0.0
  %2110 = vmatpush1.msra.mxu0 0.0
  %2111 = vmatprep.subr.mxu0 0.0
  %2112 = vmatpush1.msra.mxu0 0.0
  %2113 = vmatprep.subr.mxu0 0.0
  %2114 = vmatpush1.msra.mxu0 0.0
  %2115 = vmatprep.subr.mxu0 0.0
  %2116 = vmatpush1.msra.mxu0 0.0
  %2117 = vmatprep.subr.mxu0 0.0
  %2118 = vmatpush1.msra.mxu0 0.0
  %2119 = vmatprep.subr.mxu0 0.0
  %2120 = vmatpush1.msra.mxu0 0.0
  %2121 = vmatprep.subr.mxu0 0.0
  %2122 = vmatpush1.msra.mxu0 0.0
  %2123 = vmatprep.subr.mxu0 0.0
  %2124 = vmatpush1.msra.mxu0 0.0
  %2125 = vmatprep.subr.mxu0 0.0
  %2126 = vmatpush1.msra.mxu0 0.0
  %2127 = vmatprep.subr.mxu0 0.0
  %2128 = vmatpush1.msra.mxu0 0.0
  %2129 = vmatprep.subr.mxu0 0.0
  %2130 = vmatpush1.msra.mxu0 0.0
  %2131 = vmatprep.subr.mxu0 0.0
  %2132 = vmatpush1.msra.mxu0 0.0
  %2133 = vmatprep.subr.mxu0 0.0
  %2134 = vmatpush1.msra.mxu0 0.0
  %2135 = vmatprep.subr.mxu0 0.0
  %2136 = vmatpush1.msra.mxu0 0.0
  %2137 = vmatprep.subr.mxu0 0.0
  %2138 = vmatpush1.msra.mxu0 0.0
  %2139 = vmatprep.subr.mxu0 0.0
  %2140 = vmatpush1.msra.mxu0 0.0
  %2141 = vmatprep.subr.mxu0 0.0
  %2142 = vmatpush1.msra.mxu0 0.0
  %2143 = vmatprep.subr.mxu0 0.0
  %2144 = vmatpush1.msra.mxu0 0.0
  %2145 = vmatprep.subr.mxu0 0.0
  %2146 = vmatpush1.msra.mxu0 0.0
  %2147 = vmatprep.mubr.f32.mxu0 0.0
  %2148 = vmatmul.mubr.f32.gmra.mrb[0].mxu0 %v144
  %v2149 = vpop.f32.mrb[0].mxu0
  %v2150 = vadd.f32 0.0, %v2149
  %v2151 = vpop.f32.mrb[0].mxu0
  %2152 = vmatprep.mubr.f32.mxu0 0.0
  %2153 = vmatmul.mubr.f32.gmra.mrb[0].mxu0 %v147
  %v2154 = vpop.f32.mrb[0].mxu0
  %v2155 = vadd.f32 0.0, %v2154
  %v2156 = vpop.f32.mrb[0].mxu0
  %2157 = vmatprep.mubr.f32.mxu0 0.0
  %2158 = vmatmul.mubr.f32.gmra.mrb[0].mxu0 %v150
  %v2159 = vpop.f32.mrb[0].mxu0
  %v2160 = vadd.f32 0.0, %v2159
  %v2161 = vpop.f32.mrb[0].mxu0
  %2162 = vmatprep.mubr.f32.mxu0 0.0
  %2163 = vmatmul.mubr.f32.gmra.mrb[0].mxu0 %v153
  %v2164 = vpop.f32.mrb[0].mxu0
  %v2165 = vadd.f32 0.0, %v2164
  %v2166 = vpop.f32.mrb[0].mxu0
  %2167 = vmatprep.mubr.f32.mxu0 0.0
  %2168 = vmatmul.mubr.f32.gmra.mrb[0].mxu0 %v156
  %v2169 = vpop.f32.mrb[0].mxu0
  %v2170 = vadd.f32 0.0, %v2169
  %v2171 = vpop.f32.mrb[0].mxu0
  %2172 = vmatprep.mubr.f32.mxu0 0.0
  %2173 = vmatmul.mubr.f32.gmra.mrb[0].mxu0 %v159
  %v2174 = vpop.f32.mrb[0].mxu0
  %v2175 = vadd.f32 0.0, %v2174
  %v2176 = vpop.f32.mrb[0].mxu0
  %2177 = vmatprep.mubr.f32.mxu0 0.0
  %2178 = vmatmul.mubr.f32.gmra.mrb[0].mxu0 %v162
  %v2179 = vpop.f32.mrb[0].mxu0
  %v2180 = vadd.f32 0.0, %v2179
  %v2181 = vpop.f32.mrb[0].mxu0
  %2182 = vmatprep.mubr.f32.mxu0 0.0
  %2183 = vmatmul.mubr.f32.gmra.mrb[0].mxu0 %v165
  %v2184 = vpop.f32.mrb[0].mxu0
  %v2185 = vadd.f32 0.0, %v2184
  %v2186 = vpop.f32.mrb[0].mxu0
  %2187 = vdwg.mxu0
  %2188 = vset.pattern.permute.xlu0 12
  %2189 = vperm.xlu0 %2188, %v128
  %v2190 = vpop.permute.xlu0 %2189
  %2192 = vset.pattern.permute.xlu0 12
  %2193 = vperm.xlu0 %2192, %v129
  %v2194 = vpop.permute.xlu0 %2193
  %2196 = vset.pattern.permute.xlu0 12
  %2197 = vperm.xlu0 %2196, %v130
  %v2198 = vpop.permute.xlu0 %2197
  %2200 = vset.pattern.permute.xlu0 12
  %2201 = vperm.xlu0 %2200, %v131
  %v2202 = vpop.permute.xlu0 %2201
  %2204 = vset.pattern.permute.xlu0 12
  %2205 = vperm.xlu0 %2204, %v132
  %v2206 = vpop.permute.xlu0 %2205
  %2208 = vset.pattern.permute.xlu0 12
  %2209 = vperm.xlu0 %2208, %v133
  %v2210 = vpop.permute.xlu0 %2209
  %2212 = vset.pattern.permute.xlu0 12
  %2213 = vperm.xlu0 %2212, %v134
  %v2214 = vpop.permute.xlu0 %2213
  %2216 = vset.pattern.permute.xlu0 12
  %2217 = vperm.xlu0 %2216, %v135
  %v2218 = vpop.permute.xlu0 %2217
  %v2220 = vmul.f32 %v2150, %v2190
  %v2221 = vmul.f32 %v2155, %v2194
  %v2222 = vmul.f32 %v2160, %v2198
  %v2223 = vmul.f32 %v2165, %v2202
  %v2224 = vmul.f32 %v2170, %v2206
  %v2225 = vmul.f32 %v2175, %v2210
  %v2226 = vmul.f32 %v2180, %v2214
  %v2227 = vmul.f32 %v2185, %v2218
  %v2228 = vadd.f32 %v2069, %v2220
  %v2229 = vadd.f32 %v2070, %v2221
  %v2230 = vadd.f32 %v2071, %v2222
  %v2231 = vadd.f32 %v2072, %v2223
  %v2232 = vadd.f32 %v2073, %v2224
  %v2233 = vadd.f32 %v2074, %v2225
  %v2234 = vadd.f32 %v2075, %v2226
  %v2235 = vadd.f32 %v2076, %v2227
  %v2236 = vld [vmem:[%s3 + $0x68] sm:$0xff]
  %v2237 = vld [vmem:[%s3 + $0x130] sm:$0xff]
  %v2238 = vld [vmem:[%s3 + $0x1f8] sm:$0xff]
  %v2239 = vld [vmem:[%s3 + $0x2c0] sm:$0xff]
  %v2240 = vld [vmem:[%s3 + $0x388] sm:$0xff]
  %v2241 = vld [vmem:[%s3 + $0x450] sm:$0xff]
  %2242 = vmatprep.subr.mxu0 0.0
  %2243 = vmatpush1.msra.mxu0 %v2236
  %2244 = vmatprep.subr.mxu0 0.0
  %2245 = vmatpush1.msra.mxu0 %v2237
  %2246 = vmatprep.subr.mxu0 0.0
  %2247 = vmatpush1.msra.mxu0 %v2238
  %2248 = vmatprep.subr.mxu0 0.0
  %2249 = vmatpush1.msra.mxu0 %v2239
  %2250 = vmatprep.subr.mxu0 0.0
  %2251 = vmatpush1.msra.mxu0 %v2240
  %2252 = vmatprep.subr.mxu0 0.0
  %2253 = vmatpush1.msra.mxu0 %v2241
  %2254 = vmatprep.subr.mxu0 0.0
  %2255 = vmatpush1.msra.mxu0 0.0
  %2256 = vmatprep.subr.mxu0 0.0
  %2257 = vmatpush1.msra.mxu0 0.0
  %2258 = vmatprep.subr.mxu0 0.0
  %2259 = vmatpush1.msra.mxu0 0.0
  %2260 = vmatprep.subr.mxu0 0.0
  %2261 = vmatpush1.msra.mxu0 0.0
  %2262 = vmatprep.subr.mxu0 0.0
  %2263 = vmatpush1.msra.mxu0 0.0
  %2264 = vmatprep.subr.mxu0 0.0
  %2265 = vmatpush1.msra.mxu0 0.0
  %2266 = vmatprep.subr.mxu0 0.0
  %2267 = vmatpush1.msra.mxu0 0.0
  %2268 = vmatprep.subr.mxu0 0.0
  %2269 = vmatpush1.msra.mxu0 0.0
  %2270 = vmatprep.subr.mxu0 0.0
  %2271 = vmatpush1.msra.mxu0 0.0
  %2272 = vmatprep.subr.mxu0 0.0
  %2273 = vmatpush1.msra.mxu0 0.0
  %2274 = vmatprep.subr.mxu0 0.0
  %2275 = vmatpush1.msra.mxu0 0.0
  %2276 = vmatprep.subr.mxu0 0.0
  %2277 = vmatpush1.msra.mxu0 0.0
  %2278 = vmatprep.subr.mxu0 0.0
  %2279 = vmatpush1.msra.mxu0 0.0
  %2280 = vmatprep.subr.mxu0 0.0
  %2281 = vmatpush1.msra.mxu0 0.0
  %2282 = vmatprep.subr.mxu0 0.0
  %2283 = vmatpush1.msra.mxu0 0.0
  %2284 = vmatprep.subr.mxu0 0.0
  %2285 = vmatpush1.msra.mxu0 0.0
  %2286 = vmatprep.subr.mxu0 0.0
  %2287 = vmatpush1.msra.mxu0 0.0
  %2288 = vmatprep.subr.mxu0 0.0
  %2289 = vmatpush1.msra.mxu0 0.0
  %2290 = vmatprep.subr.mxu0 0.0
  %2291 = vmatpush1.msra.mxu0 0.0
  %2292 = vmatprep.subr.mxu0 0.0
  %2293 = vmatpush1.msra.mxu0 0.0
  %2294 = vmatprep.subr.mxu0 0.0
  %2295 = vmatpush1.msra.mxu0 0.0
  %2296 = vmatprep.subr.mxu0 0.0
  %2297 = vmatpush1.msra.mxu0 0.0
  %2298 = vmatprep.subr.mxu0 0.0
  %2299 = vmatpush1.msra.mxu0 0.0
  %2300 = vmatprep.subr.mxu0 0.0
  %2301 = vmatpush1.msra.mxu0 0.0
  %2302 = vmatprep.subr.mxu0 0.0
  %2303 = vmatpush1.msra.mxu0 0.0
  %2304 = vmatprep.subr.mxu0 0.0
  %2305 = vmatpush1.msra.mxu0 0.0
  %2306 = vmatprep.mubr.f32.mxu0 0.0
  %2307 = vmatmul.mubr.f32.gmra.mrb[0].mxu0 %v144
  %v2308 = vpop.f32.mrb[0].mxu0
  %v2309 = vadd.f32 0.0, %v2308
  %v2310 = vpop.f32.mrb[0].mxu0
  %2311 = vmatprep.mubr.f32.mxu0 0.0
  %2312 = vmatmul.mubr.f32.gmra.mrb[0].mxu0 %v147
  %v2313 = vpop.f32.mrb[0].mxu0
  %v2314 = vadd.f32 0.0, %v2313
  %v2315 = vpop.f32.mrb[0].mxu0
  %2316 = vmatprep.mubr.f32.mxu0 0.0
  %2317 = vmatmul.mubr.f32.gmra.mrb[0].mxu0 %v150
  %v2318 = vpop.f32.mrb[0].mxu0
  %v2319 = vadd.f32 0.0, %v2318
  %v2320 = vpop.f32.mrb[0].mxu0
  %2321 = vmatprep.mubr.f32.mxu0 0.0
  %2322 = vmatmul.mubr.f32.gmra.mrb[0].mxu0 %v153
  %v2323 = vpop.f32.mrb[0].mxu0
  %v2324 = vadd.f32 0.0, %v2323
  %v2325 = vpop.f32.mrb[0].mxu0
  %2326 = vmatprep.mubr.f32.mxu0 0.0
  %2327 = vmatmul.mubr.f32.gmra.mrb[0].mxu0 %v156
  %v2328 = vpop.f32.mrb[0].mxu0
  %v2329 = vadd.f32 0.0, %v2328
  %v2330 = vpop.f32.mrb[0].mxu0
  %2331 = vmatprep.mubr.f32.mxu0 0.0
  %2332 = vmatmul.mubr.f32.gmra.mrb[0].mxu0 %v159
  %v2333 = vpop.f32.mrb[0].mxu0
  %v2334 = vadd.f32 0.0, %v2333
  %v2335 = vpop.f32.mrb[0].mxu0
  %2336 = vmatprep.mubr.f32.mxu0 0.0
  %2337 = vmatmul.mubr.f32.gmra.mrb[0].mxu0 %v162
  %v2338 = vpop.f32.mrb[0].mxu0
  %v2339 = vadd.f32 0.0, %v2338
  %v2340 = vpop.f32.mrb[0].mxu0
  %2341 = vmatprep.mubr.f32.mxu0 0.0
  %2342 = vmatmul.mubr.f32.gmra.mrb[0].mxu0 %v165
  %v2343 = vpop.f32.mrb[0].mxu0
  %v2344 = vadd.f32 0.0, %v2343
  %v2345 = vpop.f32.mrb[0].mxu0
  %2346 = vdwg.mxu0
  %2347 = vset.pattern.permute.xlu0 13
  %2348 = vperm.xlu0 %2347, %v128
  %v2349 = vpop.permute.xlu0 %2348
  %2351 = vset.pattern.permute.xlu0 13
  %2352 = vperm.xlu0 %2351, %v129
  %v2353 = vpop.permute.xlu0 %2352
  %2355 = vset.pattern.permute.xlu0 13
  %2356 = vperm.xlu0 %2355, %v130
  %v2357 = vpop.permute.xlu0 %2356
  %2359 = vset.pattern.permute.xlu0 13
  %2360 = vperm.xlu0 %2359, %v131
  %v2361 = vpop.permute.xlu0 %2360
  %2363 = vset.pattern.permute.xlu0 13
  %2364 = vperm.xlu0 %2363, %v132
  %v2365 = vpop.permute.xlu0 %2364
  %2367 = vset.pattern.permute.xlu0 13
  %2368 = vperm.xlu0 %2367, %v133
  %v2369 = vpop.permute.xlu0 %2368
  %2371 = vset.pattern.permute.xlu0 13
  %2372 = vperm.xlu0 %2371, %v134
  %v2373 = vpop.permute.xlu0 %2372
  %2375 = vset.pattern.permute.xlu0 13
  %2376 = vperm.xlu0 %2375, %v135
  %v2377 = vpop.permute.xlu0 %2376
  %v2379 = vmul.f32 %v2309, %v2349
  %v2380 = vmul.f32 %v2314, %v2353
  %v2381 = vmul.f32 %v2319, %v2357
  %v2382 = vmul.f32 %v2324, %v2361
  %v2383 = vmul.f32 %v2329, %v2365
  %v2384 = vmul.f32 %v2334, %v2369
  %v2385 = vmul.f32 %v2339, %v2373
  %v2386 = vmul.f32 %v2344, %v2377
  %v2387 = vadd.f32 %v2228, %v2379
  %v2388 = vadd.f32 %v2229, %v2380
  %v2389 = vadd.f32 %v2230, %v2381
  %v2390 = vadd.f32 %v2231, %v2382
  %v2391 = vadd.f32 %v2232, %v2383
  %v2392 = vadd.f32 %v2233, %v2384
  %v2393 = vadd.f32 %v2234, %v2385
  %v2394 = vadd.f32 %v2235, %v2386
  %v2395 = vld [vmem:[%s3 + $0x70] sm:$0xff]
  %v2396 = vld [vmem:[%s3 + $0x138] sm:$0xff]
  %v2397 = vld [vmem:[%s3 + $0x200] sm:$0xff]
  %v2398 = vld [vmem:[%s3 + $0x2c8] sm:$0xff]
  %v2399 = vld [vmem:[%s3 + $0x390] sm:$0xff]
  %v2400 = vld [vmem:[%s3 + $0x458] sm:$0xff]
  %2401 = vmatprep.subr.mxu0 0.0
  %2402 = vmatpush1.msra.mxu0 %v2395
  %2403 = vmatprep.subr.mxu0 0.0
  %2404 = vmatpush1.msra.mxu0 %v2396
  %2405 = vmatprep.subr.mxu0 0.0
  %2406 = vmatpush1.msra.mxu0 %v2397
  %2407 = vmatprep.subr.mxu0 0.0
  %2408 = vmatpush1.msra.mxu0 %v2398
  %2409 = vmatprep.subr.mxu0 0.0
  %2410 = vmatpush1.msra.mxu0 %v2399
  %2411 = vmatprep.subr.mxu0 0.0
  %2412 = vmatpush1.msra.mxu0 %v2400
  %2413 = vmatprep.subr.mxu0 0.0
  %2414 = vmatpush1.msra.mxu0 0.0
  %2415 = vmatprep.subr.mxu0 0.0
  %2416 = vmatpush1.msra.mxu0 0.0
  %2417 = vmatprep.subr.mxu0 0.0
  %2418 = vmatpush1.msra.mxu0 0.0
  %2419 = vmatprep.subr.mxu0 0.0
  %2420 = vmatpush1.msra.mxu0 0.0
  %2421 = vmatprep.subr.mxu0 0.0
  %2422 = vmatpush1.msra.mxu0 0.0
  %2423 = vmatprep.subr.mxu0 0.0
  %2424 = vmatpush1.msra.mxu0 0.0
  %2425 = vmatprep.subr.mxu0 0.0
  %2426 = vmatpush1.msra.mxu0 0.0
  %2427 = vmatprep.subr.mxu0 0.0
  %2428 = vmatpush1.msra.mxu0 0.0
  %2429 = vmatprep.subr.mxu0 0.0
  %2430 = vmatpush1.msra.mxu0 0.0
  %2431 = vmatprep.subr.mxu0 0.0
  %2432 = vmatpush1.msra.mxu0 0.0
  %2433 = vmatprep.subr.mxu0 0.0
  %2434 = vmatpush1.msra.mxu0 0.0
  %2435 = vmatprep.subr.mxu0 0.0
  %2436 = vmatpush1.msra.mxu0 0.0
  %2437 = vmatprep.subr.mxu0 0.0
  %2438 = vmatpush1.msra.mxu0 0.0
  %2439 = vmatprep.subr.mxu0 0.0
  %2440 = vmatpush1.msra.mxu0 0.0
  %2441 = vmatprep.subr.mxu0 0.0
  %2442 = vmatpush1.msra.mxu0 0.0
  %2443 = vmatprep.subr.mxu0 0.0
  %2444 = vmatpush1.msra.mxu0 0.0
  %2445 = vmatprep.subr.mxu0 0.0
  %2446 = vmatpush1.msra.mxu0 0.0
  %2447 = vmatprep.subr.mxu0 0.0
  %2448 = vmatpush1.msra.mxu0 0.0
  %2449 = vmatprep.subr.mxu0 0.0
  %2450 = vmatpush1.msra.mxu0 0.0
  %2451 = vmatprep.subr.mxu0 0.0
  %2452 = vmatpush1.msra.mxu0 0.0
  %2453 = vmatprep.subr.mxu0 0.0
  %2454 = vmatpush1.msra.mxu0 0.0
  %2455 = vmatprep.subr.mxu0 0.0
  %2456 = vmatpush1.msra.mxu0 0.0
  %2457 = vmatprep.subr.mxu0 0.0
  %2458 = vmatpush1.msra.mxu0 0.0
  %2459 = vmatprep.subr.mxu0 0.0
  %2460 = vmatpush1.msra.mxu0 0.0
  %2461 = vmatprep.subr.mxu0 0.0
  %2462 = vmatpush1.msra.mxu0 0.0
  %2463 = vmatprep.subr.mxu0 0.0
  %2464 = vmatpush1.msra.mxu0 0.0
  %2465 = vmatprep.mubr.f32.mxu0 0.0
  %2466 = vmatmul.mubr.f32.gmra.mrb[0].mxu0 %v144
  %v2467 = vpop.f32.mrb[0].mxu0
  %v2468 = vadd.f32 0.0, %v2467
  %v2469 = vpop.f32.mrb[0].mxu0
  %2470 = vmatprep.mubr.f32.mxu0 0.0
  %2471 = vmatmul.mubr.f32.gmra.mrb[0].mxu0 %v147
  %v2472 = vpop.f32.mrb[0].mxu0
  %v2473 = vadd.f32 0.0, %v2472
  %v2474 = vpop.f32.mrb[0].mxu0
  %2475 = vmatprep.mubr.f32.mxu0 0.0
  %2476 = vmatmul.mubr.f32.gmra.mrb[0].mxu0 %v150
  %v2477 = vpop.f32.mrb[0].mxu0
  %v2478 = vadd.f32 0.0, %v2477
  %v2479 = vpop.f32.mrb[0].mxu0
  %2480 = vmatprep.mubr.f32.mxu0 0.0
  %2481 = vmatmul.mubr.f32.gmra.mrb[0].mxu0 %v153
  %v2482 = vpop.f32.mrb[0].mxu0
  %v2483 = vadd.f32 0.0, %v2482
  %v2484 = vpop.f32.mrb[0].mxu0
  %2485 = vmatprep.mubr.f32.mxu0 0.0
  %2486 = vmatmul.mubr.f32.gmra.mrb[0].mxu0 %v156
  %v2487 = vpop.f32.mrb[0].mxu0
  %v2488 = vadd.f32 0.0, %v2487
  %v2489 = vpop.f32.mrb[0].mxu0
  %2490 = vmatprep.mubr.f32.mxu0 0.0
  %2491 = vmatmul.mubr.f32.gmra.mrb[0].mxu0 %v159
  %v2492 = vpop.f32.mrb[0].mxu0
  %v2493 = vadd.f32 0.0, %v2492
  %v2494 = vpop.f32.mrb[0].mxu0
  %2495 = vmatprep.mubr.f32.mxu0 0.0
  %2496 = vmatmul.mubr.f32.gmra.mrb[0].mxu0 %v162
  %v2497 = vpop.f32.mrb[0].mxu0
  %v2498 = vadd.f32 0.0, %v2497
  %v2499 = vpop.f32.mrb[0].mxu0
  %2500 = vmatprep.mubr.f32.mxu0 0.0
  %2501 = vmatmul.mubr.f32.gmra.mrb[0].mxu0 %v165
  %v2502 = vpop.f32.mrb[0].mxu0
  %v2503 = vadd.f32 0.0, %v2502
  %v2504 = vpop.f32.mrb[0].mxu0
  %2505 = vdwg.mxu0
  %2506 = vset.pattern.permute.xlu0 14
  %2507 = vperm.xlu0 %2506, %v128
  %v2508 = vpop.permute.xlu0 %2507
  %2510 = vset.pattern.permute.xlu0 14
  %2511 = vperm.xlu0 %2510, %v129
  %v2512 = vpop.permute.xlu0 %2511
  %2514 = vset.pattern.permute.xlu0 14
  %2515 = vperm.xlu0 %2514, %v130
  %v2516 = vpop.permute.xlu0 %2515
  %2518 = vset.pattern.permute.xlu0 14
  %2519 = vperm.xlu0 %2518, %v131
  %v2520 = vpop.permute.xlu0 %2519
  %2522 = vset.pattern.permute.xlu0 14
  %2523 = vperm.xlu0 %2522, %v132
  %v2524 = vpop.permute.xlu0 %2523
  %2526 = vset.pattern.permute.xlu0 14
  %2527 = vperm.xlu0 %2526, %v133
  %v2528 = vpop.permute.xlu0 %2527
  %2530 = vset.pattern.permute.xlu0 14
  %2531 = vperm.xlu0 %2530, %v134
  %v2532 = vpop.permute.xlu0 %2531
  %2534 = vset.pattern.permute.xlu0 14
  %2535 = vperm.xlu0 %2534, %v135
  %v2536 = vpop.permute.xlu0 %2535
  %v2538 = vmul.f32 %v2468, %v2508
  %v2539 = vmul.f32 %v2473, %v2512
  %v2540 = vmul.f32 %v2478, %v2516
  %v2541 = vmul.f32 %v2483, %v2520
  %v2542 = vmul.f32 %v2488, %v2524
  %v2543 = vmul.f32 %v2493, %v2528
  %v2544 = vmul.f32 %v2498, %v2532
  %v2545 = vmul.f32 %v2503, %v2536
  %v2546 = vadd.f32 %v2387, %v2538
  %v2547 = vadd.f32 %v2388, %v2539
  %v2548 = vadd.f32 %v2389, %v2540
  %v2549 = vadd.f32 %v2390, %v2541
  %v2550 = vadd.f32 %v2391, %v2542
  %v2551 = vadd.f32 %v2392, %v2543
  %v2552 = vadd.f32 %v2393, %v2544
  %v2553 = vadd.f32 %v2394, %v2545
  %v2554 = vld [vmem:[%s3 + $0x78] sm:$0xff]
  %v2555 = vld [vmem:[%s3 + $0x140] sm:$0xff]
  %v2556 = vld [vmem:[%s3 + $0x208] sm:$0xff]
  %v2557 = vld [vmem:[%s3 + $0x2d0] sm:$0xff]
  %v2558 = vld [vmem:[%s3 + $0x398] sm:$0xff]
  %v2559 = vld [vmem:[%s3 + $0x460] sm:$0xff]
  %2560 = vmatprep.subr.mxu0 0.0
  %2561 = vmatpush1.msra.mxu0 %v2554
  %2562 = vmatprep.subr.mxu0 0.0
  %2563 = vmatpush1.msra.mxu0 %v2555
  %2564 = vmatprep.subr.mxu0 0.0
  %2565 = vmatpush1.msra.mxu0 %v2556
  %2566 = vmatprep.subr.mxu0 0.0
  %2567 = vmatpush1.msra.mxu0 %v2557
  %2568 = vmatprep.subr.mxu0 0.0
  %2569 = vmatpush1.msra.mxu0 %v2558
  %2570 = vmatprep.subr.mxu0 0.0
  %2571 = vmatpush1.msra.mxu0 %v2559
  %2572 = vmatprep.subr.mxu0 0.0
  %2573 = vmatpush1.msra.mxu0 0.0
  %2574 = vmatprep.subr.mxu0 0.0
  %2575 = vmatpush1.msra.mxu0 0.0
  %2576 = vmatprep.subr.mxu0 0.0
  %2577 = vmatpush1.msra.mxu0 0.0
  %2578 = vmatprep.subr.mxu0 0.0
  %2579 = vmatpush1.msra.mxu0 0.0
  %2580 = vmatprep.subr.mxu0 0.0
  %2581 = vmatpush1.msra.mxu0 0.0
  %2582 = vmatprep.subr.mxu0 0.0
  %2583 = vmatpush1.msra.mxu0 0.0
  %2584 = vmatprep.subr.mxu0 0.0
  %2585 = vmatpush1.msra.mxu0 0.0
  %2586 = vmatprep.subr.mxu0 0.0
  %2587 = vmatpush1.msra.mxu0 0.0
  %2588 = vmatprep.subr.mxu0 0.0
  %2589 = vmatpush1.msra.mxu0 0.0
  %2590 = vmatprep.subr.mxu0 0.0
  %2591 = vmatpush1.msra.mxu0 0.0
  %2592 = vmatprep.subr.mxu0 0.0
  %2593 = vmatpush1.msra.mxu0 0.0
  %2594 = vmatprep.subr.mxu0 0.0
  %2595 = vmatpush1.msra.mxu0 0.0
  %2596 = vmatprep.subr.mxu0 0.0
  %2597 = vmatpush1.msra.mxu0 0.0
  %2598 = vmatprep.subr.mxu0 0.0
  %2599 = vmatpush1.msra.mxu0 0.0
  %2600 = vmatprep.subr.mxu0 0.0
  %2601 = vmatpush1.msra.mxu0 0.0
  %2602 = vmatprep.subr.mxu0 0.0
  %2603 = vmatpush1.msra.mxu0 0.0
  %2604 = vmatprep.subr.mxu0 0.0
  %2605 = vmatpush1.msra.mxu0 0.0
  %2606 = vmatprep.subr.mxu0 0.0
  %2607 = vmatpush1.msra.mxu0 0.0
  %2608 = vmatprep.subr.mxu0 0.0
  %2609 = vmatpush1.msra.mxu0 0.0
  %2610 = vmatprep.subr.mxu0 0.0
  %2611 = vmatpush1.msra.mxu0 0.0
  %2612 = vmatprep.subr.mxu0 0.0
  %2613 = vmatpush1.msra.mxu0 0.0
  %2614 = vmatprep.subr.mxu0 0.0
  %2615 = vmatpush1.msra.mxu0 0.0
  %2616 = vmatprep.subr.mxu0 0.0
  %2617 = vmatpush1.msra.mxu0 0.0
  %2618 = vmatprep.subr.mxu0 0.0
  %2619 = vmatpush1.msra.mxu0 0.0
  %2620 = vmatprep.subr.mxu0 0.0
  %2621 = vmatpush1.msra.mxu0 0.0
  %2622 = vmatprep.subr.mxu0 0.0
  %2623 = vmatpush1.msra.mxu0 0.0
  %2624 = vmatprep.mubr.f32.mxu0 0.0
  %2625 = vmatmul.mubr.f32.gmra.mrb[0].mxu0 %v144
  %v2626 = vpop.f32.mrb[0].mxu0
  %v2627 = vadd.f32 0.0, %v2626
  %v2628 = vpop.f32.mrb[0].mxu0
  %2629 = vmatprep.mubr.f32.mxu0 0.0
  %2630 = vmatmul.mubr.f32.gmra.mrb[0].mxu0 %v147
  %v2631 = vpop.f32.mrb[0].mxu0
  %v2632 = vadd.f32 0.0, %v2631
  %v2633 = vpop.f32.mrb[0].mxu0
  %2634 = vmatprep.mubr.f32.mxu0 0.0
  %2635 = vmatmul.mubr.f32.gmra.mrb[0].mxu0 %v150
  %v2636 = vpop.f32.mrb[0].mxu0
  %v2637 = vadd.f32 0.0, %v2636
  %v2638 = vpop.f32.mrb[0].mxu0
  %2639 = vmatprep.mubr.f32.mxu0 0.0
  %2640 = vmatmul.mubr.f32.gmra.mrb[0].mxu0 %v153
  %v2641 = vpop.f32.mrb[0].mxu0
  %v2642 = vadd.f32 0.0, %v2641
  %v2643 = vpop.f32.mrb[0].mxu0
  %2644 = vmatprep.mubr.f32.mxu0 0.0
  %2645 = vmatmul.mubr.f32.gmra.mrb[0].mxu0 %v156
  %v2646 = vpop.f32.mrb[0].mxu0
  %v2647 = vadd.f32 0.0, %v2646
  %v2648 = vpop.f32.mrb[0].mxu0
  %2649 = vmatprep.mubr.f32.mxu0 0.0
  %2650 = vmatmul.mubr.f32.gmra.mrb[0].mxu0 %v159
  %v2651 = vpop.f32.mrb[0].mxu0
  %v2652 = vadd.f32 0.0, %v2651
  %v2653 = vpop.f32.mrb[0].mxu0
  %2654 = vmatprep.mubr.f32.mxu0 0.0
  %2655 = vmatmul.mubr.f32.gmra.mrb[0].mxu0 %v162
  %v2656 = vpop.f32.mrb[0].mxu0
  %v2657 = vadd.f32 0.0, %v2656
  %v2658 = vpop.f32.mrb[0].mxu0
  %2659 = vmatprep.mubr.f32.mxu0 0.0
  %2660 = vmatmul.mubr.f32.gmra.mrb[0].mxu0 %v165
  %v2661 = vpop.f32.mrb[0].mxu0
  %v2662 = vadd.f32 0.0, %v2661
  %v2663 = vpop.f32.mrb[0].mxu0
  %2664 = vdwg.mxu0
  %2665 = vset.pattern.permute.xlu0 15
  %2666 = vperm.xlu0 %2665, %v128
  %v2667 = vpop.permute.xlu0 %2666
  %2669 = vset.pattern.permute.xlu0 15
  %2670 = vperm.xlu0 %2669, %v129
  %v2671 = vpop.permute.xlu0 %2670
  %2673 = vset.pattern.permute.xlu0 15
  %2674 = vperm.xlu0 %2673, %v130
  %v2675 = vpop.permute.xlu0 %2674
  %2677 = vset.pattern.permute.xlu0 15
  %2678 = vperm.xlu0 %2677, %v131
  %v2679 = vpop.permute.xlu0 %2678
  %2681 = vset.pattern.permute.xlu0 15
  %2682 = vperm.xlu0 %2681, %v132
  %v2683 = vpop.permute.xlu0 %2682
  %2685 = vset.pattern.permute.xlu0 15
  %2686 = vperm.xlu0 %2685, %v133
  %v2687 = vpop.permute.xlu0 %2686
  %2689 = vset.pattern.permute.xlu0 15
  %2690 = vperm.xlu0 %2689, %v134
  %v2691 = vpop.permute.xlu0 %2690
  %2693 = vset.pattern.permute.xlu0 15
  %2694 = vperm.xlu0 %2693, %v135
  %v2695 = vpop.permute.xlu0 %2694
  %v2697 = vmul.f32 %v2627, %v2667
  %v2698 = vmul.f32 %v2632, %v2671
  %v2699 = vmul.f32 %v2637, %v2675
  %v2700 = vmul.f32 %v2642, %v2679
  %v2701 = vmul.f32 %v2647, %v2683
  %v2702 = vmul.f32 %v2652, %v2687
  %v2703 = vmul.f32 %v2657, %v2691
  %v2704 = vmul.f32 %v2662, %v2695
  %v2705 = vadd.f32 %v2546, %v2697
  %v2706 = vadd.f32 %v2547, %v2698
  %v2707 = vadd.f32 %v2548, %v2699
  %v2708 = vadd.f32 %v2549, %v2700
  %v2709 = vadd.f32 %v2550, %v2701
  %v2710 = vadd.f32 %v2551, %v2702
  %v2711 = vadd.f32 %v2552, %v2703
  %v2712 = vadd.f32 %v2553, %v2704
  %v2713 = vld [vmem:[%s3 + $0x80] sm:$0xff]
  %v2714 = vld [vmem:[%s3 + $0x148] sm:$0xff]
  %v2715 = vld [vmem:[%s3 + $0x210] sm:$0xff]
  %v2716 = vld [vmem:[%s3 + $0x2d8] sm:$0xff]
  %v2717 = vld [vmem:[%s3 + $0x3a0] sm:$0xff]
  %v2718 = vld [vmem:[%s3 + $0x468] sm:$0xff]
  %2719 = vmatprep.subr.mxu0 0.0
  %2720 = vmatpush1.msra.mxu0 %v2713
  %2721 = vmatprep.subr.mxu0 0.0
  %2722 = vmatpush1.msra.mxu0 %v2714
  %2723 = vmatprep.subr.mxu0 0.0
  %2724 = vmatpush1.msra.mxu0 %v2715
  %2725 = vmatprep.subr.mxu0 0.0
  %2726 = vmatpush1.msra.mxu0 %v2716
  %2727 = vmatprep.subr.mxu0 0.0
  %2728 = vmatpush1.msra.mxu0 %v2717
  %2729 = vmatprep.subr.mxu0 0.0
  %2730 = vmatpush1.msra.mxu0 %v2718
  %2731 = vmatprep.subr.mxu0 0.0
  %2732 = vmatpush1.msra.mxu0 0.0
  %2733 = vmatprep.subr.mxu0 0.0
  %2734 = vmatpush1.msra.mxu0 0.0
  %2735 = vmatprep.subr.mxu0 0.0
  %2736 = vmatpush1.msra.mxu0 0.0
  %2737 = vmatprep.subr.mxu0 0.0
  %2738 = vmatpush1.msra.mxu0 0.0
  %2739 = vmatprep.subr.mxu0 0.0
  %2740 = vmatpush1.msra.mxu0 0.0
  %2741 = vmatprep.subr.mxu0 0.0
  %2742 = vmatpush1.msra.mxu0 0.0
  %2743 = vmatprep.subr.mxu0 0.0
  %2744 = vmatpush1.msra.mxu0 0.0
  %2745 = vmatprep.subr.mxu0 0.0
  %2746 = vmatpush1.msra.mxu0 0.0
  %2747 = vmatprep.subr.mxu0 0.0
  %2748 = vmatpush1.msra.mxu0 0.0
  %2749 = vmatprep.subr.mxu0 0.0
  %2750 = vmatpush1.msra.mxu0 0.0
  %2751 = vmatprep.subr.mxu0 0.0
  %2752 = vmatpush1.msra.mxu0 0.0
  %2753 = vmatprep.subr.mxu0 0.0
  %2754 = vmatpush1.msra.mxu0 0.0
  %2755 = vmatprep.subr.mxu0 0.0
  %2756 = vmatpush1.msra.mxu0 0.0
  %2757 = vmatprep.subr.mxu0 0.0
  %2758 = vmatpush1.msra.mxu0 0.0
  %2759 = vmatprep.subr.mxu0 0.0
  %2760 = vmatpush1.msra.mxu0 0.0
  %2761 = vmatprep.subr.mxu0 0.0
  %2762 = vmatpush1.msra.mxu0 0.0
  %2763 = vmatprep.subr.mxu0 0.0
  %2764 = vmatpush1.msra.mxu0 0.0
  %2765 = vmatprep.subr.mxu0 0.0
  %2766 = vmatpush1.msra.mxu0 0.0
  %2767 = vmatprep.subr.mxu0 0.0
  %2768 = vmatpush1.msra.mxu0 0.0
  %2769 = vmatprep.subr.mxu0 0.0
  %2770 = vmatpush1.msra.mxu0 0.0
  %2771 = vmatprep.subr.mxu0 0.0
  %2772 = vmatpush1.msra.mxu0 0.0
  %2773 = vmatprep.subr.mxu0 0.0
  %2774 = vmatpush1.msra.mxu0 0.0
  %2775 = vmatprep.subr.mxu0 0.0
  %2776 = vmatpush1.msra.mxu0 0.0
  %2777 = vmatprep.subr.mxu0 0.0
  %2778 = vmatpush1.msra.mxu0 0.0
  %2779 = vmatprep.subr.mxu0 0.0
  %2780 = vmatpush1.msra.mxu0 0.0
  %2781 = vmatprep.subr.mxu0 0.0
  %2782 = vmatpush1.msra.mxu0 0.0
  %2783 = vmatprep.mubr.f32.mxu0 0.0
  %2784 = vmatmul.mubr.f32.gmra.mrb[0].mxu0 %v144
  %v2785 = vpop.f32.mrb[0].mxu0
  %v2786 = vadd.f32 0.0, %v2785
  %v2787 = vpop.f32.mrb[0].mxu0
  %2788 = vmatprep.mubr.f32.mxu0 0.0
  %2789 = vmatmul.mubr.f32.gmra.mrb[0].mxu0 %v147
  %v2790 = vpop.f32.mrb[0].mxu0
  %v2791 = vadd.f32 0.0, %v2790
  %v2792 = vpop.f32.mrb[0].mxu0
  %2793 = vmatprep.mubr.f32.mxu0 0.0
  %2794 = vmatmul.mubr.f32.gmra.mrb[0].mxu0 %v150
  %v2795 = vpop.f32.mrb[0].mxu0
  %v2796 = vadd.f32 0.0, %v2795
  %v2797 = vpop.f32.mrb[0].mxu0
  %2798 = vmatprep.mubr.f32.mxu0 0.0
  %2799 = vmatmul.mubr.f32.gmra.mrb[0].mxu0 %v153
  %v2800 = vpop.f32.mrb[0].mxu0
  %v2801 = vadd.f32 0.0, %v2800
  %v2802 = vpop.f32.mrb[0].mxu0
  %2803 = vmatprep.mubr.f32.mxu0 0.0
  %2804 = vmatmul.mubr.f32.gmra.mrb[0].mxu0 %v156
  %v2805 = vpop.f32.mrb[0].mxu0
  %v2806 = vadd.f32 0.0, %v2805
  %v2807 = vpop.f32.mrb[0].mxu0
  %2808 = vmatprep.mubr.f32.mxu0 0.0
  %2809 = vmatmul.mubr.f32.gmra.mrb[0].mxu0 %v159
  %v2810 = vpop.f32.mrb[0].mxu0
  %v2811 = vadd.f32 0.0, %v2810
  %v2812 = vpop.f32.mrb[0].mxu0
  %2813 = vmatprep.mubr.f32.mxu0 0.0
  %2814 = vmatmul.mubr.f32.gmra.mrb[0].mxu0 %v162
  %v2815 = vpop.f32.mrb[0].mxu0
  %v2816 = vadd.f32 0.0, %v2815
  %v2817 = vpop.f32.mrb[0].mxu0
  %2818 = vmatprep.mubr.f32.mxu0 0.0
  %2819 = vmatmul.mubr.f32.gmra.mrb[0].mxu0 %v165
  %v2820 = vpop.f32.mrb[0].mxu0
  %v2821 = vadd.f32 0.0, %v2820
  %v2822 = vpop.f32.mrb[0].mxu0
  %2823 = vdwg.mxu0
  %2824 = vset.pattern.permute.xlu0 16
  %2825 = vperm.xlu0 %2824, %v128
  %v2826 = vpop.permute.xlu0 %2825
  %2828 = vset.pattern.permute.xlu0 16
  %2829 = vperm.xlu0 %2828, %v129
  %v2830 = vpop.permute.xlu0 %2829
  %2832 = vset.pattern.permute.xlu0 16
  %2833 = vperm.xlu0 %2832, %v130
  %v2834 = vpop.permute.xlu0 %2833
  %2836 = vset.pattern.permute.xlu0 16
  %2837 = vperm.xlu0 %2836, %v131
  %v2838 = vpop.permute.xlu0 %2837
  %2840 = vset.pattern.permute.xlu0 16
  %2841 = vperm.xlu0 %2840, %v132
  %v2842 = vpop.permute.xlu0 %2841
  %2844 = vset.pattern.permute.xlu0 16
  %2845 = vperm.xlu0 %2844, %v133
  %v2846 = vpop.permute.xlu0 %2845
  %2848 = vset.pattern.permute.xlu0 16
  %2849 = vperm.xlu0 %2848, %v134
  %v2850 = vpop.permute.xlu0 %2849
  %2852 = vset.pattern.permute.xlu0 16
  %2853 = vperm.xlu0 %2852, %v135
  %v2854 = vpop.permute.xlu0 %2853
  %v2856 = vmul.f32 %v2786, %v2826
  %v2857 = vmul.f32 %v2791, %v2830
  %v2858 = vmul.f32 %v2796, %v2834
  %v2859 = vmul.f32 %v2801, %v2838
  %v2860 = vmul.f32 %v2806, %v2842
  %v2861 = vmul.f32 %v2811, %v2846
  %v2862 = vmul.f32 %v2816, %v2850
  %v2863 = vmul.f32 %v2821, %v2854
  %v2864 = vadd.f32 %v2705, %v2856
  %v2865 = vadd.f32 %v2706, %v2857
  %v2866 = vadd.f32 %v2707, %v2858
  %v2867 = vadd.f32 %v2708, %v2859
  %v2868 = vadd.f32 %v2709, %v2860
  %v2869 = vadd.f32 %v2710, %v2861
  %v2870 = vadd.f32 %v2711, %v2862
  %v2871 = vadd.f32 %v2712, %v2863
  %v2872 = vld [vmem:[%s3 + $0x88] sm:$0xff]
  %v2873 = vld [vmem:[%s3 + $0x150] sm:$0xff]
  %v2874 = vld [vmem:[%s3 + $0x218] sm:$0xff]
  %v2875 = vld [vmem:[%s3 + $0x2e0] sm:$0xff]
  %v2876 = vld [vmem:[%s3 + $0x3a8] sm:$0xff]
  %v2877 = vld [vmem:[%s3 + $0x470] sm:$0xff]
  %2878 = vmatprep.subr.mxu0 0.0
  %2879 = vmatpush1.msra.mxu0 %v2872
  %2880 = vmatprep.subr.mxu0 0.0
  %2881 = vmatpush1.msra.mxu0 %v2873
  %2882 = vmatprep.subr.mxu0 0.0
  %2883 = vmatpush1.msra.mxu0 %v2874
  %2884 = vmatprep.subr.mxu0 0.0
  %2885 = vmatpush1.msra.mxu0 %v2875
  %2886 = vmatprep.subr.mxu0 0.0
  %2887 = vmatpush1.msra.mxu0 %v2876
  %2888 = vmatprep.subr.mxu0 0.0
  %2889 = vmatpush1.msra.mxu0 %v2877
  %2890 = vmatprep.subr.mxu0 0.0
  %2891 = vmatpush1.msra.mxu0 0.0
  %2892 = vmatprep.subr.mxu0 0.0
  %2893 = vmatpush1.msra.mxu0 0.0
  %2894 = vmatprep.subr.mxu0 0.0
  %2895 = vmatpush1.msra.mxu0 0.0
  %2896 = vmatprep.subr.mxu0 0.0
  %2897 = vmatpush1.msra.mxu0 0.0
  %2898 = vmatprep.subr.mxu0 0.0
  %2899 = vmatpush1.msra.mxu0 0.0
  %2900 = vmatprep.subr.mxu0 0.0
  %2901 = vmatpush1.msra.mxu0 0.0
  %2902 = vmatprep.subr.mxu0 0.0
  %2903 = vmatpush1.msra.mxu0 0.0
  %2904 = vmatprep.subr.mxu0 0.0
  %2905 = vmatpush1.msra.mxu0 0.0
  %2906 = vmatprep.subr.mxu0 0.0
  %2907 = vmatpush1.msra.mxu0 0.0
  %2908 = vmatprep.subr.mxu0 0.0
  %2909 = vmatpush1.msra.mxu0 0.0
  %2910 = vmatprep.subr.mxu0 0.0
  %2911 = vmatpush1.msra.mxu0 0.0
  %2912 = vmatprep.subr.mxu0 0.0
  %2913 = vmatpush1.msra.mxu0 0.0
  %2914 = vmatprep.subr.mxu0 0.0
  %2915 = vmatpush1.msra.mxu0 0.0
  %2916 = vmatprep.subr.mxu0 0.0
  %2917 = vmatpush1.msra.mxu0 0.0
  %2918 = vmatprep.subr.mxu0 0.0
  %2919 = vmatpush1.msra.mxu0 0.0
  %2920 = vmatprep.subr.mxu0 0.0
  %2921 = vmatpush1.msra.mxu0 0.0
  %2922 = vmatprep.subr.mxu0 0.0
  %2923 = vmatpush1.msra.mxu0 0.0
  %2924 = vmatprep.subr.mxu0 0.0
  %2925 = vmatpush1.msra.mxu0 0.0
  %2926 = vmatprep.subr.mxu0 0.0
  %2927 = vmatpush1.msra.mxu0 0.0
  %2928 = vmatprep.subr.mxu0 0.0
  %2929 = vmatpush1.msra.mxu0 0.0
  %2930 = vmatprep.subr.mxu0 0.0
  %2931 = vmatpush1.msra.mxu0 0.0
  %2932 = vmatprep.subr.mxu0 0.0
  %2933 = vmatpush1.msra.mxu0 0.0
  %2934 = vmatprep.subr.mxu0 0.0
  %2935 = vmatpush1.msra.mxu0 0.0
  %2936 = vmatprep.subr.mxu0 0.0
  %2937 = vmatpush1.msra.mxu0 0.0
  %2938 = vmatprep.subr.mxu0 0.0
  %2939 = vmatpush1.msra.mxu0 0.0
  %2940 = vmatprep.subr.mxu0 0.0
  %2941 = vmatpush1.msra.mxu0 0.0
  %2942 = vmatprep.mubr.f32.mxu0 0.0
  %2943 = vmatmul.mubr.f32.gmra.mrb[0].mxu0 %v144
  %v2944 = vpop.f32.mrb[0].mxu0
  %v2945 = vadd.f32 0.0, %v2944
  %v2946 = vpop.f32.mrb[0].mxu0
  %2947 = vmatprep.mubr.f32.mxu0 0.0
  %2948 = vmatmul.mubr.f32.gmra.mrb[0].mxu0 %v147
  %v2949 = vpop.f32.mrb[0].mxu0
  %v2950 = vadd.f32 0.0, %v2949
  %v2951 = vpop.f32.mrb[0].mxu0
  %2952 = vmatprep.mubr.f32.mxu0 0.0
  %2953 = vmatmul.mubr.f32.gmra.mrb[0].mxu0 %v150
  %v2954 = vpop.f32.mrb[0].mxu0
  %v2955 = vadd.f32 0.0, %v2954
  %v2956 = vpop.f32.mrb[0].mxu0
  %2957 = vmatprep.mubr.f32.mxu0 0.0
  %2958 = vmatmul.mubr.f32.gmra.mrb[0].mxu0 %v153
  %v2959 = vpop.f32.mrb[0].mxu0
  %v2960 = vadd.f32 0.0, %v2959
  %v2961 = vpop.f32.mrb[0].mxu0
  %2962 = vmatprep.mubr.f32.mxu0 0.0
  %2963 = vmatmul.mubr.f32.gmra.mrb[0].mxu0 %v156
  %v2964 = vpop.f32.mrb[0].mxu0
  %v2965 = vadd.f32 0.0, %v2964
  %v2966 = vpop.f32.mrb[0].mxu0
  %2967 = vmatprep.mubr.f32.mxu0 0.0
  %2968 = vmatmul.mubr.f32.gmra.mrb[0].mxu0 %v159
  %v2969 = vpop.f32.mrb[0].mxu0
  %v2970 = vadd.f32 0.0, %v2969
  %v2971 = vpop.f32.mrb[0].mxu0
  %2972 = vmatprep.mubr.f32.mxu0 0.0
  %2973 = vmatmul.mubr.f32.gmra.mrb[0].mxu0 %v162
  %v2974 = vpop.f32.mrb[0].mxu0
  %v2975 = vadd.f32 0.0, %v2974
  %v2976 = vpop.f32.mrb[0].mxu0
  %2977 = vmatprep.mubr.f32.mxu0 0.0
  %2978 = vmatmul.mubr.f32.gmra.mrb[0].mxu0 %v165
  %v2979 = vpop.f32.mrb[0].mxu0
  %v2980 = vadd.f32 0.0, %v2979
  %v2981 = vpop.f32.mrb[0].mxu0
  %2982 = vdwg.mxu0
  %2983 = vset.pattern.permute.xlu0 17
  %2984 = vperm.xlu0 %2983, %v128
  %v2985 = vpop.permute.xlu0 %2984
  %2987 = vset.pattern.permute.xlu0 17
  %2988 = vperm.xlu0 %2987, %v129
  %v2989 = vpop.permute.xlu0 %2988
  %2991 = vset.pattern.permute.xlu0 17
  %2992 = vperm.xlu0 %2991, %v130
  %v2993 = vpop.permute.xlu0 %2992
  %2995 = vset.pattern.permute.xlu0 17
  %2996 = vperm.xlu0 %2995, %v131
  %v2997 = vpop.permute.xlu0 %2996
  %2999 = vset.pattern.permute.xlu0 17
  %3000 = vperm.xlu0 %2999, %v132
  %v3001 = vpop.permute.xlu0 %3000
  %3003 = vset.pattern.permute.xlu0 17
  %3004 = vperm.xlu0 %3003, %v133
  %v3005 = vpop.permute.xlu0 %3004
  %3007 = vset.pattern.permute.xlu0 17
  %3008 = vperm.xlu0 %3007, %v134
  %v3009 = vpop.permute.xlu0 %3008
  %3011 = vset.pattern.permute.xlu0 17
  %3012 = vperm.xlu0 %3011, %v135
  %v3013 = vpop.permute.xlu0 %3012
  %v3015 = vmul.f32 %v2945, %v2985
  %v3016 = vmul.f32 %v2950, %v2989
  %v3017 = vmul.f32 %v2955, %v2993
  %v3018 = vmul.f32 %v2960, %v2997
  %v3019 = vmul.f32 %v2965, %v3001
  %v3020 = vmul.f32 %v2970, %v3005
  %v3021 = vmul.f32 %v2975, %v3009
  %v3022 = vmul.f32 %v2980, %v3013
  %v3023 = vadd.f32 %v2864, %v3015
  %v3024 = vadd.f32 %v2865, %v3016
  %v3025 = vadd.f32 %v2866, %v3017
  %v3026 = vadd.f32 %v2867, %v3018
  %v3027 = vadd.f32 %v2868, %v3019
  %v3028 = vadd.f32 %v2869, %v3020
  %v3029 = vadd.f32 %v2870, %v3021
  %v3030 = vadd.f32 %v2871, %v3022
  %v3031 = vld [vmem:[%s3 + $0x90] sm:$0xff]
  %v3032 = vld [vmem:[%s3 + $0x158] sm:$0xff]
  %v3033 = vld [vmem:[%s3 + $0x220] sm:$0xff]
  %v3034 = vld [vmem:[%s3 + $0x2e8] sm:$0xff]
  %v3035 = vld [vmem:[%s3 + $0x3b0] sm:$0xff]
  %v3036 = vld [vmem:[%s3 + $0x478] sm:$0xff]
  %3037 = vmatprep.subr.mxu0 0.0
  %3038 = vmatpush1.msra.mxu0 %v3031
  %3039 = vmatprep.subr.mxu0 0.0
  %3040 = vmatpush1.msra.mxu0 %v3032
  %3041 = vmatprep.subr.mxu0 0.0
  %3042 = vmatpush1.msra.mxu0 %v3033
  %3043 = vmatprep.subr.mxu0 0.0
  %3044 = vmatpush1.msra.mxu0 %v3034
  %3045 = vmatprep.subr.mxu0 0.0
  %3046 = vmatpush1.msra.mxu0 %v3035
  %3047 = vmatprep.subr.mxu0 0.0
  %3048 = vmatpush1.msra.mxu0 %v3036
  %3049 = vmatprep.subr.mxu0 0.0
  %3050 = vmatpush1.msra.mxu0 0.0
  %3051 = vmatprep.subr.mxu0 0.0
  %3052 = vmatpush1.msra.mxu0 0.0
  %3053 = vmatprep.subr.mxu0 0.0
  %3054 = vmatpush1.msra.mxu0 0.0
  %3055 = vmatprep.subr.mxu0 0.0
  %3056 = vmatpush1.msra.mxu0 0.0
  %3057 = vmatprep.subr.mxu0 0.0
  %3058 = vmatpush1.msra.mxu0 0.0
  %3059 = vmatprep.subr.mxu0 0.0
  %3060 = vmatpush1.msra.mxu0 0.0
  %3061 = vmatprep.subr.mxu0 0.0
  %3062 = vmatpush1.msra.mxu0 0.0
  %3063 = vmatprep.subr.mxu0 0.0
  %3064 = vmatpush1.msra.mxu0 0.0
  %3065 = vmatprep.subr.mxu0 0.0
  %3066 = vmatpush1.msra.mxu0 0.0
  %3067 = vmatprep.subr.mxu0 0.0
  %3068 = vmatpush1.msra.mxu0 0.0
  %3069 = vmatprep.subr.mxu0 0.0
  %3070 = vmatpush1.msra.mxu0 0.0
  %3071 = vmatprep.subr.mxu0 0.0
  %3072 = vmatpush1.msra.mxu0 0.0
  %3073 = vmatprep.subr.mxu0 0.0
  %3074 = vmatpush1.msra.mxu0 0.0
  %3075 = vmatprep.subr.mxu0 0.0
  %3076 = vmatpush1.msra.mxu0 0.0
  %3077 = vmatprep.subr.mxu0 0.0
  %3078 = vmatpush1.msra.mxu0 0.0
  %3079 = vmatprep.subr.mxu0 0.0
  %3080 = vmatpush1.msra.mxu0 0.0
  %3081 = vmatprep.subr.mxu0 0.0
  %3082 = vmatpush1.msra.mxu0 0.0
  %3083 = vmatprep.subr.mxu0 0.0
  %3084 = vmatpush1.msra.mxu0 0.0
  %3085 = vmatprep.subr.mxu0 0.0
  %3086 = vmatpush1.msra.mxu0 0.0
  %3087 = vmatprep.subr.mxu0 0.0
  %3088 = vmatpush1.msra.mxu0 0.0
  %3089 = vmatprep.subr.mxu0 0.0
  %3090 = vmatpush1.msra.mxu0 0.0
  %3091 = vmatprep.subr.mxu0 0.0
  %3092 = vmatpush1.msra.mxu0 0.0
  %3093 = vmatprep.subr.mxu0 0.0
  %3094 = vmatpush1.msra.mxu0 0.0
  %3095 = vmatprep.subr.mxu0 0.0
  %3096 = vmatpush1.msra.mxu0 0.0
  %3097 = vmatprep.subr.mxu0 0.0
  %3098 = vmatpush1.msra.mxu0 0.0
  %3099 = vmatprep.subr.mxu0 0.0
  %3100 = vmatpush1.msra.mxu0 0.0
  %3101 = vmatprep.mubr.f32.mxu0 0.0
  %3102 = vmatmul.mubr.f32.gmra.mrb[0].mxu0 %v144
  %v3103 = vpop.f32.mrb[0].mxu0
  %v3104 = vadd.f32 0.0, %v3103
  %v3105 = vpop.f32.mrb[0].mxu0
  %3106 = vmatprep.mubr.f32.mxu0 0.0
  %3107 = vmatmul.mubr.f32.gmra.mrb[0].mxu0 %v147
  %v3108 = vpop.f32.mrb[0].mxu0
  %v3109 = vadd.f32 0.0, %v3108
  %v3110 = vpop.f32.mrb[0].mxu0
  %3111 = vmatprep.mubr.f32.mxu0 0.0
  %3112 = vmatmul.mubr.f32.gmra.mrb[0].mxu0 %v150
  %v3113 = vpop.f32.mrb[0].mxu0
  %v3114 = vadd.f32 0.0, %v3113
  %v3115 = vpop.f32.mrb[0].mxu0
  %3116 = vmatprep.mubr.f32.mxu0 0.0
  %3117 = vmatmul.mubr.f32.gmra.mrb[0].mxu0 %v153
  %v3118 = vpop.f32.mrb[0].mxu0
  %v3119 = vadd.f32 0.0, %v3118
  %v3120 = vpop.f32.mrb[0].mxu0
  %3121 = vmatprep.mubr.f32.mxu0 0.0
  %3122 = vmatmul.mubr.f32.gmra.mrb[0].mxu0 %v156
  %v3123 = vpop.f32.mrb[0].mxu0
  %v3124 = vadd.f32 0.0, %v3123
  %v3125 = vpop.f32.mrb[0].mxu0
  %3126 = vmatprep.mubr.f32.mxu0 0.0
  %3127 = vmatmul.mubr.f32.gmra.mrb[0].mxu0 %v159
  %v3128 = vpop.f32.mrb[0].mxu0
  %v3129 = vadd.f32 0.0, %v3128
  %v3130 = vpop.f32.mrb[0].mxu0
  %3131 = vmatprep.mubr.f32.mxu0 0.0
  %3132 = vmatmul.mubr.f32.gmra.mrb[0].mxu0 %v162
  %v3133 = vpop.f32.mrb[0].mxu0
  %v3134 = vadd.f32 0.0, %v3133
  %v3135 = vpop.f32.mrb[0].mxu0
  %3136 = vmatprep.mubr.f32.mxu0 0.0
  %3137 = vmatmul.mubr.f32.gmra.mrb[0].mxu0 %v165
  %v3138 = vpop.f32.mrb[0].mxu0
  %v3139 = vadd.f32 0.0, %v3138
  %v3140 = vpop.f32.mrb[0].mxu0
  %3141 = vdwg.mxu0
  %3142 = vset.pattern.permute.xlu0 18
  %3143 = vperm.xlu0 %3142, %v128
  %v3144 = vpop.permute.xlu0 %3143
  %3146 = vset.pattern.permute.xlu0 18
  %3147 = vperm.xlu0 %3146, %v129
  %v3148 = vpop.permute.xlu0 %3147
  %3150 = vset.pattern.permute.xlu0 18
  %3151 = vperm.xlu0 %3150, %v130
  %v3152 = vpop.permute.xlu0 %3151
  %3154 = vset.pattern.permute.xlu0 18
  %3155 = vperm.xlu0 %3154, %v131
  %v3156 = vpop.permute.xlu0 %3155
  %3158 = vset.pattern.permute.xlu0 18
  %3159 = vperm.xlu0 %3158, %v132
  %v3160 = vpop.permute.xlu0 %3159
  %3162 = vset.pattern.permute.xlu0 18
  %3163 = vperm.xlu0 %3162, %v133
  %v3164 = vpop.permute.xlu0 %3163
  %3166 = vset.pattern.permute.xlu0 18
  %3167 = vperm.xlu0 %3166, %v134
  %v3168 = vpop.permute.xlu0 %3167
  %3170 = vset.pattern.permute.xlu0 18
  %3171 = vperm.xlu0 %3170, %v135
  %v3172 = vpop.permute.xlu0 %3171
  %v3174 = vmul.f32 %v3104, %v3144
  %v3175 = vmul.f32 %v3109, %v3148
  %v3176 = vmul.f32 %v3114, %v3152
  %v3177 = vmul.f32 %v3119, %v3156
  %v3178 = vmul.f32 %v3124, %v3160
  %v3179 = vmul.f32 %v3129, %v3164
  %v3180 = vmul.f32 %v3134, %v3168
  %v3181 = vmul.f32 %v3139, %v3172
  %v3182 = vadd.f32 %v3023, %v3174
  %v3183 = vadd.f32 %v3024, %v3175
  %v3184 = vadd.f32 %v3025, %v3176
  %v3185 = vadd.f32 %v3026, %v3177
  %v3186 = vadd.f32 %v3027, %v3178
  %v3187 = vadd.f32 %v3028, %v3179
  %v3188 = vadd.f32 %v3029, %v3180
  %v3189 = vadd.f32 %v3030, %v3181
  %v3190 = vld [vmem:[%s3 + $0x98] sm:$0xff]
  %v3191 = vld [vmem:[%s3 + $0x160] sm:$0xff]
  %v3192 = vld [vmem:[%s3 + $0x228] sm:$0xff]
  %v3193 = vld [vmem:[%s3 + $0x2f0] sm:$0xff]
  %v3194 = vld [vmem:[%s3 + $0x3b8] sm:$0xff]
  %v3195 = vld [vmem:[%s3 + $0x480] sm:$0xff]
  %3196 = vmatprep.subr.mxu0 0.0
  %3197 = vmatpush1.msra.mxu0 %v3190
  %3198 = vmatprep.subr.mxu0 0.0
  %3199 = vmatpush1.msra.mxu0 %v3191
  %3200 = vmatprep.subr.mxu0 0.0
  %3201 = vmatpush1.msra.mxu0 %v3192
  %3202 = vmatprep.subr.mxu0 0.0
  %3203 = vmatpush1.msra.mxu0 %v3193
  %3204 = vmatprep.subr.mxu0 0.0
  %3205 = vmatpush1.msra.mxu0 %v3194
  %3206 = vmatprep.subr.mxu0 0.0
  %3207 = vmatpush1.msra.mxu0 %v3195
  %3208 = vmatprep.subr.mxu0 0.0
  %3209 = vmatpush1.msra.mxu0 0.0
  %3210 = vmatprep.subr.mxu0 0.0
  %3211 = vmatpush1.msra.mxu0 0.0
  %3212 = vmatprep.subr.mxu0 0.0
  %3213 = vmatpush1.msra.mxu0 0.0
  %3214 = vmatprep.subr.mxu0 0.0
  %3215 = vmatpush1.msra.mxu0 0.0
  %3216 = vmatprep.subr.mxu0 0.0
  %3217 = vmatpush1.msra.mxu0 0.0
  %3218 = vmatprep.subr.mxu0 0.0
  %3219 = vmatpush1.msra.mxu0 0.0
  %3220 = vmatprep.subr.mxu0 0.0
  %3221 = vmatpush1.msra.mxu0 0.0
  %3222 = vmatprep.subr.mxu0 0.0
  %3223 = vmatpush1.msra.mxu0 0.0
  %3224 = vmatprep.subr.mxu0 0.0
  %3225 = vmatpush1.msra.mxu0 0.0
  %3226 = vmatprep.subr.mxu0 0.0
  %3227 = vmatpush1.msra.mxu0 0.0
  %3228 = vmatprep.subr.mxu0 0.0
  %3229 = vmatpush1.msra.mxu0 0.0
  %3230 = vmatprep.subr.mxu0 0.0
  %3231 = vmatpush1.msra.mxu0 0.0
  %3232 = vmatprep.subr.mxu0 0.0
  %3233 = vmatpush1.msra.mxu0 0.0
  %3234 = vmatprep.subr.mxu0 0.0
  %3235 = vmatpush1.msra.mxu0 0.0
  %3236 = vmatprep.subr.mxu0 0.0
  %3237 = vmatpush1.msra.mxu0 0.0
  %3238 = vmatprep.subr.mxu0 0.0
  %3239 = vmatpush1.msra.mxu0 0.0
  %3240 = vmatprep.subr.mxu0 0.0
  %3241 = vmatpush1.msra.mxu0 0.0
  %3242 = vmatprep.subr.mxu0 0.0
  %3243 = vmatpush1.msra.mxu0 0.0
  %3244 = vmatprep.subr.mxu0 0.0
  %3245 = vmatpush1.msra.mxu0 0.0
  %3246 = vmatprep.subr.mxu0 0.0
  %3247 = vmatpush1.msra.mxu0 0.0
  %3248 = vmatprep.subr.mxu0 0.0
  %3249 = vmatpush1.msra.mxu0 0.0
  %3250 = vmatprep.subr.mxu0 0.0
  %3251 = vmatpush1.msra.mxu0 0.0
  %3252 = vmatprep.subr.mxu0 0.0
  %3253 = vmatpush1.msra.mxu0 0.0
  %3254 = vmatprep.subr.mxu0 0.0
  %3255 = vmatpush1.msra.mxu0 0.0
  %3256 = vmatprep.subr.mxu0 0.0
  %3257 = vmatpush1.msra.mxu0 0.0
  %3258 = vmatprep.subr.mxu0 0.0
  %3259 = vmatpush1.msra.mxu0 0.0
  %3260 = vmatprep.mubr.f32.mxu0 0.0
  %3261 = vmatmul.mubr.f32.gmra.mrb[0].mxu0 %v144
  %v3262 = vpop.f32.mrb[0].mxu0
  %v3263 = vadd.f32 0.0, %v3262
  %v3264 = vpop.f32.mrb[0].mxu0
  %3265 = vmatprep.mubr.f32.mxu0 0.0
  %3266 = vmatmul.mubr.f32.gmra.mrb[0].mxu0 %v147
  %v3267 = vpop.f32.mrb[0].mxu0
  %v3268 = vadd.f32 0.0, %v3267
  %v3269 = vpop.f32.mrb[0].mxu0
  %3270 = vmatprep.mubr.f32.mxu0 0.0
  %3271 = vmatmul.mubr.f32.gmra.mrb[0].mxu0 %v150
  %v3272 = vpop.f32.mrb[0].mxu0
  %v3273 = vadd.f32 0.0, %v3272
  %v3274 = vpop.f32.mrb[0].mxu0
  %3275 = vmatprep.mubr.f32.mxu0 0.0
  %3276 = vmatmul.mubr.f32.gmra.mrb[0].mxu0 %v153
  %v3277 = vpop.f32.mrb[0].mxu0
  %v3278 = vadd.f32 0.0, %v3277
  %v3279 = vpop.f32.mrb[0].mxu0
  %3280 = vmatprep.mubr.f32.mxu0 0.0
  %3281 = vmatmul.mubr.f32.gmra.mrb[0].mxu0 %v156
  %v3282 = vpop.f32.mrb[0].mxu0
  %v3283 = vadd.f32 0.0, %v3282
  %v3284 = vpop.f32.mrb[0].mxu0
  %3285 = vmatprep.mubr.f32.mxu0 0.0
  %3286 = vmatmul.mubr.f32.gmra.mrb[0].mxu0 %v159
  %v3287 = vpop.f32.mrb[0].mxu0
  %v3288 = vadd.f32 0.0, %v3287
  %v3289 = vpop.f32.mrb[0].mxu0
  %3290 = vmatprep.mubr.f32.mxu0 0.0
  %3291 = vmatmul.mubr.f32.gmra.mrb[0].mxu0 %v162
  %v3292 = vpop.f32.mrb[0].mxu0
  %v3293 = vadd.f32 0.0, %v3292
  %v3294 = vpop.f32.mrb[0].mxu0
  %3295 = vmatprep.mubr.f32.mxu0 0.0
  %3296 = vmatmul.mubr.f32.gmra.mrb[0].mxu0 %v165
  %v3297 = vpop.f32.mrb[0].mxu0
  %v3298 = vadd.f32 0.0, %v3297
  %v3299 = vpop.f32.mrb[0].mxu0
  %3300 = vdwg.mxu0
  %3301 = vset.pattern.permute.xlu0 19
  %3302 = vperm.xlu0 %3301, %v128
  %v3303 = vpop.permute.xlu0 %3302
  %3305 = vset.pattern.permute.xlu0 19
  %3306 = vperm.xlu0 %3305, %v129
  %v3307 = vpop.permute.xlu0 %3306
  %3309 = vset.pattern.permute.xlu0 19
  %3310 = vperm.xlu0 %3309, %v130
  %v3311 = vpop.permute.xlu0 %3310
  %3313 = vset.pattern.permute.xlu0 19
  %3314 = vperm.xlu0 %3313, %v131
  %v3315 = vpop.permute.xlu0 %3314
  %3317 = vset.pattern.permute.xlu0 19
  %3318 = vperm.xlu0 %3317, %v132
  %v3319 = vpop.permute.xlu0 %3318
  %3321 = vset.pattern.permute.xlu0 19
  %3322 = vperm.xlu0 %3321, %v133
  %v3323 = vpop.permute.xlu0 %3322
  %3325 = vset.pattern.permute.xlu0 19
  %3326 = vperm.xlu0 %3325, %v134
  %v3327 = vpop.permute.xlu0 %3326
  %3329 = vset.pattern.permute.xlu0 19
  %3330 = vperm.xlu0 %3329, %v135
  %v3331 = vpop.permute.xlu0 %3330
  %v3333 = vmul.f32 %v3263, %v3303
  %v3334 = vmul.f32 %v3268, %v3307
  %v3335 = vmul.f32 %v3273, %v3311
  %v3336 = vmul.f32 %v3278, %v3315
  %v3337 = vmul.f32 %v3283, %v3319
  %v3338 = vmul.f32 %v3288, %v3323
  %v3339 = vmul.f32 %v3293, %v3327
  %v3340 = vmul.f32 %v3298, %v3331
  %v3341 = vadd.f32 %v3182, %v3333
  %v3342 = vadd.f32 %v3183, %v3334
  %v3343 = vadd.f32 %v3184, %v3335
  %v3344 = vadd.f32 %v3185, %v3336
  %v3345 = vadd.f32 %v3186, %v3337
  %v3346 = vadd.f32 %v3187, %v3338
  %v3347 = vadd.f32 %v3188, %v3339
  %v3348 = vadd.f32 %v3189, %v3340
  %v3349 = vld [vmem:[%s3 + $0xa0] sm:$0xff]
  %v3350 = vld [vmem:[%s3 + $0x168] sm:$0xff]
  %v3351 = vld [vmem:[%s3 + $0x230] sm:$0xff]
  %v3352 = vld [vmem:[%s3 + $0x2f8] sm:$0xff]
  %v3353 = vld [vmem:[%s3 + $0x3c0] sm:$0xff]
  %v3354 = vld [vmem:[%s3 + $0x488] sm:$0xff]
  %3355 = vmatprep.subr.mxu0 0.0
  %3356 = vmatpush1.msra.mxu0 %v3349
  %3357 = vmatprep.subr.mxu0 0.0
  %3358 = vmatpush1.msra.mxu0 %v3350
  %3359 = vmatprep.subr.mxu0 0.0
  %3360 = vmatpush1.msra.mxu0 %v3351
  %3361 = vmatprep.subr.mxu0 0.0
  %3362 = vmatpush1.msra.mxu0 %v3352
  %3363 = vmatprep.subr.mxu0 0.0
  %3364 = vmatpush1.msra.mxu0 %v3353
  %3365 = vmatprep.subr.mxu0 0.0
  %3366 = vmatpush1.msra.mxu0 %v3354
  %3367 = vmatprep.subr.mxu0 0.0
  %3368 = vmatpush1.msra.mxu0 0.0
  %3369 = vmatprep.subr.mxu0 0.0
  %3370 = vmatpush1.msra.mxu0 0.0
  %3371 = vmatprep.subr.mxu0 0.0
  %3372 = vmatpush1.msra.mxu0 0.0
  %3373 = vmatprep.subr.mxu0 0.0
  %3374 = vmatpush1.msra.mxu0 0.0
  %3375 = vmatprep.subr.mxu0 0.0
  %3376 = vmatpush1.msra.mxu0 0.0
  %3377 = vmatprep.subr.mxu0 0.0
  %3378 = vmatpush1.msra.mxu0 0.0
  %3379 = vmatprep.subr.mxu0 0.0
  %3380 = vmatpush1.msra.mxu0 0.0
  %3381 = vmatprep.subr.mxu0 0.0
  %3382 = vmatpush1.msra.mxu0 0.0
  %3383 = vmatprep.subr.mxu0 0.0
  %3384 = vmatpush1.msra.mxu0 0.0
  %3385 = vmatprep.subr.mxu0 0.0
  %3386 = vmatpush1.msra.mxu0 0.0
  %3387 = vmatprep.subr.mxu0 0.0
  %3388 = vmatpush1.msra.mxu0 0.0
  %3389 = vmatprep.subr.mxu0 0.0
  %3390 = vmatpush1.msra.mxu0 0.0
  %3391 = vmatprep.subr.mxu0 0.0
  %3392 = vmatpush1.msra.mxu0 0.0
  %3393 = vmatprep.subr.mxu0 0.0
  %3394 = vmatpush1.msra.mxu0 0.0
  %3395 = vmatprep.subr.mxu0 0.0
  %3396 = vmatpush1.msra.mxu0 0.0
  %3397 = vmatprep.subr.mxu0 0.0
  %3398 = vmatpush1.msra.mxu0 0.0
  %3399 = vmatprep.subr.mxu0 0.0
  %3400 = vmatpush1.msra.mxu0 0.0
  %3401 = vmatprep.subr.mxu0 0.0
  %3402 = vmatpush1.msra.mxu0 0.0
  %3403 = vmatprep.subr.mxu0 0.0
  %3404 = vmatpush1.msra.mxu0 0.0
  %3405 = vmatprep.subr.mxu0 0.0
  %3406 = vmatpush1.msra.mxu0 0.0
  %3407 = vmatprep.subr.mxu0 0.0
  %3408 = vmatpush1.msra.mxu0 0.0
  %3409 = vmatprep.subr.mxu0 0.0
  %3410 = vmatpush1.msra.mxu0 0.0
  %3411 = vmatprep.subr.mxu0 0.0
  %3412 = vmatpush1.msra.mxu0 0.0
  %3413 = vmatprep.subr.mxu0 0.0
  %3414 = vmatpush1.msra.mxu0 0.0
  %3415 = vmatprep.subr.mxu0 0.0
  %3416 = vmatpush1.msra.mxu0 0.0
  %3417 = vmatprep.subr.mxu0 0.0
  %3418 = vmatpush1.msra.mxu0 0.0
  %3419 = vmatprep.mubr.f32.mxu0 0.0
  %3420 = vmatmul.mubr.f32.gmra.mrb[0].mxu0 %v144
  %v3421 = vpop.f32.mrb[0].mxu0
  %v3422 = vadd.f32 0.0, %v3421
  %v3423 = vpop.f32.mrb[0].mxu0
  %3424 = vmatprep.mubr.f32.mxu0 0.0
  %3425 = vmatmul.mubr.f32.gmra.mrb[0].mxu0 %v147
  %v3426 = vpop.f32.mrb[0].mxu0
  %v3427 = vadd.f32 0.0, %v3426
  %v3428 = vpop.f32.mrb[0].mxu0
  %3429 = vmatprep.mubr.f32.mxu0 0.0
  %3430 = vmatmul.mubr.f32.gmra.mrb[0].mxu0 %v150
  %v3431 = vpop.f32.mrb[0].mxu0
  %v3432 = vadd.f32 0.0, %v3431
  %v3433 = vpop.f32.mrb[0].mxu0
  %3434 = vmatprep.mubr.f32.mxu0 0.0
  %3435 = vmatmul.mubr.f32.gmra.mrb[0].mxu0 %v153
  %v3436 = vpop.f32.mrb[0].mxu0
  %v3437 = vadd.f32 0.0, %v3436
  %v3438 = vpop.f32.mrb[0].mxu0
  %3439 = vmatprep.mubr.f32.mxu0 0.0
  %3440 = vmatmul.mubr.f32.gmra.mrb[0].mxu0 %v156
  %v3441 = vpop.f32.mrb[0].mxu0
  %v3442 = vadd.f32 0.0, %v3441
  %v3443 = vpop.f32.mrb[0].mxu0
  %3444 = vmatprep.mubr.f32.mxu0 0.0
  %3445 = vmatmul.mubr.f32.gmra.mrb[0].mxu0 %v159
  %v3446 = vpop.f32.mrb[0].mxu0
  %v3447 = vadd.f32 0.0, %v3446
  %v3448 = vpop.f32.mrb[0].mxu0
  %3449 = vmatprep.mubr.f32.mxu0 0.0
  %3450 = vmatmul.mubr.f32.gmra.mrb[0].mxu0 %v162
  %v3451 = vpop.f32.mrb[0].mxu0
  %v3452 = vadd.f32 0.0, %v3451
  %v3453 = vpop.f32.mrb[0].mxu0
  %3454 = vmatprep.mubr.f32.mxu0 0.0
  %3455 = vmatmul.mubr.f32.gmra.mrb[0].mxu0 %v165
  %v3456 = vpop.f32.mrb[0].mxu0
  %v3457 = vadd.f32 0.0, %v3456
  %v3458 = vpop.f32.mrb[0].mxu0
  %3459 = vdwg.mxu0
  %3460 = vset.pattern.permute.xlu0 20
  %3461 = vperm.xlu0 %3460, %v128
  %v3462 = vpop.permute.xlu0 %3461
  %3464 = vset.pattern.permute.xlu0 20
  %3465 = vperm.xlu0 %3464, %v129
  %v3466 = vpop.permute.xlu0 %3465
  %3468 = vset.pattern.permute.xlu0 20
  %3469 = vperm.xlu0 %3468, %v130
  %v3470 = vpop.permute.xlu0 %3469
  %3472 = vset.pattern.permute.xlu0 20
  %3473 = vperm.xlu0 %3472, %v131
  %v3474 = vpop.permute.xlu0 %3473
  %3476 = vset.pattern.permute.xlu0 20
  %3477 = vperm.xlu0 %3476, %v132
  %v3478 = vpop.permute.xlu0 %3477
  %3480 = vset.pattern.permute.xlu0 20
  %3481 = vperm.xlu0 %3480, %v133
  %v3482 = vpop.permute.xlu0 %3481
  %3484 = vset.pattern.permute.xlu0 20
  %3485 = vperm.xlu0 %3484, %v134
  %v3486 = vpop.permute.xlu0 %3485
  %3488 = vset.pattern.permute.xlu0 20
  %3489 = vperm.xlu0 %3488, %v135
  %v3490 = vpop.permute.xlu0 %3489
  %v3492 = vmul.f32 %v3422, %v3462
  %v3493 = vmul.f32 %v3427, %v3466
  %v3494 = vmul.f32 %v3432, %v3470
  %v3495 = vmul.f32 %v3437, %v3474
  %v3496 = vmul.f32 %v3442, %v3478
  %v3497 = vmul.f32 %v3447, %v3482
  %v3498 = vmul.f32 %v3452, %v3486
  %v3499 = vmul.f32 %v3457, %v3490
  %v3500 = vadd.f32 %v3341, %v3492
  %v3501 = vadd.f32 %v3342, %v3493
  %v3502 = vadd.f32 %v3343, %v3494
  %v3503 = vadd.f32 %v3344, %v3495
  %v3504 = vadd.f32 %v3345, %v3496
  %v3505 = vadd.f32 %v3346, %v3497
  %v3506 = vadd.f32 %v3347, %v3498
  %v3507 = vadd.f32 %v3348, %v3499
  %v3508 = vld [vmem:[%s3 + $0xa8] sm:$0xff]
  %v3509 = vld [vmem:[%s3 + $0x170] sm:$0xff]
  %v3510 = vld [vmem:[%s3 + $0x238] sm:$0xff]
  %v3511 = vld [vmem:[%s3 + $0x300] sm:$0xff]
  %v3512 = vld [vmem:[%s3 + $0x3c8] sm:$0xff]
  %v3513 = vld [vmem:[%s3 + $0x490] sm:$0xff]
  %3514 = vmatprep.subr.mxu0 0.0
  %3515 = vmatpush1.msra.mxu0 %v3508
  %3516 = vmatprep.subr.mxu0 0.0
  %3517 = vmatpush1.msra.mxu0 %v3509
  %3518 = vmatprep.subr.mxu0 0.0
  %3519 = vmatpush1.msra.mxu0 %v3510
  %3520 = vmatprep.subr.mxu0 0.0
  %3521 = vmatpush1.msra.mxu0 %v3511
  %3522 = vmatprep.subr.mxu0 0.0
  %3523 = vmatpush1.msra.mxu0 %v3512
  %3524 = vmatprep.subr.mxu0 0.0
  %3525 = vmatpush1.msra.mxu0 %v3513
  %3526 = vmatprep.subr.mxu0 0.0
  %3527 = vmatpush1.msra.mxu0 0.0
  %3528 = vmatprep.subr.mxu0 0.0
  %3529 = vmatpush1.msra.mxu0 0.0
  %3530 = vmatprep.subr.mxu0 0.0
  %3531 = vmatpush1.msra.mxu0 0.0
  %3532 = vmatprep.subr.mxu0 0.0
  %3533 = vmatpush1.msra.mxu0 0.0
  %3534 = vmatprep.subr.mxu0 0.0
  %3535 = vmatpush1.msra.mxu0 0.0
  %3536 = vmatprep.subr.mxu0 0.0
  %3537 = vmatpush1.msra.mxu0 0.0
  %3538 = vmatprep.subr.mxu0 0.0
  %3539 = vmatpush1.msra.mxu0 0.0
  %3540 = vmatprep.subr.mxu0 0.0
  %3541 = vmatpush1.msra.mxu0 0.0
  %3542 = vmatprep.subr.mxu0 0.0
  %3543 = vmatpush1.msra.mxu0 0.0
  %3544 = vmatprep.subr.mxu0 0.0
  %3545 = vmatpush1.msra.mxu0 0.0
  %3546 = vmatprep.subr.mxu0 0.0
  %3547 = vmatpush1.msra.mxu0 0.0
  %3548 = vmatprep.subr.mxu0 0.0
  %3549 = vmatpush1.msra.mxu0 0.0
  %3550 = vmatprep.subr.mxu0 0.0
  %3551 = vmatpush1.msra.mxu0 0.0
  %3552 = vmatprep.subr.mxu0 0.0
  %3553 = vmatpush1.msra.mxu0 0.0
  %3554 = vmatprep.subr.mxu0 0.0
  %3555 = vmatpush1.msra.mxu0 0.0
  %3556 = vmatprep.subr.mxu0 0.0
  %3557 = vmatpush1.msra.mxu0 0.0
  %3558 = vmatprep.subr.mxu0 0.0
  %3559 = vmatpush1.msra.mxu0 0.0
  %3560 = vmatprep.subr.mxu0 0.0
  %3561 = vmatpush1.msra.mxu0 0.0
  %3562 = vmatprep.subr.mxu0 0.0
  %3563 = vmatpush1.msra.mxu0 0.0
  %3564 = vmatprep.subr.mxu0 0.0
  %3565 = vmatpush1.msra.mxu0 0.0
  %3566 = vmatprep.subr.mxu0 0.0
  %3567 = vmatpush1.msra.mxu0 0.0
  %3568 = vmatprep.subr.mxu0 0.0
  %3569 = vmatpush1.msra.mxu0 0.0
  %3570 = vmatprep.subr.mxu0 0.0
  %3571 = vmatpush1.msra.mxu0 0.0
  %3572 = vmatprep.subr.mxu0 0.0
  %3573 = vmatpush1.msra.mxu0 0.0
  %3574 = vmatprep.subr.mxu0 0.0
  %3575 = vmatpush1.msra.mxu0 0.0
  %3576 = vmatprep.subr.mxu0 0.0
  %3577 = vmatpush1.msra.mxu0 0.0
  %3578 = vmatprep.mubr.f32.mxu0 0.0
  %3579 = vmatmul.mubr.f32.gmra.mrb[0].mxu0 %v144
  %v3580 = vpop.f32.mrb[0].mxu0
  %v3581 = vadd.f32 0.0, %v3580
  %v3582 = vpop.f32.mrb[0].mxu0
  %3583 = vmatprep.mubr.f32.mxu0 0.0
  %3584 = vmatmul.mubr.f32.gmra.mrb[0].mxu0 %v147
  %v3585 = vpop.f32.mrb[0].mxu0
  %v3586 = vadd.f32 0.0, %v3585
  %v3587 = vpop.f32.mrb[0].mxu0
  %3588 = vmatprep.mubr.f32.mxu0 0.0
  %3589 = vmatmul.mubr.f32.gmra.mrb[0].mxu0 %v150
  %v3590 = vpop.f32.mrb[0].mxu0
  %v3591 = vadd.f32 0.0, %v3590
  %v3592 = vpop.f32.mrb[0].mxu0
  %3593 = vmatprep.mubr.f32.mxu0 0.0
  %3594 = vmatmul.mubr.f32.gmra.mrb[0].mxu0 %v153
  %v3595 = vpop.f32.mrb[0].mxu0
  %v3596 = vadd.f32 0.0, %v3595
  %v3597 = vpop.f32.mrb[0].mxu0
  %3598 = vmatprep.mubr.f32.mxu0 0.0
  %3599 = vmatmul.mubr.f32.gmra.mrb[0].mxu0 %v156
  %v3600 = vpop.f32.mrb[0].mxu0
  %v3601 = vadd.f32 0.0, %v3600
  %v3602 = vpop.f32.mrb[0].mxu0
  %3603 = vmatprep.mubr.f32.mxu0 0.0
  %3604 = vmatmul.mubr.f32.gmra.mrb[0].mxu0 %v159
  %v3605 = vpop.f32.mrb[0].mxu0
  %v3606 = vadd.f32 0.0, %v3605
  %v3607 = vpop.f32.mrb[0].mxu0
  %3608 = vmatprep.mubr.f32.mxu0 0.0
  %3609 = vmatmul.mubr.f32.gmra.mrb[0].mxu0 %v162
  %v3610 = vpop.f32.mrb[0].mxu0
  %v3611 = vadd.f32 0.0, %v3610
  %v3612 = vpop.f32.mrb[0].mxu0
  %3613 = vmatprep.mubr.f32.mxu0 0.0
  %3614 = vmatmul.mubr.f32.gmra.mrb[0].mxu0 %v165
  %v3615 = vpop.f32.mrb[0].mxu0
  %v3616 = vadd.f32 0.0, %v3615
  %v3617 = vpop.f32.mrb[0].mxu0
  %3618 = vdwg.mxu0
  %3619 = vset.pattern.permute.xlu0 21
  %3620 = vperm.xlu0 %3619, %v128
  %v3621 = vpop.permute.xlu0 %3620
  %3623 = vset.pattern.permute.xlu0 21
  %3624 = vperm.xlu0 %3623, %v129
  %v3625 = vpop.permute.xlu0 %3624
  %3627 = vset.pattern.permute.xlu0 21
  %3628 = vperm.xlu0 %3627, %v130
  %v3629 = vpop.permute.xlu0 %3628
  %3631 = vset.pattern.permute.xlu0 21
  %3632 = vperm.xlu0 %3631, %v131
  %v3633 = vpop.permute.xlu0 %3632
  %3635 = vset.pattern.permute.xlu0 21
  %3636 = vperm.xlu0 %3635, %v132
  %v3637 = vpop.permute.xlu0 %3636
  %3639 = vset.pattern.permute.xlu0 21
  %3640 = vperm.xlu0 %3639, %v133
  %v3641 = vpop.permute.xlu0 %3640
  %3643 = vset.pattern.permute.xlu0 21
  %3644 = vperm.xlu0 %3643, %v134
  %v3645 = vpop.permute.xlu0 %3644
  %3647 = vset.pattern.permute.xlu0 21
  %3648 = vperm.xlu0 %3647, %v135
  %v3649 = vpop.permute.xlu0 %3648
  %v3651 = vmul.f32 %v3581, %v3621
  %v3652 = vmul.f32 %v3586, %v3625
  %v3653 = vmul.f32 %v3591, %v3629
  %v3654 = vmul.f32 %v3596, %v3633
  %v3655 = vmul.f32 %v3601, %v3637
  %v3656 = vmul.f32 %v3606, %v3641
  %v3657 = vmul.f32 %v3611, %v3645
  %v3658 = vmul.f32 %v3616, %v3649
  %v3659 = vadd.f32 %v3500, %v3651
  %v3660 = vadd.f32 %v3501, %v3652
  %v3661 = vadd.f32 %v3502, %v3653
  %v3662 = vadd.f32 %v3503, %v3654
  %v3663 = vadd.f32 %v3504, %v3655
  %v3664 = vadd.f32 %v3505, %v3656
  %v3665 = vadd.f32 %v3506, %v3657
  %v3666 = vadd.f32 %v3507, %v3658
  %v3667 = vld [vmem:[%s3 + $0xb0] sm:$0xff]
  %v3668 = vld [vmem:[%s3 + $0x178] sm:$0xff]
  %v3669 = vld [vmem:[%s3 + $0x240] sm:$0xff]
  %v3670 = vld [vmem:[%s3 + $0x308] sm:$0xff]
  %v3671 = vld [vmem:[%s3 + $0x3d0] sm:$0xff]
  %v3672 = vld [vmem:[%s3 + $0x498] sm:$0xff]
  %3673 = vmatprep.subr.mxu0 0.0
  %3674 = vmatpush1.msra.mxu0 %v3667
  %3675 = vmatprep.subr.mxu0 0.0
  %3676 = vmatpush1.msra.mxu0 %v3668
  %3677 = vmatprep.subr.mxu0 0.0
  %3678 = vmatpush1.msra.mxu0 %v3669
  %3679 = vmatprep.subr.mxu0 0.0
  %3680 = vmatpush1.msra.mxu0 %v3670
  %3681 = vmatprep.subr.mxu0 0.0
  %3682 = vmatpush1.msra.mxu0 %v3671
  %3683 = vmatprep.subr.mxu0 0.0
  %3684 = vmatpush1.msra.mxu0 %v3672
  %3685 = vmatprep.subr.mxu0 0.0
  %3686 = vmatpush1.msra.mxu0 0.0
  %3687 = vmatprep.subr.mxu0 0.0
  %3688 = vmatpush1.msra.mxu0 0.0
  %3689 = vmatprep.subr.mxu0 0.0
  %3690 = vmatpush1.msra.mxu0 0.0
  %3691 = vmatprep.subr.mxu0 0.0
  %3692 = vmatpush1.msra.mxu0 0.0
  %3693 = vmatprep.subr.mxu0 0.0
  %3694 = vmatpush1.msra.mxu0 0.0
  %3695 = vmatprep.subr.mxu0 0.0
  %3696 = vmatpush1.msra.mxu0 0.0
  %3697 = vmatprep.subr.mxu0 0.0
  %3698 = vmatpush1.msra.mxu0 0.0
  %3699 = vmatprep.subr.mxu0 0.0
  %3700 = vmatpush1.msra.mxu0 0.0
  %3701 = vmatprep.subr.mxu0 0.0
  %3702 = vmatpush1.msra.mxu0 0.0
  %3703 = vmatprep.subr.mxu0 0.0
  %3704 = vmatpush1.msra.mxu0 0.0
  %3705 = vmatprep.subr.mxu0 0.0
  %3706 = vmatpush1.msra.mxu0 0.0
  %3707 = vmatprep.subr.mxu0 0.0
  %3708 = vmatpush1.msra.mxu0 0.0
  %3709 = vmatprep.subr.mxu0 0.0
  %3710 = vmatpush1.msra.mxu0 0.0
  %3711 = vmatprep.subr.mxu0 0.0
  %3712 = vmatpush1.msra.mxu0 0.0
  %3713 = vmatprep.subr.mxu0 0.0
  %3714 = vmatpush1.msra.mxu0 0.0
  %3715 = vmatprep.subr.mxu0 0.0
  %3716 = vmatpush1.msra.mxu0 0.0
  %3717 = vmatprep.subr.mxu0 0.0
  %3718 = vmatpush1.msra.mxu0 0.0
  %3719 = vmatprep.subr.mxu0 0.0
  %3720 = vmatpush1.msra.mxu0 0.0
  %3721 = vmatprep.subr.mxu0 0.0
  %3722 = vmatpush1.msra.mxu0 0.0
  %3723 = vmatprep.subr.mxu0 0.0
  %3724 = vmatpush1.msra.mxu0 0.0
  %3725 = vmatprep.subr.mxu0 0.0
  %3726 = vmatpush1.msra.mxu0 0.0
  %3727 = vmatprep.subr.mxu0 0.0
  %3728 = vmatpush1.msra.mxu0 0.0
  %3729 = vmatprep.subr.mxu0 0.0
  %3730 = vmatpush1.msra.mxu0 0.0
  %3731 = vmatprep.subr.mxu0 0.0
  %3732 = vmatpush1.msra.mxu0 0.0
  %3733 = vmatprep.subr.mxu0 0.0
  %3734 = vmatpush1.msra.mxu0 0.0
  %3735 = vmatprep.subr.mxu0 0.0
  %3736 = vmatpush1.msra.mxu0 0.0
  %3737 = vmatprep.mubr.f32.mxu0 0.0
  %3738 = vmatmul.mubr.f32.gmra.mrb[0].mxu0 %v144
  %v3739 = vpop.f32.mrb[0].mxu0
  %v3740 = vadd.f32 0.0, %v3739
  %v3741 = vpop.f32.mrb[0].mxu0
  %3742 = vmatprep.mubr.f32.mxu0 0.0
  %3743 = vmatmul.mubr.f32.gmra.mrb[0].mxu0 %v147
  %v3744 = vpop.f32.mrb[0].mxu0
  %v3745 = vadd.f32 0.0, %v3744
  %v3746 = vpop.f32.mrb[0].mxu0
  %3747 = vmatprep.mubr.f32.mxu0 0.0
  %3748 = vmatmul.mubr.f32.gmra.mrb[0].mxu0 %v150
  %v3749 = vpop.f32.mrb[0].mxu0
  %v3750 = vadd.f32 0.0, %v3749
  %v3751 = vpop.f32.mrb[0].mxu0
  %3752 = vmatprep.mubr.f32.mxu0 0.0
  %3753 = vmatmul.mubr.f32.gmra.mrb[0].mxu0 %v153
  %v3754 = vpop.f32.mrb[0].mxu0
  %v3755 = vadd.f32 0.0, %v3754
  %v3756 = vpop.f32.mrb[0].mxu0
  %3757 = vmatprep.mubr.f32.mxu0 0.0
  %3758 = vmatmul.mubr.f32.gmra.mrb[0].mxu0 %v156
  %v3759 = vpop.f32.mrb[0].mxu0
  %v3760 = vadd.f32 0.0, %v3759
  %v3761 = vpop.f32.mrb[0].mxu0
  %3762 = vmatprep.mubr.f32.mxu0 0.0
  %3763 = vmatmul.mubr.f32.gmra.mrb[0].mxu0 %v159
  %v3764 = vpop.f32.mrb[0].mxu0
  %v3765 = vadd.f32 0.0, %v3764
  %v3766 = vpop.f32.mrb[0].mxu0
  %3767 = vmatprep.mubr.f32.mxu0 0.0
  %3768 = vmatmul.mubr.f32.gmra.mrb[0].mxu0 %v162
  %v3769 = vpop.f32.mrb[0].mxu0
  %v3770 = vadd.f32 0.0, %v3769
  %v3771 = vpop.f32.mrb[0].mxu0
  %3772 = vmatprep.mubr.f32.mxu0 0.0
  %3773 = vmatmul.mubr.f32.gmra.mrb[0].mxu0 %v165
  %v3774 = vpop.f32.mrb[0].mxu0
  %v3775 = vadd.f32 0.0, %v3774
  %v3776 = vpop.f32.mrb[0].mxu0
  %3777 = vdwg.mxu0
  %3778 = vset.pattern.permute.xlu0 22
  %3779 = vperm.xlu0 %3778, %v128
  %v3780 = vpop.permute.xlu0 %3779
  %3782 = vset.pattern.permute.xlu0 22
  %3783 = vperm.xlu0 %3782, %v129
  %v3784 = vpop.permute.xlu0 %3783
  %3786 = vset.pattern.permute.xlu0 22
  %3787 = vperm.xlu0 %3786, %v130
  %v3788 = vpop.permute.xlu0 %3787
  %3790 = vset.pattern.permute.xlu0 22
  %3791 = vperm.xlu0 %3790, %v131
  %v3792 = vpop.permute.xlu0 %3791
  %3794 = vset.pattern.permute.xlu0 22
  %3795 = vperm.xlu0 %3794, %v132
  %v3796 = vpop.permute.xlu0 %3795
  %3798 = vset.pattern.permute.xlu0 22
  %3799 = vperm.xlu0 %3798, %v133
  %v3800 = vpop.permute.xlu0 %3799
  %3802 = vset.pattern.permute.xlu0 22
  %3803 = vperm.xlu0 %3802, %v134
  %v3804 = vpop.permute.xlu0 %3803
  %3806 = vset.pattern.permute.xlu0 22
  %3807 = vperm.xlu0 %3806, %v135
  %v3808 = vpop.permute.xlu0 %3807
  %v3810 = vmul.f32 %v3740, %v3780
  %v3811 = vmul.f32 %v3745, %v3784
  %v3812 = vmul.f32 %v3750, %v3788
  %v3813 = vmul.f32 %v3755, %v3792
  %v3814 = vmul.f32 %v3760, %v3796
  %v3815 = vmul.f32 %v3765, %v3800
  %v3816 = vmul.f32 %v3770, %v3804
  %v3817 = vmul.f32 %v3775, %v3808
  %v3818 = vadd.f32 %v3659, %v3810
  %v3819 = vadd.f32 %v3660, %v3811
  %v3820 = vadd.f32 %v3661, %v3812
  %v3821 = vadd.f32 %v3662, %v3813
  %v3822 = vadd.f32 %v3663, %v3814
  %v3823 = vadd.f32 %v3664, %v3815
  %v3824 = vadd.f32 %v3665, %v3816
  %v3825 = vadd.f32 %v3666, %v3817
  %v3826 = vld [vmem:[%s3 + $0xb8] sm:$0xff]
  %v3827 = vld [vmem:[%s3 + $0x180] sm:$0xff]
  %v3828 = vld [vmem:[%s3 + $0x248] sm:$0xff]
  %v3829 = vld [vmem:[%s3 + $0x310] sm:$0xff]
  %v3830 = vld [vmem:[%s3 + $0x3d8] sm:$0xff]
  %v3831 = vld [vmem:[%s3 + $0x4a0] sm:$0xff]
  %3832 = vmatprep.subr.mxu0 0.0
  %3833 = vmatpush1.msra.mxu0 %v3826
  %3834 = vmatprep.subr.mxu0 0.0
  %3835 = vmatpush1.msra.mxu0 %v3827
  %3836 = vmatprep.subr.mxu0 0.0
  %3837 = vmatpush1.msra.mxu0 %v3828
  %3838 = vmatprep.subr.mxu0 0.0
  %3839 = vmatpush1.msra.mxu0 %v3829
  %3840 = vmatprep.subr.mxu0 0.0
  %3841 = vmatpush1.msra.mxu0 %v3830
  %3842 = vmatprep.subr.mxu0 0.0
  %3843 = vmatpush1.msra.mxu0 %v3831
  %3844 = vmatprep.subr.mxu0 0.0
  %3845 = vmatpush1.msra.mxu0 0.0
  %3846 = vmatprep.subr.mxu0 0.0
  %3847 = vmatpush1.msra.mxu0 0.0
  %3848 = vmatprep.subr.mxu0 0.0
  %3849 = vmatpush1.msra.mxu0 0.0
  %3850 = vmatprep.subr.mxu0 0.0
  %3851 = vmatpush1.msra.mxu0 0.0
  %3852 = vmatprep.subr.mxu0 0.0
  %3853 = vmatpush1.msra.mxu0 0.0
  %3854 = vmatprep.subr.mxu0 0.0
  %3855 = vmatpush1.msra.mxu0 0.0
  %3856 = vmatprep.subr.mxu0 0.0
  %3857 = vmatpush1.msra.mxu0 0.0
  %3858 = vmatprep.subr.mxu0 0.0
  %3859 = vmatpush1.msra.mxu0 0.0
  %3860 = vmatprep.subr.mxu0 0.0
  %3861 = vmatpush1.msra.mxu0 0.0
  %3862 = vmatprep.subr.mxu0 0.0
  %3863 = vmatpush1.msra.mxu0 0.0
  %3864 = vmatprep.subr.mxu0 0.0
  %3865 = vmatpush1.msra.mxu0 0.0
  %3866 = vmatprep.subr.mxu0 0.0
  %3867 = vmatpush1.msra.mxu0 0.0
  %3868 = vmatprep.subr.mxu0 0.0
  %3869 = vmatpush1.msra.mxu0 0.0
  %3870 = vmatprep.subr.mxu0 0.0
  %3871 = vmatpush1.msra.mxu0 0.0
  %3872 = vmatprep.subr.mxu0 0.0
  %3873 = vmatpush1.msra.mxu0 0.0
  %3874 = vmatprep.subr.mxu0 0.0
  %3875 = vmatpush1.msra.mxu0 0.0
  %3876 = vmatprep.subr.mxu0 0.0
  %3877 = vmatpush1.msra.mxu0 0.0
  %3878 = vmatprep.subr.mxu0 0.0
  %3879 = vmatpush1.msra.mxu0 0.0
  %3880 = vmatprep.subr.mxu0 0.0
  %3881 = vmatpush1.msra.mxu0 0.0
  %3882 = vmatprep.subr.mxu0 0.0
  %3883 = vmatpush1.msra.mxu0 0.0
  %3884 = vmatprep.subr.mxu0 0.0
  %3885 = vmatpush1.msra.mxu0 0.0
  %3886 = vmatprep.subr.mxu0 0.0
  %3887 = vmatpush1.msra.mxu0 0.0
  %3888 = vmatprep.subr.mxu0 0.0
  %3889 = vmatpush1.msra.mxu0 0.0
  %3890 = vmatprep.subr.mxu0 0.0
  %3891 = vmatpush1.msra.mxu0 0.0
  %3892 = vmatprep.subr.mxu0 0.0
  %3893 = vmatpush1.msra.mxu0 0.0
  %3894 = vmatprep.subr.mxu0 0.0
  %3895 = vmatpush1.msra.mxu0 0.0
  %3896 = vmatprep.mubr.f32.mxu0 0.0
  %3897 = vmatmul.mubr.f32.gmra.mrb[0].mxu0 %v144
  %v3898 = vpop.f32.mrb[0].mxu0
  %v3899 = vadd.f32 0.0, %v3898
  %v3900 = vpop.f32.mrb[0].mxu0
  %3901 = vmatprep.mubr.f32.mxu0 0.0
  %3902 = vmatmul.mubr.f32.gmra.mrb[0].mxu0 %v147
  %v3903 = vpop.f32.mrb[0].mxu0
  %v3904 = vadd.f32 0.0, %v3903
  %v3905 = vpop.f32.mrb[0].mxu0
  %3906 = vmatprep.mubr.f32.mxu0 0.0
  %3907 = vmatmul.mubr.f32.gmra.mrb[0].mxu0 %v150
  %v3908 = vpop.f32.mrb[0].mxu0
  %v3909 = vadd.f32 0.0, %v3908
  %v3910 = vpop.f32.mrb[0].mxu0
  %3911 = vmatprep.mubr.f32.mxu0 0.0
  %3912 = vmatmul.mubr.f32.gmra.mrb[0].mxu0 %v153
  %v3913 = vpop.f32.mrb[0].mxu0
  %v3914 = vadd.f32 0.0, %v3913
  %v3915 = vpop.f32.mrb[0].mxu0
  %3916 = vmatprep.mubr.f32.mxu0 0.0
  %3917 = vmatmul.mubr.f32.gmra.mrb[0].mxu0 %v156
  %v3918 = vpop.f32.mrb[0].mxu0
  %v3919 = vadd.f32 0.0, %v3918
  %v3920 = vpop.f32.mrb[0].mxu0
  %3921 = vmatprep.mubr.f32.mxu0 0.0
  %3922 = vmatmul.mubr.f32.gmra.mrb[0].mxu0 %v159
  %v3923 = vpop.f32.mrb[0].mxu0
  %v3924 = vadd.f32 0.0, %v3923
  %v3925 = vpop.f32.mrb[0].mxu0
  %3926 = vmatprep.mubr.f32.mxu0 0.0
  %3927 = vmatmul.mubr.f32.gmra.mrb[0].mxu0 %v162
  %v3928 = vpop.f32.mrb[0].mxu0
  %v3929 = vadd.f32 0.0, %v3928
  %v3930 = vpop.f32.mrb[0].mxu0
  %3931 = vmatprep.mubr.f32.mxu0 0.0
  %3932 = vmatmul.mubr.f32.gmra.mrb[0].mxu0 %v165
  %v3933 = vpop.f32.mrb[0].mxu0
  %v3934 = vadd.f32 0.0, %v3933
  %v3935 = vpop.f32.mrb[0].mxu0
  %3936 = vdwg.mxu0
  %3937 = vset.pattern.permute.xlu0 23
  %3938 = vperm.xlu0 %3937, %v128
  %v3939 = vpop.permute.xlu0 %3938
  %3941 = vset.pattern.permute.xlu0 23
  %3942 = vperm.xlu0 %3941, %v129
  %v3943 = vpop.permute.xlu0 %3942
  %3945 = vset.pattern.permute.xlu0 23
  %3946 = vperm.xlu0 %3945, %v130
  %v3947 = vpop.permute.xlu0 %3946
  %3949 = vset.pattern.permute.xlu0 23
  %3950 = vperm.xlu0 %3949, %v131
  %v3951 = vpop.permute.xlu0 %3950
  %3953 = vset.pattern.permute.xlu0 23
  %3954 = vperm.xlu0 %3953, %v132
  %v3955 = vpop.permute.xlu0 %3954
  %3957 = vset.pattern.permute.xlu0 23
  %3958 = vperm.xlu0 %3957, %v133
  %v3959 = vpop.permute.xlu0 %3958
  %3961 = vset.pattern.permute.xlu0 23
  %3962 = vperm.xlu0 %3961, %v134
  %v3963 = vpop.permute.xlu0 %3962
  %3965 = vset.pattern.permute.xlu0 23
  %3966 = vperm.xlu0 %3965, %v135
  %v3967 = vpop.permute.xlu0 %3966
  %v3969 = vmul.f32 %v3899, %v3939
  %v3970 = vmul.f32 %v3904, %v3943
  %v3971 = vmul.f32 %v3909, %v3947
  %v3972 = vmul.f32 %v3914, %v3951
  %v3973 = vmul.f32 %v3919, %v3955
  %v3974 = vmul.f32 %v3924, %v3959
  %v3975 = vmul.f32 %v3929, %v3963
  %v3976 = vmul.f32 %v3934, %v3967
  %v3977 = vadd.f32 %v3818, %v3969
  %v3978 = vadd.f32 %v3819, %v3970
  %v3979 = vadd.f32 %v3820, %v3971
  %v3980 = vadd.f32 %v3821, %v3972
  %v3981 = vadd.f32 %v3822, %v3973
  %v3982 = vadd.f32 %v3823, %v3974
  %v3983 = vadd.f32 %v3824, %v3975
  %v3984 = vadd.f32 %v3825, %v3976
  %v3985 = vld [vmem:[%s3 + $0xc0] sm:$0xff]
  %v3986 = vld [vmem:[%s3 + $0x188] sm:$0xff]
  %v3987 = vld [vmem:[%s3 + $0x250] sm:$0xff]
  %v3988 = vld [vmem:[%s3 + $0x318] sm:$0xff]
  %v3989 = vld [vmem:[%s3 + $0x3e0] sm:$0xff]
  %v3990 = vld [vmem:[%s3 + $0x4a8] sm:$0xff]
  %3991 = vmatprep.subr.mxu0 0.0
  %3992 = vmatpush1.msra.mxu0 %v3985
  %3993 = vmatprep.subr.mxu0 0.0
  %3994 = vmatpush1.msra.mxu0 %v3986
  %3995 = vmatprep.subr.mxu0 0.0
  %3996 = vmatpush1.msra.mxu0 %v3987
  %3997 = vmatprep.subr.mxu0 0.0
  %3998 = vmatpush1.msra.mxu0 %v3988
  %3999 = vmatprep.subr.mxu0 0.0
  %4000 = vmatpush1.msra.mxu0 %v3989
  %4001 = vmatprep.subr.mxu0 0.0
  %4002 = vmatpush1.msra.mxu0 %v3990
  %4003 = vmatprep.subr.mxu0 0.0
  %4004 = vmatpush1.msra.mxu0 0.0
  %4005 = vmatprep.subr.mxu0 0.0
  %4006 = vmatpush1.msra.mxu0 0.0
  %4007 = vmatprep.subr.mxu0 0.0
  %4008 = vmatpush1.msra.mxu0 0.0
  %4009 = vmatprep.subr.mxu0 0.0
  %4010 = vmatpush1.msra.mxu0 0.0
  %4011 = vmatprep.subr.mxu0 0.0
  %4012 = vmatpush1.msra.mxu0 0.0
  %4013 = vmatprep.subr.mxu0 0.0
  %4014 = vmatpush1.msra.mxu0 0.0
  %4015 = vmatprep.subr.mxu0 0.0
  %4016 = vmatpush1.msra.mxu0 0.0
  %4017 = vmatprep.subr.mxu0 0.0
  %4018 = vmatpush1.msra.mxu0 0.0
  %4019 = vmatprep.subr.mxu0 0.0
  %4020 = vmatpush1.msra.mxu0 0.0
  %4021 = vmatprep.subr.mxu0 0.0
  %4022 = vmatpush1.msra.mxu0 0.0
  %4023 = vmatprep.subr.mxu0 0.0
  %4024 = vmatpush1.msra.mxu0 0.0
  %4025 = vmatprep.subr.mxu0 0.0
  %4026 = vmatpush1.msra.mxu0 0.0
  %4027 = vmatprep.subr.mxu0 0.0
  %4028 = vmatpush1.msra.mxu0 0.0
  %4029 = vmatprep.subr.mxu0 0.0
  %4030 = vmatpush1.msra.mxu0 0.0
  %4031 = vmatprep.subr.mxu0 0.0
  %4032 = vmatpush1.msra.mxu0 0.0
  %4033 = vmatprep.subr.mxu0 0.0
  %4034 = vmatpush1.msra.mxu0 0.0
  %4035 = vmatprep.subr.mxu0 0.0
  %4036 = vmatpush1.msra.mxu0 0.0
  %4037 = vmatprep.subr.mxu0 0.0
  %4038 = vmatpush1.msra.mxu0 0.0
  %4039 = vmatprep.subr.mxu0 0.0
  %4040 = vmatpush1.msra.mxu0 0.0
  %4041 = vmatprep.subr.mxu0 0.0
  %4042 = vmatpush1.msra.mxu0 0.0
  %4043 = vmatprep.subr.mxu0 0.0
  %4044 = vmatpush1.msra.mxu0 0.0
  %4045 = vmatprep.subr.mxu0 0.0
  %4046 = vmatpush1.msra.mxu0 0.0
  %4047 = vmatprep.subr.mxu0 0.0
  %4048 = vmatpush1.msra.mxu0 0.0
  %4049 = vmatprep.subr.mxu0 0.0
  %4050 = vmatpush1.msra.mxu0 0.0
  %4051 = vmatprep.subr.mxu0 0.0
  %4052 = vmatpush1.msra.mxu0 0.0
  %4053 = vmatprep.subr.mxu0 0.0
  %4054 = vmatpush1.msra.mxu0 0.0
  %4055 = vmatprep.mubr.f32.mxu0 0.0
  %4056 = vmatmul.mubr.f32.gmra.mrb[0].mxu0 %v144
  %v4057 = vpop.f32.mrb[0].mxu0
  %v4058 = vadd.f32 0.0, %v4057
  %v4059 = vpop.f32.mrb[0].mxu0
  %4060 = vmatprep.mubr.f32.mxu0 0.0
  %4061 = vmatmul.mubr.f32.gmra.mrb[0].mxu0 %v147
  %v4062 = vpop.f32.mrb[0].mxu0
  %v4063 = vadd.f32 0.0, %v4062
  %v4064 = vpop.f32.mrb[0].mxu0
  %4065 = vmatprep.mubr.f32.mxu0 0.0
  %4066 = vmatmul.mubr.f32.gmra.mrb[0].mxu0 %v150
  %v4067 = vpop.f32.mrb[0].mxu0
  %v4068 = vadd.f32 0.0, %v4067
  %v4069 = vpop.f32.mrb[0].mxu0
  %4070 = vmatprep.mubr.f32.mxu0 0.0
  %4071 = vmatmul.mubr.f32.gmra.mrb[0].mxu0 %v153
  %v4072 = vpop.f32.mrb[0].mxu0
  %v4073 = vadd.f32 0.0, %v4072
  %v4074 = vpop.f32.mrb[0].mxu0
  %4075 = vmatprep.mubr.f32.mxu0 0.0
  %4076 = vmatmul.mubr.f32.gmra.mrb[0].mxu0 %v156
  %v4077 = vpop.f32.mrb[0].mxu0
  %v4078 = vadd.f32 0.0, %v4077
  %v4079 = vpop.f32.mrb[0].mxu0
  %4080 = vmatprep.mubr.f32.mxu0 0.0
  %4081 = vmatmul.mubr.f32.gmra.mrb[0].mxu0 %v159
  %v4082 = vpop.f32.mrb[0].mxu0
  %v4083 = vadd.f32 0.0, %v4082
  %v4084 = vpop.f32.mrb[0].mxu0
  %4085 = vmatprep.mubr.f32.mxu0 0.0
  %4086 = vmatmul.mubr.f32.gmra.mrb[0].mxu0 %v162
  %v4087 = vpop.f32.mrb[0].mxu0
  %v4088 = vadd.f32 0.0, %v4087
  %v4089 = vpop.f32.mrb[0].mxu0
  %4090 = vmatprep.mubr.f32.mxu0 0.0
  %4091 = vmatmul.mubr.f32.gmra.mrb[0].mxu0 %v165
  %v4092 = vpop.f32.mrb[0].mxu0
  %v4093 = vadd.f32 0.0, %v4092
  %v4094 = vpop.f32.mrb[0].mxu0
  %4095 = vdwg.mxu0
  %4096 = vset.pattern.permute.xlu0 24
  %4097 = vperm.xlu0 %4096, %v128
  %v4098 = vpop.permute.xlu0 %4097
  %4100 = vset.pattern.permute.xlu0 24
  %4101 = vperm.xlu0 %4100, %v129
  %v4102 = vpop.permute.xlu0 %4101
  %4104 = vset.pattern.permute.xlu0 24
  %4105 = vperm.xlu0 %4104, %v130
  %v4106 = vpop.permute.xlu0 %4105
  %4108 = vset.pattern.permute.xlu0 24
  %4109 = vperm.xlu0 %4108, %v131
  %v4110 = vpop.permute.xlu0 %4109
  %4112 = vset.pattern.permute.xlu0 24
  %4113 = vperm.xlu0 %4112, %v132
  %v4114 = vpop.permute.xlu0 %4113
  %4116 = vset.pattern.permute.xlu0 24
  %4117 = vperm.xlu0 %4116, %v133
  %v4118 = vpop.permute.xlu0 %4117
  %4120 = vset.pattern.permute.xlu0 24
  %4121 = vperm.xlu0 %4120, %v134
  %v4122 = vpop.permute.xlu0 %4121
  %4124 = vset.pattern.permute.xlu0 24
  %4125 = vperm.xlu0 %4124, %v135
  %v4126 = vpop.permute.xlu0 %4125
  %v4128 = vmul.f32 %v4058, %v4098
  %v4129 = vmul.f32 %v4063, %v4102
  %v4130 = vmul.f32 %v4068, %v4106
  %v4131 = vmul.f32 %v4073, %v4110
  %v4132 = vmul.f32 %v4078, %v4114
  %v4133 = vmul.f32 %v4083, %v4118
  %v4134 = vmul.f32 %v4088, %v4122
  %v4135 = vmul.f32 %v4093, %v4126
  %v4136 = vadd.f32 %v3977, %v4128
  %v4137 = vadd.f32 %v3978, %v4129
  %v4138 = vadd.f32 %v3979, %v4130
  %v4139 = vadd.f32 %v3980, %v4131
  %v4140 = vadd.f32 %v3981, %v4132
  %v4141 = vadd.f32 %v3982, %v4133
  %v4142 = vadd.f32 %v3983, %v4134
  %v4143 = vadd.f32 %v3984, %v4135
  %v4144 = vld [vmem:[%s8] sm:$0xff]
  %v4145 = vld [vmem:[%s8 + $0x8] sm:$0xff]
  %v4146 = vld [vmem:[%s8 + $0x10] sm:$0xff]
  %v4147 = vld [vmem:[%s8 + $0x18] sm:$0xff]
  %v4148 = vld [vmem:[%s8 + $0x20] sm:$0xff]
  %v4149 = vld [vmem:[%s8 + $0x28] sm:$0xff]
  %vm4150 = vcmask 523264
  %v4152 = vsel %vm4150, %v122, 0
  %v4155 = vsel %vm4150, %v123, 0
  %v4158 = vsel %vm4150, %v124, 0
  %v4161 = vsel %vm4150, %v125, 0
  %v4164 = vsel %vm4150, %v126, 0
  %v4167 = vsel %vm4150, %v127, 0
  %4169 = vmatprep.subr.mxu0 0.0
  %4170 = vmatpush1.msra.mxu0 %v4136
  %4171 = vmatprep.subr.mxu0 0.0
  %4172 = vmatpush1.msra.mxu0 %v4137
  %4173 = vmatprep.subr.mxu0 0.0
  %4174 = vmatpush1.msra.mxu0 %v4138
  %4175 = vmatprep.subr.mxu0 0.0
  %4176 = vmatpush1.msra.mxu0 %v4139
  %4177 = vmatprep.subr.mxu0 0.0
  %4178 = vmatpush1.msra.mxu0 %v4140
  %4179 = vmatprep.subr.mxu0 0.0
  %4180 = vmatpush1.msra.mxu0 %v4141
  %4181 = vmatprep.subr.mxu0 0.0
  %4182 = vmatpush1.msra.mxu0 %v4142
  %4183 = vmatprep.subr.mxu0 0.0
  %4184 = vmatpush1.msra.mxu0 %v4143
  %4185 = vmatprep.subr.mxu0 0.0
  %4186 = vmatpush1.msra.mxu0 0.0
  %4187 = vmatprep.subr.mxu0 0.0
  %4188 = vmatpush1.msra.mxu0 0.0
  %4189 = vmatprep.subr.mxu0 0.0
  %4190 = vmatpush1.msra.mxu0 0.0
  %4191 = vmatprep.subr.mxu0 0.0
  %4192 = vmatpush1.msra.mxu0 0.0
  %4193 = vmatprep.subr.mxu0 0.0
  %4194 = vmatpush1.msra.mxu0 0.0
  %4195 = vmatprep.subr.mxu0 0.0
  %4196 = vmatpush1.msra.mxu0 0.0
  %4197 = vmatprep.subr.mxu0 0.0
  %4198 = vmatpush1.msra.mxu0 0.0
  %4199 = vmatprep.subr.mxu0 0.0
  %4200 = vmatpush1.msra.mxu0 0.0
  %4201 = vmatprep.subr.mxu0 0.0
  %4202 = vmatpush1.msra.mxu0 0.0
  %4203 = vmatprep.subr.mxu0 0.0
  %4204 = vmatpush1.msra.mxu0 0.0
  %4205 = vmatprep.subr.mxu0 0.0
  %4206 = vmatpush1.msra.mxu0 0.0
  %4207 = vmatprep.subr.mxu0 0.0
  %4208 = vmatpush1.msra.mxu0 0.0
  %4209 = vmatprep.subr.mxu0 0.0
  %4210 = vmatpush1.msra.mxu0 0.0
  %4211 = vmatprep.subr.mxu0 0.0
  %4212 = vmatpush1.msra.mxu0 0.0
  %4213 = vmatprep.subr.mxu0 0.0
  %4214 = vmatpush1.msra.mxu0 0.0
  %4215 = vmatprep.subr.mxu0 0.0
  %4216 = vmatpush1.msra.mxu0 0.0
  %4217 = vmatprep.subr.mxu0 0.0
  %4218 = vmatpush1.msra.mxu0 0.0
  %4219 = vmatprep.subr.mxu0 0.0
  %4220 = vmatpush1.msra.mxu0 0.0
  %4221 = vmatprep.subr.mxu0 0.0
  %4222 = vmatpush1.msra.mxu0 0.0
  %4223 = vmatprep.subr.mxu0 0.0
  %4224 = vmatpush1.msra.mxu0 0.0
  %4225 = vmatprep.subr.mxu0 0.0
  %4226 = vmatpush1.msra.mxu0 0.0
  %4227 = vmatprep.subr.mxu0 0.0
  %4228 = vmatpush1.msra.mxu0 0.0
  %4229 = vmatprep.subr.mxu0 0.0
  %4230 = vmatpush1.msra.mxu0 0.0
  %4231 = vmatprep.subr.mxu0 0.0
  %4232 = vmatpush1.msra.mxu0 0.0
  %4233 = vmatprep.mubr.f32.mxu0 0.0
  %4234 = vmatmul.mubr.f32.gmra.mrb[0].mxu0 %v4152
  %v4235 = vpop.f32.mrb[0].mxu0
  %v4236 = vadd.f32 0.0, %v4235
  %v4237 = vpop.f32.mrb[0].mxu0
  %4238 = vmatprep.mubr.f32.mxu0 0.0
  %4239 = vmatmul.mubr.f32.gmra.mrb[0].mxu0 %v4155
  %v4240 = vpop.f32.mrb[0].mxu0
  %v4241 = vadd.f32 0.0, %v4240
  %v4242 = vpop.f32.mrb[0].mxu0
  %4243 = vmatprep.mubr.f32.mxu0 0.0
  %4244 = vmatmul.mubr.f32.gmra.mrb[0].mxu0 %v4158
  %v4245 = vpop.f32.mrb[0].mxu0
  %v4246 = vadd.f32 0.0, %v4245
  %v4247 = vpop.f32.mrb[0].mxu0
  %4248 = vmatprep.mubr.f32.mxu0 0.0
  %4249 = vmatmul.mubr.f32.gmra.mrb[0].mxu0 %v4161
  %v4250 = vpop.f32.mrb[0].mxu0
  %v4251 = vadd.f32 0.0, %v4250
  %v4252 = vpop.f32.mrb[0].mxu0
  %4253 = vmatprep.mubr.f32.mxu0 0.0
  %4254 = vmatmul.mubr.f32.gmra.mrb[0].mxu0 %v4164
  %v4255 = vpop.f32.mrb[0].mxu0
  %v4256 = vadd.f32 0.0, %v4255
  %v4257 = vpop.f32.mrb[0].mxu0
  %4258 = vmatprep.mubr.f32.mxu0 0.0
  %4259 = vmatmul.mubr.f32.gmra.mrb[0].mxu0 %v4167
  %v4260 = vpop.f32.mrb[0].mxu0
  %v4261 = vadd.f32 0.0, %v4260
  %v4262 = vpop.f32.mrb[0].mxu0
  %4263 = vdwg.mxu0
  %v4264 = vadd.f32 %v4144, %v4236
  %v4265 = vadd.f32 %v4145, %v4241
  %v4266 = vadd.f32 %v4146, %v4246
  %v4267 = vadd.f32 %v4147, %v4251
  %v4268 = vadd.f32 %v4148, %v4256
  %v4269 = vadd.f32 %v4149, %v4261
  %4270 = vst [vmem:[%s8] sm:$0xff] %v4264
  %4271 = vst [vmem:[%s8 + $0x8] sm:$0xff] %v4265
  %4272 = vst [vmem:[%s8 + $0x10] sm:$0xff] %v4266
  %4273 = vst [vmem:[%s8 + $0x18] sm:$0xff] %v4267
  %4274 = vst [vmem:[%s8 + $0x20] sm:$0xff] %v4268
  %4275 = vst [vmem:[%s8 + $0x28] sm:$0xff] %v4269
  // Predicated region
  $region38: #{hybrid_gnn_forward.7} parent=0 // pred_check
    %p4276 = pneg %p30
  $region39: #{hybrid_gnn_forward.7} parent=0 // pred_check_branch
    %4278 = sbr.rel (%p4276) target = $region41
  $region40: #{hybrid_gnn_forward.7} parent=0 // pred_region
    %v4279 = vld [vmem:[%s8] sm:$0xff]
    %v4280 = vld [vmem:[%s8 + $0x8] sm:$0xff]
    %v4281 = vld [vmem:[%s8 + $0x10] sm:$0xff]
    %v4282 = vld [vmem:[%s8 + $0x18] sm:$0xff]
    %v4283 = vld [vmem:[%s8 + $0x20] sm:$0xff]
    %v4284 = vld [vmem:[%s8 + $0x28] sm:$0xff]
    %v4285 = vld [vmem:[%s7] sm:$0xff]
    %v4286 = vld [vmem:[%s7 + $0x8] sm:$0xff]
    %v4287 = vld [vmem:[%s7 + $0x10] sm:$0xff]
    %v4288 = vld [vmem:[%s7 + $0x18] sm:$0xff]
    %v4289 = vld [vmem:[%s7 + $0x20] sm:$0xff]
    %v4290 = vld [vmem:[%s7 + $0x28] sm:$0xff]
    %4292 = vset.pattern.permute.xlu0 0
    %4293 = vperm.xlu0 %4292, %v4285
    %v4294 = vpop.permute.xlu0 %4293
    %4297 = vset.pattern.permute.xlu0 0
    %4298 = vperm.xlu0 %4297, %v4286
    %v4299 = vpop.permute.xlu0 %4298
    %4302 = vset.pattern.permute.xlu0 0
    %4303 = vperm.xlu0 %4302, %v4287
    %v4304 = vpop.permute.xlu0 %4303
    %4307 = vset.pattern.permute.xlu0 0
    %4308 = vperm.xlu0 %4307, %v4288
    %v4309 = vpop.permute.xlu0 %4308
    %4312 = vset.pattern.permute.xlu0 0
    %4313 = vperm.xlu0 %4312, %v4289
    %v4314 = vpop.permute.xlu0 %4313
    %4317 = vset.pattern.permute.xlu0 0
    %4318 = vperm.xlu0 %4317, %v4290
    %v4319 = vpop.permute.xlu0 %4318
    %v4321 = vmul.f32 %v4279, %v4294
    %v4322 = vmul.f32 %v4280, %v4299
    %v4323 = vmul.f32 %v4281, %v4304
    %v4324 = vmul.f32 %v4282, %v4309
    %v4325 = vmul.f32 %v4283, %v4314
    %v4326 = vmul.f32 %v4284, %v4319
    %v4327 = vld [vmem:[%s4] sm:$0xf]
    %v4328 = vld [vmem:[%s4 + $0x4] sm:$0xf]
    %v4329 = vld [vmem:[%s4 + $0x8] sm:$0xf]
    %v4330 = vld [vmem:[%s4 + $0xc] sm:$0xf]
    %v4331 = vld [vmem:[%s4 + $0x10] sm:$0xf]
    %v4332 = vld [vmem:[%s4 + $0x14] sm:$0xf]
    %v4333 = vld [vmem:[%s5] sm:$0xf]
    %v4334 = vld [vmem:[%s5 + $0x4] sm:$0xf]
    %v4335 = vld [vmem:[%s5 + $0x8] sm:$0xf]
    %v4336 = vld [vmem:[%s5 + $0xc] sm:$0xf]
    %v4337 = vld [vmem:[%s5 + $0x10] sm:$0xf]
    %v4338 = vld [vmem:[%s5 + $0x14] sm:$0xf]
    %v4339 = vld [vmem:[%s5 + $0x18] sm:$0xf]
    %v4340 = vld [vmem:[%s5 + $0x1c] sm:$0xf]
    %v4341 = vld [vmem:[%s5 + $0x20] sm:$0xf]
    %v4342 = vld [vmem:[%s5 + $0x24] sm:$0xf]
    %v4343 = vld [vmem:[%s5 + $0x28] sm:$0xf]
    %v4344 = vld [vmem:[%s5 + $0x2c] sm:$0xf]
    %v4345 = vld [vmem:[%s5 + $0x30] sm:$0xf]
    %v4346 = vld [vmem:[%s5 + $0x34] sm:$0xf]
    %v4347 = vld [vmem:[%s5 + $0x38] sm:$0xf]
    %v4348 = vld [vmem:[%s5 + $0x3c] sm:$0xf]
    %v4355 = vunpack.c.l.b16 %v4327
    %v4356 = vunpack.c.l.b16 %v4328
    %v4357 = vunpack.c.l.b16 %v4329
    %v4358 = vunpack.c.l.b16 %v4330
    %v4359 = vunpack.c.l.b16 %v4331
    %v4360 = vunpack.c.l.b16 %v4332
    %v4361 = vpack.c.b16 %v4356, %v4355
    %v4362 = vpack.c.b16 %v4358, %v4357
    %v4363 = vpack.c.b16 %v4360, %v4359
    %v4383 = vunpack.c.l.b16 %v4333
    %v4384 = vunpack.c.l.b16 %v4334
    %v4385 = vunpack.c.l.b16 %v4335
    %v4386 = vunpack.c.l.b16 %v4336
    %v4387 = vunpack.c.l.b16 %v4337
    %v4388 = vunpack.c.l.b16 %v4338
    %v4389 = vunpack.c.l.b16 %v4339
    %v4390 = vunpack.c.l.b16 %v4340
    %v4391 = vunpack.c.l.b16 %v4341
    %v4392 = vunpack.c.l.b16 %v4342
    %v4393 = vunpack.c.l.b16 %v4343
    %v4394 = vunpack.c.l.b16 %v4344
    %v4395 = vunpack.c.l.b16 %v4345
    %v4396 = vunpack.c.l.b16 %v4346
    %v4397 = vunpack.c.l.b16 %v4347
    %v4398 = vunpack.c.l.b16 %v4348
    %v4399 = vpack.c.b16 %v4384, %v4383
    %v4400 = vpack.c.b16 %v4386, %v4385
    %v4401 = vpack.c.b16 %v4388, %v4387
    %v4402 = vpack.c.b16 %v4390, %v4389
    %v4403 = vpack.c.b16 %v4392, %v4391
    %v4404 = vpack.c.b16 %v4394, %v4393
    %v4405 = vpack.c.b16 %v4396, %v4395
    %v4406 = vpack.c.b16 %v4398, %v4397
    %4415 = vmatprep.subr.bf16.mxu0 0
    %4416 = vmatpush1.bf16.msra.mxu0 %v4399
    %4417 = vmatprep.subr.bf16.mxu0 0
    %4418 = vmatpush1.bf16.msra.mxu0 %v4400
    %4419 = vmatprep.subr.bf16.mxu0 0
    %4420 = vmatpush1.bf16.msra.mxu0 %v4401
    %4421 = vmatprep.subr.bf16.mxu0 0
    %4422 = vmatpush1.bf16.msra.mxu0 %v4402
    %4423 = vmatprep.subr.bf16.mxu0 0
    %4424 = vmatpush1.bf16.msra.mxu0 %v4403
    %4425 = vmatprep.subr.bf16.mxu0 0
    %4426 = vmatpush1.bf16.msra.mxu0 %v4404
    %4427 = vmatprep.subr.bf16.mxu0 0
    %4428 = vmatpush1.bf16.msra.mxu0 %v4405
    %4429 = vmatprep.subr.bf16.mxu0 0
    %4430 = vmatpush1.bf16.msra.mxu0 %v4406
    %4431 = vmatprep.subr.bf16.mxu0 0
    %4432 = vmatpush1.bf16.msra.mxu0 0
    %4433 = vmatprep.subr.bf16.mxu0 0
    %4434 = vmatpush1.bf16.msra.mxu0 0
    %4435 = vmatprep.subr.bf16.mxu0 0
    %4436 = vmatpush1.bf16.msra.mxu0 0
    %4437 = vmatprep.subr.bf16.mxu0 0
    %4438 = vmatpush1.bf16.msra.mxu0 0
    %4439 = vmatprep.subr.bf16.mxu0 0
    %4440 = vmatpush1.bf16.msra.mxu0 0
    %4441 = vmatprep.subr.bf16.mxu0 0
    %4442 = vmatpush1.bf16.msra.mxu0 0
    %4443 = vmatprep.subr.bf16.mxu0 0
    %4444 = vmatpush1.bf16.msra.mxu0 0
    %4445 = vmatprep.subr.bf16.mxu0 0
    %4446 = vmatpush1.bf16.msra.mxu0 0
    %4447 = vmatprep.mubr.bf16.mxu0 0
    %4448 = vmatmul.mubr.bf16.gmra.mrb[0].mxu0 %v4361
    %v4449 = vpop.f32.mrb[0].mxu0
    %v4450 = vadd.f32 0.0, %v4449
    %v4451 = vpop.f32.mrb[0].mxu0
    %v4452 = vpop.f32.mrb[0].mxu0
    %v4453 = vadd.f32 0.0, %v4452
    %v4454 = vpop.f32.mrb[0].mxu0
    %4455 = vmatprep.mubr.bf16.mxu0 0
    %4456 = vmatmul.mubr.bf16.gmra.mrb[0].mxu0 %v4362
    %v4457 = vpop.f32.mrb[0].mxu0
    %v4458 = vadd.f32 0.0, %v4457
    %v4459 = vpop.f32.mrb[0].mxu0
    %v4460 = vpop.f32.mrb[0].mxu0
    %v4461 = vadd.f32 0.0, %v4460
    %v4462 = vpop.f32.mrb[0].mxu0
    %4463 = vmatprep.mubr.bf16.mxu0 0
    %4464 = vmatmul.mubr.bf16.gmra.mrb[0].mxu0 %v4363
    %v4465 = vpop.f32.mrb[0].mxu0
    %v4466 = vadd.f32 0.0, %v4465
    %v4467 = vpop.f32.mrb[0].mxu0
    %v4468 = vpop.f32.mrb[0].mxu0
    %v4469 = vadd.f32 0.0, %v4468
    %v4470 = vpop.f32.mrb[0].mxu0
    %4471 = vdwg.mxu0
    %v4472 = vadd.f32 %v4321, %v4450
    %v4473 = vadd.f32 %v4322, %v4453
    %v4474 = vadd.f32 %v4323, %v4458
    %v4475 = vadd.f32 %v4324, %v4461
    %v4476 = vadd.f32 %v4325, %v4466
    %v4477 = vadd.f32 %v4326, %v4469
    %v4478 = vld [vmem:[%s6] sm:$0x1]
    %v4480 = vlaneseq
    %v4481 = vshrl.u32 %v4480, 7
    %v4482 = vsub.s32 0, %v4481
    %v4483 = vrot.slane %v4478, %v4482
    %v4485 = vadd.f32 %v4472, %v4483
    %v4486 = vadd.f32 %v4473, %v4483
    %v4487 = vadd.f32 %v4474, %v4483
    %v4488 = vadd.f32 %v4475, %v4483
    %v4489 = vadd.f32 %v4476, %v4483
    %v4490 = vadd.f32 %v4477, %v4483
    %v4491 = vmax.f32 %v4485, 0.0
    %v4492 = vmax.f32 %v4486, 0.0
    %v4493 = vmax.f32 %v4487, 0.0
    %v4494 = vmax.f32 %v4488, 0.0
    %v4495 = vmax.f32 %v4489, 0.0
    %v4496 = vmax.f32 %v4490, 0.0
    %4497 = vst [vmem:[%s8] sm:$0xff] %v4491
    %4498 = vst [vmem:[%s8 + $0x8] sm:$0xff] %v4492
    %4499 = vst [vmem:[%s8 + $0x10] sm:$0xff] %v4493
    %4500 = vst [vmem:[%s8 + $0x18] sm:$0xff] %v4494
    %4501 = vst [vmem:[%s8 + $0x20] sm:$0xff] %v4495
    %4502 = vst [vmem:[%s8 + $0x28] sm:$0xff] %v4496
  $region41: #{hybrid_gnn_forward.7} parent=0 // pred_fallthru
    _
  // Predicated region
  $region42: #{hybrid_gnn_forward.7} parent=0 // pred_check
    _
  $region43: #{hybrid_gnn_forward.7} parent=0 // pred_check_branch
    %4504 = sbr.rel (0) target = $region45
  $region44: #{hybrid_gnn_forward.7} parent=0 // pred_region
    _
  $region45: #{hybrid_gnn_forward.7} parent=0 // pred_fallthru
    _
  // Predicated region
  $region46: #{hybrid_gnn_forward.7} parent=0 // pred_check
    _
  $region47: #{hybrid_gnn_forward.7} parent=0 // pred_check_branch
    %4506 = sbr.rel (0) target = $region49
  $region48: #{hybrid_gnn_forward.7} parent=0 // pred_region
    _
  $region49: #{hybrid_gnn_forward.7} parent=0 // pred_fallthru
    _

</llo_original>
